<compile_context>
chip_gen: v7x
topology: tpu7x:2x2x1
jax: 0.10.0
libtpu: 0.0.40
codegen_flags: <defaults>
</compile_context>

<pallas_src>
import math

import jax
import jax.numpy as jnp
from jax import lax
from jax.experimental import pallas as pl
from jax.experimental.pallas import tpu as pltpu

# Small but structurally faithful hyper-parameters.
BATCH = 2
SEQ = 8            # << 1000 and << max_seq_len, so long-sequence branches never fire
INPUT_DIM = 16
HIDDEN = 64        # d_model (divisible by nhead)
NHEAD = 8
HEAD_DIM = HIDDEN // NHEAD
FFN = 128          # dim_feedforward
EMBED = 32         # embedding_dim
NUM_LAYERS = 2
MAX_SEQ_LEN = 150 * 30
LN_EPS = 1e-5      # PyTorch LayerNorm / TransformerEncoderLayer default
L2_EPS = 1e-12     # F.normalize default eps

# EUP approximate reciprocal in the softmax denominator (perf). Rows then do
# not sum to exactly 1; flip to False for exact division.
APPROX_RECIPROCAL = True

# ----------------------- packed-slab row offsets (static) -----------------------
# Slab "qkv" (lane width 3*HIDDEN = 192): per layer [Wqkv (64 rows) | bqkv | pad]
QKV_LAYER_STRIDE = HIDDEN + 8                       # 72 (8-row aligned blocks)
QKV_ROWS = NUM_LAYERS * QKV_LAYER_STRIDE            # 144

# Slab "ffn1" (lane width FFN = 128): per layer [Wff1 (64 rows) | bff1 | pad]
FFN_LAYER_STRIDE = HIDDEN + 8                       # 72
FFN_ROWS = NUM_LAYERS * FFN_LAYER_STRIDE            # 144

# Slab "h64" (lane width HIDDEN = 64):
#   [W1 (16) | b1 (pad to 8) | per-layer (Wo 64 | 8-row vec block | Wff2 128) |
#    fc1w 64 | fc1b (pad to 8)]
H64_W1 = 0
H64_B1 = INPUT_DIM                                  # 16
H64_LAYER0 = INPUT_DIM + 8                          # 24
H64_WO = 0
H64_VEC = HIDDEN                                    # bo, ln1g, ln1b, ln2g, ln2b, bff2
H64_WFF2 = HIDDEN + 8                               # 72
H64_LAYER_STRIDE = HIDDEN + 8 + FFN                 # 200
H64_FC1W = H64_LAYER0 + NUM_LAYERS * H64_LAYER_STRIDE   # 424
H64_FC1B = H64_FC1W + HIDDEN                        # 488
H64_ROWS = H64_FC1B + 8                             # 496
VEC_BO, VEC_LN1G, VEC_LN1B, VEC_LN2G, VEC_LN2B, VEC_BFF2 = 0, 1, 2, 3, 4, 5

# Slab "e32" (lane width EMBED = 32): [fc2w (64) | fc2b | lnfg | lnfb | pad]
E32_FC2W = 0
E32_VEC = HIDDEN                                    # 64
VEC_FC2B, VEC_LNFG, VEC_LNFB = 0, 1, 2
E32_ROWS = HIDDEN + 8                               # 72


def _layer_norm(x, g, b, eps=LN_EPS):
    mu = jnp.mean(x, axis=-1, keepdims=True)
    xc = x - mu
    var = jnp.mean(xc * xc, axis=-1, keepdims=True)
    return xc * lax.rsqrt(var + eps) * g + b


def _softmax_last(x):
    x = x - jnp.max(x, axis=-1, keepdims=True)
    e = jnp.exp(x)
    s = jnp.sum(e, axis=-1, keepdims=True)
    if APPROX_RECIPROCAL:
        return e * pl.reciprocal(s, approx=True)
    return e / s


def gesture_encoder_kernel(x_ref, qkv_ref, ffn_ref, h64_ref, e32_ref,
                           out_ref, ao_scr):
    f32 = jnp.float32
    scale = 1.0 / math.sqrt(HEAD_DIM)

    # ---- linear1 over all B*S rows at once ----
    w1 = h64_ref[H64_W1:H64_W1 + INPUT_DIM, :]
    b1 = h64_ref[H64_B1:H64_B1 + 1, :]
    h = jnp.dot(x_ref[...], w1, preferred_element_type=f32) + b1          # (B*S, H)

    for l in range(NUM_LAYERS):
        qb = l * QKV_LAYER_STRIDE
        fb = l * FFN_LAYER_STRIDE
        hb = H64_LAYER0 + l * H64_LAYER_STRIDE

        wqkv = qkv_ref[qb:qb + HIDDEN, :]                                  # (64, 192)
        bqkv = qkv_ref[qb + HIDDEN:qb + HIDDEN + 1, :]                     # (1, 192)
        wo = h64_ref[hb + H64_WO:hb + H64_WO + HIDDEN, :]                  # (64, 64)
        vec = h64_ref[hb + H64_VEC:hb + H64_VEC + 8, :]                    # (8, 64)
        bo = vec[VEC_BO:VEC_BO + 1]
        ln1g = vec[VEC_LN1G:VEC_LN1G + 1]
        ln1b = vec[VEC_LN1B:VEC_LN1B + 1]
        ln2g = vec[VEC_LN2G:VEC_LN2G + 1]
        ln2b = vec[VEC_LN2B:VEC_LN2B + 1]
        bff2 = vec[VEC_BFF2:VEC_BFF2 + 1]
        wff1 = ffn_ref[fb:fb + HIDDEN, :]                                  # (64, 128)
        bff1 = ffn_ref[fb + HIDDEN:fb + HIDDEN + 1, :]                     # (1, 128)
        wff2 = h64_ref[hb + H64_WFF2:hb + H64_WFF2 + FFN, :]               # (128, 64)

        # ---- self-attention: one fused, lane-dense QKV matmul ----
        qkv = jnp.dot(h, wqkv, preferred_element_type=f32) + bqkv          # (B*S, 192)

        for hd in range(NHEAD):
            c = hd * HEAD_DIM
            # Static lane slices + free leading-dim split to (B, S, HD).
            q = qkv[:, c:c + HEAD_DIM].reshape(BATCH, SEQ, HEAD_DIM)
            k = qkv[:, HIDDEN + c:HIDDEN + c + HEAD_DIM].reshape(BATCH, SEQ, HEAD_DIM)
            v = qkv[:, 2 * HIDDEN + c:2 * HIDDEN + c + HEAD_DIM].reshape(
                BATCH, SEQ, HEAD_DIM)
            # Batched (over examples) rank-3 dot_generals; (S,S)=(8,8) tiles are
            # the only unavoidable sub-lane-dense intermediates.
            sc = jnp.einsum("bqd,bkd->bqk", q, k,
                            preferred_element_type=f32) * scale            # (B, S, S)
            p = _softmax_last(sc)
            ao = jnp.einsum("bqk,bkd->bqd", p, v,
                            preferred_element_type=f32)                    # (B, S, HD)
            # Assemble the (b, s, head, hd)-ordered attention output.
            ao_scr[:, c:c + HEAD_DIM] = ao.reshape(BATCH * SEQ, HEAD_DIM)

        # Single lane-dense output projection (replaces per-head proj + head-sum).
        attn = jnp.dot(ao_scr[...], wo, preferred_element_type=f32) + bo   # (B*S, H)
        h = _layer_norm(h + attn, ln1g, ln1b)

        # ---- feed-forward (relu) on the full (B*S, H) slab ----
        ff = jnp.maximum(
            jnp.dot(h, wff1, preferred_element_type=f32) + bff1, 0.0)
        ff = jnp.dot(ff, wff2, preferred_element_type=f32) + bff2
        h = _layer_norm(h + ff, ln2g, ln2b)

    # ---- AdaptiveAvgPool1d(1): per-batch mean over the sequence ----
    pooled = jnp.mean(h.reshape(BATCH, SEQ, HIDDEN), axis=1)               # (B, H)

    # ---- relu(fc1) -> fc2 -> LayerNorm -> L2 normalize ----
    fc1w = h64_ref[H64_FC1W:H64_FC1W + HIDDEN, :]
    fc1b = h64_ref[H64_FC1B:H64_FC1B + 1, :]
    y = jnp.maximum(
        jnp.dot(pooled, fc1w, preferred_element_type=f32) + fc1b, 0.0)

    fc2w = e32_ref[E32_FC2W:E32_FC2W + HIDDEN, :]
    evec = e32_ref[E32_VEC:E32_VEC + 8, :]
    y = jnp.dot(y, fc2w, preferred_element_type=f32) + evec[VEC_FC2B:VEC_FC2B + 1]
    y = _layer_norm(y, evec[VEC_LNFG:VEC_LNFG + 1], evec[VEC_LNFB:VEC_LNFB + 1])
    # F.normalize(p=2): x / max(||x||, eps) == x * rsqrt(max(||x||^2, eps^2))
    nrm2 = jnp.sum(y * y, axis=-1, keepdims=True)
    out_ref[...] = y * lax.rsqrt(jnp.maximum(nrm2, L2_EPS * L2_EPS))       # (B, E)


def _pack_params(p):
    """Pack the 17 PyTorch-layout params into 4 contiguous f32 slabs."""
    f32 = jnp.float32
    qkv = jnp.zeros((QKV_ROWS, 3 * HIDDEN), f32)
    ffn = jnp.zeros((FFN_ROWS, FFN), f32)
    h64 = jnp.zeros((H64_ROWS, HIDDEN), f32)
    e32 = jnp.zeros((E32_ROWS, EMBED), f32)

    h64 = h64.at[H64_W1:H64_W1 + INPUT_DIM].set(p["w1"])
    h64 = h64.at[H64_B1].set(p["b1"][0])

    for l in range(NUM_LAYERS):
        qb = l * QKV_LAYER_STRIDE
        wq = jnp.concatenate([p["wq"][l], p["wk"][l], p["wv"][l]], axis=1)   # (64,192)
        bq = jnp.concatenate([p["bq"][l], p["bk"][l], p["bv"][l]], axis=1)   # (1,192)
        qkv = qkv.at[qb:qb + HIDDEN].set(wq)
        qkv = qkv.at[qb + HIDDEN].set(bq[0])

        fb = l * FFN_LAYER_STRIDE
        ffn = ffn.at[fb:fb + HIDDEN].set(p["wff1"][l])
        ffn = ffn.at[fb + HIDDEN].set(p["bff1"][l][0])

        hb = H64_LAYER0 + l * H64_LAYER_STRIDE
        h64 = h64.at[hb + H64_WO:hb + H64_WO + HIDDEN].set(p["wo"][l])
        vec = jnp.stack([p["bo"][l][0], p["ln1g"][l][0], p["ln1b"][l][0],
                         p["ln2g"][l][0], p["ln2b"][l][0], p["bff2"][l][0]], axis=0)
        h64 = h64.at[hb + H64_VEC:hb + H64_VEC + 6].set(vec)
        h64 = h64.at[hb + H64_WFF2:hb + H64_WFF2 + FFN].set(p["wff2"][l])

    h64 = h64.at[H64_FC1W:H64_FC1W + HIDDEN].set(p["fc1w"])
    h64 = h64.at[H64_FC1B].set(p["fc1b"][0])

    e32 = e32.at[E32_FC2W:E32_FC2W + HIDDEN].set(p["fc2w"])
    evec = jnp.stack([p["fc2b"][0], p["lnfg"][0], p["lnfb"][0]], axis=0)
    e32 = e32.at[E32_VEC:E32_VEC + 3].set(evec)
    return qkv, ffn, h64, e32


def gesture_encoder(x, params):
    B, S, Din = x.shape
    # TODO(synk): seq_len > max_seq_len subsampling and seq_len > 1000 chunking
    # branches of the PyTorch forward are not implemented (never fire for SEQ=8).
    assert S <= MAX_SEQ_LEN and S <= 1000, "long-sequence branches not implemented"
    assert (B, S, Din) == (BATCH, SEQ, INPUT_DIM)
    x2 = x.reshape(B * S, Din)
    qkv, ffn, h64, e32 = _pack_params(params)
    # Gridless single invocation: the whole problem (~0.3 MiB) lives in VMEM.
    out = pl.pallas_call(
        gesture_encoder_kernel,
        out_shape=jax.ShapeDtypeStruct((B, EMBED), jnp.float32),
        scratch_shapes=[pltpu.VMEM((B * S, HIDDEN), jnp.float32)],
    )(x2, qkv, ffn, h64, e32)
    return out


def init_params(key):
    keys = iter(jax.random.split(key, 32))

    def w(shape, scale=0.05):
        return (scale * jax.random.normal(next(keys), shape)).astype(jnp.float32)

    p = {}
    p["w1"] = w((INPUT_DIM, HIDDEN)); p["b1"] = w((1, HIDDEN))
    p["wq"] = w((NUM_LAYERS, HIDDEN, HIDDEN))
    p["wk"] = w((NUM_LAYERS, HIDDEN, HIDDEN))
    p["wv"] = w((NUM_LAYERS, HIDDEN, HIDDEN))
    p["bq"] = w((NUM_LAYERS, 1, HIDDEN))
    p["bk"] = w((NUM_LAYERS, 1, HIDDEN))
    p["bv"] = w((NUM_LAYERS, 1, HIDDEN))
    p["wo"] = w((NUM_LAYERS, HIDDEN, HIDDEN)); p["bo"] = w((NUM_LAYERS, 1, HIDDEN))
    p["ln1g"] = jnp.ones((NUM_LAYERS, 1, HIDDEN), jnp.float32)
    p["ln1b"] = jnp.zeros((NUM_LAYERS, 1, HIDDEN), jnp.float32)
    p["ln2g"] = jnp.ones((NUM_LAYERS, 1, HIDDEN), jnp.float32)
    p["ln2b"] = jnp.zeros((NUM_LAYERS, 1, HIDDEN), jnp.float32)
    p["wff1"] = w((NUM_LAYERS, HIDDEN, FFN)); p["bff1"] = w((NUM_LAYERS, 1, FFN))
    p["wff2"] = w((NUM_LAYERS, FFN, HIDDEN)); p["bff2"] = w((NUM_LAYERS, 1, HIDDEN))
    p["fc1w"] = w((HIDDEN, HIDDEN)); p["fc1b"] = w((1, HIDDEN))
    p["fc2w"] = w((HIDDEN, EMBED)); p["fc2b"] = w((1, EMBED))
    p["lnfg"] = jnp.ones((1, EMBED), jnp.float32)
    p["lnfb"] = jnp.zeros((1, EMBED), jnp.float32)
    return p


def reference_forward(x, p):
    """Pure-JAX reference mirroring the PyTorch eval-mode forward."""
    h = jnp.einsum("bsd,dh->bsh", x, p["w1"]) + p["b1"]
    B, S, H = h.shape
    for l in range(NUM_LAYERS):
        q = h @ p["wq"][l] + p["bq"][l]
        k = h @ p["wk"][l] + p["bk"][l]
        v = h @ p["wv"][l] + p["bv"][l]
        qh = q.reshape(B, S, NHEAD, HEAD_DIM)
        kh = k.reshape(B, S, NHEAD, HEAD_DIM)
        vh = v.reshape(B, S, NHEAD, HEAD_DIM)
        sc = jnp.einsum("bqnd,bknd->bnqk", qh, kh) / math.sqrt(HEAD_DIM)
        pa = jax.nn.softmax(sc, axis=-1)
        ao = jnp.einsum("bnqk,bknd->bqnd", pa, vh).reshape(B, S, H)
        ao = ao @ p["wo"][l] + p["bo"][l]
        h = _layer_norm(h + ao, p["ln1g"][l], p["ln1b"][l])
        ff = jax.nn.relu(h @ p["wff1"][l] + p["bff1"][l]) @ p["wff2"][l] + p["bff2"][l]
        h = _layer_norm(h + ff, p["ln2g"][l], p["ln2b"][l])
    pooled = jnp.mean(h, axis=1)                                   # (B, H)
    y = jax.nn.relu(pooled @ p["fc1w"] + p["fc1b"])
    y = y @ p["fc2w"] + p["fc2b"]
    y = _layer_norm(y, p["lnfg"], p["lnfb"])
    nrm = jnp.sqrt(jnp.sum(y * y, axis=-1, keepdims=True))
    return y / jnp.maximum(nrm, L2_EPS)


if __name__ == "__main__":
    key = jax.random.PRNGKey(0)
    kx, kp = jax.random.split(key)
    x = jax.random.normal(kx, (BATCH, SEQ, INPUT_DIM), dtype=jnp.float32)
    params = init_params(kp)

    out = gesture_encoder(x, params)
    out = jax.block_until_ready(out)

    ref = reference_forward(x, params)
    assert out.shape == (BATCH, EMBED), out.shape
    max_err = float(jnp.max(jnp.abs(out - ref)))
    assert max_err < 5e-3, f"max abs error {max_err}"

    print("KERNEL_OK")
</pallas_src>

<mosaic_0001>
module attributes {stable_mosaic.version = 11 : i64} {
  func.func @gesture_encoder_kernel(%arg0: memref<16x16xf32, #tpu.memory_space<vmem>>, %arg1: memref<144x192xf32, #tpu.memory_space<vmem>>, %arg2: memref<144x128xf32, #tpu.memory_space<vmem>>, %arg3: memref<496x64xf32, #tpu.memory_space<vmem>>, %arg4: memref<72x32xf32, #tpu.memory_space<vmem>>, %arg5: memref<2x32xf32, #tpu.memory_space<vmem>>, %arg6: memref<16x64xf32, #tpu.memory_space<vmem>>) attributes {dimension_semantics = [], scalar_prefetch = 0 : i64, scratch_operands = 1 : i64, tpu.core_type = #tpu.core_type<tc>} {
    %c0 = arith.constant 0 : index
    %c0_0 = arith.constant 0 : index
    %0 = vector.load %arg3[%c0, %c0_0] : memref<496x64xf32, #tpu.memory_space<vmem>>, vector<16x64xf32>
    %c16 = arith.constant 16 : index
    %c0_1 = arith.constant 0 : index
    %1 = vector.load %arg3[%c16, %c0_1] : memref<496x64xf32, #tpu.memory_space<vmem>>, vector<1x64xf32>
    %c0_2 = arith.constant 0 : index
    %c0_3 = arith.constant 0 : index
    %2 = vector.load %arg0[%c0_2, %c0_3] : memref<16x16xf32, #tpu.memory_space<vmem>>, vector<16x16xf32>
    %cst = arith.constant dense<0.000000e+00> : vector<16x64xf32>
    %3 = tpu.matmul %2, %0, %cst {dimension_numbers = #tpu.dot_dimension_numbers<[1], [0], [0], [1], [0, 0, 1, 1], [], []>} : vector<16x16xf32>, vector<16x64xf32>, vector<16x64xf32> -> vector<16x64xf32>
    %4 = vector.broadcast %1 : vector<1x64xf32> to vector<16x64xf32>
    %5 = arith.addf %3, %4 : vector<16x64xf32>
    %c0_4 = arith.constant 0 : index
    %c0_5 = arith.constant 0 : index
    %6 = vector.load %arg1[%c0_4, %c0_5] : memref<144x192xf32, #tpu.memory_space<vmem>>, vector<64x192xf32>
    %c64 = arith.constant 64 : index
    %c0_6 = arith.constant 0 : index
    %7 = vector.load %arg1[%c64, %c0_6] : memref<144x192xf32, #tpu.memory_space<vmem>>, vector<1x192xf32>
    %c24 = arith.constant 24 : index
    %c0_7 = arith.constant 0 : index
    %8 = vector.load %arg3[%c24, %c0_7] : memref<496x64xf32, #tpu.memory_space<vmem>>, vector<64x64xf32>
    %c88 = arith.constant 88 : index
    %c0_8 = arith.constant 0 : index
    %9 = vector.load %arg3[%c88, %c0_8] : memref<496x64xf32, #tpu.memory_space<vmem>>, vector<8x64xf32>
    %10 = vector.extract_strided_slice %9 {offsets = [0, 0], sizes = [1, 64], strides = [1, 1]} : vector<8x64xf32> to vector<1x64xf32>
    %11 = vector.extract_strided_slice %9 {offsets = [1, 0], sizes = [1, 64], strides = [1, 1]} : vector<8x64xf32> to vector<1x64xf32>
    %12 = vector.extract_strided_slice %9 {offsets = [2, 0], sizes = [1, 64], strides = [1, 1]} : vector<8x64xf32> to vector<1x64xf32>
    %13 = vector.extract_strided_slice %9 {offsets = [3, 0], sizes = [1, 64], strides = [1, 1]} : vector<8x64xf32> to vector<1x64xf32>
    %14 = vector.extract_strided_slice %9 {offsets = [4, 0], sizes = [1, 64], strides = [1, 1]} : vector<8x64xf32> to vector<1x64xf32>
    %15 = vector.extract_strided_slice %9 {offsets = [5, 0], sizes = [1, 64], strides = [1, 1]} : vector<8x64xf32> to vector<1x64xf32>
    %c0_9 = arith.constant 0 : index
    %c0_10 = arith.constant 0 : index
    %16 = vector.load %arg2[%c0_9, %c0_10] : memref<144x128xf32, #tpu.memory_space<vmem>>, vector<64x128xf32>
    %c64_11 = arith.constant 64 : index
    %c0_12 = arith.constant 0 : index
    %17 = vector.load %arg2[%c64_11, %c0_12] : memref<144x128xf32, #tpu.memory_space<vmem>>, vector<1x128xf32>
    %c96 = arith.constant 96 : index
    %c0_13 = arith.constant 0 : index
    %18 = vector.load %arg3[%c96, %c0_13] : memref<496x64xf32, #tpu.memory_space<vmem>>, vector<128x64xf32>
    %cst_14 = arith.constant dense<0.000000e+00> : vector<16x192xf32>
    %19 = tpu.matmul %5, %6, %cst_14 {dimension_numbers = #tpu.dot_dimension_numbers<[1], [0], [0], [1], [0, 0, 1, 1], [], []>} : vector<16x64xf32>, vector<64x192xf32>, vector<16x192xf32> -> vector<16x192xf32>
    %20 = vector.broadcast %7 : vector<1x192xf32> to vector<16x192xf32>
    %21 = arith.addf %19, %20 : vector<16x192xf32>
    %22 = vector.extract_strided_slice %21 {offsets = [0, 0], sizes = [16, 8], strides = [1, 1]} : vector<16x192xf32> to vector<16x8xf32>
    %23 = vector.shape_cast %22 : vector<16x8xf32> to vector<2x8x8xf32>
    %24 = vector.extract_strided_slice %21 {offsets = [0, 64], sizes = [16, 8], strides = [1, 1]} : vector<16x192xf32> to vector<16x8xf32>
    %25 = vector.shape_cast %24 : vector<16x8xf32> to vector<2x8x8xf32>
    %26 = vector.extract_strided_slice %21 {offsets = [0, 128], sizes = [16, 8], strides = [1, 1]} : vector<16x192xf32> to vector<16x8xf32>
    %27 = vector.shape_cast %26 : vector<16x8xf32> to vector<2x8x8xf32>
    "tpu.trace_start"() <{level = 10 : i32, message = "bqd,bkd->bqk"}> : () -> ()
    %cst_15 = arith.constant dense<0.000000e+00> : vector<2x8x8xf32>
    %28 = tpu.matmul %23, %25, %cst_15 {dimension_numbers = #tpu.dot_dimension_numbers<[2], [2], [1], [1], [0, 0, 0, 1, 1, 1], [0], [0]>} : vector<2x8x8xf32>, vector<2x8x8xf32>, vector<2x8x8xf32> -> vector<2x8x8xf32>
    "tpu.trace_stop"() : () -> ()
    %cst_16 = arith.constant 0.353553385 : f32
    %29 = vector.broadcast %cst_16 : f32 to vector<2x8x8xf32>
    %30 = arith.mulf %28, %29 : vector<2x8x8xf32>
    %cst_17 = arith.constant dense<0xFF800000> : vector<2x8xf32>
    %31 = vector.multi_reduction <maximumf>, %30, %cst_17 [2] : vector<2x8x8xf32> to vector<2x8xf32>
    %32 = vector.shape_cast %31 : vector<2x8xf32> to vector<2x8x1xf32>
    %33 = vector.broadcast %32 : vector<2x8x1xf32> to vector<2x8x8xf32>
    %34 = arith.subf %30, %33 : vector<2x8x8xf32>
    %35 = math.exp %34 : vector<2x8x8xf32>
    %cst_18 = arith.constant dense<0.000000e+00> : vector<2x8xf32>
    %36 = vector.multi_reduction <add>, %35, %cst_18 [2] : vector<2x8x8xf32> to vector<2x8xf32>
    %37 = vector.shape_cast %36 : vector<2x8xf32> to vector<2x8x1xf32>
    %38 = tpu.reciprocal %37 {approx = true} : vector<2x8x1xf32> -> vector<2x8x1xf32>
    %39 = vector.broadcast %38 : vector<2x8x1xf32> to vector<2x8x8xf32>
    %40 = arith.mulf %35, %39 : vector<2x8x8xf32>
    "tpu.trace_start"() <{level = 10 : i32, message = "bqk,bkd->bqd"}> : () -> ()
    %cst_19 = arith.constant dense<0.000000e+00> : vector<2x8x8xf32>
    %41 = tpu.matmul %40, %27, %cst_19 {dimension_numbers = #tpu.dot_dimension_numbers<[2], [1], [1], [2], [0, 0, 0, 1, 1, 2], [0], [0]>} : vector<2x8x8xf32>, vector<2x8x8xf32>, vector<2x8x8xf32> -> vector<2x8x8xf32>
    "tpu.trace_stop"() : () -> ()
    %42 = vector.shape_cast %41 : vector<2x8x8xf32> to vector<16x8xf32>
    %c0_20 = arith.constant 0 : index
    %c0_21 = arith.constant 0 : index
    %43 = vector.load %arg6[%c0_20, %c0_21] : memref<16x64xf32, #tpu.memory_space<vmem>>, vector<16x8xf32>
    tpu.vector_store %arg6[%c0_20, %c0_21], %42 {strides = array<i32>} : memref<16x64xf32, #tpu.memory_space<vmem>>, vector<16x8xf32>,
    %44 = vector.extract_strided_slice %21 {offsets = [0, 8], sizes = [16, 8], strides = [1, 1]} : vector<16x192xf32> to vector<16x8xf32>
    %45 = vector.shape_cast %44 : vector<16x8xf32> to vector<2x8x8xf32>
    %46 = vector.extract_strided_slice %21 {offsets = [0, 72], sizes = [16, 8], strides = [1, 1]} : vector<16x192xf32> to vector<16x8xf32>
    %47 = vector.shape_cast %46 : vector<16x8xf32> to vector<2x8x8xf32>
    %48 = vector.extract_strided_slice %21 {offsets = [0, 136], sizes = [16, 8], strides = [1, 1]} : vector<16x192xf32> to vector<16x8xf32>
    %49 = vector.shape_cast %48 : vector<16x8xf32> to vector<2x8x8xf32>
    "tpu.trace_start"() <{level = 10 : i32, message = "bqd,bkd->bqk"}> : () -> ()
    %cst_22 = arith.constant dense<0.000000e+00> : vector<2x8x8xf32>
    %50 = tpu.matmul %45, %47, %cst_22 {dimension_numbers = #tpu.dot_dimension_numbers<[2], [2], [1], [1], [0, 0, 0, 1, 1, 1], [0], [0]>} : vector<2x8x8xf32>, vector<2x8x8xf32>, vector<2x8x8xf32> -> vector<2x8x8xf32>
    "tpu.trace_stop"() : () -> ()
    %cst_23 = arith.constant 0.353553385 : f32
    %51 = vector.broadcast %cst_23 : f32 to vector<2x8x8xf32>
    %52 = arith.mulf %50, %51 : vector<2x8x8xf32>
    %cst_24 = arith.constant dense<0xFF800000> : vector<2x8xf32>
    %53 = vector.multi_reduction <maximumf>, %52, %cst_24 [2] : vector<2x8x8xf32> to vector<2x8xf32>
    %54 = vector.shape_cast %53 : vector<2x8xf32> to vector<2x8x1xf32>
    %55 = vector.broadcast %54 : vector<2x8x1xf32> to vector<2x8x8xf32>
    %56 = arith.subf %52, %55 : vector<2x8x8xf32>
    %57 = math.exp %56 : vector<2x8x8xf32>
    %cst_25 = arith.constant dense<0.000000e+00> : vector<2x8xf32>
    %58 = vector.multi_reduction <add>, %57, %cst_25 [2] : vector<2x8x8xf32> to vector<2x8xf32>
    %59 = vector.shape_cast %58 : vector<2x8xf32> to vector<2x8x1xf32>
    %60 = tpu.reciprocal %59 {approx = true} : vector<2x8x1xf32> -> vector<2x8x1xf32>
    %61 = vector.broadcast %60 : vector<2x8x1xf32> to vector<2x8x8xf32>
    %62 = arith.mulf %57, %61 : vector<2x8x8xf32>
    "tpu.trace_start"() <{level = 10 : i32, message = "bqk,bkd->bqd"}> : () -> ()
    %cst_26 = arith.constant dense<0.000000e+00> : vector<2x8x8xf32>
    %63 = tpu.matmul %62, %49, %cst_26 {dimension_numbers = #tpu.dot_dimension_numbers<[2], [1], [1], [2], [0, 0, 0, 1, 1, 2], [0], [0]>} : vector<2x8x8xf32>, vector<2x8x8xf32>, vector<2x8x8xf32> -> vector<2x8x8xf32>
    "tpu.trace_stop"() : () -> ()
    %64 = vector.shape_cast %63 : vector<2x8x8xf32> to vector<16x8xf32>
    %c0_27 = arith.constant 0 : index
    %c8 = arith.constant 8 : index
    %65 = vector.load %arg6[%c0_27, %c8] : memref<16x64xf32, #tpu.memory_space<vmem>>, vector<16x8xf32>
    tpu.vector_store %arg6[%c0_27, %c8], %64 {strides = array<i32>} : memref<16x64xf32, #tpu.memory_space<vmem>>, vector<16x8xf32>,
    %66 = vector.extract_strided_slice %21 {offsets = [0, 16], sizes = [16, 8], strides = [1, 1]} : vector<16x192xf32> to vector<16x8xf32>
    %67 = vector.shape_cast %66 : vector<16x8xf32> to vector<2x8x8xf32>
    %68 = vector.extract_strided_slice %21 {offsets = [0, 80], sizes = [16, 8], strides = [1, 1]} : vector<16x192xf32> to vector<16x8xf32>
    %69 = vector.shape_cast %68 : vector<16x8xf32> to vector<2x8x8xf32>
    %70 = vector.extract_strided_slice %21 {offsets = [0, 144], sizes = [16, 8], strides = [1, 1]} : vector<16x192xf32> to vector<16x8xf32>
    %71 = vector.shape_cast %70 : vector<16x8xf32> to vector<2x8x8xf32>
    "tpu.trace_start"() <{level = 10 : i32, message = "bqd,bkd->bqk"}> : () -> ()
    %cst_28 = arith.constant dense<0.000000e+00> : vector<2x8x8xf32>
    %72 = tpu.matmul %67, %69, %cst_28 {dimension_numbers = #tpu.dot_dimension_numbers<[2], [2], [1], [1], [0, 0, 0, 1, 1, 1], [0], [0]>} : vector<2x8x8xf32>, vector<2x8x8xf32>, vector<2x8x8xf32> -> vector<2x8x8xf32>
    "tpu.trace_stop"() : () -> ()
    %cst_29 = arith.constant 0.353553385 : f32
    %73 = vector.broadcast %cst_29 : f32 to vector<2x8x8xf32>
    %74 = arith.mulf %72, %73 : vector<2x8x8xf32>
    %cst_30 = arith.constant dense<0xFF800000> : vector<2x8xf32>
    %75 = vector.multi_reduction <maximumf>, %74, %cst_30 [2] : vector<2x8x8xf32> to vector<2x8xf32>
    %76 = vector.shape_cast %75 : vector<2x8xf32> to vector<2x8x1xf32>
    %77 = vector.broadcast %76 : vector<2x8x1xf32> to vector<2x8x8xf32>
    %78 = arith.subf %74, %77 : vector<2x8x8xf32>
    %79 = math.exp %78 : vector<2x8x8xf32>
    %cst_31 = arith.constant dense<0.000000e+00> : vector<2x8xf32>
    %80 = vector.multi_reduction <add>, %79, %cst_31 [2] : vector<2x8x8xf32> to vector<2x8xf32>
    %81 = vector.shape_cast %80 : vector<2x8xf32> to vector<2x8x1xf32>
    %82 = tpu.reciprocal %81 {approx = true} : vector<2x8x1xf32> -> vector<2x8x1xf32>
    %83 = vector.broadcast %82 : vector<2x8x1xf32> to vector<2x8x8xf32>
    %84 = arith.mulf %79, %83 : vector<2x8x8xf32>
    "tpu.trace_start"() <{level = 10 : i32, message = "bqk,bkd->bqd"}> : () -> ()
    %cst_32 = arith.constant dense<0.000000e+00> : vector<2x8x8xf32>
    %85 = tpu.matmul %84, %71, %cst_32 {dimension_numbers = #tpu.dot_dimension_numbers<[2], [1], [1], [2], [0, 0, 0, 1, 1, 2], [0], [0]>} : vector<2x8x8xf32>, vector<2x8x8xf32>, vector<2x8x8xf32> -> vector<2x8x8xf32>
    "tpu.trace_stop"() : () -> ()
    %86 = vector.shape_cast %85 : vector<2x8x8xf32> to vector<16x8xf32>
    %c0_33 = arith.constant 0 : index
    %c16_34 = arith.constant 16 : index
    %87 = vector.load %arg6[%c0_33, %c16_34] : memref<16x64xf32, #tpu.memory_space<vmem>>, vector<16x8xf32>
    tpu.vector_store %arg6[%c0_33, %c16_34], %86 {strides = array<i32>} : memref<16x64xf32, #tpu.memory_space<vmem>>, vector<16x8xf32>,
    %88 = vector.extract_strided_slice %21 {offsets = [0, 24], sizes = [16, 8], strides = [1, 1]} : vector<16x192xf32> to vector<16x8xf32>
    %89 = vector.shape_cast %88 : vector<16x8xf32> to vector<2x8x8xf32>
    %90 = vector.extract_strided_slice %21 {offsets = [0, 88], sizes = [16, 8], strides = [1, 1]} : vector<16x192xf32> to vector<16x8xf32>
    %91 = vector.shape_cast %90 : vector<16x8xf32> to vector<2x8x8xf32>
    %92 = vector.extract_strided_slice %21 {offsets = [0, 152], sizes = [16, 8], strides = [1, 1]} : vector<16x192xf32> to vector<16x8xf32>
    %93 = vector.shape_cast %92 : vector<16x8xf32> to vector<2x8x8xf32>
    "tpu.trace_start"() <{level = 10 : i32, message = "bqd,bkd->bqk"}> : () -> ()
    %cst_35 = arith.constant dense<0.000000e+00> : vector<2x8x8xf32>
    %94 = tpu.matmul %89, %91, %cst_35 {dimension_numbers = #tpu.dot_dimension_numbers<[2], [2], [1], [1], [0, 0, 0, 1, 1, 1], [0], [0]>} : vector<2x8x8xf32>, vector<2x8x8xf32>, vector<2x8x8xf32> -> vector<2x8x8xf32>
    "tpu.trace_stop"() : () -> ()
    %cst_36 = arith.constant 0.353553385 : f32
    %95 = vector.broadcast %cst_36 : f32 to vector<2x8x8xf32>
    %96 = arith.mulf %94, %95 : vector<2x8x8xf32>
    %cst_37 = arith.constant dense<0xFF800000> : vector<2x8xf32>
    %97 = vector.multi_reduction <maximumf>, %96, %cst_37 [2] : vector<2x8x8xf32> to vector<2x8xf32>
    %98 = vector.shape_cast %97 : vector<2x8xf32> to vector<2x8x1xf32>
    %99 = vector.broadcast %98 : vector<2x8x1xf32> to vector<2x8x8xf32>
    %100 = arith.subf %96, %99 : vector<2x8x8xf32>
    %101 = math.exp %100 : vector<2x8x8xf32>
    %cst_38 = arith.constant dense<0.000000e+00> : vector<2x8xf32>
    %102 = vector.multi_reduction <add>, %101, %cst_38 [2] : vector<2x8x8xf32> to vector<2x8xf32>
    %103 = vector.shape_cast %102 : vector<2x8xf32> to vector<2x8x1xf32>
    %104 = tpu.reciprocal %103 {approx = true} : vector<2x8x1xf32> -> vector<2x8x1xf32>
    %105 = vector.broadcast %104 : vector<2x8x1xf32> to vector<2x8x8xf32>
    %106 = arith.mulf %101, %105 : vector<2x8x8xf32>
    "tpu.trace_start"() <{level = 10 : i32, message = "bqk,bkd->bqd"}> : () -> ()
    %cst_39 = arith.constant dense<0.000000e+00> : vector<2x8x8xf32>
    %107 = tpu.matmul %106, %93, %cst_39 {dimension_numbers = #tpu.dot_dimension_numbers<[2], [1], [1], [2], [0, 0, 0, 1, 1, 2], [0], [0]>} : vector<2x8x8xf32>, vector<2x8x8xf32>, vector<2x8x8xf32> -> vector<2x8x8xf32>
    "tpu.trace_stop"() : () -> ()
    %108 = vector.shape_cast %107 : vector<2x8x8xf32> to vector<16x8xf32>
    %c0_40 = arith.constant 0 : index
    %c24_41 = arith.constant 24 : index
    %109 = vector.load %arg6[%c0_40, %c24_41] : memref<16x64xf32, #tpu.memory_space<vmem>>, vector<16x8xf32>
    tpu.vector_store %arg6[%c0_40, %c24_41], %108 {strides = array<i32>} : memref<16x64xf32, #tpu.memory_space<vmem>>, vector<16x8xf32>,
    %110 = vector.extract_strided_slice %21 {offsets = [0, 32], sizes = [16, 8], strides = [1, 1]} : vector<16x192xf32> to vector<16x8xf32>
    %111 = vector.shape_cast %110 : vector<16x8xf32> to vector<2x8x8xf32>
    %112 = vector.extract_strided_slice %21 {offsets = [0, 96], sizes = [16, 8], strides = [1, 1]} : vector<16x192xf32> to vector<16x8xf32>
    %113 = vector.shape_cast %112 : vector<16x8xf32> to vector<2x8x8xf32>
    %114 = vector.extract_strided_slice %21 {offsets = [0, 160], sizes = [16, 8], strides = [1, 1]} : vector<16x192xf32> to vector<16x8xf32>
    %115 = vector.shape_cast %114 : vector<16x8xf32> to vector<2x8x8xf32>
    "tpu.trace_start"() <{level = 10 : i32, message = "bqd,bkd->bqk"}> : () -> ()
    %cst_42 = arith.constant dense<0.000000e+00> : vector<2x8x8xf32>
    %116 = tpu.matmul %111, %113, %cst_42 {dimension_numbers = #tpu.dot_dimension_numbers<[2], [2], [1], [1], [0, 0, 0, 1, 1, 1], [0], [0]>} : vector<2x8x8xf32>, vector<2x8x8xf32>, vector<2x8x8xf32> -> vector<2x8x8xf32>
    "tpu.trace_stop"() : () -> ()
    %cst_43 = arith.constant 0.353553385 : f32
    %117 = vector.broadcast %cst_43 : f32 to vector<2x8x8xf32>
    %118 = arith.mulf %116, %117 : vector<2x8x8xf32>
    %cst_44 = arith.constant dense<0xFF800000> : vector<2x8xf32>
    %119 = vector.multi_reduction <maximumf>, %118, %cst_44 [2] : vector<2x8x8xf32> to vector<2x8xf32>
    %120 = vector.shape_cast %119 : vector<2x8xf32> to vector<2x8x1xf32>
    %121 = vector.broadcast %120 : vector<2x8x1xf32> to vector<2x8x8xf32>
    %122 = arith.subf %118, %121 : vector<2x8x8xf32>
    %123 = math.exp %122 : vector<2x8x8xf32>
    %cst_45 = arith.constant dense<0.000000e+00> : vector<2x8xf32>
    %124 = vector.multi_reduction <add>, %123, %cst_45 [2] : vector<2x8x8xf32> to vector<2x8xf32>
    %125 = vector.shape_cast %124 : vector<2x8xf32> to vector<2x8x1xf32>
    %126 = tpu.reciprocal %125 {approx = true} : vector<2x8x1xf32> -> vector<2x8x1xf32>
    %127 = vector.broadcast %126 : vector<2x8x1xf32> to vector<2x8x8xf32>
    %128 = arith.mulf %123, %127 : vector<2x8x8xf32>
    "tpu.trace_start"() <{level = 10 : i32, message = "bqk,bkd->bqd"}> : () -> ()
    %cst_46 = arith.constant dense<0.000000e+00> : vector<2x8x8xf32>
    %129 = tpu.matmul %128, %115, %cst_46 {dimension_numbers = #tpu.dot_dimension_numbers<[2], [1], [1], [2], [0, 0, 0, 1, 1, 2], [0], [0]>} : vector<2x8x8xf32>, vector<2x8x8xf32>, vector<2x8x8xf32> -> vector<2x8x8xf32>
    "tpu.trace_stop"() : () -> ()
    %130 = vector.shape_cast %129 : vector<2x8x8xf32> to vector<16x8xf32>
    %c0_47 = arith.constant 0 : index
    %c32 = arith.constant 32 : index
    %131 = vector.load %arg6[%c0_47, %c32] : memref<16x64xf32, #tpu.memory_space<vmem>>, vector<16x8xf32>
    tpu.vector_store %arg6[%c0_47, %c32], %130 {strides = array<i32>} : memref<16x64xf32, #tpu.memory_space<vmem>>, vector<16x8xf32>,
    %132 = vector.extract_strided_slice %21 {offsets = [0, 40], sizes = [16, 8], strides = [1, 1]} : vector<16x192xf32> to vector<16x8xf32>
    %133 = vector.shape_cast %132 : vector<16x8xf32> to vector<2x8x8xf32>
    %134 = vector.extract_strided_slice %21 {offsets = [0, 104], sizes = [16, 8], strides = [1, 1]} : vector<16x192xf32> to vector<16x8xf32>
    %135 = vector.shape_cast %134 : vector<16x8xf32> to vector<2x8x8xf32>
    %136 = vector.extract_strided_slice %21 {offsets = [0, 168], sizes = [16, 8], strides = [1, 1]} : vector<16x192xf32> to vector<16x8xf32>
    %137 = vector.shape_cast %136 : vector<16x8xf32> to vector<2x8x8xf32>
    "tpu.trace_start"() <{level = 10 : i32, message = "bqd,bkd->bqk"}> : () -> ()
    %cst_48 = arith.constant dense<0.000000e+00> : vector<2x8x8xf32>
    %138 = tpu.matmul %133, %135, %cst_48 {dimension_numbers = #tpu.dot_dimension_numbers<[2], [2], [1], [1], [0, 0, 0, 1, 1, 1], [0], [0]>} : vector<2x8x8xf32>, vector<2x8x8xf32>, vector<2x8x8xf32> -> vector<2x8x8xf32>
    "tpu.trace_stop"() : () -> ()
    %cst_49 = arith.constant 0.353553385 : f32
    %139 = vector.broadcast %cst_49 : f32 to vector<2x8x8xf32>
    %140 = arith.mulf %138, %139 : vector<2x8x8xf32>
    %cst_50 = arith.constant dense<0xFF800000> : vector<2x8xf32>
    %141 = vector.multi_reduction <maximumf>, %140, %cst_50 [2] : vector<2x8x8xf32> to vector<2x8xf32>
    %142 = vector.shape_cast %141 : vector<2x8xf32> to vector<2x8x1xf32>
    %143 = vector.broadcast %142 : vector<2x8x1xf32> to vector<2x8x8xf32>
    %144 = arith.subf %140, %143 : vector<2x8x8xf32>
    %145 = math.exp %144 : vector<2x8x8xf32>
    %cst_51 = arith.constant dense<0.000000e+00> : vector<2x8xf32>
    %146 = vector.multi_reduction <add>, %145, %cst_51 [2] : vector<2x8x8xf32> to vector<2x8xf32>
    %147 = vector.shape_cast %146 : vector<2x8xf32> to vector<2x8x1xf32>
    %148 = tpu.reciprocal %147 {approx = true} : vector<2x8x1xf32> -> vector<2x8x1xf32>
    %149 = vector.broadcast %148 : vector<2x8x1xf32> to vector<2x8x8xf32>
    %150 = arith.mulf %145, %149 : vector<2x8x8xf32>
    "tpu.trace_start"() <{level = 10 : i32, message = "bqk,bkd->bqd"}> : () -> ()
    %cst_52 = arith.constant dense<0.000000e+00> : vector<2x8x8xf32>
    %151 = tpu.matmul %150, %137, %cst_52 {dimension_numbers = #tpu.dot_dimension_numbers<[2], [1], [1], [2], [0, 0, 0, 1, 1, 2], [0], [0]>} : vector<2x8x8xf32>, vector<2x8x8xf32>, vector<2x8x8xf32> -> vector<2x8x8xf32>
    "tpu.trace_stop"() : () -> ()
    %152 = vector.shape_cast %151 : vector<2x8x8xf32> to vector<16x8xf32>
    %c0_53 = arith.constant 0 : index
    %c40 = arith.constant 40 : index
    %153 = vector.load %arg6[%c0_53, %c40] : memref<16x64xf32, #tpu.memory_space<vmem>>, vector<16x8xf32>
    tpu.vector_store %arg6[%c0_53, %c40], %152 {strides = array<i32>} : memref<16x64xf32, #tpu.memory_space<vmem>>, vector<16x8xf32>,
    %154 = vector.extract_strided_slice %21 {offsets = [0, 48], sizes = [16, 8], strides = [1, 1]} : vector<16x192xf32> to vector<16x8xf32>
    %155 = vector.shape_cast %154 : vector<16x8xf32> to vector<2x8x8xf32>
    %156 = vector.extract_strided_slice %21 {offsets = [0, 112], sizes = [16, 8], strides = [1, 1]} : vector<16x192xf32> to vector<16x8xf32>
    %157 = vector.shape_cast %156 : vector<16x8xf32> to vector<2x8x8xf32>
    %158 = vector.extract_strided_slice %21 {offsets = [0, 176], sizes = [16, 8], strides = [1, 1]} : vector<16x192xf32> to vector<16x8xf32>
    %159 = vector.shape_cast %158 : vector<16x8xf32> to vector<2x8x8xf32>
    "tpu.trace_start"() <{level = 10 : i32, message = "bqd,bkd->bqk"}> : () -> ()
    %cst_54 = arith.constant dense<0.000000e+00> : vector<2x8x8xf32>
    %160 = tpu.matmul %155, %157, %cst_54 {dimension_numbers = #tpu.dot_dimension_numbers<[2], [2], [1], [1], [0, 0, 0, 1, 1, 1], [0], [0]>} : vector<2x8x8xf32>, vector<2x8x8xf32>, vector<2x8x8xf32> -> vector<2x8x8xf32>
    "tpu.trace_stop"() : () -> ()
    %cst_55 = arith.constant 0.353553385 : f32
    %161 = vector.broadcast %cst_55 : f32 to vector<2x8x8xf32>
    %162 = arith.mulf %160, %161 : vector<2x8x8xf32>
    %cst_56 = arith.constant dense<0xFF800000> : vector<2x8xf32>
    %163 = vector.multi_reduction <maximumf>, %162, %cst_56 [2] : vector<2x8x8xf32> to vector<2x8xf32>
    %164 = vector.shape_cast %163 : vector<2x8xf32> to vector<2x8x1xf32>
    %165 = vector.broadcast %164 : vector<2x8x1xf32> to vector<2x8x8xf32>
    %166 = arith.subf %162, %165 : vector<2x8x8xf32>
    %167 = math.exp %166 : vector<2x8x8xf32>
    %cst_57 = arith.constant dense<0.000000e+00> : vector<2x8xf32>
    %168 = vector.multi_reduction <add>, %167, %cst_57 [2] : vector<2x8x8xf32> to vector<2x8xf32>
    %169 = vector.shape_cast %168 : vector<2x8xf32> to vector<2x8x1xf32>
    %170 = tpu.reciprocal %169 {approx = true} : vector<2x8x1xf32> -> vector<2x8x1xf32>
    %171 = vector.broadcast %170 : vector<2x8x1xf32> to vector<2x8x8xf32>
    %172 = arith.mulf %167, %171 : vector<2x8x8xf32>
    "tpu.trace_start"() <{level = 10 : i32, message = "bqk,bkd->bqd"}> : () -> ()
    %cst_58 = arith.constant dense<0.000000e+00> : vector<2x8x8xf32>
    %173 = tpu.matmul %172, %159, %cst_58 {dimension_numbers = #tpu.dot_dimension_numbers<[2], [1], [1], [2], [0, 0, 0, 1, 1, 2], [0], [0]>} : vector<2x8x8xf32>, vector<2x8x8xf32>, vector<2x8x8xf32> -> vector<2x8x8xf32>
    "tpu.trace_stop"() : () -> ()
    %174 = vector.shape_cast %173 : vector<2x8x8xf32> to vector<16x8xf32>
    %c0_59 = arith.constant 0 : index
    %c48 = arith.constant 48 : index
    %175 = vector.load %arg6[%c0_59, %c48] : memref<16x64xf32, #tpu.memory_space<vmem>>, vector<16x8xf32>
    tpu.vector_store %arg6[%c0_59, %c48], %174 {strides = array<i32>} : memref<16x64xf32, #tpu.memory_space<vmem>>, vector<16x8xf32>,
    %176 = vector.extract_strided_slice %21 {offsets = [0, 56], sizes = [16, 8], strides = [1, 1]} : vector<16x192xf32> to vector<16x8xf32>
    %177 = vector.shape_cast %176 : vector<16x8xf32> to vector<2x8x8xf32>
    %178 = vector.extract_strided_slice %21 {offsets = [0, 120], sizes = [16, 8], strides = [1, 1]} : vector<16x192xf32> to vector<16x8xf32>
    %179 = vector.shape_cast %178 : vector<16x8xf32> to vector<2x8x8xf32>
    %180 = vector.extract_strided_slice %21 {offsets = [0, 184], sizes = [16, 8], strides = [1, 1]} : vector<16x192xf32> to vector<16x8xf32>
    %181 = vector.shape_cast %180 : vector<16x8xf32> to vector<2x8x8xf32>
    "tpu.trace_start"() <{level = 10 : i32, message = "bqd,bkd->bqk"}> : () -> ()
    %cst_60 = arith.constant dense<0.000000e+00> : vector<2x8x8xf32>
    %182 = tpu.matmul %177, %179, %cst_60 {dimension_numbers = #tpu.dot_dimension_numbers<[2], [2], [1], [1], [0, 0, 0, 1, 1, 1], [0], [0]>} : vector<2x8x8xf32>, vector<2x8x8xf32>, vector<2x8x8xf32> -> vector<2x8x8xf32>
    "tpu.trace_stop"() : () -> ()
    %cst_61 = arith.constant 0.353553385 : f32
    %183 = vector.broadcast %cst_61 : f32 to vector<2x8x8xf32>
    %184 = arith.mulf %182, %183 : vector<2x8x8xf32>
    %cst_62 = arith.constant dense<0xFF800000> : vector<2x8xf32>
    %185 = vector.multi_reduction <maximumf>, %184, %cst_62 [2] : vector<2x8x8xf32> to vector<2x8xf32>
    %186 = vector.shape_cast %185 : vector<2x8xf32> to vector<2x8x1xf32>
    %187 = vector.broadcast %186 : vector<2x8x1xf32> to vector<2x8x8xf32>
    %188 = arith.subf %184, %187 : vector<2x8x8xf32>
    %189 = math.exp %188 : vector<2x8x8xf32>
    %cst_63 = arith.constant dense<0.000000e+00> : vector<2x8xf32>
    %190 = vector.multi_reduction <add>, %189, %cst_63 [2] : vector<2x8x8xf32> to vector<2x8xf32>
    %191 = vector.shape_cast %190 : vector<2x8xf32> to vector<2x8x1xf32>
    %192 = tpu.reciprocal %191 {approx = true} : vector<2x8x1xf32> -> vector<2x8x1xf32>
    %193 = vector.broadcast %192 : vector<2x8x1xf32> to vector<2x8x8xf32>
    %194 = arith.mulf %189, %193 : vector<2x8x8xf32>
    "tpu.trace_start"() <{level = 10 : i32, message = "bqk,bkd->bqd"}> : () -> ()
    %cst_64 = arith.constant dense<0.000000e+00> : vector<2x8x8xf32>
    %195 = tpu.matmul %194, %181, %cst_64 {dimension_numbers = #tpu.dot_dimension_numbers<[2], [1], [1], [2], [0, 0, 0, 1, 1, 2], [0], [0]>} : vector<2x8x8xf32>, vector<2x8x8xf32>, vector<2x8x8xf32> -> vector<2x8x8xf32>
    "tpu.trace_stop"() : () -> ()
    %196 = vector.shape_cast %195 : vector<2x8x8xf32> to vector<16x8xf32>
    %c0_65 = arith.constant 0 : index
    %c56 = arith.constant 56 : index
    %197 = vector.load %arg6[%c0_65, %c56] : memref<16x64xf32, #tpu.memory_space<vmem>>, vector<16x8xf32>
    tpu.vector_store %arg6[%c0_65, %c56], %196 {strides = array<i32>} : memref<16x64xf32, #tpu.memory_space<vmem>>, vector<16x8xf32>,
    %c0_66 = arith.constant 0 : index
    %c0_67 = arith.constant 0 : index
    %198 = vector.load %arg6[%c0_66, %c0_67] : memref<16x64xf32, #tpu.memory_space<vmem>>, vector<16x64xf32>
    %cst_68 = arith.constant dense<0.000000e+00> : vector<16x64xf32>
    %199 = tpu.matmul %198, %8, %cst_68 {dimension_numbers = #tpu.dot_dimension_numbers<[1], [0], [0], [1], [0, 0, 1, 1], [], []>} : vector<16x64xf32>, vector<64x64xf32>, vector<16x64xf32> -> vector<16x64xf32>
    %200 = vector.broadcast %10 : vector<1x64xf32> to vector<16x64xf32>
    %201 = arith.addf %199, %200 : vector<16x64xf32>
    %202 = arith.addf %5, %201 : vector<16x64xf32>
    %cst_69 = arith.constant dense<0.000000e+00> : vector<16xf32>
    %203 = vector.multi_reduction <add>, %202, %cst_69 [1] : vector<16x64xf32> to vector<16xf32>
    %204 = vector.shape_cast %203 : vector<16xf32> to vector<16x1xf32>
    %cst_70 = arith.constant 6.400000e+01 : f32
    %205 = vector.broadcast %cst_70 : f32 to vector<16x1xf32>
    %206 = arith.divf %204, %205 : vector<16x1xf32>
    %207 = vector.broadcast %206 : vector<16x1xf32> to vector<16x64xf32>
    %208 = arith.subf %202, %207 : vector<16x64xf32>
    %209 = arith.mulf %208, %208 : vector<16x64xf32>
    %cst_71 = arith.constant dense<0.000000e+00> : vector<16xf32>
    %210 = vector.multi_reduction <add>, %209, %cst_71 [1] : vector<16x64xf32> to vector<16xf32>
    %211 = vector.shape_cast %210 : vector<16xf32> to vector<16x1xf32>
    %cst_72 = arith.constant 6.400000e+01 : f32
    %212 = vector.broadcast %cst_72 : f32 to vector<16x1xf32>
    %213 = arith.divf %211, %212 : vector<16x1xf32>
    %cst_73 = arith.constant 9.99999974E-6 : f32
    %214 = vector.broadcast %cst_73 : f32 to vector<16x1xf32>
    %215 = arith.addf %213, %214 : vector<16x1xf32>
    %216 = math.rsqrt %215 : vector<16x1xf32>
    %217 = vector.broadcast %216 : vector<16x1xf32> to vector<16x64xf32>
    %218 = arith.mulf %208, %217 : vector<16x64xf32>
    %219 = vector.broadcast %11 : vector<1x64xf32> to vector<16x64xf32>
    %220 = arith.mulf %218, %219 : vector<16x64xf32>
    %221 = vector.broadcast %12 : vector<1x64xf32> to vector<16x64xf32>
    %222 = arith.addf %220, %221 : vector<16x64xf32>
    %cst_74 = arith.constant dense<0.000000e+00> : vector<16x128xf32>
    %223 = tpu.matmul %222, %16, %cst_74 {dimension_numbers = #tpu.dot_dimension_numbers<[1], [0], [0], [1], [0, 0, 1, 1], [], []>} : vector<16x64xf32>, vector<64x128xf32>, vector<16x128xf32> -> vector<16x128xf32>
    %224 = vector.broadcast %17 : vector<1x128xf32> to vector<16x128xf32>
    %225 = arith.addf %223, %224 : vector<16x128xf32>
    %cst_75 = arith.constant 0.000000e+00 : f32
    %226 = vector.broadcast %cst_75 : f32 to vector<16x128xf32>
    %227 = arith.maximumf %225, %226 : vector<16x128xf32>
    %cst_76 = arith.constant dense<0.000000e+00> : vector<16x64xf32>
    %228 = tpu.matmul %227, %18, %cst_76 {dimension_numbers = #tpu.dot_dimension_numbers<[1], [0], [0], [1], [0, 0, 1, 1], [], []>} : vector<16x128xf32>, vector<128x64xf32>, vector<16x64xf32> -> vector<16x64xf32>
    %229 = vector.broadcast %15 : vector<1x64xf32> to vector<16x64xf32>
    %230 = arith.addf %228, %229 : vector<16x64xf32>
    %231 = arith.addf %222, %230 : vector<16x64xf32>
    %cst_77 = arith.constant dense<0.000000e+00> : vector<16xf32>
    %232 = vector.multi_reduction <add>, %231, %cst_77 [1] : vector<16x64xf32> to vector<16xf32>
    %233 = vector.shape_cast %232 : vector<16xf32> to vector<16x1xf32>
    %cst_78 = arith.constant 6.400000e+01 : f32
    %234 = vector.broadcast %cst_78 : f32 to vector<16x1xf32>
    %235 = arith.divf %233, %234 : vector<16x1xf32>
    %236 = vector.broadcast %235 : vector<16x1xf32> to vector<16x64xf32>
    %237 = arith.subf %231, %236 : vector<16x64xf32>
    %238 = arith.mulf %237, %237 : vector<16x64xf32>
    %cst_79 = arith.constant dense<0.000000e+00> : vector<16xf32>
    %239 = vector.multi_reduction <add>, %238, %cst_79 [1] : vector<16x64xf32> to vector<16xf32>
    %240 = vector.shape_cast %239 : vector<16xf32> to vector<16x1xf32>
    %cst_80 = arith.constant 6.400000e+01 : f32
    %241 = vector.broadcast %cst_80 : f32 to vector<16x1xf32>
    %242 = arith.divf %240, %241 : vector<16x1xf32>
    %cst_81 = arith.constant 9.99999974E-6 : f32
    %243 = vector.broadcast %cst_81 : f32 to vector<16x1xf32>
    %244 = arith.addf %242, %243 : vector<16x1xf32>
    %245 = math.rsqrt %244 : vector<16x1xf32>
    %246 = vector.broadcast %245 : vector<16x1xf32> to vector<16x64xf32>
    %247 = arith.mulf %237, %246 : vector<16x64xf32>
    %248 = vector.broadcast %13 : vector<1x64xf32> to vector<16x64xf32>
    %249 = arith.mulf %247, %248 : vector<16x64xf32>
    %250 = vector.broadcast %14 : vector<1x64xf32> to vector<16x64xf32>
    %251 = arith.addf %249, %250 : vector<16x64xf32>
    %c72 = arith.constant 72 : index
    %c0_82 = arith.constant 0 : index
    %252 = vector.load %arg1[%c72, %c0_82] : memref<144x192xf32, #tpu.memory_space<vmem>>, vector<64x192xf32>
    %c136 = arith.constant 136 : index
    %c0_83 = arith.constant 0 : index
    %253 = vector.load %arg1[%c136, %c0_83] : memref<144x192xf32, #tpu.memory_space<vmem>>, vector<1x192xf32>
    %c224 = arith.constant 224 : index
    %c0_84 = arith.constant 0 : index
    %254 = vector.load %arg3[%c224, %c0_84] : memref<496x64xf32, #tpu.memory_space<vmem>>, vector<64x64xf32>
    %c288 = arith.constant 288 : index
    %c0_85 = arith.constant 0 : index
    %255 = vector.load %arg3[%c288, %c0_85] : memref<496x64xf32, #tpu.memory_space<vmem>>, vector<8x64xf32>
    %256 = vector.extract_strided_slice %255 {offsets = [0, 0], sizes = [1, 64], strides = [1, 1]} : vector<8x64xf32> to vector<1x64xf32>
    %257 = vector.extract_strided_slice %255 {offsets = [1, 0], sizes = [1, 64], strides = [1, 1]} : vector<8x64xf32> to vector<1x64xf32>
    %258 = vector.extract_strided_slice %255 {offsets = [2, 0], sizes = [1, 64], strides = [1, 1]} : vector<8x64xf32> to vector<1x64xf32>
    %259 = vector.extract_strided_slice %255 {offsets = [3, 0], sizes = [1, 64], strides = [1, 1]} : vector<8x64xf32> to vector<1x64xf32>
    %260 = vector.extract_strided_slice %255 {offsets = [4, 0], sizes = [1, 64], strides = [1, 1]} : vector<8x64xf32> to vector<1x64xf32>
    %261 = vector.extract_strided_slice %255 {offsets = [5, 0], sizes = [1, 64], strides = [1, 1]} : vector<8x64xf32> to vector<1x64xf32>
    %c72_86 = arith.constant 72 : index
    %c0_87 = arith.constant 0 : index
    %262 = vector.load %arg2[%c72_86, %c0_87] : memref<144x128xf32, #tpu.memory_space<vmem>>, vector<64x128xf32>
    %c136_88 = arith.constant 136 : index
    %c0_89 = arith.constant 0 : index
    %263 = vector.load %arg2[%c136_88, %c0_89] : memref<144x128xf32, #tpu.memory_space<vmem>>, vector<1x128xf32>
    %c296 = arith.constant 296 : index
    %c0_90 = arith.constant 0 : index
    %264 = vector.load %arg3[%c296, %c0_90] : memref<496x64xf32, #tpu.memory_space<vmem>>, vector<128x64xf32>
    %cst_91 = arith.constant dense<0.000000e+00> : vector<16x192xf32>
    %265 = tpu.matmul %251, %252, %cst_91 {dimension_numbers = #tpu.dot_dimension_numbers<[1], [0], [0], [1], [0, 0, 1, 1], [], []>} : vector<16x64xf32>, vector<64x192xf32>, vector<16x192xf32> -> vector<16x192xf32>
    %266 = vector.broadcast %253 : vector<1x192xf32> to vector<16x192xf32>
    %267 = arith.addf %265, %266 : vector<16x192xf32>
    %268 = vector.extract_strided_slice %267 {offsets = [0, 0], sizes = [16, 8], strides = [1, 1]} : vector<16x192xf32> to vector<16x8xf32>
    %269 = vector.shape_cast %268 : vector<16x8xf32> to vector<2x8x8xf32>
    %270 = vector.extract_strided_slice %267 {offsets = [0, 64], sizes = [16, 8], strides = [1, 1]} : vector<16x192xf32> to vector<16x8xf32>
    %271 = vector.shape_cast %270 : vector<16x8xf32> to vector<2x8x8xf32>
    %272 = vector.extract_strided_slice %267 {offsets = [0, 128], sizes = [16, 8], strides = [1, 1]} : vector<16x192xf32> to vector<16x8xf32>
    %273 = vector.shape_cast %272 : vector<16x8xf32> to vector<2x8x8xf32>
    "tpu.trace_start"() <{level = 10 : i32, message = "bqd,bkd->bqk"}> : () -> ()
    %cst_92 = arith.constant dense<0.000000e+00> : vector<2x8x8xf32>
    %274 = tpu.matmul %269, %271, %cst_92 {dimension_numbers = #tpu.dot_dimension_numbers<[2], [2], [1], [1], [0, 0, 0, 1, 1, 1], [0], [0]>} : vector<2x8x8xf32>, vector<2x8x8xf32>, vector<2x8x8xf32> -> vector<2x8x8xf32>
    "tpu.trace_stop"() : () -> ()
    %cst_93 = arith.constant 0.353553385 : f32
    %275 = vector.broadcast %cst_93 : f32 to vector<2x8x8xf32>
    %276 = arith.mulf %274, %275 : vector<2x8x8xf32>
    %cst_94 = arith.constant dense<0xFF800000> : vector<2x8xf32>
    %277 = vector.multi_reduction <maximumf>, %276, %cst_94 [2] : vector<2x8x8xf32> to vector<2x8xf32>
    %278 = vector.shape_cast %277 : vector<2x8xf32> to vector<2x8x1xf32>
    %279 = vector.broadcast %278 : vector<2x8x1xf32> to vector<2x8x8xf32>
    %280 = arith.subf %276, %279 : vector<2x8x8xf32>
    %281 = math.exp %280 : vector<2x8x8xf32>
    %cst_95 = arith.constant dense<0.000000e+00> : vector<2x8xf32>
    %282 = vector.multi_reduction <add>, %281, %cst_95 [2] : vector<2x8x8xf32> to vector<2x8xf32>
    %283 = vector.shape_cast %282 : vector<2x8xf32> to vector<2x8x1xf32>
    %284 = tpu.reciprocal %283 {approx = true} : vector<2x8x1xf32> -> vector<2x8x1xf32>
    %285 = vector.broadcast %284 : vector<2x8x1xf32> to vector<2x8x8xf32>
    %286 = arith.mulf %281, %285 : vector<2x8x8xf32>
    "tpu.trace_start"() <{level = 10 : i32, message = "bqk,bkd->bqd"}> : () -> ()
    %cst_96 = arith.constant dense<0.000000e+00> : vector<2x8x8xf32>
    %287 = tpu.matmul %286, %273, %cst_96 {dimension_numbers = #tpu.dot_dimension_numbers<[2], [1], [1], [2], [0, 0, 0, 1, 1, 2], [0], [0]>} : vector<2x8x8xf32>, vector<2x8x8xf32>, vector<2x8x8xf32> -> vector<2x8x8xf32>
    "tpu.trace_stop"() : () -> ()
    %288 = vector.shape_cast %287 : vector<2x8x8xf32> to vector<16x8xf32>
    %c0_97 = arith.constant 0 : index
    %c0_98 = arith.constant 0 : index
    %289 = vector.load %arg6[%c0_97, %c0_98] : memref<16x64xf32, #tpu.memory_space<vmem>>, vector<16x8xf32>
    tpu.vector_store %arg6[%c0_97, %c0_98], %288 {strides = array<i32>} : memref<16x64xf32, #tpu.memory_space<vmem>>, vector<16x8xf32>,
    %290 = vector.extract_strided_slice %267 {offsets = [0, 8], sizes = [16, 8], strides = [1, 1]} : vector<16x192xf32> to vector<16x8xf32>
    %291 = vector.shape_cast %290 : vector<16x8xf32> to vector<2x8x8xf32>
    %292 = vector.extract_strided_slice %267 {offsets = [0, 72], sizes = [16, 8], strides = [1, 1]} : vector<16x192xf32> to vector<16x8xf32>
    %293 = vector.shape_cast %292 : vector<16x8xf32> to vector<2x8x8xf32>
    %294 = vector.extract_strided_slice %267 {offsets = [0, 136], sizes = [16, 8], strides = [1, 1]} : vector<16x192xf32> to vector<16x8xf32>
    %295 = vector.shape_cast %294 : vector<16x8xf32> to vector<2x8x8xf32>
    "tpu.trace_start"() <{level = 10 : i32, message = "bqd,bkd->bqk"}> : () -> ()
    %cst_99 = arith.constant dense<0.000000e+00> : vector<2x8x8xf32>
    %296 = tpu.matmul %291, %293, %cst_99 {dimension_numbers = #tpu.dot_dimension_numbers<[2], [2], [1], [1], [0, 0, 0, 1, 1, 1], [0], [0]>} : vector<2x8x8xf32>, vector<2x8x8xf32>, vector<2x8x8xf32> -> vector<2x8x8xf32>
    "tpu.trace_stop"() : () -> ()
    %cst_100 = arith.constant 0.353553385 : f32
    %297 = vector.broadcast %cst_100 : f32 to vector<2x8x8xf32>
    %298 = arith.mulf %296, %297 : vector<2x8x8xf32>
    %cst_101 = arith.constant dense<0xFF800000> : vector<2x8xf32>
    %299 = vector.multi_reduction <maximumf>, %298, %cst_101 [2] : vector<2x8x8xf32> to vector<2x8xf32>
    %300 = vector.shape_cast %299 : vector<2x8xf32> to vector<2x8x1xf32>
    %301 = vector.broadcast %300 : vector<2x8x1xf32> to vector<2x8x8xf32>
    %302 = arith.subf %298, %301 : vector<2x8x8xf32>
    %303 = math.exp %302 : vector<2x8x8xf32>
    %cst_102 = arith.constant dense<0.000000e+00> : vector<2x8xf32>
    %304 = vector.multi_reduction <add>, %303, %cst_102 [2] : vector<2x8x8xf32> to vector<2x8xf32>
    %305 = vector.shape_cast %304 : vector<2x8xf32> to vector<2x8x1xf32>
    %306 = tpu.reciprocal %305 {approx = true} : vector<2x8x1xf32> -> vector<2x8x1xf32>
    %307 = vector.broadcast %306 : vector<2x8x1xf32> to vector<2x8x8xf32>
    %308 = arith.mulf %303, %307 : vector<2x8x8xf32>
    "tpu.trace_start"() <{level = 10 : i32, message = "bqk,bkd->bqd"}> : () -> ()
    %cst_103 = arith.constant dense<0.000000e+00> : vector<2x8x8xf32>
    %309 = tpu.matmul %308, %295, %cst_103 {dimension_numbers = #tpu.dot_dimension_numbers<[2], [1], [1], [2], [0, 0, 0, 1, 1, 2], [0], [0]>} : vector<2x8x8xf32>, vector<2x8x8xf32>, vector<2x8x8xf32> -> vector<2x8x8xf32>
    "tpu.trace_stop"() : () -> ()
    %310 = vector.shape_cast %309 : vector<2x8x8xf32> to vector<16x8xf32>
    %c0_104 = arith.constant 0 : index
    %c8_105 = arith.constant 8 : index
    %311 = vector.load %arg6[%c0_104, %c8_105] : memref<16x64xf32, #tpu.memory_space<vmem>>, vector<16x8xf32>
    tpu.vector_store %arg6[%c0_104, %c8_105], %310 {strides = array<i32>} : memref<16x64xf32, #tpu.memory_space<vmem>>, vector<16x8xf32>,
    %312 = vector.extract_strided_slice %267 {offsets = [0, 16], sizes = [16, 8], strides = [1, 1]} : vector<16x192xf32> to vector<16x8xf32>
    %313 = vector.shape_cast %312 : vector<16x8xf32> to vector<2x8x8xf32>
    %314 = vector.extract_strided_slice %267 {offsets = [0, 80], sizes = [16, 8], strides = [1, 1]} : vector<16x192xf32> to vector<16x8xf32>
    %315 = vector.shape_cast %314 : vector<16x8xf32> to vector<2x8x8xf32>
    %316 = vector.extract_strided_slice %267 {offsets = [0, 144], sizes = [16, 8], strides = [1, 1]} : vector<16x192xf32> to vector<16x8xf32>
    %317 = vector.shape_cast %316 : vector<16x8xf32> to vector<2x8x8xf32>
    "tpu.trace_start"() <{level = 10 : i32, message = "bqd,bkd->bqk"}> : () -> ()
    %cst_106 = arith.constant dense<0.000000e+00> : vector<2x8x8xf32>
    %318 = tpu.matmul %313, %315, %cst_106 {dimension_numbers = #tpu.dot_dimension_numbers<[2], [2], [1], [1], [0, 0, 0, 1, 1, 1], [0], [0]>} : vector<2x8x8xf32>, vector<2x8x8xf32>, vector<2x8x8xf32> -> vector<2x8x8xf32>
    "tpu.trace_stop"() : () -> ()
    %cst_107 = arith.constant 0.353553385 : f32
    %319 = vector.broadcast %cst_107 : f32 to vector<2x8x8xf32>
    %320 = arith.mulf %318, %319 : vector<2x8x8xf32>
    %cst_108 = arith.constant dense<0xFF800000> : vector<2x8xf32>
    %321 = vector.multi_reduction <maximumf>, %320, %cst_108 [2] : vector<2x8x8xf32> to vector<2x8xf32>
    %322 = vector.shape_cast %321 : vector<2x8xf32> to vector<2x8x1xf32>
    %323 = vector.broadcast %322 : vector<2x8x1xf32> to vector<2x8x8xf32>
    %324 = arith.subf %320, %323 : vector<2x8x8xf32>
    %325 = math.exp %324 : vector<2x8x8xf32>
    %cst_109 = arith.constant dense<0.000000e+00> : vector<2x8xf32>
    %326 = vector.multi_reduction <add>, %325, %cst_109 [2] : vector<2x8x8xf32> to vector<2x8xf32>
    %327 = vector.shape_cast %326 : vector<2x8xf32> to vector<2x8x1xf32>
    %328 = tpu.reciprocal %327 {approx = true} : vector<2x8x1xf32> -> vector<2x8x1xf32>
    %329 = vector.broadcast %328 : vector<2x8x1xf32> to vector<2x8x8xf32>
    %330 = arith.mulf %325, %329 : vector<2x8x8xf32>
    "tpu.trace_start"() <{level = 10 : i32, message = "bqk,bkd->bqd"}> : () -> ()
    %cst_110 = arith.constant dense<0.000000e+00> : vector<2x8x8xf32>
    %331 = tpu.matmul %330, %317, %cst_110 {dimension_numbers = #tpu.dot_dimension_numbers<[2], [1], [1], [2], [0, 0, 0, 1, 1, 2], [0], [0]>} : vector<2x8x8xf32>, vector<2x8x8xf32>, vector<2x8x8xf32> -> vector<2x8x8xf32>
    "tpu.trace_stop"() : () -> ()
    %332 = vector.shape_cast %331 : vector<2x8x8xf32> to vector<16x8xf32>
    %c0_111 = arith.constant 0 : index
    %c16_112 = arith.constant 16 : index
    %333 = vector.load %arg6[%c0_111, %c16_112] : memref<16x64xf32, #tpu.memory_space<vmem>>, vector<16x8xf32>
    tpu.vector_store %arg6[%c0_111, %c16_112], %332 {strides = array<i32>} : memref<16x64xf32, #tpu.memory_space<vmem>>, vector<16x8xf32>,
    %334 = vector.extract_strided_slice %267 {offsets = [0, 24], sizes = [16, 8], strides = [1, 1]} : vector<16x192xf32> to vector<16x8xf32>
    %335 = vector.shape_cast %334 : vector<16x8xf32> to vector<2x8x8xf32>
    %336 = vector.extract_strided_slice %267 {offsets = [0, 88], sizes = [16, 8], strides = [1, 1]} : vector<16x192xf32> to vector<16x8xf32>
    %337 = vector.shape_cast %336 : vector<16x8xf32> to vector<2x8x8xf32>
    %338 = vector.extract_strided_slice %267 {offsets = [0, 152], sizes = [16, 8], strides = [1, 1]} : vector<16x192xf32> to vector<16x8xf32>
    %339 = vector.shape_cast %338 : vector<16x8xf32> to vector<2x8x8xf32>
    "tpu.trace_start"() <{level = 10 : i32, message = "bqd,bkd->bqk"}> : () -> ()
    %cst_113 = arith.constant dense<0.000000e+00> : vector<2x8x8xf32>
    %340 = tpu.matmul %335, %337, %cst_113 {dimension_numbers = #tpu.dot_dimension_numbers<[2], [2], [1], [1], [0, 0, 0, 1, 1, 1], [0], [0]>} : vector<2x8x8xf32>, vector<2x8x8xf32>, vector<2x8x8xf32> -> vector<2x8x8xf32>
    "tpu.trace_stop"() : () -> ()
    %cst_114 = arith.constant 0.353553385 : f32
    %341 = vector.broadcast %cst_114 : f32 to vector<2x8x8xf32>
    %342 = arith.mulf %340, %341 : vector<2x8x8xf32>
    %cst_115 = arith.constant dense<0xFF800000> : vector<2x8xf32>
    %343 = vector.multi_reduction <maximumf>, %342, %cst_115 [2] : vector<2x8x8xf32> to vector<2x8xf32>
    %344 = vector.shape_cast %343 : vector<2x8xf32> to vector<2x8x1xf32>
    %345 = vector.broadcast %344 : vector<2x8x1xf32> to vector<2x8x8xf32>
    %346 = arith.subf %342, %345 : vector<2x8x8xf32>
    %347 = math.exp %346 : vector<2x8x8xf32>
    %cst_116 = arith.constant dense<0.000000e+00> : vector<2x8xf32>
    %348 = vector.multi_reduction <add>, %347, %cst_116 [2] : vector<2x8x8xf32> to vector<2x8xf32>
    %349 = vector.shape_cast %348 : vector<2x8xf32> to vector<2x8x1xf32>
    %350 = tpu.reciprocal %349 {approx = true} : vector<2x8x1xf32> -> vector<2x8x1xf32>
    %351 = vector.broadcast %350 : vector<2x8x1xf32> to vector<2x8x8xf32>
    %352 = arith.mulf %347, %351 : vector<2x8x8xf32>
    "tpu.trace_start"() <{level = 10 : i32, message = "bqk,bkd->bqd"}> : () -> ()
    %cst_117 = arith.constant dense<0.000000e+00> : vector<2x8x8xf32>
    %353 = tpu.matmul %352, %339, %cst_117 {dimension_numbers = #tpu.dot_dimension_numbers<[2], [1], [1], [2], [0, 0, 0, 1, 1, 2], [0], [0]>} : vector<2x8x8xf32>, vector<2x8x8xf32>, vector<2x8x8xf32> -> vector<2x8x8xf32>
    "tpu.trace_stop"() : () -> ()
    %354 = vector.shape_cast %353 : vector<2x8x8xf32> to vector<16x8xf32>
    %c0_118 = arith.constant 0 : index
    %c24_119 = arith.constant 24 : index
    %355 = vector.load %arg6[%c0_118, %c24_119] : memref<16x64xf32, #tpu.memory_space<vmem>>, vector<16x8xf32>
    tpu.vector_store %arg6[%c0_118, %c24_119], %354 {strides = array<i32>} : memref<16x64xf32, #tpu.memory_space<vmem>>, vector<16x8xf32>,
    %356 = vector.extract_strided_slice %267 {offsets = [0, 32], sizes = [16, 8], strides = [1, 1]} : vector<16x192xf32> to vector<16x8xf32>
    %357 = vector.shape_cast %356 : vector<16x8xf32> to vector<2x8x8xf32>
    %358 = vector.extract_strided_slice %267 {offsets = [0, 96], sizes = [16, 8], strides = [1, 1]} : vector<16x192xf32> to vector<16x8xf32>
    %359 = vector.shape_cast %358 : vector<16x8xf32> to vector<2x8x8xf32>
    %360 = vector.extract_strided_slice %267 {offsets = [0, 160], sizes = [16, 8], strides = [1, 1]} : vector<16x192xf32> to vector<16x8xf32>
    %361 = vector.shape_cast %360 : vector<16x8xf32> to vector<2x8x8xf32>
    "tpu.trace_start"() <{level = 10 : i32, message = "bqd,bkd->bqk"}> : () -> ()
    %cst_120 = arith.constant dense<0.000000e+00> : vector<2x8x8xf32>
    %362 = tpu.matmul %357, %359, %cst_120 {dimension_numbers = #tpu.dot_dimension_numbers<[2], [2], [1], [1], [0, 0, 0, 1, 1, 1], [0], [0]>} : vector<2x8x8xf32>, vector<2x8x8xf32>, vector<2x8x8xf32> -> vector<2x8x8xf32>
    "tpu.trace_stop"() : () -> ()
    %cst_121 = arith.constant 0.353553385 : f32
    %363 = vector.broadcast %cst_121 : f32 to vector<2x8x8xf32>
    %364 = arith.mulf %362, %363 : vector<2x8x8xf32>
    %cst_122 = arith.constant dense<0xFF800000> : vector<2x8xf32>
    %365 = vector.multi_reduction <maximumf>, %364, %cst_122 [2] : vector<2x8x8xf32> to vector<2x8xf32>
    %366 = vector.shape_cast %365 : vector<2x8xf32> to vector<2x8x1xf32>
    %367 = vector.broadcast %366 : vector<2x8x1xf32> to vector<2x8x8xf32>
    %368 = arith.subf %364, %367 : vector<2x8x8xf32>
    %369 = math.exp %368 : vector<2x8x8xf32>
    %cst_123 = arith.constant dense<0.000000e+00> : vector<2x8xf32>
    %370 = vector.multi_reduction <add>, %369, %cst_123 [2] : vector<2x8x8xf32> to vector<2x8xf32>
    %371 = vector.shape_cast %370 : vector<2x8xf32> to vector<2x8x1xf32>
    %372 = tpu.reciprocal %371 {approx = true} : vector<2x8x1xf32> -> vector<2x8x1xf32>
    %373 = vector.broadcast %372 : vector<2x8x1xf32> to vector<2x8x8xf32>
    %374 = arith.mulf %369, %373 : vector<2x8x8xf32>
    "tpu.trace_start"() <{level = 10 : i32, message = "bqk,bkd->bqd"}> : () -> ()
    %cst_124 = arith.constant dense<0.000000e+00> : vector<2x8x8xf32>
    %375 = tpu.matmul %374, %361, %cst_124 {dimension_numbers = #tpu.dot_dimension_numbers<[2], [1], [1], [2], [0, 0, 0, 1, 1, 2], [0], [0]>} : vector<2x8x8xf32>, vector<2x8x8xf32>, vector<2x8x8xf32> -> vector<2x8x8xf32>
    "tpu.trace_stop"() : () -> ()
    %376 = vector.shape_cast %375 : vector<2x8x8xf32> to vector<16x8xf32>
    %c0_125 = arith.constant 0 : index
    %c32_126 = arith.constant 32 : index
    %377 = vector.load %arg6[%c0_125, %c32_126] : memref<16x64xf32, #tpu.memory_space<vmem>>, vector<16x8xf32>
    tpu.vector_store %arg6[%c0_125, %c32_126], %376 {strides = array<i32>} : memref<16x64xf32, #tpu.memory_space<vmem>>, vector<16x8xf32>,
    %378 = vector.extract_strided_slice %267 {offsets = [0, 40], sizes = [16, 8], strides = [1, 1]} : vector<16x192xf32> to vector<16x8xf32>
    %379 = vector.shape_cast %378 : vector<16x8xf32> to vector<2x8x8xf32>
    %380 = vector.extract_strided_slice %267 {offsets = [0, 104], sizes = [16, 8], strides = [1, 1]} : vector<16x192xf32> to vector<16x8xf32>
    %381 = vector.shape_cast %380 : vector<16x8xf32> to vector<2x8x8xf32>
    %382 = vector.extract_strided_slice %267 {offsets = [0, 168], sizes = [16, 8], strides = [1, 1]} : vector<16x192xf32> to vector<16x8xf32>
    %383 = vector.shape_cast %382 : vector<16x8xf32> to vector<2x8x8xf32>
    "tpu.trace_start"() <{level = 10 : i32, message = "bqd,bkd->bqk"}> : () -> ()
    %cst_127 = arith.constant dense<0.000000e+00> : vector<2x8x8xf32>
    %384 = tpu.matmul %379, %381, %cst_127 {dimension_numbers = #tpu.dot_dimension_numbers<[2], [2], [1], [1], [0, 0, 0, 1, 1, 1], [0], [0]>} : vector<2x8x8xf32>, vector<2x8x8xf32>, vector<2x8x8xf32> -> vector<2x8x8xf32>
    "tpu.trace_stop"() : () -> ()
    %cst_128 = arith.constant 0.353553385 : f32
    %385 = vector.broadcast %cst_128 : f32 to vector<2x8x8xf32>
    %386 = arith.mulf %384, %385 : vector<2x8x8xf32>
    %cst_129 = arith.constant dense<0xFF800000> : vector<2x8xf32>
    %387 = vector.multi_reduction <maximumf>, %386, %cst_129 [2] : vector<2x8x8xf32> to vector<2x8xf32>
    %388 = vector.shape_cast %387 : vector<2x8xf32> to vector<2x8x1xf32>
    %389 = vector.broadcast %388 : vector<2x8x1xf32> to vector<2x8x8xf32>
    %390 = arith.subf %386, %389 : vector<2x8x8xf32>
    %391 = math.exp %390 : vector<2x8x8xf32>
    %cst_130 = arith.constant dense<0.000000e+00> : vector<2x8xf32>
    %392 = vector.multi_reduction <add>, %391, %cst_130 [2] : vector<2x8x8xf32> to vector<2x8xf32>
    %393 = vector.shape_cast %392 : vector<2x8xf32> to vector<2x8x1xf32>
    %394 = tpu.reciprocal %393 {approx = true} : vector<2x8x1xf32> -> vector<2x8x1xf32>
    %395 = vector.broadcast %394 : vector<2x8x1xf32> to vector<2x8x8xf32>
    %396 = arith.mulf %391, %395 : vector<2x8x8xf32>
    "tpu.trace_start"() <{level = 10 : i32, message = "bqk,bkd->bqd"}> : () -> ()
    %cst_131 = arith.constant dense<0.000000e+00> : vector<2x8x8xf32>
    %397 = tpu.matmul %396, %383, %cst_131 {dimension_numbers = #tpu.dot_dimension_numbers<[2], [1], [1], [2], [0, 0, 0, 1, 1, 2], [0], [0]>} : vector<2x8x8xf32>, vector<2x8x8xf32>, vector<2x8x8xf32> -> vector<2x8x8xf32>
    "tpu.trace_stop"() : () -> ()
    %398 = vector.shape_cast %397 : vector<2x8x8xf32> to vector<16x8xf32>
    %c0_132 = arith.constant 0 : index
    %c40_133 = arith.constant 40 : index
    %399 = vector.load %arg6[%c0_132, %c40_133] : memref<16x64xf32, #tpu.memory_space<vmem>>, vector<16x8xf32>
    tpu.vector_store %arg6[%c0_132, %c40_133], %398 {strides = array<i32>} : memref<16x64xf32, #tpu.memory_space<vmem>>, vector<16x8xf32>,
    %400 = vector.extract_strided_slice %267 {offsets = [0, 48], sizes = [16, 8], strides = [1, 1]} : vector<16x192xf32> to vector<16x8xf32>
    %401 = vector.shape_cast %400 : vector<16x8xf32> to vector<2x8x8xf32>
    %402 = vector.extract_strided_slice %267 {offsets = [0, 112], sizes = [16, 8], strides = [1, 1]} : vector<16x192xf32> to vector<16x8xf32>
    %403 = vector.shape_cast %402 : vector<16x8xf32> to vector<2x8x8xf32>
    %404 = vector.extract_strided_slice %267 {offsets = [0, 176], sizes = [16, 8], strides = [1, 1]} : vector<16x192xf32> to vector<16x8xf32>
    %405 = vector.shape_cast %404 : vector<16x8xf32> to vector<2x8x8xf32>
    "tpu.trace_start"() <{level = 10 : i32, message = "bqd,bkd->bqk"}> : () -> ()
    %cst_134 = arith.constant dense<0.000000e+00> : vector<2x8x8xf32>
    %406 = tpu.matmul %401, %403, %cst_134 {dimension_numbers = #tpu.dot_dimension_numbers<[2], [2], [1], [1], [0, 0, 0, 1, 1, 1], [0], [0]>} : vector<2x8x8xf32>, vector<2x8x8xf32>, vector<2x8x8xf32> -> vector<2x8x8xf32>
    "tpu.trace_stop"() : () -> ()
    %cst_135 = arith.constant 0.353553385 : f32
    %407 = vector.broadcast %cst_135 : f32 to vector<2x8x8xf32>
    %408 = arith.mulf %406, %407 : vector<2x8x8xf32>
    %cst_136 = arith.constant dense<0xFF800000> : vector<2x8xf32>
    %409 = vector.multi_reduction <maximumf>, %408, %cst_136 [2] : vector<2x8x8xf32> to vector<2x8xf32>
    %410 = vector.shape_cast %409 : vector<2x8xf32> to vector<2x8x1xf32>
    %411 = vector.broadcast %410 : vector<2x8x1xf32> to vector<2x8x8xf32>
    %412 = arith.subf %408, %411 : vector<2x8x8xf32>
    %413 = math.exp %412 : vector<2x8x8xf32>
    %cst_137 = arith.constant dense<0.000000e+00> : vector<2x8xf32>
    %414 = vector.multi_reduction <add>, %413, %cst_137 [2] : vector<2x8x8xf32> to vector<2x8xf32>
    %415 = vector.shape_cast %414 : vector<2x8xf32> to vector<2x8x1xf32>
    %416 = tpu.reciprocal %415 {approx = true} : vector<2x8x1xf32> -> vector<2x8x1xf32>
    %417 = vector.broadcast %416 : vector<2x8x1xf32> to vector<2x8x8xf32>
    %418 = arith.mulf %413, %417 : vector<2x8x8xf32>
    "tpu.trace_start"() <{level = 10 : i32, message = "bqk,bkd->bqd"}> : () -> ()
    %cst_138 = arith.constant dense<0.000000e+00> : vector<2x8x8xf32>
    %419 = tpu.matmul %418, %405, %cst_138 {dimension_numbers = #tpu.dot_dimension_numbers<[2], [1], [1], [2], [0, 0, 0, 1, 1, 2], [0], [0]>} : vector<2x8x8xf32>, vector<2x8x8xf32>, vector<2x8x8xf32> -> vector<2x8x8xf32>
    "tpu.trace_stop"() : () -> ()
    %420 = vector.shape_cast %419 : vector<2x8x8xf32> to vector<16x8xf32>
    %c0_139 = arith.constant 0 : index
    %c48_140 = arith.constant 48 : index
    %421 = vector.load %arg6[%c0_139, %c48_140] : memref<16x64xf32, #tpu.memory_space<vmem>>, vector<16x8xf32>
    tpu.vector_store %arg6[%c0_139, %c48_140], %420 {strides = array<i32>} : memref<16x64xf32, #tpu.memory_space<vmem>>, vector<16x8xf32>,
    %422 = vector.extract_strided_slice %267 {offsets = [0, 56], sizes = [16, 8], strides = [1, 1]} : vector<16x192xf32> to vector<16x8xf32>
    %423 = vector.shape_cast %422 : vector<16x8xf32> to vector<2x8x8xf32>
    %424 = vector.extract_strided_slice %267 {offsets = [0, 120], sizes = [16, 8], strides = [1, 1]} : vector<16x192xf32> to vector<16x8xf32>
    %425 = vector.shape_cast %424 : vector<16x8xf32> to vector<2x8x8xf32>
    %426 = vector.extract_strided_slice %267 {offsets = [0, 184], sizes = [16, 8], strides = [1, 1]} : vector<16x192xf32> to vector<16x8xf32>
    %427 = vector.shape_cast %426 : vector<16x8xf32> to vector<2x8x8xf32>
    "tpu.trace_start"() <{level = 10 : i32, message = "bqd,bkd->bqk"}> : () -> ()
    %cst_141 = arith.constant dense<0.000000e+00> : vector<2x8x8xf32>
    %428 = tpu.matmul %423, %425, %cst_141 {dimension_numbers = #tpu.dot_dimension_numbers<[2], [2], [1], [1], [0, 0, 0, 1, 1, 1], [0], [0]>} : vector<2x8x8xf32>, vector<2x8x8xf32>, vector<2x8x8xf32> -> vector<2x8x8xf32>
    "tpu.trace_stop"() : () -> ()
    %cst_142 = arith.constant 0.353553385 : f32
    %429 = vector.broadcast %cst_142 : f32 to vector<2x8x8xf32>
    %430 = arith.mulf %428, %429 : vector<2x8x8xf32>
    %cst_143 = arith.constant dense<0xFF800000> : vector<2x8xf32>
    %431 = vector.multi_reduction <maximumf>, %430, %cst_143 [2] : vector<2x8x8xf32> to vector<2x8xf32>
    %432 = vector.shape_cast %431 : vector<2x8xf32> to vector<2x8x1xf32>
    %433 = vector.broadcast %432 : vector<2x8x1xf32> to vector<2x8x8xf32>
    %434 = arith.subf %430, %433 : vector<2x8x8xf32>
    %435 = math.exp %434 : vector<2x8x8xf32>
    %cst_144 = arith.constant dense<0.000000e+00> : vector<2x8xf32>
    %436 = vector.multi_reduction <add>, %435, %cst_144 [2] : vector<2x8x8xf32> to vector<2x8xf32>
    %437 = vector.shape_cast %436 : vector<2x8xf32> to vector<2x8x1xf32>
    %438 = tpu.reciprocal %437 {approx = true} : vector<2x8x1xf32> -> vector<2x8x1xf32>
    %439 = vector.broadcast %438 : vector<2x8x1xf32> to vector<2x8x8xf32>
    %440 = arith.mulf %435, %439 : vector<2x8x8xf32>
    "tpu.trace_start"() <{level = 10 : i32, message = "bqk,bkd->bqd"}> : () -> ()
    %cst_145 = arith.constant dense<0.000000e+00> : vector<2x8x8xf32>
    %441 = tpu.matmul %440, %427, %cst_145 {dimension_numbers = #tpu.dot_dimension_numbers<[2], [1], [1], [2], [0, 0, 0, 1, 1, 2], [0], [0]>} : vector<2x8x8xf32>, vector<2x8x8xf32>, vector<2x8x8xf32> -> vector<2x8x8xf32>
    "tpu.trace_stop"() : () -> ()
    %442 = vector.shape_cast %441 : vector<2x8x8xf32> to vector<16x8xf32>
    %c0_146 = arith.constant 0 : index
    %c56_147 = arith.constant 56 : index
    %443 = vector.load %arg6[%c0_146, %c56_147] : memref<16x64xf32, #tpu.memory_space<vmem>>, vector<16x8xf32>
    tpu.vector_store %arg6[%c0_146, %c56_147], %442 {strides = array<i32>} : memref<16x64xf32, #tpu.memory_space<vmem>>, vector<16x8xf32>,
    %c0_148 = arith.constant 0 : index
    %c0_149 = arith.constant 0 : index
    %444 = vector.load %arg6[%c0_148, %c0_149] : memref<16x64xf32, #tpu.memory_space<vmem>>, vector<16x64xf32>
    %cst_150 = arith.constant dense<0.000000e+00> : vector<16x64xf32>
    %445 = tpu.matmul %444, %254, %cst_150 {dimension_numbers = #tpu.dot_dimension_numbers<[1], [0], [0], [1], [0, 0, 1, 1], [], []>} : vector<16x64xf32>, vector<64x64xf32>, vector<16x64xf32> -> vector<16x64xf32>
    %446 = vector.broadcast %256 : vector<1x64xf32> to vector<16x64xf32>
    %447 = arith.addf %445, %446 : vector<16x64xf32>
    %448 = arith.addf %251, %447 : vector<16x64xf32>
    %cst_151 = arith.constant dense<0.000000e+00> : vector<16xf32>
    %449 = vector.multi_reduction <add>, %448, %cst_151 [1] : vector<16x64xf32> to vector<16xf32>
    %450 = vector.shape_cast %449 : vector<16xf32> to vector<16x1xf32>
    %cst_152 = arith.constant 6.400000e+01 : f32
    %451 = vector.broadcast %cst_152 : f32 to vector<16x1xf32>
    %452 = arith.divf %450, %451 : vector<16x1xf32>
    %453 = vector.broadcast %452 : vector<16x1xf32> to vector<16x64xf32>
    %454 = arith.subf %448, %453 : vector<16x64xf32>
    %455 = arith.mulf %454, %454 : vector<16x64xf32>
    %cst_153 = arith.constant dense<0.000000e+00> : vector<16xf32>
    %456 = vector.multi_reduction <add>, %455, %cst_153 [1] : vector<16x64xf32> to vector<16xf32>
    %457 = vector.shape_cast %456 : vector<16xf32> to vector<16x1xf32>
    %cst_154 = arith.constant 6.400000e+01 : f32
    %458 = vector.broadcast %cst_154 : f32 to vector<16x1xf32>
    %459 = arith.divf %457, %458 : vector<16x1xf32>
    %cst_155 = arith.constant 9.99999974E-6 : f32
    %460 = vector.broadcast %cst_155 : f32 to vector<16x1xf32>
    %461 = arith.addf %459, %460 : vector<16x1xf32>
    %462 = math.rsqrt %461 : vector<16x1xf32>
    %463 = vector.broadcast %462 : vector<16x1xf32> to vector<16x64xf32>
    %464 = arith.mulf %454, %463 : vector<16x64xf32>
    %465 = vector.broadcast %257 : vector<1x64xf32> to vector<16x64xf32>
    %466 = arith.mulf %464, %465 : vector<16x64xf32>
    %467 = vector.broadcast %258 : vector<1x64xf32> to vector<16x64xf32>
    %468 = arith.addf %466, %467 : vector<16x64xf32>
    %cst_156 = arith.constant dense<0.000000e+00> : vector<16x128xf32>
    %469 = tpu.matmul %468, %262, %cst_156 {dimension_numbers = #tpu.dot_dimension_numbers<[1], [0], [0], [1], [0, 0, 1, 1], [], []>} : vector<16x64xf32>, vector<64x128xf32>, vector<16x128xf32> -> vector<16x128xf32>
    %470 = vector.broadcast %263 : vector<1x128xf32> to vector<16x128xf32>
    %471 = arith.addf %469, %470 : vector<16x128xf32>
    %cst_157 = arith.constant 0.000000e+00 : f32
    %472 = vector.broadcast %cst_157 : f32 to vector<16x128xf32>
    %473 = arith.maximumf %471, %472 : vector<16x128xf32>
    %cst_158 = arith.constant dense<0.000000e+00> : vector<16x64xf32>
    %474 = tpu.matmul %473, %264, %cst_158 {dimension_numbers = #tpu.dot_dimension_numbers<[1], [0], [0], [1], [0, 0, 1, 1], [], []>} : vector<16x128xf32>, vector<128x64xf32>, vector<16x64xf32> -> vector<16x64xf32>
    %475 = vector.broadcast %261 : vector<1x64xf32> to vector<16x64xf32>
    %476 = arith.addf %474, %475 : vector<16x64xf32>
    %477 = arith.addf %468, %476 : vector<16x64xf32>
    %cst_159 = arith.constant dense<0.000000e+00> : vector<16xf32>
    %478 = vector.multi_reduction <add>, %477, %cst_159 [1] : vector<16x64xf32> to vector<16xf32>
    %479 = vector.shape_cast %478 : vector<16xf32> to vector<16x1xf32>
    %cst_160 = arith.constant 6.400000e+01 : f32
    %480 = vector.broadcast %cst_160 : f32 to vector<16x1xf32>
    %481 = arith.divf %479, %480 : vector<16x1xf32>
    %482 = vector.broadcast %481 : vector<16x1xf32> to vector<16x64xf32>
    %483 = arith.subf %477, %482 : vector<16x64xf32>
    %484 = arith.mulf %483, %483 : vector<16x64xf32>
    %cst_161 = arith.constant dense<0.000000e+00> : vector<16xf32>
    %485 = vector.multi_reduction <add>, %484, %cst_161 [1] : vector<16x64xf32> to vector<16xf32>
    %486 = vector.shape_cast %485 : vector<16xf32> to vector<16x1xf32>
    %cst_162 = arith.constant 6.400000e+01 : f32
    %487 = vector.broadcast %cst_162 : f32 to vector<16x1xf32>
    %488 = arith.divf %486, %487 : vector<16x1xf32>
    %cst_163 = arith.constant 9.99999974E-6 : f32
    %489 = vector.broadcast %cst_163 : f32 to vector<16x1xf32>
    %490 = arith.addf %488, %489 : vector<16x1xf32>
    %491 = math.rsqrt %490 : vector<16x1xf32>
    %492 = vector.broadcast %491 : vector<16x1xf32> to vector<16x64xf32>
    %493 = arith.mulf %483, %492 : vector<16x64xf32>
    %494 = vector.broadcast %259 : vector<1x64xf32> to vector<16x64xf32>
    %495 = arith.mulf %493, %494 : vector<16x64xf32>
    %496 = vector.broadcast %260 : vector<1x64xf32> to vector<16x64xf32>
    %497 = arith.addf %495, %496 : vector<16x64xf32>
    %498 = vector.shape_cast %497 : vector<16x64xf32> to vector<2x8x64xf32>
    %cst_164 = arith.constant dense<0.000000e+00> : vector<2x64xf32>
    %499 = vector.multi_reduction <add>, %498, %cst_164 [1] : vector<2x8x64xf32> to vector<2x64xf32>
    %cst_165 = arith.constant 8.000000e+00 : f32
    %500 = vector.broadcast %cst_165 : f32 to vector<2x64xf32>
    %501 = arith.divf %499, %500 : vector<2x64xf32>
    %c424 = arith.constant 424 : index
    %c0_166 = arith.constant 0 : index
    %502 = vector.load %arg3[%c424, %c0_166] : memref<496x64xf32, #tpu.memory_space<vmem>>, vector<64x64xf32>
    %c488 = arith.constant 488 : index
    %c0_167 = arith.constant 0 : index
    %503 = vector.load %arg3[%c488, %c0_167] : memref<496x64xf32, #tpu.memory_space<vmem>>, vector<1x64xf32>
    %cst_168 = arith.constant dense<0.000000e+00> : vector<2x64xf32>
    %504 = tpu.matmul %501, %502, %cst_168 {dimension_numbers = #tpu.dot_dimension_numbers<[1], [0], [0], [1], [0, 0, 1, 1], [], []>} : vector<2x64xf32>, vector<64x64xf32>, vector<2x64xf32> -> vector<2x64xf32>
    %505 = vector.broadcast %503 : vector<1x64xf32> to vector<2x64xf32>
    %506 = arith.addf %504, %505 : vector<2x64xf32>
    %cst_169 = arith.constant 0.000000e+00 : f32
    %507 = vector.broadcast %cst_169 : f32 to vector<2x64xf32>
    %508 = arith.maximumf %506, %507 : vector<2x64xf32>
    %c0_170 = arith.constant 0 : index
    %c0_171 = arith.constant 0 : index
    %509 = vector.load %arg4[%c0_170, %c0_171] : memref<72x32xf32, #tpu.memory_space<vmem>>, vector<64x32xf32>
    %c64_172 = arith.constant 64 : index
    %c0_173 = arith.constant 0 : index
    %510 = vector.load %arg4[%c64_172, %c0_173] : memref<72x32xf32, #tpu.memory_space<vmem>>, vector<8x32xf32>
    %cst_174 = arith.constant dense<0.000000e+00> : vector<2x32xf32>
    %511 = tpu.matmul %508, %509, %cst_174 {dimension_numbers = #tpu.dot_dimension_numbers<[1], [0], [0], [1], [0, 0, 1, 1], [], []>} : vector<2x64xf32>, vector<64x32xf32>, vector<2x32xf32> -> vector<2x32xf32>
    %512 = vector.extract_strided_slice %510 {offsets = [0, 0], sizes = [1, 32], strides = [1, 1]} : vector<8x32xf32> to vector<1x32xf32>
    %513 = vector.broadcast %512 : vector<1x32xf32> to vector<2x32xf32>
    %514 = arith.addf %511, %513 : vector<2x32xf32>
    %515 = vector.extract_strided_slice %510 {offsets = [1, 0], sizes = [1, 32], strides = [1, 1]} : vector<8x32xf32> to vector<1x32xf32>
    %516 = vector.extract_strided_slice %510 {offsets = [2, 0], sizes = [1, 32], strides = [1, 1]} : vector<8x32xf32> to vector<1x32xf32>
    %cst_175 = arith.constant dense<0.000000e+00> : vector<2xf32>
    %517 = vector.multi_reduction <add>, %514, %cst_175 [1] : vector<2x32xf32> to vector<2xf32>
    %518 = vector.shape_cast %517 : vector<2xf32> to vector<2x1xf32>
    %cst_176 = arith.constant 3.200000e+01 : f32
    %519 = vector.broadcast %cst_176 : f32 to vector<2x1xf32>
    %520 = arith.divf %518, %519 : vector<2x1xf32>
    %521 = vector.broadcast %520 : vector<2x1xf32> to vector<2x32xf32>
    %522 = arith.subf %514, %521 : vector<2x32xf32>
    %523 = arith.mulf %522, %522 : vector<2x32xf32>
    %cst_177 = arith.constant dense<0.000000e+00> : vector<2xf32>
    %524 = vector.multi_reduction <add>, %523, %cst_177 [1] : vector<2x32xf32> to vector<2xf32>
    %525 = vector.shape_cast %524 : vector<2xf32> to vector<2x1xf32>
    %cst_178 = arith.constant 3.200000e+01 : f32
    %526 = vector.broadcast %cst_178 : f32 to vector<2x1xf32>
    %527 = arith.divf %525, %526 : vector<2x1xf32>
    %cst_179 = arith.constant 9.99999974E-6 : f32
    %528 = vector.broadcast %cst_179 : f32 to vector<2x1xf32>
    %529 = arith.addf %527, %528 : vector<2x1xf32>
    %530 = math.rsqrt %529 : vector<2x1xf32>
    %531 = vector.broadcast %530 : vector<2x1xf32> to vector<2x32xf32>
    %532 = arith.mulf %522, %531 : vector<2x32xf32>
    %533 = vector.broadcast %515 : vector<1x32xf32> to vector<2x32xf32>
    %534 = arith.mulf %532, %533 : vector<2x32xf32>
    %535 = vector.broadcast %516 : vector<1x32xf32> to vector<2x32xf32>
    %536 = arith.addf %534, %535 : vector<2x32xf32>
    %537 = arith.mulf %536, %536 : vector<2x32xf32>
    %cst_180 = arith.constant dense<0.000000e+00> : vector<2xf32>
    %538 = vector.multi_reduction <add>, %537, %cst_180 [1] : vector<2x32xf32> to vector<2xf32>
    %539 = vector.shape_cast %538 : vector<2xf32> to vector<2x1xf32>
    %cst_181 = arith.constant 1.000000e-24 : f32
    %540 = vector.broadcast %cst_181 : f32 to vector<2x1xf32>
    %541 = arith.maximumf %539, %540 : vector<2x1xf32>
    %542 = math.rsqrt %541 : vector<2x1xf32>
    %543 = vector.broadcast %542 : vector<2x1xf32> to vector<2x32xf32>
    %544 = arith.mulf %536, %543 : vector<2x32xf32>
    %c0_182 = arith.constant 0 : index
    %c0_183 = arith.constant 0 : index
    %545 = vector.load %arg5[%c0_182, %c0_183] : memref<2x32xf32, #tpu.memory_space<vmem>>, vector<2x32xf32>
    tpu.vector_store %arg5[%c0_182, %c0_183], %544 {strides = array<i32>} : memref<2x32xf32, #tpu.memory_space<vmem>>, vector<2x32xf32>,
    return
  }
}

</mosaic_0001>

<llo_original>
// kernel: tpu_custom_call.1
$region0: #{tpu_custom_call.1}
  #allocation0 [shape = 'u32[]', space=smem, size = 0x4, offset = 0x4, fixed_abs, tag = 'smem constant byte address 0x4 - core index']
  #allocation1 [shape = 'u32[144,128]{1,0:T(1,128)}', space=vmem, size = 0x12000, scoped, tag = 'internal scratch']
  #allocation2 [shape = 'f32[16,64]{1,0:T(8,128)}', space=vmem, size = 0x2000, scoped, tag = 'scratch operand']
  %s0 = inlined_call_operand.vmem [shape: f32[16,16], index: 0, kind: input, shape index: {}]
  %s1 = inlined_call_operand.vmem [shape: f32[144,192], index: 1, kind: input, shape index: {}]
  %s2 = inlined_call_operand.vmem [shape: f32[144,128], index: 2, kind: input, shape index: {}]
  %s3 = inlined_call_operand.vmem [shape: f32[496,64], index: 3, kind: input, shape index: {}]
  %s4 = inlined_call_operand.vmem [shape: f32[72,32], index: 4, kind: input, shape index: {}]
  %s5 = inlined_call_operand.hbm [shape: f32[2,32], index: 5, kind: output, shape index: {}]
  %s6 = sld [smem:[#allocation0]]
  $region30: #{tpu_custom_call.1} parent=0
    _
  %s8 = ssub.s32 1, %s6
  %s9 = scalar_select 0, %s8, %s6
  $region1: #{tpu_custom_call.1} parent=0
    #allocation3 [shape = 'u8[1024]{0}', space=vmem, size = 0x400, scoped, tag = 'output window, operand 0, single buffered']
    #allocation4 [shape = 's32[1]{0}', space=sflag, size = 0x4, scoped, tag = 'scoped memory for tpu_custom_call.1']
    %10 = vsyncpa [#allocation4], 0
    // Predicated region
    $region2: #{tpu_custom_call.1} parent=1 // pred_check
      _
    $region3: #{tpu_custom_call.1} parent=1 // pred_check_branch
      %12 = sbr.rel (0) target = $region5
    $region4: #{tpu_custom_call.1} parent=1 // pred_region
      _
    $region5: #{tpu_custom_call.1} parent=1 // pred_fallthru
      _
    // Predicated region
    $region6: #{tpu_custom_call.1} parent=1 // pred_check
      _
    $region7: #{tpu_custom_call.1} parent=1 // pred_check_branch
      %14 = sbr.rel (0) target = $region9
    $region8: #{tpu_custom_call.1} parent=1 // pred_region
      _
    $region9: #{tpu_custom_call.1} parent=1 // pred_fallthru
      _
    // Predicated region
    $region10: #{tpu_custom_call.1} parent=1 // pred_check
      _
    $region11: #{tpu_custom_call.1} parent=1 // pred_check_branch
      %16 = sbr.rel (0) target = $region13
    $region12: #{tpu_custom_call.1} parent=1 // pred_region
      _
    $region13: #{tpu_custom_call.1} parent=1 // pred_fallthru
      _
    // Predicated region
    $region14: #{tpu_custom_call.1} parent=1 // pred_check
      _
    $region15: #{tpu_custom_call.1} parent=1 // pred_check_branch
      %18 = sbr.rel (0) target = $region17
    $region16: #{tpu_custom_call.1} parent=1 // pred_region
      _
    $region17: #{tpu_custom_call.1} parent=1 // pred_fallthru
      _
    // Predicated region
    $region18: #{tpu_custom_call.1} parent=1 // pred_check
      _
    $region19: #{tpu_custom_call.1} parent=1 // pred_check_branch
      %20 = sbr.rel (0) target = $region21
    $region20: #{tpu_custom_call.1} parent=1 // pred_region
      _
    $region21: #{tpu_custom_call.1} parent=1 // pred_fallthru
      _
    %v21 = vld [vmem:[%s3] sm:$0xff]
    %v22 = vld [vmem:[%s3 + $0x8] sm:$0xff]
    %v23 = vld [vmem:[%s3 + $0x10] sm:$0x1]
    %v24 = vld [vmem:[%s0] sm:$0xff]
    %v25 = vld [vmem:[%s0 + $0x8] sm:$0xff]
    %v26 = vlaneseq
    %v27 = vshrl.u32 %v26, 7
    %v28 = vsub.s32 0, %v27
    %v29 = vrot.slane %v23, %v28
    %vm30 = vcmask 130048
    %v32 = vsel %vm30, %v24, 0
    %v35 = vsel %vm30, %v25, 0
    %37 = vmatprep.subr.mxu0 0.0
    %38 = vmatpush1.msra.mxu0 %v21
    %39 = vmatprep.subr.mxu0 0.0
    %40 = vmatpush1.msra.mxu0 %v22
    %41 = vmatprep.subr.mxu0 0.0
    %42 = vmatpush1.msra.mxu0 0.0
    %43 = vmatprep.subr.mxu0 0.0
    %44 = vmatpush1.msra.mxu0 0.0
    %45 = vmatprep.subr.mxu0 0.0
    %46 = vmatpush1.msra.mxu0 0.0
    %47 = vmatprep.subr.mxu0 0.0
    %48 = vmatpush1.msra.mxu0 0.0
    %49 = vmatprep.subr.mxu0 0.0
    %50 = vmatpush1.msra.mxu0 0.0
    %51 = vmatprep.subr.mxu0 0.0
    %52 = vmatpush1.msra.mxu0 0.0
    %53 = vmatprep.subr.mxu0 0.0
    %54 = vmatpush1.msra.mxu0 0.0
    %55 = vmatprep.subr.mxu0 0.0
    %56 = vmatpush1.msra.mxu0 0.0
    %57 = vmatprep.subr.mxu0 0.0
    %58 = vmatpush1.msra.mxu0 0.0
    %59 = vmatprep.subr.mxu0 0.0
    %60 = vmatpush1.msra.mxu0 0.0
    %61 = vmatprep.subr.mxu0 0.0
    %62 = vmatpush1.msra.mxu0 0.0
    %63 = vmatprep.subr.mxu0 0.0
    %64 = vmatpush1.msra.mxu0 0.0
    %65 = vmatprep.subr.mxu0 0.0
    %66 = vmatpush1.msra.mxu0 0.0
    %67 = vmatprep.subr.mxu0 0.0
    %68 = vmatpush1.msra.mxu0 0.0
    %69 = vmatprep.subr.mxu0 0.0
    %70 = vmatpush1.msra.mxu0 0.0
    %71 = vmatprep.subr.mxu0 0.0
    %72 = vmatpush1.msra.mxu0 0.0
    %73 = vmatprep.subr.mxu0 0.0
    %74 = vmatpush1.msra.mxu0 0.0
    %75 = vmatprep.subr.mxu0 0.0
    %76 = vmatpush1.msra.mxu0 0.0
    %77 = vmatprep.subr.mxu0 0.0
    %78 = vmatpush1.msra.mxu0 0.0
    %79 = vmatprep.subr.mxu0 0.0
    %80 = vmatpush1.msra.mxu0 0.0
    %81 = vmatprep.subr.mxu0 0.0
    %82 = vmatpush1.msra.mxu0 0.0
    %83 = vmatprep.subr.mxu0 0.0
    %84 = vmatpush1.msra.mxu0 0.0
    %85 = vmatprep.subr.mxu0 0.0
    %86 = vmatpush1.msra.mxu0 0.0
    %87 = vmatprep.subr.mxu0 0.0
    %88 = vmatpush1.msra.mxu0 0.0
    %89 = vmatprep.subr.mxu0 0.0
    %90 = vmatpush1.msra.mxu0 0.0
    %91 = vmatprep.subr.mxu0 0.0
    %92 = vmatpush1.msra.mxu0 0.0
    %93 = vmatprep.subr.mxu0 0.0
    %94 = vmatpush1.msra.mxu0 0.0
    %95 = vmatprep.subr.mxu0 0.0
    %96 = vmatpush1.msra.mxu0 0.0
    %97 = vmatprep.subr.mxu0 0.0
    %98 = vmatpush1.msra.mxu0 0.0
    %99 = vmatprep.subr.mxu0 0.0
    %100 = vmatpush1.msra.mxu0 0.0
    %101 = vmatprep.mubr.f32.mxu0 0.0
    %102 = vmatmul.mubr.f32.gmra.mrb[0].mxu0 %v32
    %v103 = vpop.f32.mrb[0].mxu0
    %v104 = vadd.f32 %v29, %v103
    %v105 = vpop.f32.mrb[0].mxu0
    %106 = vmatprep.mubr.f32.mxu0 0.0
    %107 = vmatmul.mubr.f32.gmra.mrb[0].mxu0 %v35
    %v108 = vpop.f32.mrb[0].mxu0
    %v109 = vadd.f32 %v29, %v108
    %v110 = vpop.f32.mrb[0].mxu0
    %111 = vdwg.mxu0
    %v112 = vld [vmem:[%s1] sm:$0xff]
    %v113 = vld [vmem:[%s1 + $0x8] sm:$0xff]
    %v114 = vld [vmem:[%s1 + $0x10] sm:$0xff]
    %v115 = vld [vmem:[%s1 + $0x18] sm:$0xff]
    %v116 = vld [vmem:[%s1 + $0x20] sm:$0xff]
    %v117 = vld [vmem:[%s1 + $0x28] sm:$0xff]
    %v118 = vld [vmem:[%s1 + $0x30] sm:$0xff]
    %v119 = vld [vmem:[%s1 + $0x38] sm:$0xff]
    %v120 = vld [vmem:[%s1 + $0x40] sm:$0xff]
    %v121 = vld [vmem:[%s1 + $0x48] sm:$0xff]
    %v122 = vld [vmem:[%s1 + $0x50] sm:$0xff]
    %v123 = vld [vmem:[%s1 + $0x58] sm:$0xff]
    %v124 = vld [vmem:[%s1 + $0x60] sm:$0xff]
    %v125 = vld [vmem:[%s1 + $0x68] sm:$0xff]
    %v126 = vld [vmem:[%s1 + $0x70] sm:$0xff]
    %v127 = vld [vmem:[%s1 + $0x78] sm:$0xff]
    %s128 = scalar_lea.vmem %s1, 128
    %v129 = vld [vmem:[%s128] ss:$8 sm:$0x3]
    %v130 = vld [vmem:[%s3 + $0x18] sm:$0xff]
    %v131 = vld [vmem:[%s3 + $0x20] sm:$0xff]
    %v132 = vld [vmem:[%s3 + $0x28] sm:$0xff]
    %v133 = vld [vmem:[%s3 + $0x30] sm:$0xff]
    %v134 = vld [vmem:[%s3 + $0x38] sm:$0xff]
    %v135 = vld [vmem:[%s3 + $0x40] sm:$0xff]
    %v136 = vld [vmem:[%s3 + $0x48] sm:$0xff]
    %v137 = vld [vmem:[%s3 + $0x50] sm:$0xff]
    %v138 = vld [vmem:[%s3 + $0x58] sm:$0xff]
    %v139 = vld [vmem:[%s2] sm:$0xff]
    %v140 = vld [vmem:[%s2 + $0x8] sm:$0xff]
    %v141 = vld [vmem:[%s2 + $0x10] sm:$0xff]
    %v142 = vld [vmem:[%s2 + $0x18] sm:$0xff]
    %v143 = vld [vmem:[%s2 + $0x20] sm:$0xff]
    %v144 = vld [vmem:[%s2 + $0x28] sm:$0xff]
    %v145 = vld [vmem:[%s2 + $0x30] sm:$0xff]
    %v146 = vld [vmem:[%s2 + $0x38] sm:$0xff]
    %v147 = vld [vmem:[%s2 + $0x40] sm:$0x1]
    %v148 = vld [vmem:[%s3 + $0x60] sm:$0xff]
    %v149 = vld [vmem:[%s3 + $0x68] sm:$0xff]
    %v150 = vld [vmem:[%s3 + $0x70] sm:$0xff]
    %v151 = vld [vmem:[%s3 + $0x78] sm:$0xff]
    %v152 = vld [vmem:[%s3 + $0x80] sm:$0xff]
    %v153 = vld [vmem:[%s3 + $0x88] sm:$0xff]
    %v154 = vld [vmem:[%s3 + $0x90] sm:$0xff]
    %v155 = vld [vmem:[%s3 + $0x98] sm:$0xff]
    %v156 = vld [vmem:[%s3 + $0xa0] sm:$0xff]
    %v157 = vld [vmem:[%s3 + $0xa8] sm:$0xff]
    %v158 = vld [vmem:[%s3 + $0xb0] sm:$0xff]
    %v159 = vld [vmem:[%s3 + $0xb8] sm:$0xff]
    %v160 = vld [vmem:[%s3 + $0xc0] sm:$0xff]
    %v161 = vld [vmem:[%s3 + $0xc8] sm:$0xff]
    %v162 = vld [vmem:[%s3 + $0xd0] sm:$0xff]
    %v163 = vld [vmem:[%s3 + $0xd8] sm:$0xff]
    %v165 = vlaneseq
    %v166 = vshrl.u32 %v165, 7
    %v167 = vsub.s32 0, %v166
    %v168 = vrot.slane %v129, %v167
    %v169 = vlaneseq
    %v170 = vshrl.u32 %v169, 7
    %v171 = vsub.s32 1, %v170
    %v172 = vrot.slane %v129, %v171
    %vm175 = vcmask 523264
    %v177 = vsel %vm175, %v104, 0
    %v180 = vsel %vm175, %v109, 0
    %182 = vmatprep.subr.mxu0 %v113
    %183 = vmatpush1.msra.mxu0 %v112
    %184 = vmatprep.subr.mxu0 %v115
    %185 = vmatpush1.msra.mxu0 %v114
    %186 = vmatprep.subr.mxu0 %v117
    %187 = vmatpush1.msra.mxu0 %v116
    %188 = vmatprep.subr.mxu0 %v119
    %189 = vmatpush1.msra.mxu0 %v118
    %190 = vmatprep.subr.mxu0 %v121
    %191 = vmatpush1.msra.mxu0 %v120
    %192 = vmatprep.subr.mxu0 %v123
    %193 = vmatpush1.msra.mxu0 %v122
    %194 = vmatprep.subr.mxu0 %v125
    %195 = vmatpush1.msra.mxu0 %v124
    %196 = vmatprep.subr.mxu0 %v127
    %197 = vmatpush1.msra.mxu0 %v126
    %198 = vmatprep.subr.mxu0 0.0
    %199 = vmatpush1.msra.mxu0 0.0
    %200 = vmatprep.subr.mxu0 0.0
    %201 = vmatpush1.msra.mxu0 0.0
    %202 = vmatprep.subr.mxu0 0.0
    %203 = vmatpush1.msra.mxu0 0.0
    %204 = vmatprep.subr.mxu0 0.0
    %205 = vmatpush1.msra.mxu0 0.0
    %206 = vmatprep.subr.mxu0 0.0
    %207 = vmatpush1.msra.mxu0 0.0
    %208 = vmatprep.subr.mxu0 0.0
    %209 = vmatpush1.msra.mxu0 0.0
    %210 = vmatprep.subr.mxu0 0.0
    %211 = vmatpush1.msra.mxu0 0.0
    %212 = vmatprep.subr.mxu0 0.0
    %213 = vmatpush1.msra.mxu0 0.0
    %214 = vmatprep.subr.mxu0 0.0
    %215 = vmatpush1.msra.mxu0 0.0
    %216 = vmatprep.subr.mxu0 0.0
    %217 = vmatpush1.msra.mxu0 0.0
    %218 = vmatprep.subr.mxu0 0.0
    %219 = vmatpush1.msra.mxu0 0.0
    %220 = vmatprep.subr.mxu0 0.0
    %221 = vmatpush1.msra.mxu0 0.0
    %222 = vmatprep.subr.mxu0 0.0
    %223 = vmatpush1.msra.mxu0 0.0
    %224 = vmatprep.subr.mxu0 0.0
    %225 = vmatpush1.msra.mxu0 0.0
    %226 = vmatprep.subr.mxu0 0.0
    %227 = vmatpush1.msra.mxu0 0.0
    %228 = vmatprep.subr.mxu0 0.0
    %229 = vmatpush1.msra.mxu0 0.0
    %230 = vmatprep.subr.mxu0 0.0
    %231 = vmatpush1.msra.mxu0 0.0
    %232 = vmatprep.subr.mxu0 0.0
    %233 = vmatpush1.msra.mxu0 0.0
    %234 = vmatprep.subr.mxu0 0.0
    %235 = vmatpush1.msra.mxu0 0.0
    %236 = vmatprep.subr.mxu0 0.0
    %237 = vmatpush1.msra.mxu0 0.0
    %238 = vmatprep.subr.mxu0 0.0
    %239 = vmatpush1.msra.mxu0 0.0
    %240 = vmatprep.subr.mxu0 0.0
    %241 = vmatpush1.msra.mxu0 0.0
    %242 = vmatprep.subr.mxu0 0.0
    %243 = vmatpush1.msra.mxu0 0.0
    %244 = vmatprep.subr.mxu0 0.0
    %245 = vmatpush1.msra.mxu0 0.0
    %246 = vmatprep.mubr.f32.mxu0 0.0
    %247 = vmatmul.mubr.f32.gmra.mrb[0].mxu0 %v177
    %v248 = vpop.f32.mrb[0].mxu0
    %v249 = vadd.f32 %v168, %v248
    %v250 = vpop.f32.mrb[0].mxu0
    %v251 = vadd.f32 %v172, %v250
    %252 = vmatprep.mubr.f32.mxu0 0.0
    %253 = vmatmul.mubr.f32.gmra.mrb[0].mxu0 %v180
    %v254 = vpop.f32.mrb[0].mxu0
    %v255 = vadd.f32 %v168, %v254
    %v256 = vpop.f32.mrb[0].mxu0
    %v257 = vadd.f32 %v172, %v256
    %258 = vdwg.mxu0
    %260 = vrot.lane.b32.xlu0 %v249, 64
    %v261 = vpop.permute.xlu0 %260
    %vm262 = vcmask 64512
    %v263 = vsel %vm262, %v249, 0
    %v265 = vsel %vm262, %v261, 0
    %267 = vmatprep.subr.mxu0 0.0
    %268 = vmatpush1.xpose.msra.mxu0 %v265
    %269 = vmatprep.subr.mxu0 0.0
    %270 = vmatpush1.xpose.msra.mxu0 0.0
    %271 = vmatprep.subr.mxu0 0.0
    %272 = vmatpush1.xpose.msra.mxu0 0.0
    %273 = vmatprep.subr.mxu0 0.0
    %274 = vmatpush1.xpose.msra.mxu0 0.0
    %275 = vmatprep.subr.mxu0 0.0
    %276 = vmatpush1.xpose.msra.mxu0 0.0
    %277 = vmatprep.subr.mxu0 0.0
    %278 = vmatpush1.xpose.msra.mxu0 0.0
    %279 = vmatprep.subr.mxu0 0.0
    %280 = vmatpush1.xpose.msra.mxu0 0.0
    %281 = vmatprep.subr.mxu0 0.0
    %282 = vmatpush1.xpose.msra.mxu0 0.0
    %283 = vmatprep.subr.mxu0 0.0
    %284 = vmatpush1.xpose.msra.mxu0 0.0
    %285 = vmatprep.subr.mxu0 0.0
    %286 = vmatpush1.xpose.msra.mxu0 0.0
    %287 = vmatprep.subr.mxu0 0.0
    %288 = vmatpush1.xpose.msra.mxu0 0.0
    %289 = vmatprep.subr.mxu0 0.0
    %290 = vmatpush1.xpose.msra.mxu0 0.0
    %291 = vmatprep.subr.mxu0 0.0
    %292 = vmatpush1.xpose.msra.mxu0 0.0
    %293 = vmatprep.subr.mxu0 0.0
    %294 = vmatpush1.xpose.msra.mxu0 0.0
    %295 = vmatprep.subr.mxu0 0.0
    %296 = vmatpush1.xpose.msra.mxu0 0.0
    %297 = vmatprep.subr.mxu0 0.0
    %298 = vmatpush1.xpose.msra.mxu0 0.0
    %299 = vmatprep.subr.mxu0 0.0
    %300 = vmatpush1.xpose.msra.mxu0 0.0
    %301 = vmatprep.subr.mxu0 0.0
    %302 = vmatpush1.xpose.msra.mxu0 0.0
    %303 = vmatprep.subr.mxu0 0.0
    %304 = vmatpush1.xpose.msra.mxu0 0.0
    %305 = vmatprep.subr.mxu0 0.0
    %306 = vmatpush1.xpose.msra.mxu0 0.0
    %307 = vmatprep.subr.mxu0 0.0
    %308 = vmatpush1.xpose.msra.mxu0 0.0
    %309 = vmatprep.subr.mxu0 0.0
    %310 = vmatpush1.xpose.msra.mxu0 0.0
    %311 = vmatprep.subr.mxu0 0.0
    %312 = vmatpush1.xpose.msra.mxu0 0.0
    %313 = vmatprep.subr.mxu0 0.0
    %314 = vmatpush1.xpose.msra.mxu0 0.0
    %315 = vmatprep.subr.mxu0 0.0
    %316 = vmatpush1.xpose.msra.mxu0 0.0
    %317 = vmatprep.subr.mxu0 0.0
    %318 = vmatpush1.xpose.msra.mxu0 0.0
    %319 = vmatprep.subr.mxu0 0.0
    %320 = vmatpush1.xpose.msra.mxu0 0.0
    %321 = vmatprep.subr.mxu0 0.0
    %322 = vmatpush1.xpose.msra.mxu0 0.0
    %323 = vmatprep.subr.mxu0 0.0
    %324 = vmatpush1.xpose.msra.mxu0 0.0
    %325 = vmatprep.subr.mxu0 0.0
    %326 = vmatpush1.xpose.msra.mxu0 0.0
    %327 = vmatprep.subr.mxu0 0.0
    %328 = vmatpush1.xpose.msra.mxu0 0.0
    %329 = vmatprep.subr.mxu0 0.0
    %330 = vmatpush1.xpose.msra.mxu0 0.0
    %331 = vmatprep.mubr.f32.mxu0 0.0
    %332 = vmatmul.mubr.f32.gmra.mrb[0].mxu0 %v263
    %v333 = vpop.f32.mrb[0].mxu0
    %v334 = vadd.f32 0.0, %v333
    %v335 = vpop.f32.mrb[0].mxu0
    %336 = vdwg.mxu0
    %338 = vrot.lane.b32.xlu0 %v255, 64
    %v339 = vpop.permute.xlu0 %338
    %v340 = vsel %vm262, %v255, 0
    %v342 = vsel %vm262, %v339, 0
    %344 = vmatprep.subr.mxu0 0.0
    %345 = vmatpush1.xpose.msra.mxu0 %v342
    %346 = vmatprep.subr.mxu0 0.0
    %347 = vmatpush1.xpose.msra.mxu0 0.0
    %348 = vmatprep.subr.mxu0 0.0
    %349 = vmatpush1.xpose.msra.mxu0 0.0
    %350 = vmatprep.subr.mxu0 0.0
    %351 = vmatpush1.xpose.msra.mxu0 0.0
    %352 = vmatprep.subr.mxu0 0.0
    %353 = vmatpush1.xpose.msra.mxu0 0.0
    %354 = vmatprep.subr.mxu0 0.0
    %355 = vmatpush1.xpose.msra.mxu0 0.0
    %356 = vmatprep.subr.mxu0 0.0
    %357 = vmatpush1.xpose.msra.mxu0 0.0
    %358 = vmatprep.subr.mxu0 0.0
    %359 = vmatpush1.xpose.msra.mxu0 0.0
    %360 = vmatprep.subr.mxu0 0.0
    %361 = vmatpush1.xpose.msra.mxu0 0.0
    %362 = vmatprep.subr.mxu0 0.0
    %363 = vmatpush1.xpose.msra.mxu0 0.0
    %364 = vmatprep.subr.mxu0 0.0
    %365 = vmatpush1.xpose.msra.mxu0 0.0
    %366 = vmatprep.subr.mxu0 0.0
    %367 = vmatpush1.xpose.msra.mxu0 0.0
    %368 = vmatprep.subr.mxu0 0.0
    %369 = vmatpush1.xpose.msra.mxu0 0.0
    %370 = vmatprep.subr.mxu0 0.0
    %371 = vmatpush1.xpose.msra.mxu0 0.0
    %372 = vmatprep.subr.mxu0 0.0
    %373 = vmatpush1.xpose.msra.mxu0 0.0
    %374 = vmatprep.subr.mxu0 0.0
    %375 = vmatpush1.xpose.msra.mxu0 0.0
    %376 = vmatprep.subr.mxu0 0.0
    %377 = vmatpush1.xpose.msra.mxu0 0.0
    %378 = vmatprep.subr.mxu0 0.0
    %379 = vmatpush1.xpose.msra.mxu0 0.0
    %380 = vmatprep.subr.mxu0 0.0
    %381 = vmatpush1.xpose.msra.mxu0 0.0
    %382 = vmatprep.subr.mxu0 0.0
    %383 = vmatpush1.xpose.msra.mxu0 0.0
    %384 = vmatprep.subr.mxu0 0.0
    %385 = vmatpush1.xpose.msra.mxu0 0.0
    %386 = vmatprep.subr.mxu0 0.0
    %387 = vmatpush1.xpose.msra.mxu0 0.0
    %388 = vmatprep.subr.mxu0 0.0
    %389 = vmatpush1.xpose.msra.mxu0 0.0
    %390 = vmatprep.subr.mxu0 0.0
    %391 = vmatpush1.xpose.msra.mxu0 0.0
    %392 = vmatprep.subr.mxu0 0.0
    %393 = vmatpush1.xpose.msra.mxu0 0.0
    %394 = vmatprep.subr.mxu0 0.0
    %395 = vmatpush1.xpose.msra.mxu0 0.0
    %396 = vmatprep.subr.mxu0 0.0
    %397 = vmatpush1.xpose.msra.mxu0 0.0
    %398 = vmatprep.subr.mxu0 0.0
    %399 = vmatpush1.xpose.msra.mxu0 0.0
    %400 = vmatprep.subr.mxu0 0.0
    %401 = vmatpush1.xpose.msra.mxu0 0.0
    %402 = vmatprep.subr.mxu0 0.0
    %403 = vmatpush1.xpose.msra.mxu0 0.0
    %404 = vmatprep.subr.mxu0 0.0
    %405 = vmatpush1.xpose.msra.mxu0 0.0
    %406 = vmatprep.subr.mxu0 0.0
    %407 = vmatpush1.xpose.msra.mxu0 0.0
    %408 = vmatprep.mubr.f32.mxu0 0.0
    %409 = vmatmul.mubr.f32.gmra.mrb[0].mxu0 %v340
    %v410 = vpop.f32.mrb[0].mxu0
    %v411 = vadd.f32 0.0, %v410
    %v412 = vpop.f32.mrb[0].mxu0
    %413 = vdwg.mxu0
    %v414 = vmul.f32 %v334, 0.35355338
    %v415 = vmul.f32 %v411, 0.35355338
    %v416 = vsel %vm262, %v414, -inf
    %417 = vmax.xlane.f32.xlu0 %v416
    %v418 = vpop.xlane.xlu0 %417
    %v419 = vsel %vm262, %v415, -inf
    %420 = vmax.xlane.f32.xlu0 %v419
    %v421 = vpop.xlane.xlu0 %420
    %v422 = vsub.f32 %v414, %v418
    %v423 = vsub.f32 %v415, %v421
    %v424 = vmul.f32 %v422, 1.442695
    %v425 = vpow.pop %v424
    %v426 = vmul.f32 %v423, 1.442695
    %v427 = vpow.pop %v426
    %v428 = vsel %vm262, %v425, 0.0
    %429 = vadd.xlane.f32.xlu0 %v428
    %v430 = vpop.xlane.xlu0 %429
    %v431 = vsel %vm262, %v427, 0.0
    %432 = vadd.xlane.f32.xlu0 %v431
    %v433 = vpop.xlane.xlu0 %432
    %v434 = vrcp.pop %v430
    %v435 = vrcp.pop %v433
    %v436 = vmul.f32 %v425, %v434
    %v437 = vmul.f32 %v427, %v435
    %v439 = vsel %vm262, %v436, 0
    %441 = vmatprep.subr.mxu0 0.0
    %442 = vmatpush1.msra.mxu0 %v251
    %443 = vmatprep.subr.mxu0 0.0
    %444 = vmatpush1.msra.mxu0 0.0
    %445 = vmatprep.subr.mxu0 0.0
    %446 = vmatpush1.msra.mxu0 0.0
    %447 = vmatprep.subr.mxu0 0.0
    %448 = vmatpush1.msra.mxu0 0.0
    %449 = vmatprep.subr.mxu0 0.0
    %450 = vmatpush1.msra.mxu0 0.0
    %451 = vmatprep.subr.mxu0 0.0
    %452 = vmatpush1.msra.mxu0 0.0
    %453 = vmatprep.subr.mxu0 0.0
    %454 = vmatpush1.msra.mxu0 0.0
    %455 = vmatprep.subr.mxu0 0.0
    %456 = vmatpush1.msra.mxu0 0.0
    %457 = vmatprep.subr.mxu0 0.0
    %458 = vmatpush1.msra.mxu0 0.0
    %459 = vmatprep.subr.mxu0 0.0
    %460 = vmatpush1.msra.mxu0 0.0
    %461 = vmatprep.subr.mxu0 0.0
    %462 = vmatpush1.msra.mxu0 0.0
    %463 = vmatprep.subr.mxu0 0.0
    %464 = vmatpush1.msra.mxu0 0.0
    %465 = vmatprep.subr.mxu0 0.0
    %466 = vmatpush1.msra.mxu0 0.0
    %467 = vmatprep.subr.mxu0 0.0
    %468 = vmatpush1.msra.mxu0 0.0
    %469 = vmatprep.subr.mxu0 0.0
    %470 = vmatpush1.msra.mxu0 0.0
    %471 = vmatprep.subr.mxu0 0.0
    %472 = vmatpush1.msra.mxu0 0.0
    %473 = vmatprep.subr.mxu0 0.0
    %474 = vmatpush1.msra.mxu0 0.0
    %475 = vmatprep.subr.mxu0 0.0
    %476 = vmatpush1.msra.mxu0 0.0
    %477 = vmatprep.subr.mxu0 0.0
    %478 = vmatpush1.msra.mxu0 0.0
    %479 = vmatprep.subr.mxu0 0.0
    %480 = vmatpush1.msra.mxu0 0.0
    %481 = vmatprep.subr.mxu0 0.0
    %482 = vmatpush1.msra.mxu0 0.0
    %483 = vmatprep.subr.mxu0 0.0
    %484 = vmatpush1.msra.mxu0 0.0
    %485 = vmatprep.subr.mxu0 0.0
    %486 = vmatpush1.msra.mxu0 0.0
    %487 = vmatprep.subr.mxu0 0.0
    %488 = vmatpush1.msra.mxu0 0.0
    %489 = vmatprep.subr.mxu0 0.0
    %490 = vmatpush1.msra.mxu0 0.0
    %491 = vmatprep.subr.mxu0 0.0
    %492 = vmatpush1.msra.mxu0 0.0
    %493 = vmatprep.subr.mxu0 0.0
    %494 = vmatpush1.msra.mxu0 0.0
    %495 = vmatprep.subr.mxu0 0.0
    %496 = vmatpush1.msra.mxu0 0.0
    %497 = vmatprep.subr.mxu0 0.0
    %498 = vmatpush1.msra.mxu0 0.0
    %499 = vmatprep.subr.mxu0 0.0
    %500 = vmatpush1.msra.mxu0 0.0
    %501 = vmatprep.subr.mxu0 0.0
    %502 = vmatpush1.msra.mxu0 0.0
    %503 = vmatprep.subr.mxu0 0.0
    %504 = vmatpush1.msra.mxu0 0.0
    %505 = vmatprep.mubr.f32.mxu0 0.0
    %506 = vmatmul.mubr.f32.gmra.mrb[0].mxu0 %v439
    %v507 = vpop.f32.mrb[0].mxu0
    %v508 = vadd.f32 0.0, %v507
    %v509 = vpop.f32.mrb[0].mxu0
    %510 = vdwg.mxu0
    %v512 = vsel %vm262, %v437, 0
    %514 = vmatprep.subr.mxu0 0.0
    %515 = vmatpush1.msra.mxu0 %v257
    %516 = vmatprep.subr.mxu0 0.0
    %517 = vmatpush1.msra.mxu0 0.0
    %518 = vmatprep.subr.mxu0 0.0
    %519 = vmatpush1.msra.mxu0 0.0
    %520 = vmatprep.subr.mxu0 0.0
    %521 = vmatpush1.msra.mxu0 0.0
    %522 = vmatprep.subr.mxu0 0.0
    %523 = vmatpush1.msra.mxu0 0.0
    %524 = vmatprep.subr.mxu0 0.0
    %525 = vmatpush1.msra.mxu0 0.0
    %526 = vmatprep.subr.mxu0 0.0
    %527 = vmatpush1.msra.mxu0 0.0
    %528 = vmatprep.subr.mxu0 0.0
    %529 = vmatpush1.msra.mxu0 0.0
    %530 = vmatprep.subr.mxu0 0.0
    %531 = vmatpush1.msra.mxu0 0.0
    %532 = vmatprep.subr.mxu0 0.0
    %533 = vmatpush1.msra.mxu0 0.0
    %534 = vmatprep.subr.mxu0 0.0
    %535 = vmatpush1.msra.mxu0 0.0
    %536 = vmatprep.subr.mxu0 0.0
    %537 = vmatpush1.msra.mxu0 0.0
    %538 = vmatprep.subr.mxu0 0.0
    %539 = vmatpush1.msra.mxu0 0.0
    %540 = vmatprep.subr.mxu0 0.0
    %541 = vmatpush1.msra.mxu0 0.0
    %542 = vmatprep.subr.mxu0 0.0
    %543 = vmatpush1.msra.mxu0 0.0
    %544 = vmatprep.subr.mxu0 0.0
    %545 = vmatpush1.msra.mxu0 0.0
    %546 = vmatprep.subr.mxu0 0.0
    %547 = vmatpush1.msra.mxu0 0.0
    %548 = vmatprep.subr.mxu0 0.0
    %549 = vmatpush1.msra.mxu0 0.0
    %550 = vmatprep.subr.mxu0 0.0
    %551 = vmatpush1.msra.mxu0 0.0
    %552 = vmatprep.subr.mxu0 0.0
    %553 = vmatpush1.msra.mxu0 0.0
    %554 = vmatprep.subr.mxu0 0.0
    %555 = vmatpush1.msra.mxu0 0.0
    %556 = vmatprep.subr.mxu0 0.0
    %557 = vmatpush1.msra.mxu0 0.0
    %558 = vmatprep.subr.mxu0 0.0
    %559 = vmatpush1.msra.mxu0 0.0
    %560 = vmatprep.subr.mxu0 0.0
    %561 = vmatpush1.msra.mxu0 0.0
    %562 = vmatprep.subr.mxu0 0.0
    %563 = vmatpush1.msra.mxu0 0.0
    %564 = vmatprep.subr.mxu0 0.0
    %565 = vmatpush1.msra.mxu0 0.0
    %566 = vmatprep.subr.mxu0 0.0
    %567 = vmatpush1.msra.mxu0 0.0
    %568 = vmatprep.subr.mxu0 0.0
    %569 = vmatpush1.msra.mxu0 0.0
    %570 = vmatprep.subr.mxu0 0.0
    %571 = vmatpush1.msra.mxu0 0.0
    %572 = vmatprep.subr.mxu0 0.0
    %573 = vmatpush1.msra.mxu0 0.0
    %574 = vmatprep.subr.mxu0 0.0
    %575 = vmatpush1.msra.mxu0 0.0
    %576 = vmatprep.subr.mxu0 0.0
    %577 = vmatpush1.msra.mxu0 0.0
    %578 = vmatprep.mubr.f32.mxu0 0.0
    %579 = vmatmul.mubr.f32.gmra.mrb[0].mxu0 %v512
    %v580 = vpop.f32.mrb[0].mxu0
    %v581 = vadd.f32 0.0, %v580
    %v582 = vpop.f32.mrb[0].mxu0
    %583 = vdwg.mxu0
    %584 = vst.msk [vmem:[#allocation2] sm:$0xff] %vm262, %v508
    %585 = vst.msk [vmem:[#allocation2 + $0x8] sm:$0xff] %vm262, %v581
    %586 = vrot.lane.b32.xlu0 %v249, 120
    %v587 = vpop.permute.xlu0 %586
    %588 = vrot.lane.b32.xlu0 %v249, 56
    %v589 = vpop.permute.xlu0 %588
    %v590 = vsel %vm262, %v587, 0
    %v592 = vsel %vm262, %v589, 0
    %594 = vmatprep.subr.mxu0 0.0
    %595 = vmatpush1.xpose.msra.mxu0 %v592
    %596 = vmatprep.subr.mxu0 0.0
    %597 = vmatpush1.xpose.msra.mxu0 0.0
    %598 = vmatprep.subr.mxu0 0.0
    %599 = vmatpush1.xpose.msra.mxu0 0.0
    %600 = vmatprep.subr.mxu0 0.0
    %601 = vmatpush1.xpose.msra.mxu0 0.0
    %602 = vmatprep.subr.mxu0 0.0
    %603 = vmatpush1.xpose.msra.mxu0 0.0
    %604 = vmatprep.subr.mxu0 0.0
    %605 = vmatpush1.xpose.msra.mxu0 0.0
    %606 = vmatprep.subr.mxu0 0.0
    %607 = vmatpush1.xpose.msra.mxu0 0.0
    %608 = vmatprep.subr.mxu0 0.0
    %609 = vmatpush1.xpose.msra.mxu0 0.0
    %610 = vmatprep.subr.mxu0 0.0
    %611 = vmatpush1.xpose.msra.mxu0 0.0
    %612 = vmatprep.subr.mxu0 0.0
    %613 = vmatpush1.xpose.msra.mxu0 0.0
    %614 = vmatprep.subr.mxu0 0.0
    %615 = vmatpush1.xpose.msra.mxu0 0.0
    %616 = vmatprep.subr.mxu0 0.0
    %617 = vmatpush1.xpose.msra.mxu0 0.0
    %618 = vmatprep.subr.mxu0 0.0
    %619 = vmatpush1.xpose.msra.mxu0 0.0
    %620 = vmatprep.subr.mxu0 0.0
    %621 = vmatpush1.xpose.msra.mxu0 0.0
    %622 = vmatprep.subr.mxu0 0.0
    %623 = vmatpush1.xpose.msra.mxu0 0.0
    %624 = vmatprep.subr.mxu0 0.0
    %625 = vmatpush1.xpose.msra.mxu0 0.0
    %626 = vmatprep.subr.mxu0 0.0
    %627 = vmatpush1.xpose.msra.mxu0 0.0
    %628 = vmatprep.subr.mxu0 0.0
    %629 = vmatpush1.xpose.msra.mxu0 0.0
    %630 = vmatprep.subr.mxu0 0.0
    %631 = vmatpush1.xpose.msra.mxu0 0.0
    %632 = vmatprep.subr.mxu0 0.0
    %633 = vmatpush1.xpose.msra.mxu0 0.0
    %634 = vmatprep.subr.mxu0 0.0
    %635 = vmatpush1.xpose.msra.mxu0 0.0
    %636 = vmatprep.subr.mxu0 0.0
    %637 = vmatpush1.xpose.msra.mxu0 0.0
    %638 = vmatprep.subr.mxu0 0.0
    %639 = vmatpush1.xpose.msra.mxu0 0.0
    %640 = vmatprep.subr.mxu0 0.0
    %641 = vmatpush1.xpose.msra.mxu0 0.0
    %642 = vmatprep.subr.mxu0 0.0
    %643 = vmatpush1.xpose.msra.mxu0 0.0
    %644 = vmatprep.subr.mxu0 0.0
    %645 = vmatpush1.xpose.msra.mxu0 0.0
    %646 = vmatprep.subr.mxu0 0.0
    %647 = vmatpush1.xpose.msra.mxu0 0.0
    %648 = vmatprep.subr.mxu0 0.0
    %649 = vmatpush1.xpose.msra.mxu0 0.0
    %650 = vmatprep.subr.mxu0 0.0
    %651 = vmatpush1.xpose.msra.mxu0 0.0
    %652 = vmatprep.subr.mxu0 0.0
    %653 = vmatpush1.xpose.msra.mxu0 0.0
    %654 = vmatprep.subr.mxu0 0.0
    %655 = vmatpush1.xpose.msra.mxu0 0.0
    %656 = vmatprep.subr.mxu0 0.0
    %657 = vmatpush1.xpose.msra.mxu0 0.0
    %658 = vmatprep.mubr.f32.mxu0 0.0
    %659 = vmatmul.mubr.f32.gmra.mrb[0].mxu0 %v590
    %v660 = vpop.f32.mrb[0].mxu0
    %v661 = vadd.f32 0.0, %v660
    %v662 = vpop.f32.mrb[0].mxu0
    %663 = vdwg.mxu0
    %664 = vrot.lane.b32.xlu0 %v255, 120
    %v665 = vpop.permute.xlu0 %664
    %666 = vrot.lane.b32.xlu0 %v255, 56
    %v667 = vpop.permute.xlu0 %666
    %v668 = vsel %vm262, %v665, 0
    %v670 = vsel %vm262, %v667, 0
    %672 = vmatprep.subr.mxu0 0.0
    %673 = vmatpush1.xpose.msra.mxu0 %v670
    %674 = vmatprep.subr.mxu0 0.0
    %675 = vmatpush1.xpose.msra.mxu0 0.0
    %676 = vmatprep.subr.mxu0 0.0
    %677 = vmatpush1.xpose.msra.mxu0 0.0
    %678 = vmatprep.subr.mxu0 0.0
    %679 = vmatpush1.xpose.msra.mxu0 0.0
    %680 = vmatprep.subr.mxu0 0.0
    %681 = vmatpush1.xpose.msra.mxu0 0.0
    %682 = vmatprep.subr.mxu0 0.0
    %683 = vmatpush1.xpose.msra.mxu0 0.0
    %684 = vmatprep.subr.mxu0 0.0
    %685 = vmatpush1.xpose.msra.mxu0 0.0
    %686 = vmatprep.subr.mxu0 0.0
    %687 = vmatpush1.xpose.msra.mxu0 0.0
    %688 = vmatprep.subr.mxu0 0.0
    %689 = vmatpush1.xpose.msra.mxu0 0.0
    %690 = vmatprep.subr.mxu0 0.0
    %691 = vmatpush1.xpose.msra.mxu0 0.0
    %692 = vmatprep.subr.mxu0 0.0
    %693 = vmatpush1.xpose.msra.mxu0 0.0
    %694 = vmatprep.subr.mxu0 0.0
    %695 = vmatpush1.xpose.msra.mxu0 0.0
    %696 = vmatprep.subr.mxu0 0.0
    %697 = vmatpush1.xpose.msra.mxu0 0.0
    %698 = vmatprep.subr.mxu0 0.0
    %699 = vmatpush1.xpose.msra.mxu0 0.0
    %700 = vmatprep.subr.mxu0 0.0
    %701 = vmatpush1.xpose.msra.mxu0 0.0
    %702 = vmatprep.subr.mxu0 0.0
    %703 = vmatpush1.xpose.msra.mxu0 0.0
    %704 = vmatprep.subr.mxu0 0.0
    %705 = vmatpush1.xpose.msra.mxu0 0.0
    %706 = vmatprep.subr.mxu0 0.0
    %707 = vmatpush1.xpose.msra.mxu0 0.0
    %708 = vmatprep.subr.mxu0 0.0
    %709 = vmatpush1.xpose.msra.mxu0 0.0
    %710 = vmatprep.subr.mxu0 0.0
    %711 = vmatpush1.xpose.msra.mxu0 0.0
    %712 = vmatprep.subr.mxu0 0.0
    %713 = vmatpush1.xpose.msra.mxu0 0.0
    %714 = vmatprep.subr.mxu0 0.0
    %715 = vmatpush1.xpose.msra.mxu0 0.0
    %716 = vmatprep.subr.mxu0 0.0
    %717 = vmatpush1.xpose.msra.mxu0 0.0
    %718 = vmatprep.subr.mxu0 0.0
    %719 = vmatpush1.xpose.msra.mxu0 0.0
    %720 = vmatprep.subr.mxu0 0.0
    %721 = vmatpush1.xpose.msra.mxu0 0.0
    %722 = vmatprep.subr.mxu0 0.0
    %723 = vmatpush1.xpose.msra.mxu0 0.0
    %724 = vmatprep.subr.mxu0 0.0
    %725 = vmatpush1.xpose.msra.mxu0 0.0
    %726 = vmatprep.subr.mxu0 0.0
    %727 = vmatpush1.xpose.msra.mxu0 0.0
    %728 = vmatprep.subr.mxu0 0.0
    %729 = vmatpush1.xpose.msra.mxu0 0.0
    %730 = vmatprep.subr.mxu0 0.0
    %731 = vmatpush1.xpose.msra.mxu0 0.0
    %732 = vmatprep.subr.mxu0 0.0
    %733 = vmatpush1.xpose.msra.mxu0 0.0
    %734 = vmatprep.subr.mxu0 0.0
    %735 = vmatpush1.xpose.msra.mxu0 0.0
    %736 = vmatprep.mubr.f32.mxu0 0.0
    %737 = vmatmul.mubr.f32.gmra.mrb[0].mxu0 %v668
    %v738 = vpop.f32.mrb[0].mxu0
    %v739 = vadd.f32 0.0, %v738
    %v740 = vpop.f32.mrb[0].mxu0
    %741 = vdwg.mxu0
    %v742 = vmul.f32 %v661, 0.35355338
    %v743 = vmul.f32 %v739, 0.35355338
    %v744 = vsel %vm262, %v742, -inf
    %745 = vmax.xlane.f32.xlu0 %v744
    %v746 = vpop.xlane.xlu0 %745
    %v747 = vsel %vm262, %v743, -inf
    %748 = vmax.xlane.f32.xlu0 %v747
    %v749 = vpop.xlane.xlu0 %748
    %v750 = vsub.f32 %v742, %v746
    %v751 = vsub.f32 %v743, %v749
    %v752 = vmul.f32 %v750, 1.442695
    %v753 = vpow.pop %v752
    %v754 = vmul.f32 %v751, 1.442695
    %v755 = vpow.pop %v754
    %v756 = vsel %vm262, %v753, 0.0
    %757 = vadd.xlane.f32.xlu0 %v756
    %v758 = vpop.xlane.xlu0 %757
    %v759 = vsel %vm262, %v755, 0.0
    %760 = vadd.xlane.f32.xlu0 %v759
    %v761 = vpop.xlane.xlu0 %760
    %v762 = vrcp.pop %v758
    %v763 = vrcp.pop %v761
    %v764 = vmul.f32 %v753, %v762
    %v765 = vmul.f32 %v755, %v763
    %767 = vrot.lane.b32.xlu0 %v251, 120
    %v768 = vpop.permute.xlu0 %767
    %v771 = vsel %vm262, %v764, 0
    %773 = vmatprep.subr.mxu0 0.0
    %774 = vmatpush1.msra.mxu0 %v768
    %775 = vmatprep.subr.mxu0 0.0
    %776 = vmatpush1.msra.mxu0 0.0
    %777 = vmatprep.subr.mxu0 0.0
    %778 = vmatpush1.msra.mxu0 0.0
    %779 = vmatprep.subr.mxu0 0.0
    %780 = vmatpush1.msra.mxu0 0.0
    %781 = vmatprep.subr.mxu0 0.0
    %782 = vmatpush1.msra.mxu0 0.0
    %783 = vmatprep.subr.mxu0 0.0
    %784 = vmatpush1.msra.mxu0 0.0
    %785 = vmatprep.subr.mxu0 0.0
    %786 = vmatpush1.msra.mxu0 0.0
    %787 = vmatprep.subr.mxu0 0.0
    %788 = vmatpush1.msra.mxu0 0.0
    %789 = vmatprep.subr.mxu0 0.0
    %790 = vmatpush1.msra.mxu0 0.0
    %791 = vmatprep.subr.mxu0 0.0
    %792 = vmatpush1.msra.mxu0 0.0
    %793 = vmatprep.subr.mxu0 0.0
    %794 = vmatpush1.msra.mxu0 0.0
    %795 = vmatprep.subr.mxu0 0.0
    %796 = vmatpush1.msra.mxu0 0.0
    %797 = vmatprep.subr.mxu0 0.0
    %798 = vmatpush1.msra.mxu0 0.0
    %799 = vmatprep.subr.mxu0 0.0
    %800 = vmatpush1.msra.mxu0 0.0
    %801 = vmatprep.subr.mxu0 0.0
    %802 = vmatpush1.msra.mxu0 0.0
    %803 = vmatprep.subr.mxu0 0.0
    %804 = vmatpush1.msra.mxu0 0.0
    %805 = vmatprep.subr.mxu0 0.0
    %806 = vmatpush1.msra.mxu0 0.0
    %807 = vmatprep.subr.mxu0 0.0
    %808 = vmatpush1.msra.mxu0 0.0
    %809 = vmatprep.subr.mxu0 0.0
    %810 = vmatpush1.msra.mxu0 0.0
    %811 = vmatprep.subr.mxu0 0.0
    %812 = vmatpush1.msra.mxu0 0.0
    %813 = vmatprep.subr.mxu0 0.0
    %814 = vmatpush1.msra.mxu0 0.0
    %815 = vmatprep.subr.mxu0 0.0
    %816 = vmatpush1.msra.mxu0 0.0
    %817 = vmatprep.subr.mxu0 0.0
    %818 = vmatpush1.msra.mxu0 0.0
    %819 = vmatprep.subr.mxu0 0.0
    %820 = vmatpush1.msra.mxu0 0.0
    %821 = vmatprep.subr.mxu0 0.0
    %822 = vmatpush1.msra.mxu0 0.0
    %823 = vmatprep.subr.mxu0 0.0
    %824 = vmatpush1.msra.mxu0 0.0
    %825 = vmatprep.subr.mxu0 0.0
    %826 = vmatpush1.msra.mxu0 0.0
    %827 = vmatprep.subr.mxu0 0.0
    %828 = vmatpush1.msra.mxu0 0.0
    %829 = vmatprep.subr.mxu0 0.0
    %830 = vmatpush1.msra.mxu0 0.0
    %831 = vmatprep.subr.mxu0 0.0
    %832 = vmatpush1.msra.mxu0 0.0
    %833 = vmatprep.subr.mxu0 0.0
    %834 = vmatpush1.msra.mxu0 0.0
    %835 = vmatprep.subr.mxu0 0.0
    %836 = vmatpush1.msra.mxu0 0.0
    %837 = vmatprep.mubr.f32.mxu0 0.0
    %838 = vmatmul.mubr.f32.gmra.mrb[0].mxu0 %v771
    %v839 = vpop.f32.mrb[0].mxu0
    %v840 = vadd.f32 0.0, %v839
    %v841 = vpop.f32.mrb[0].mxu0
    %842 = vdwg.mxu0
    %844 = vrot.lane.b32.xlu0 %v257, 120
    %v845 = vpop.permute.xlu0 %844
    %v848 = vsel %vm262, %v765, 0
    %850 = vmatprep.subr.mxu0 0.0
    %851 = vmatpush1.msra.mxu0 %v845
    %852 = vmatprep.subr.mxu0 0.0
    %853 = vmatpush1.msra.mxu0 0.0
    %854 = vmatprep.subr.mxu0 0.0
    %855 = vmatpush1.msra.mxu0 0.0
    %856 = vmatprep.subr.mxu0 0.0
    %857 = vmatpush1.msra.mxu0 0.0
    %858 = vmatprep.subr.mxu0 0.0
    %859 = vmatpush1.msra.mxu0 0.0
    %860 = vmatprep.subr.mxu0 0.0
    %861 = vmatpush1.msra.mxu0 0.0
    %862 = vmatprep.subr.mxu0 0.0
    %863 = vmatpush1.msra.mxu0 0.0
    %864 = vmatprep.subr.mxu0 0.0
    %865 = vmatpush1.msra.mxu0 0.0
    %866 = vmatprep.subr.mxu0 0.0
    %867 = vmatpush1.msra.mxu0 0.0
    %868 = vmatprep.subr.mxu0 0.0
    %869 = vmatpush1.msra.mxu0 0.0
    %870 = vmatprep.subr.mxu0 0.0
    %871 = vmatpush1.msra.mxu0 0.0
    %872 = vmatprep.subr.mxu0 0.0
    %873 = vmatpush1.msra.mxu0 0.0
    %874 = vmatprep.subr.mxu0 0.0
    %875 = vmatpush1.msra.mxu0 0.0
    %876 = vmatprep.subr.mxu0 0.0
    %877 = vmatpush1.msra.mxu0 0.0
    %878 = vmatprep.subr.mxu0 0.0
    %879 = vmatpush1.msra.mxu0 0.0
    %880 = vmatprep.subr.mxu0 0.0
    %881 = vmatpush1.msra.mxu0 0.0
    %882 = vmatprep.subr.mxu0 0.0
    %883 = vmatpush1.msra.mxu0 0.0
    %884 = vmatprep.subr.mxu0 0.0
    %885 = vmatpush1.msra.mxu0 0.0
    %886 = vmatprep.subr.mxu0 0.0
    %887 = vmatpush1.msra.mxu0 0.0
    %888 = vmatprep.subr.mxu0 0.0
    %889 = vmatpush1.msra.mxu0 0.0
    %890 = vmatprep.subr.mxu0 0.0
    %891 = vmatpush1.msra.mxu0 0.0
    %892 = vmatprep.subr.mxu0 0.0
    %893 = vmatpush1.msra.mxu0 0.0
    %894 = vmatprep.subr.mxu0 0.0
    %895 = vmatpush1.msra.mxu0 0.0
    %896 = vmatprep.subr.mxu0 0.0
    %897 = vmatpush1.msra.mxu0 0.0
    %898 = vmatprep.subr.mxu0 0.0
    %899 = vmatpush1.msra.mxu0 0.0
    %900 = vmatprep.subr.mxu0 0.0
    %901 = vmatpush1.msra.mxu0 0.0
    %902 = vmatprep.subr.mxu0 0.0
    %903 = vmatpush1.msra.mxu0 0.0
    %904 = vmatprep.subr.mxu0 0.0
    %905 = vmatpush1.msra.mxu0 0.0
    %906 = vmatprep.subr.mxu0 0.0
    %907 = vmatpush1.msra.mxu0 0.0
    %908 = vmatprep.subr.mxu0 0.0
    %909 = vmatpush1.msra.mxu0 0.0
    %910 = vmatprep.subr.mxu0 0.0
    %911 = vmatpush1.msra.mxu0 0.0
    %912 = vmatprep.subr.mxu0 0.0
    %913 = vmatpush1.msra.mxu0 0.0
    %914 = vmatprep.mubr.f32.mxu0 0.0
    %915 = vmatmul.mubr.f32.gmra.mrb[0].mxu0 %v848
    %v916 = vpop.f32.mrb[0].mxu0
    %v917 = vadd.f32 0.0, %v916
    %v918 = vpop.f32.mrb[0].mxu0
    %919 = vdwg.mxu0
    %922 = vrot.lane.b32.xlu0 %v840, 8
    %v923 = vpop.permute.xlu0 %922
    %924 = vrot.lane.b32.xlu0 %v917, 8
    %v925 = vpop.permute.xlu0 %924
    %vm928 = vcmask 130112
    %929 = vst.msk [vmem:[#allocation2] sm:$0xff] %vm928, %v923
    %930 = vst.msk [vmem:[#allocation2 + $0x8] sm:$0xff] %vm928, %v925
    %931 = vrot.lane.b32.xlu0 %v249, 112
    %v932 = vpop.permute.xlu0 %931
    %933 = vrot.lane.b32.xlu0 %v249, 48
    %v934 = vpop.permute.xlu0 %933
    %v935 = vsel %vm262, %v932, 0
    %v937 = vsel %vm262, %v934, 0
    %939 = vmatprep.subr.mxu0 0.0
    %940 = vmatpush1.xpose.msra.mxu0 %v937
    %941 = vmatprep.subr.mxu0 0.0
    %942 = vmatpush1.xpose.msra.mxu0 0.0
    %943 = vmatprep.subr.mxu0 0.0
    %944 = vmatpush1.xpose.msra.mxu0 0.0
    %945 = vmatprep.subr.mxu0 0.0
    %946 = vmatpush1.xpose.msra.mxu0 0.0
    %947 = vmatprep.subr.mxu0 0.0
    %948 = vmatpush1.xpose.msra.mxu0 0.0
    %949 = vmatprep.subr.mxu0 0.0
    %950 = vmatpush1.xpose.msra.mxu0 0.0
    %951 = vmatprep.subr.mxu0 0.0
    %952 = vmatpush1.xpose.msra.mxu0 0.0
    %953 = vmatprep.subr.mxu0 0.0
    %954 = vmatpush1.xpose.msra.mxu0 0.0
    %955 = vmatprep.subr.mxu0 0.0
    %956 = vmatpush1.xpose.msra.mxu0 0.0
    %957 = vmatprep.subr.mxu0 0.0
    %958 = vmatpush1.xpose.msra.mxu0 0.0
    %959 = vmatprep.subr.mxu0 0.0
    %960 = vmatpush1.xpose.msra.mxu0 0.0
    %961 = vmatprep.subr.mxu0 0.0
    %962 = vmatpush1.xpose.msra.mxu0 0.0
    %963 = vmatprep.subr.mxu0 0.0
    %964 = vmatpush1.xpose.msra.mxu0 0.0
    %965 = vmatprep.subr.mxu0 0.0
    %966 = vmatpush1.xpose.msra.mxu0 0.0
    %967 = vmatprep.subr.mxu0 0.0
    %968 = vmatpush1.xpose.msra.mxu0 0.0
    %969 = vmatprep.subr.mxu0 0.0
    %970 = vmatpush1.xpose.msra.mxu0 0.0
    %971 = vmatprep.subr.mxu0 0.0
    %972 = vmatpush1.xpose.msra.mxu0 0.0
    %973 = vmatprep.subr.mxu0 0.0
    %974 = vmatpush1.xpose.msra.mxu0 0.0
    %975 = vmatprep.subr.mxu0 0.0
    %976 = vmatpush1.xpose.msra.mxu0 0.0
    %977 = vmatprep.subr.mxu0 0.0
    %978 = vmatpush1.xpose.msra.mxu0 0.0
    %979 = vmatprep.subr.mxu0 0.0
    %980 = vmatpush1.xpose.msra.mxu0 0.0
    %981 = vmatprep.subr.mxu0 0.0
    %982 = vmatpush1.xpose.msra.mxu0 0.0
    %983 = vmatprep.subr.mxu0 0.0
    %984 = vmatpush1.xpose.msra.mxu0 0.0
    %985 = vmatprep.subr.mxu0 0.0
    %986 = vmatpush1.xpose.msra.mxu0 0.0
    %987 = vmatprep.subr.mxu0 0.0
    %988 = vmatpush1.xpose.msra.mxu0 0.0
    %989 = vmatprep.subr.mxu0 0.0
    %990 = vmatpush1.xpose.msra.mxu0 0.0
    %991 = vmatprep.subr.mxu0 0.0
    %992 = vmatpush1.xpose.msra.mxu0 0.0
    %993 = vmatprep.subr.mxu0 0.0
    %994 = vmatpush1.xpose.msra.mxu0 0.0
    %995 = vmatprep.subr.mxu0 0.0
    %996 = vmatpush1.xpose.msra.mxu0 0.0
    %997 = vmatprep.subr.mxu0 0.0
    %998 = vmatpush1.xpose.msra.mxu0 0.0
    %999 = vmatprep.subr.mxu0 0.0
    %1000 = vmatpush1.xpose.msra.mxu0 0.0
    %1001 = vmatprep.subr.mxu0 0.0
    %1002 = vmatpush1.xpose.msra.mxu0 0.0
    %1003 = vmatprep.mubr.f32.mxu0 0.0
    %1004 = vmatmul.mubr.f32.gmra.mrb[0].mxu0 %v935
    %v1005 = vpop.f32.mrb[0].mxu0
    %v1006 = vadd.f32 0.0, %v1005
    %v1007 = vpop.f32.mrb[0].mxu0
    %1008 = vdwg.mxu0
    %1009 = vrot.lane.b32.xlu0 %v255, 112
    %v1010 = vpop.permute.xlu0 %1009
    %1011 = vrot.lane.b32.xlu0 %v255, 48
    %v1012 = vpop.permute.xlu0 %1011
    %v1013 = vsel %vm262, %v1010, 0
    %v1015 = vsel %vm262, %v1012, 0
    %1017 = vmatprep.subr.mxu0 0.0
    %1018 = vmatpush1.xpose.msra.mxu0 %v1015
    %1019 = vmatprep.subr.mxu0 0.0
    %1020 = vmatpush1.xpose.msra.mxu0 0.0
    %1021 = vmatprep.subr.mxu0 0.0
    %1022 = vmatpush1.xpose.msra.mxu0 0.0
    %1023 = vmatprep.subr.mxu0 0.0
    %1024 = vmatpush1.xpose.msra.mxu0 0.0
    %1025 = vmatprep.subr.mxu0 0.0
    %1026 = vmatpush1.xpose.msra.mxu0 0.0
    %1027 = vmatprep.subr.mxu0 0.0
    %1028 = vmatpush1.xpose.msra.mxu0 0.0
    %1029 = vmatprep.subr.mxu0 0.0
    %1030 = vmatpush1.xpose.msra.mxu0 0.0
    %1031 = vmatprep.subr.mxu0 0.0
    %1032 = vmatpush1.xpose.msra.mxu0 0.0
    %1033 = vmatprep.subr.mxu0 0.0
    %1034 = vmatpush1.xpose.msra.mxu0 0.0
    %1035 = vmatprep.subr.mxu0 0.0
    %1036 = vmatpush1.xpose.msra.mxu0 0.0
    %1037 = vmatprep.subr.mxu0 0.0
    %1038 = vmatpush1.xpose.msra.mxu0 0.0
    %1039 = vmatprep.subr.mxu0 0.0
    %1040 = vmatpush1.xpose.msra.mxu0 0.0
    %1041 = vmatprep.subr.mxu0 0.0
    %1042 = vmatpush1.xpose.msra.mxu0 0.0
    %1043 = vmatprep.subr.mxu0 0.0
    %1044 = vmatpush1.xpose.msra.mxu0 0.0
    %1045 = vmatprep.subr.mxu0 0.0
    %1046 = vmatpush1.xpose.msra.mxu0 0.0
    %1047 = vmatprep.subr.mxu0 0.0
    %1048 = vmatpush1.xpose.msra.mxu0 0.0
    %1049 = vmatprep.subr.mxu0 0.0
    %1050 = vmatpush1.xpose.msra.mxu0 0.0
    %1051 = vmatprep.subr.mxu0 0.0
    %1052 = vmatpush1.xpose.msra.mxu0 0.0
    %1053 = vmatprep.subr.mxu0 0.0
    %1054 = vmatpush1.xpose.msra.mxu0 0.0
    %1055 = vmatprep.subr.mxu0 0.0
    %1056 = vmatpush1.xpose.msra.mxu0 0.0
    %1057 = vmatprep.subr.mxu0 0.0
    %1058 = vmatpush1.xpose.msra.mxu0 0.0
    %1059 = vmatprep.subr.mxu0 0.0
    %1060 = vmatpush1.xpose.msra.mxu0 0.0
    %1061 = vmatprep.subr.mxu0 0.0
    %1062 = vmatpush1.xpose.msra.mxu0 0.0
    %1063 = vmatprep.subr.mxu0 0.0
    %1064 = vmatpush1.xpose.msra.mxu0 0.0
    %1065 = vmatprep.subr.mxu0 0.0
    %1066 = vmatpush1.xpose.msra.mxu0 0.0
    %1067 = vmatprep.subr.mxu0 0.0
    %1068 = vmatpush1.xpose.msra.mxu0 0.0
    %1069 = vmatprep.subr.mxu0 0.0
    %1070 = vmatpush1.xpose.msra.mxu0 0.0
    %1071 = vmatprep.subr.mxu0 0.0
    %1072 = vmatpush1.xpose.msra.mxu0 0.0
    %1073 = vmatprep.subr.mxu0 0.0
    %1074 = vmatpush1.xpose.msra.mxu0 0.0
    %1075 = vmatprep.subr.mxu0 0.0
    %1076 = vmatpush1.xpose.msra.mxu0 0.0
    %1077 = vmatprep.subr.mxu0 0.0
    %1078 = vmatpush1.xpose.msra.mxu0 0.0
    %1079 = vmatprep.subr.mxu0 0.0
    %1080 = vmatpush1.xpose.msra.mxu0 0.0
    %1081 = vmatprep.mubr.f32.mxu0 0.0
    %1082 = vmatmul.mubr.f32.gmra.mrb[0].mxu0 %v1013
    %v1083 = vpop.f32.mrb[0].mxu0
    %v1084 = vadd.f32 0.0, %v1083
    %v1085 = vpop.f32.mrb[0].mxu0
    %1086 = vdwg.mxu0
    %v1087 = vmul.f32 %v1006, 0.35355338
    %v1088 = vmul.f32 %v1084, 0.35355338
    %v1089 = vsel %vm262, %v1087, -inf
    %1090 = vmax.xlane.f32.xlu0 %v1089
    %v1091 = vpop.xlane.xlu0 %1090
    %v1092 = vsel %vm262, %v1088, -inf
    %1093 = vmax.xlane.f32.xlu0 %v1092
    %v1094 = vpop.xlane.xlu0 %1093
    %v1095 = vsub.f32 %v1087, %v1091
    %v1096 = vsub.f32 %v1088, %v1094
    %v1097 = vmul.f32 %v1095, 1.442695
    %v1098 = vpow.pop %v1097
    %v1099 = vmul.f32 %v1096, 1.442695
    %v1100 = vpow.pop %v1099
    %v1101 = vsel %vm262, %v1098, 0.0
    %1102 = vadd.xlane.f32.xlu0 %v1101
    %v1103 = vpop.xlane.xlu0 %1102
    %v1104 = vsel %vm262, %v1100, 0.0
    %1105 = vadd.xlane.f32.xlu0 %v1104
    %v1106 = vpop.xlane.xlu0 %1105
    %v1107 = vrcp.pop %v1103
    %v1108 = vrcp.pop %v1106
    %v1109 = vmul.f32 %v1098, %v1107
    %v1110 = vmul.f32 %v1100, %v1108
    %1111 = vrot.lane.b32.xlu0 %v251, 112
    %v1112 = vpop.permute.xlu0 %1111
    %v1115 = vsel %vm262, %v1109, 0
    %1117 = vmatprep.subr.mxu0 0.0
    %1118 = vmatpush1.msra.mxu0 %v1112
    %1119 = vmatprep.subr.mxu0 0.0
    %1120 = vmatpush1.msra.mxu0 0.0
    %1121 = vmatprep.subr.mxu0 0.0
    %1122 = vmatpush1.msra.mxu0 0.0
    %1123 = vmatprep.subr.mxu0 0.0
    %1124 = vmatpush1.msra.mxu0 0.0
    %1125 = vmatprep.subr.mxu0 0.0
    %1126 = vmatpush1.msra.mxu0 0.0
    %1127 = vmatprep.subr.mxu0 0.0
    %1128 = vmatpush1.msra.mxu0 0.0
    %1129 = vmatprep.subr.mxu0 0.0
    %1130 = vmatpush1.msra.mxu0 0.0
    %1131 = vmatprep.subr.mxu0 0.0
    %1132 = vmatpush1.msra.mxu0 0.0
    %1133 = vmatprep.subr.mxu0 0.0
    %1134 = vmatpush1.msra.mxu0 0.0
    %1135 = vmatprep.subr.mxu0 0.0
    %1136 = vmatpush1.msra.mxu0 0.0
    %1137 = vmatprep.subr.mxu0 0.0
    %1138 = vmatpush1.msra.mxu0 0.0
    %1139 = vmatprep.subr.mxu0 0.0
    %1140 = vmatpush1.msra.mxu0 0.0
    %1141 = vmatprep.subr.mxu0 0.0
    %1142 = vmatpush1.msra.mxu0 0.0
    %1143 = vmatprep.subr.mxu0 0.0
    %1144 = vmatpush1.msra.mxu0 0.0
    %1145 = vmatprep.subr.mxu0 0.0
    %1146 = vmatpush1.msra.mxu0 0.0
    %1147 = vmatprep.subr.mxu0 0.0
    %1148 = vmatpush1.msra.mxu0 0.0
    %1149 = vmatprep.subr.mxu0 0.0
    %1150 = vmatpush1.msra.mxu0 0.0
    %1151 = vmatprep.subr.mxu0 0.0
    %1152 = vmatpush1.msra.mxu0 0.0
    %1153 = vmatprep.subr.mxu0 0.0
    %1154 = vmatpush1.msra.mxu0 0.0
    %1155 = vmatprep.subr.mxu0 0.0
    %1156 = vmatpush1.msra.mxu0 0.0
    %1157 = vmatprep.subr.mxu0 0.0
    %1158 = vmatpush1.msra.mxu0 0.0
    %1159 = vmatprep.subr.mxu0 0.0
    %1160 = vmatpush1.msra.mxu0 0.0
    %1161 = vmatprep.subr.mxu0 0.0
    %1162 = vmatpush1.msra.mxu0 0.0
    %1163 = vmatprep.subr.mxu0 0.0
    %1164 = vmatpush1.msra.mxu0 0.0
    %1165 = vmatprep.subr.mxu0 0.0
    %1166 = vmatpush1.msra.mxu0 0.0
    %1167 = vmatprep.subr.mxu0 0.0
    %1168 = vmatpush1.msra.mxu0 0.0
    %1169 = vmatprep.subr.mxu0 0.0
    %1170 = vmatpush1.msra.mxu0 0.0
    %1171 = vmatprep.subr.mxu0 0.0
    %1172 = vmatpush1.msra.mxu0 0.0
    %1173 = vmatprep.subr.mxu0 0.0
    %1174 = vmatpush1.msra.mxu0 0.0
    %1175 = vmatprep.subr.mxu0 0.0
    %1176 = vmatpush1.msra.mxu0 0.0
    %1177 = vmatprep.subr.mxu0 0.0
    %1178 = vmatpush1.msra.mxu0 0.0
    %1179 = vmatprep.subr.mxu0 0.0
    %1180 = vmatpush1.msra.mxu0 0.0
    %1181 = vmatprep.mubr.f32.mxu0 0.0
    %1182 = vmatmul.mubr.f32.gmra.mrb[0].mxu0 %v1115
    %v1183 = vpop.f32.mrb[0].mxu0
    %v1184 = vadd.f32 0.0, %v1183
    %v1185 = vpop.f32.mrb[0].mxu0
    %1186 = vdwg.mxu0
    %1187 = vrot.lane.b32.xlu0 %v257, 112
    %v1188 = vpop.permute.xlu0 %1187
    %v1191 = vsel %vm262, %v1110, 0
    %1193 = vmatprep.subr.mxu0 0.0
    %1194 = vmatpush1.msra.mxu0 %v1188
    %1195 = vmatprep.subr.mxu0 0.0
    %1196 = vmatpush1.msra.mxu0 0.0
    %1197 = vmatprep.subr.mxu0 0.0
    %1198 = vmatpush1.msra.mxu0 0.0
    %1199 = vmatprep.subr.mxu0 0.0
    %1200 = vmatpush1.msra.mxu0 0.0
    %1201 = vmatprep.subr.mxu0 0.0
    %1202 = vmatpush1.msra.mxu0 0.0
    %1203 = vmatprep.subr.mxu0 0.0
    %1204 = vmatpush1.msra.mxu0 0.0
    %1205 = vmatprep.subr.mxu0 0.0
    %1206 = vmatpush1.msra.mxu0 0.0
    %1207 = vmatprep.subr.mxu0 0.0
    %1208 = vmatpush1.msra.mxu0 0.0
    %1209 = vmatprep.subr.mxu0 0.0
    %1210 = vmatpush1.msra.mxu0 0.0
    %1211 = vmatprep.subr.mxu0 0.0
    %1212 = vmatpush1.msra.mxu0 0.0
    %1213 = vmatprep.subr.mxu0 0.0
    %1214 = vmatpush1.msra.mxu0 0.0
    %1215 = vmatprep.subr.mxu0 0.0
    %1216 = vmatpush1.msra.mxu0 0.0
    %1217 = vmatprep.subr.mxu0 0.0
    %1218 = vmatpush1.msra.mxu0 0.0
    %1219 = vmatprep.subr.mxu0 0.0
    %1220 = vmatpush1.msra.mxu0 0.0
    %1221 = vmatprep.subr.mxu0 0.0
    %1222 = vmatpush1.msra.mxu0 0.0
    %1223 = vmatprep.subr.mxu0 0.0
    %1224 = vmatpush1.msra.mxu0 0.0
    %1225 = vmatprep.subr.mxu0 0.0
    %1226 = vmatpush1.msra.mxu0 0.0
    %1227 = vmatprep.subr.mxu0 0.0
    %1228 = vmatpush1.msra.mxu0 0.0
    %1229 = vmatprep.subr.mxu0 0.0
    %1230 = vmatpush1.msra.mxu0 0.0
    %1231 = vmatprep.subr.mxu0 0.0
    %1232 = vmatpush1.msra.mxu0 0.0
    %1233 = vmatprep.subr.mxu0 0.0
    %1234 = vmatpush1.msra.mxu0 0.0
    %1235 = vmatprep.subr.mxu0 0.0
    %1236 = vmatpush1.msra.mxu0 0.0
    %1237 = vmatprep.subr.mxu0 0.0
    %1238 = vmatpush1.msra.mxu0 0.0
    %1239 = vmatprep.subr.mxu0 0.0
    %1240 = vmatpush1.msra.mxu0 0.0
    %1241 = vmatprep.subr.mxu0 0.0
    %1242 = vmatpush1.msra.mxu0 0.0
    %1243 = vmatprep.subr.mxu0 0.0
    %1244 = vmatpush1.msra.mxu0 0.0
    %1245 = vmatprep.subr.mxu0 0.0
    %1246 = vmatpush1.msra.mxu0 0.0
    %1247 = vmatprep.subr.mxu0 0.0
    %1248 = vmatpush1.msra.mxu0 0.0
    %1249 = vmatprep.subr.mxu0 0.0
    %1250 = vmatpush1.msra.mxu0 0.0
    %1251 = vmatprep.subr.mxu0 0.0
    %1252 = vmatpush1.msra.mxu0 0.0
    %1253 = vmatprep.subr.mxu0 0.0
    %1254 = vmatpush1.msra.mxu0 0.0
    %1255 = vmatprep.subr.mxu0 0.0
    %1256 = vmatpush1.msra.mxu0 0.0
    %1257 = vmatprep.mubr.f32.mxu0 0.0
    %1258 = vmatmul.mubr.f32.gmra.mrb[0].mxu0 %v1191
    %v1259 = vpop.f32.mrb[0].mxu0
    %v1260 = vadd.f32 0.0, %v1259
    %v1261 = vpop.f32.mrb[0].mxu0
    %1262 = vdwg.mxu0
    %1265 = vrot.lane.b32.xlu0 %v1184, 16
    %v1266 = vpop.permute.xlu0 %1265
    %1267 = vrot.lane.b32.xlu0 %v1260, 16
    %v1268 = vpop.permute.xlu0 %1267
    %vm1271 = vcmask 195712
    %1272 = vst.msk [vmem:[#allocation2] sm:$0xff] %vm1271, %v1266
    %1273 = vst.msk [vmem:[#allocation2 + $0x8] sm:$0xff] %vm1271, %v1268
    %1274 = vrot.lane.b32.xlu0 %v249, 104
    %v1275 = vpop.permute.xlu0 %1274
    %1276 = vrot.lane.b32.xlu0 %v249, 40
    %v1277 = vpop.permute.xlu0 %1276
    %v1278 = vsel %vm262, %v1275, 0
    %v1280 = vsel %vm262, %v1277, 0
    %1282 = vmatprep.subr.mxu0 0.0
    %1283 = vmatpush1.xpose.msra.mxu0 %v1280
    %1284 = vmatprep.subr.mxu0 0.0
    %1285 = vmatpush1.xpose.msra.mxu0 0.0
    %1286 = vmatprep.subr.mxu0 0.0
    %1287 = vmatpush1.xpose.msra.mxu0 0.0
    %1288 = vmatprep.subr.mxu0 0.0
    %1289 = vmatpush1.xpose.msra.mxu0 0.0
    %1290 = vmatprep.subr.mxu0 0.0
    %1291 = vmatpush1.xpose.msra.mxu0 0.0
    %1292 = vmatprep.subr.mxu0 0.0
    %1293 = vmatpush1.xpose.msra.mxu0 0.0
    %1294 = vmatprep.subr.mxu0 0.0
    %1295 = vmatpush1.xpose.msra.mxu0 0.0
    %1296 = vmatprep.subr.mxu0 0.0
    %1297 = vmatpush1.xpose.msra.mxu0 0.0
    %1298 = vmatprep.subr.mxu0 0.0
    %1299 = vmatpush1.xpose.msra.mxu0 0.0
    %1300 = vmatprep.subr.mxu0 0.0
    %1301 = vmatpush1.xpose.msra.mxu0 0.0
    %1302 = vmatprep.subr.mxu0 0.0
    %1303 = vmatpush1.xpose.msra.mxu0 0.0
    %1304 = vmatprep.subr.mxu0 0.0
    %1305 = vmatpush1.xpose.msra.mxu0 0.0
    %1306 = vmatprep.subr.mxu0 0.0
    %1307 = vmatpush1.xpose.msra.mxu0 0.0
    %1308 = vmatprep.subr.mxu0 0.0
    %1309 = vmatpush1.xpose.msra.mxu0 0.0
    %1310 = vmatprep.subr.mxu0 0.0
    %1311 = vmatpush1.xpose.msra.mxu0 0.0
    %1312 = vmatprep.subr.mxu0 0.0
    %1313 = vmatpush1.xpose.msra.mxu0 0.0
    %1314 = vmatprep.subr.mxu0 0.0
    %1315 = vmatpush1.xpose.msra.mxu0 0.0
    %1316 = vmatprep.subr.mxu0 0.0
    %1317 = vmatpush1.xpose.msra.mxu0 0.0
    %1318 = vmatprep.subr.mxu0 0.0
    %1319 = vmatpush1.xpose.msra.mxu0 0.0
    %1320 = vmatprep.subr.mxu0 0.0
    %1321 = vmatpush1.xpose.msra.mxu0 0.0
    %1322 = vmatprep.subr.mxu0 0.0
    %1323 = vmatpush1.xpose.msra.mxu0 0.0
    %1324 = vmatprep.subr.mxu0 0.0
    %1325 = vmatpush1.xpose.msra.mxu0 0.0
    %1326 = vmatprep.subr.mxu0 0.0
    %1327 = vmatpush1.xpose.msra.mxu0 0.0
    %1328 = vmatprep.subr.mxu0 0.0
    %1329 = vmatpush1.xpose.msra.mxu0 0.0
    %1330 = vmatprep.subr.mxu0 0.0
    %1331 = vmatpush1.xpose.msra.mxu0 0.0
    %1332 = vmatprep.subr.mxu0 0.0
    %1333 = vmatpush1.xpose.msra.mxu0 0.0
    %1334 = vmatprep.subr.mxu0 0.0
    %1335 = vmatpush1.xpose.msra.mxu0 0.0
    %1336 = vmatprep.subr.mxu0 0.0
    %1337 = vmatpush1.xpose.msra.mxu0 0.0
    %1338 = vmatprep.subr.mxu0 0.0
    %1339 = vmatpush1.xpose.msra.mxu0 0.0
    %1340 = vmatprep.subr.mxu0 0.0
    %1341 = vmatpush1.xpose.msra.mxu0 0.0
    %1342 = vmatprep.subr.mxu0 0.0
    %1343 = vmatpush1.xpose.msra.mxu0 0.0
    %1344 = vmatprep.subr.mxu0 0.0
    %1345 = vmatpush1.xpose.msra.mxu0 0.0
    %1346 = vmatprep.mubr.f32.mxu0 0.0
    %1347 = vmatmul.mubr.f32.gmra.mrb[0].mxu0 %v1278
    %v1348 = vpop.f32.mrb[0].mxu0
    %v1349 = vadd.f32 0.0, %v1348
    %v1350 = vpop.f32.mrb[0].mxu0
    %1351 = vdwg.mxu0
    %1352 = vrot.lane.b32.xlu0 %v255, 104
    %v1353 = vpop.permute.xlu0 %1352
    %1354 = vrot.lane.b32.xlu0 %v255, 40
    %v1355 = vpop.permute.xlu0 %1354
    %v1356 = vsel %vm262, %v1353, 0
    %v1358 = vsel %vm262, %v1355, 0
    %1360 = vmatprep.subr.mxu0 0.0
    %1361 = vmatpush1.xpose.msra.mxu0 %v1358
    %1362 = vmatprep.subr.mxu0 0.0
    %1363 = vmatpush1.xpose.msra.mxu0 0.0
    %1364 = vmatprep.subr.mxu0 0.0
    %1365 = vmatpush1.xpose.msra.mxu0 0.0
    %1366 = vmatprep.subr.mxu0 0.0
    %1367 = vmatpush1.xpose.msra.mxu0 0.0
    %1368 = vmatprep.subr.mxu0 0.0
    %1369 = vmatpush1.xpose.msra.mxu0 0.0
    %1370 = vmatprep.subr.mxu0 0.0
    %1371 = vmatpush1.xpose.msra.mxu0 0.0
    %1372 = vmatprep.subr.mxu0 0.0
    %1373 = vmatpush1.xpose.msra.mxu0 0.0
    %1374 = vmatprep.subr.mxu0 0.0
    %1375 = vmatpush1.xpose.msra.mxu0 0.0
    %1376 = vmatprep.subr.mxu0 0.0
    %1377 = vmatpush1.xpose.msra.mxu0 0.0
    %1378 = vmatprep.subr.mxu0 0.0
    %1379 = vmatpush1.xpose.msra.mxu0 0.0
    %1380 = vmatprep.subr.mxu0 0.0
    %1381 = vmatpush1.xpose.msra.mxu0 0.0
    %1382 = vmatprep.subr.mxu0 0.0
    %1383 = vmatpush1.xpose.msra.mxu0 0.0
    %1384 = vmatprep.subr.mxu0 0.0
    %1385 = vmatpush1.xpose.msra.mxu0 0.0
    %1386 = vmatprep.subr.mxu0 0.0
    %1387 = vmatpush1.xpose.msra.mxu0 0.0
    %1388 = vmatprep.subr.mxu0 0.0
    %1389 = vmatpush1.xpose.msra.mxu0 0.0
    %1390 = vmatprep.subr.mxu0 0.0
    %1391 = vmatpush1.xpose.msra.mxu0 0.0
    %1392 = vmatprep.subr.mxu0 0.0
    %1393 = vmatpush1.xpose.msra.mxu0 0.0
    %1394 = vmatprep.subr.mxu0 0.0
    %1395 = vmatpush1.xpose.msra.mxu0 0.0
    %1396 = vmatprep.subr.mxu0 0.0
    %1397 = vmatpush1.xpose.msra.mxu0 0.0
    %1398 = vmatprep.subr.mxu0 0.0
    %1399 = vmatpush1.xpose.msra.mxu0 0.0
    %1400 = vmatprep.subr.mxu0 0.0
    %1401 = vmatpush1.xpose.msra.mxu0 0.0
    %1402 = vmatprep.subr.mxu0 0.0
    %1403 = vmatpush1.xpose.msra.mxu0 0.0
    %1404 = vmatprep.subr.mxu0 0.0
    %1405 = vmatpush1.xpose.msra.mxu0 0.0
    %1406 = vmatprep.subr.mxu0 0.0
    %1407 = vmatpush1.xpose.msra.mxu0 0.0
    %1408 = vmatprep.subr.mxu0 0.0
    %1409 = vmatpush1.xpose.msra.mxu0 0.0
    %1410 = vmatprep.subr.mxu0 0.0
    %1411 = vmatpush1.xpose.msra.mxu0 0.0
    %1412 = vmatprep.subr.mxu0 0.0
    %1413 = vmatpush1.xpose.msra.mxu0 0.0
    %1414 = vmatprep.subr.mxu0 0.0
    %1415 = vmatpush1.xpose.msra.mxu0 0.0
    %1416 = vmatprep.subr.mxu0 0.0
    %1417 = vmatpush1.xpose.msra.mxu0 0.0
    %1418 = vmatprep.subr.mxu0 0.0
    %1419 = vmatpush1.xpose.msra.mxu0 0.0
    %1420 = vmatprep.subr.mxu0 0.0
    %1421 = vmatpush1.xpose.msra.mxu0 0.0
    %1422 = vmatprep.subr.mxu0 0.0
    %1423 = vmatpush1.xpose.msra.mxu0 0.0
    %1424 = vmatprep.mubr.f32.mxu0 0.0
    %1425 = vmatmul.mubr.f32.gmra.mrb[0].mxu0 %v1356
    %v1426 = vpop.f32.mrb[0].mxu0
    %v1427 = vadd.f32 0.0, %v1426
    %v1428 = vpop.f32.mrb[0].mxu0
    %1429 = vdwg.mxu0
    %v1430 = vmul.f32 %v1349, 0.35355338
    %v1431 = vmul.f32 %v1427, 0.35355338
    %v1432 = vsel %vm262, %v1430, -inf
    %1433 = vmax.xlane.f32.xlu0 %v1432
    %v1434 = vpop.xlane.xlu0 %1433
    %v1435 = vsel %vm262, %v1431, -inf
    %1436 = vmax.xlane.f32.xlu0 %v1435
    %v1437 = vpop.xlane.xlu0 %1436
    %v1438 = vsub.f32 %v1430, %v1434
    %v1439 = vsub.f32 %v1431, %v1437
    %v1440 = vmul.f32 %v1438, 1.442695
    %v1441 = vpow.pop %v1440
    %v1442 = vmul.f32 %v1439, 1.442695
    %v1443 = vpow.pop %v1442
    %v1444 = vsel %vm262, %v1441, 0.0
    %1445 = vadd.xlane.f32.xlu0 %v1444
    %v1446 = vpop.xlane.xlu0 %1445
    %v1447 = vsel %vm262, %v1443, 0.0
    %1448 = vadd.xlane.f32.xlu0 %v1447
    %v1449 = vpop.xlane.xlu0 %1448
    %v1450 = vrcp.pop %v1446
    %v1451 = vrcp.pop %v1449
    %v1452 = vmul.f32 %v1441, %v1450
    %v1453 = vmul.f32 %v1443, %v1451
    %1454 = vrot.lane.b32.xlu0 %v251, 104
    %v1455 = vpop.permute.xlu0 %1454
    %v1458 = vsel %vm262, %v1452, 0
    %1460 = vmatprep.subr.mxu0 0.0
    %1461 = vmatpush1.msra.mxu0 %v1455
    %1462 = vmatprep.subr.mxu0 0.0
    %1463 = vmatpush1.msra.mxu0 0.0
    %1464 = vmatprep.subr.mxu0 0.0
    %1465 = vmatpush1.msra.mxu0 0.0
    %1466 = vmatprep.subr.mxu0 0.0
    %1467 = vmatpush1.msra.mxu0 0.0
    %1468 = vmatprep.subr.mxu0 0.0
    %1469 = vmatpush1.msra.mxu0 0.0
    %1470 = vmatprep.subr.mxu0 0.0
    %1471 = vmatpush1.msra.mxu0 0.0
    %1472 = vmatprep.subr.mxu0 0.0
    %1473 = vmatpush1.msra.mxu0 0.0
    %1474 = vmatprep.subr.mxu0 0.0
    %1475 = vmatpush1.msra.mxu0 0.0
    %1476 = vmatprep.subr.mxu0 0.0
    %1477 = vmatpush1.msra.mxu0 0.0
    %1478 = vmatprep.subr.mxu0 0.0
    %1479 = vmatpush1.msra.mxu0 0.0
    %1480 = vmatprep.subr.mxu0 0.0
    %1481 = vmatpush1.msra.mxu0 0.0
    %1482 = vmatprep.subr.mxu0 0.0
    %1483 = vmatpush1.msra.mxu0 0.0
    %1484 = vmatprep.subr.mxu0 0.0
    %1485 = vmatpush1.msra.mxu0 0.0
    %1486 = vmatprep.subr.mxu0 0.0
    %1487 = vmatpush1.msra.mxu0 0.0
    %1488 = vmatprep.subr.mxu0 0.0
    %1489 = vmatpush1.msra.mxu0 0.0
    %1490 = vmatprep.subr.mxu0 0.0
    %1491 = vmatpush1.msra.mxu0 0.0
    %1492 = vmatprep.subr.mxu0 0.0
    %1493 = vmatpush1.msra.mxu0 0.0
    %1494 = vmatprep.subr.mxu0 0.0
    %1495 = vmatpush1.msra.mxu0 0.0
    %1496 = vmatprep.subr.mxu0 0.0
    %1497 = vmatpush1.msra.mxu0 0.0
    %1498 = vmatprep.subr.mxu0 0.0
    %1499 = vmatpush1.msra.mxu0 0.0
    %1500 = vmatprep.subr.mxu0 0.0
    %1501 = vmatpush1.msra.mxu0 0.0
    %1502 = vmatprep.subr.mxu0 0.0
    %1503 = vmatpush1.msra.mxu0 0.0
    %1504 = vmatprep.subr.mxu0 0.0
    %1505 = vmatpush1.msra.mxu0 0.0
    %1506 = vmatprep.subr.mxu0 0.0
    %1507 = vmatpush1.msra.mxu0 0.0
    %1508 = vmatprep.subr.mxu0 0.0
    %1509 = vmatpush1.msra.mxu0 0.0
    %1510 = vmatprep.subr.mxu0 0.0
    %1511 = vmatpush1.msra.mxu0 0.0
    %1512 = vmatprep.subr.mxu0 0.0
    %1513 = vmatpush1.msra.mxu0 0.0
    %1514 = vmatprep.subr.mxu0 0.0
    %1515 = vmatpush1.msra.mxu0 0.0
    %1516 = vmatprep.subr.mxu0 0.0
    %1517 = vmatpush1.msra.mxu0 0.0
    %1518 = vmatprep.subr.mxu0 0.0
    %1519 = vmatpush1.msra.mxu0 0.0
    %1520 = vmatprep.subr.mxu0 0.0
    %1521 = vmatpush1.msra.mxu0 0.0
    %1522 = vmatprep.subr.mxu0 0.0
    %1523 = vmatpush1.msra.mxu0 0.0
    %1524 = vmatprep.mubr.f32.mxu0 0.0
    %1525 = vmatmul.mubr.f32.gmra.mrb[0].mxu0 %v1458
    %v1526 = vpop.f32.mrb[0].mxu0
    %v1527 = vadd.f32 0.0, %v1526
    %v1528 = vpop.f32.mrb[0].mxu0
    %1529 = vdwg.mxu0
    %1530 = vrot.lane.b32.xlu0 %v257, 104
    %v1531 = vpop.permute.xlu0 %1530
    %v1534 = vsel %vm262, %v1453, 0
    %1536 = vmatprep.subr.mxu0 0.0
    %1537 = vmatpush1.msra.mxu0 %v1531
    %1538 = vmatprep.subr.mxu0 0.0
    %1539 = vmatpush1.msra.mxu0 0.0
    %1540 = vmatprep.subr.mxu0 0.0
    %1541 = vmatpush1.msra.mxu0 0.0
    %1542 = vmatprep.subr.mxu0 0.0
    %1543 = vmatpush1.msra.mxu0 0.0
    %1544 = vmatprep.subr.mxu0 0.0
    %1545 = vmatpush1.msra.mxu0 0.0
    %1546 = vmatprep.subr.mxu0 0.0
    %1547 = vmatpush1.msra.mxu0 0.0
    %1548 = vmatprep.subr.mxu0 0.0
    %1549 = vmatpush1.msra.mxu0 0.0
    %1550 = vmatprep.subr.mxu0 0.0
    %1551 = vmatpush1.msra.mxu0 0.0
    %1552 = vmatprep.subr.mxu0 0.0
    %1553 = vmatpush1.msra.mxu0 0.0
    %1554 = vmatprep.subr.mxu0 0.0
    %1555 = vmatpush1.msra.mxu0 0.0
    %1556 = vmatprep.subr.mxu0 0.0
    %1557 = vmatpush1.msra.mxu0 0.0
    %1558 = vmatprep.subr.mxu0 0.0
    %1559 = vmatpush1.msra.mxu0 0.0
    %1560 = vmatprep.subr.mxu0 0.0
    %1561 = vmatpush1.msra.mxu0 0.0
    %1562 = vmatprep.subr.mxu0 0.0
    %1563 = vmatpush1.msra.mxu0 0.0
    %1564 = vmatprep.subr.mxu0 0.0
    %1565 = vmatpush1.msra.mxu0 0.0
    %1566 = vmatprep.subr.mxu0 0.0
    %1567 = vmatpush1.msra.mxu0 0.0
    %1568 = vmatprep.subr.mxu0 0.0
    %1569 = vmatpush1.msra.mxu0 0.0
    %1570 = vmatprep.subr.mxu0 0.0
    %1571 = vmatpush1.msra.mxu0 0.0
    %1572 = vmatprep.subr.mxu0 0.0
    %1573 = vmatpush1.msra.mxu0 0.0
    %1574 = vmatprep.subr.mxu0 0.0
    %1575 = vmatpush1.msra.mxu0 0.0
    %1576 = vmatprep.subr.mxu0 0.0
    %1577 = vmatpush1.msra.mxu0 0.0
    %1578 = vmatprep.subr.mxu0 0.0
    %1579 = vmatpush1.msra.mxu0 0.0
    %1580 = vmatprep.subr.mxu0 0.0
    %1581 = vmatpush1.msra.mxu0 0.0
    %1582 = vmatprep.subr.mxu0 0.0
    %1583 = vmatpush1.msra.mxu0 0.0
    %1584 = vmatprep.subr.mxu0 0.0
    %1585 = vmatpush1.msra.mxu0 0.0
    %1586 = vmatprep.subr.mxu0 0.0
    %1587 = vmatpush1.msra.mxu0 0.0
    %1588 = vmatprep.subr.mxu0 0.0
    %1589 = vmatpush1.msra.mxu0 0.0
    %1590 = vmatprep.subr.mxu0 0.0
    %1591 = vmatpush1.msra.mxu0 0.0
    %1592 = vmatprep.subr.mxu0 0.0
    %1593 = vmatpush1.msra.mxu0 0.0
    %1594 = vmatprep.subr.mxu0 0.0
    %1595 = vmatpush1.msra.mxu0 0.0
    %1596 = vmatprep.subr.mxu0 0.0
    %1597 = vmatpush1.msra.mxu0 0.0
    %1598 = vmatprep.subr.mxu0 0.0
    %1599 = vmatpush1.msra.mxu0 0.0
    %1600 = vmatprep.mubr.f32.mxu0 0.0
    %1601 = vmatmul.mubr.f32.gmra.mrb[0].mxu0 %v1534
    %v1602 = vpop.f32.mrb[0].mxu0
    %v1603 = vadd.f32 0.0, %v1602
    %v1604 = vpop.f32.mrb[0].mxu0
    %1605 = vdwg.mxu0
    %1608 = vrot.lane.b32.xlu0 %v1527, 24
    %v1609 = vpop.permute.xlu0 %1608
    %1610 = vrot.lane.b32.xlu0 %v1603, 24
    %v1611 = vpop.permute.xlu0 %1610
    %vm1614 = vcmask 261312
    %1615 = vst.msk [vmem:[#allocation2] sm:$0xff] %vm1614, %v1609
    %1616 = vst.msk [vmem:[#allocation2 + $0x8] sm:$0xff] %vm1614, %v1611
    %1617 = vrot.lane.b32.xlu0 %v249, 96
    %v1618 = vpop.permute.xlu0 %1617
    %1619 = vrot.lane.b32.xlu0 %v249, 32
    %v1620 = vpop.permute.xlu0 %1619
    %v1621 = vsel %vm262, %v1618, 0
    %v1623 = vsel %vm262, %v1620, 0
    %1625 = vmatprep.subr.mxu0 0.0
    %1626 = vmatpush1.xpose.msra.mxu0 %v1623
    %1627 = vmatprep.subr.mxu0 0.0
    %1628 = vmatpush1.xpose.msra.mxu0 0.0
    %1629 = vmatprep.subr.mxu0 0.0
    %1630 = vmatpush1.xpose.msra.mxu0 0.0
    %1631 = vmatprep.subr.mxu0 0.0
    %1632 = vmatpush1.xpose.msra.mxu0 0.0
    %1633 = vmatprep.subr.mxu0 0.0
    %1634 = vmatpush1.xpose.msra.mxu0 0.0
    %1635 = vmatprep.subr.mxu0 0.0
    %1636 = vmatpush1.xpose.msra.mxu0 0.0
    %1637 = vmatprep.subr.mxu0 0.0
    %1638 = vmatpush1.xpose.msra.mxu0 0.0
    %1639 = vmatprep.subr.mxu0 0.0
    %1640 = vmatpush1.xpose.msra.mxu0 0.0
    %1641 = vmatprep.subr.mxu0 0.0
    %1642 = vmatpush1.xpose.msra.mxu0 0.0
    %1643 = vmatprep.subr.mxu0 0.0
    %1644 = vmatpush1.xpose.msra.mxu0 0.0
    %1645 = vmatprep.subr.mxu0 0.0
    %1646 = vmatpush1.xpose.msra.mxu0 0.0
    %1647 = vmatprep.subr.mxu0 0.0
    %1648 = vmatpush1.xpose.msra.mxu0 0.0
    %1649 = vmatprep.subr.mxu0 0.0
    %1650 = vmatpush1.xpose.msra.mxu0 0.0
    %1651 = vmatprep.subr.mxu0 0.0
    %1652 = vmatpush1.xpose.msra.mxu0 0.0
    %1653 = vmatprep.subr.mxu0 0.0
    %1654 = vmatpush1.xpose.msra.mxu0 0.0
    %1655 = vmatprep.subr.mxu0 0.0
    %1656 = vmatpush1.xpose.msra.mxu0 0.0
    %1657 = vmatprep.subr.mxu0 0.0
    %1658 = vmatpush1.xpose.msra.mxu0 0.0
    %1659 = vmatprep.subr.mxu0 0.0
    %1660 = vmatpush1.xpose.msra.mxu0 0.0
    %1661 = vmatprep.subr.mxu0 0.0
    %1662 = vmatpush1.xpose.msra.mxu0 0.0
    %1663 = vmatprep.subr.mxu0 0.0
    %1664 = vmatpush1.xpose.msra.mxu0 0.0
    %1665 = vmatprep.subr.mxu0 0.0
    %1666 = vmatpush1.xpose.msra.mxu0 0.0
    %1667 = vmatprep.subr.mxu0 0.0
    %1668 = vmatpush1.xpose.msra.mxu0 0.0
    %1669 = vmatprep.subr.mxu0 0.0
    %1670 = vmatpush1.xpose.msra.mxu0 0.0
    %1671 = vmatprep.subr.mxu0 0.0
    %1672 = vmatpush1.xpose.msra.mxu0 0.0
    %1673 = vmatprep.subr.mxu0 0.0
    %1674 = vmatpush1.xpose.msra.mxu0 0.0
    %1675 = vmatprep.subr.mxu0 0.0
    %1676 = vmatpush1.xpose.msra.mxu0 0.0
    %1677 = vmatprep.subr.mxu0 0.0
    %1678 = vmatpush1.xpose.msra.mxu0 0.0
    %1679 = vmatprep.subr.mxu0 0.0
    %1680 = vmatpush1.xpose.msra.mxu0 0.0
    %1681 = vmatprep.subr.mxu0 0.0
    %1682 = vmatpush1.xpose.msra.mxu0 0.0
    %1683 = vmatprep.subr.mxu0 0.0
    %1684 = vmatpush1.xpose.msra.mxu0 0.0
    %1685 = vmatprep.subr.mxu0 0.0
    %1686 = vmatpush1.xpose.msra.mxu0 0.0
    %1687 = vmatprep.subr.mxu0 0.0
    %1688 = vmatpush1.xpose.msra.mxu0 0.0
    %1689 = vmatprep.mubr.f32.mxu0 0.0
    %1690 = vmatmul.mubr.f32.gmra.mrb[0].mxu0 %v1621
    %v1691 = vpop.f32.mrb[0].mxu0
    %v1692 = vadd.f32 0.0, %v1691
    %v1693 = vpop.f32.mrb[0].mxu0
    %1694 = vdwg.mxu0
    %1695 = vrot.lane.b32.xlu0 %v255, 96
    %v1696 = vpop.permute.xlu0 %1695
    %1697 = vrot.lane.b32.xlu0 %v255, 32
    %v1698 = vpop.permute.xlu0 %1697
    %v1699 = vsel %vm262, %v1696, 0
    %v1701 = vsel %vm262, %v1698, 0
    %1703 = vmatprep.subr.mxu0 0.0
    %1704 = vmatpush1.xpose.msra.mxu0 %v1701
    %1705 = vmatprep.subr.mxu0 0.0
    %1706 = vmatpush1.xpose.msra.mxu0 0.0
    %1707 = vmatprep.subr.mxu0 0.0
    %1708 = vmatpush1.xpose.msra.mxu0 0.0
    %1709 = vmatprep.subr.mxu0 0.0
    %1710 = vmatpush1.xpose.msra.mxu0 0.0
    %1711 = vmatprep.subr.mxu0 0.0
    %1712 = vmatpush1.xpose.msra.mxu0 0.0
    %1713 = vmatprep.subr.mxu0 0.0
    %1714 = vmatpush1.xpose.msra.mxu0 0.0
    %1715 = vmatprep.subr.mxu0 0.0
    %1716 = vmatpush1.xpose.msra.mxu0 0.0
    %1717 = vmatprep.subr.mxu0 0.0
    %1718 = vmatpush1.xpose.msra.mxu0 0.0
    %1719 = vmatprep.subr.mxu0 0.0
    %1720 = vmatpush1.xpose.msra.mxu0 0.0
    %1721 = vmatprep.subr.mxu0 0.0
    %1722 = vmatpush1.xpose.msra.mxu0 0.0
    %1723 = vmatprep.subr.mxu0 0.0
    %1724 = vmatpush1.xpose.msra.mxu0 0.0
    %1725 = vmatprep.subr.mxu0 0.0
    %1726 = vmatpush1.xpose.msra.mxu0 0.0
    %1727 = vmatprep.subr.mxu0 0.0
    %1728 = vmatpush1.xpose.msra.mxu0 0.0
    %1729 = vmatprep.subr.mxu0 0.0
    %1730 = vmatpush1.xpose.msra.mxu0 0.0
    %1731 = vmatprep.subr.mxu0 0.0
    %1732 = vmatpush1.xpose.msra.mxu0 0.0
    %1733 = vmatprep.subr.mxu0 0.0
    %1734 = vmatpush1.xpose.msra.mxu0 0.0
    %1735 = vmatprep.subr.mxu0 0.0
    %1736 = vmatpush1.xpose.msra.mxu0 0.0
    %1737 = vmatprep.subr.mxu0 0.0
    %1738 = vmatpush1.xpose.msra.mxu0 0.0
    %1739 = vmatprep.subr.mxu0 0.0
    %1740 = vmatpush1.xpose.msra.mxu0 0.0
    %1741 = vmatprep.subr.mxu0 0.0
    %1742 = vmatpush1.xpose.msra.mxu0 0.0
    %1743 = vmatprep.subr.mxu0 0.0
    %1744 = vmatpush1.xpose.msra.mxu0 0.0
    %1745 = vmatprep.subr.mxu0 0.0
    %1746 = vmatpush1.xpose.msra.mxu0 0.0
    %1747 = vmatprep.subr.mxu0 0.0
    %1748 = vmatpush1.xpose.msra.mxu0 0.0
    %1749 = vmatprep.subr.mxu0 0.0
    %1750 = vmatpush1.xpose.msra.mxu0 0.0
    %1751 = vmatprep.subr.mxu0 0.0
    %1752 = vmatpush1.xpose.msra.mxu0 0.0
    %1753 = vmatprep.subr.mxu0 0.0
    %1754 = vmatpush1.xpose.msra.mxu0 0.0
    %1755 = vmatprep.subr.mxu0 0.0
    %1756 = vmatpush1.xpose.msra.mxu0 0.0
    %1757 = vmatprep.subr.mxu0 0.0
    %1758 = vmatpush1.xpose.msra.mxu0 0.0
    %1759 = vmatprep.subr.mxu0 0.0
    %1760 = vmatpush1.xpose.msra.mxu0 0.0
    %1761 = vmatprep.subr.mxu0 0.0
    %1762 = vmatpush1.xpose.msra.mxu0 0.0
    %1763 = vmatprep.subr.mxu0 0.0
    %1764 = vmatpush1.xpose.msra.mxu0 0.0
    %1765 = vmatprep.subr.mxu0 0.0
    %1766 = vmatpush1.xpose.msra.mxu0 0.0
    %1767 = vmatprep.mubr.f32.mxu0 0.0
    %1768 = vmatmul.mubr.f32.gmra.mrb[0].mxu0 %v1699
    %v1769 = vpop.f32.mrb[0].mxu0
    %v1770 = vadd.f32 0.0, %v1769
    %v1771 = vpop.f32.mrb[0].mxu0
    %1772 = vdwg.mxu0
    %v1773 = vmul.f32 %v1692, 0.35355338
    %v1774 = vmul.f32 %v1770, 0.35355338
    %v1775 = vsel %vm262, %v1773, -inf
    %1776 = vmax.xlane.f32.xlu0 %v1775
    %v1777 = vpop.xlane.xlu0 %1776
    %v1778 = vsel %vm262, %v1774, -inf
    %1779 = vmax.xlane.f32.xlu0 %v1778
    %v1780 = vpop.xlane.xlu0 %1779
    %v1781 = vsub.f32 %v1773, %v1777
    %v1782 = vsub.f32 %v1774, %v1780
    %v1783 = vmul.f32 %v1781, 1.442695
    %v1784 = vpow.pop %v1783
    %v1785 = vmul.f32 %v1782, 1.442695
    %v1786 = vpow.pop %v1785
    %v1787 = vsel %vm262, %v1784, 0.0
    %1788 = vadd.xlane.f32.xlu0 %v1787
    %v1789 = vpop.xlane.xlu0 %1788
    %v1790 = vsel %vm262, %v1786, 0.0
    %1791 = vadd.xlane.f32.xlu0 %v1790
    %v1792 = vpop.xlane.xlu0 %1791
    %v1793 = vrcp.pop %v1789
    %v1794 = vrcp.pop %v1792
    %v1795 = vmul.f32 %v1784, %v1793
    %v1796 = vmul.f32 %v1786, %v1794
    %1797 = vrot.lane.b32.xlu0 %v251, 96
    %v1798 = vpop.permute.xlu0 %1797
    %v1801 = vsel %vm262, %v1795, 0
    %1803 = vmatprep.subr.mxu0 0.0
    %1804 = vmatpush1.msra.mxu0 %v1798
    %1805 = vmatprep.subr.mxu0 0.0
    %1806 = vmatpush1.msra.mxu0 0.0
    %1807 = vmatprep.subr.mxu0 0.0
    %1808 = vmatpush1.msra.mxu0 0.0
    %1809 = vmatprep.subr.mxu0 0.0
    %1810 = vmatpush1.msra.mxu0 0.0
    %1811 = vmatprep.subr.mxu0 0.0
    %1812 = vmatpush1.msra.mxu0 0.0
    %1813 = vmatprep.subr.mxu0 0.0
    %1814 = vmatpush1.msra.mxu0 0.0
    %1815 = vmatprep.subr.mxu0 0.0
    %1816 = vmatpush1.msra.mxu0 0.0
    %1817 = vmatprep.subr.mxu0 0.0
    %1818 = vmatpush1.msra.mxu0 0.0
    %1819 = vmatprep.subr.mxu0 0.0
    %1820 = vmatpush1.msra.mxu0 0.0
    %1821 = vmatprep.subr.mxu0 0.0
    %1822 = vmatpush1.msra.mxu0 0.0
    %1823 = vmatprep.subr.mxu0 0.0
    %1824 = vmatpush1.msra.mxu0 0.0
    %1825 = vmatprep.subr.mxu0 0.0
    %1826 = vmatpush1.msra.mxu0 0.0
    %1827 = vmatprep.subr.mxu0 0.0
    %1828 = vmatpush1.msra.mxu0 0.0
    %1829 = vmatprep.subr.mxu0 0.0
    %1830 = vmatpush1.msra.mxu0 0.0
    %1831 = vmatprep.subr.mxu0 0.0
    %1832 = vmatpush1.msra.mxu0 0.0
    %1833 = vmatprep.subr.mxu0 0.0
    %1834 = vmatpush1.msra.mxu0 0.0
    %1835 = vmatprep.subr.mxu0 0.0
    %1836 = vmatpush1.msra.mxu0 0.0
    %1837 = vmatprep.subr.mxu0 0.0
    %1838 = vmatpush1.msra.mxu0 0.0
    %1839 = vmatprep.subr.mxu0 0.0
    %1840 = vmatpush1.msra.mxu0 0.0
    %1841 = vmatprep.subr.mxu0 0.0
    %1842 = vmatpush1.msra.mxu0 0.0
    %1843 = vmatprep.subr.mxu0 0.0
    %1844 = vmatpush1.msra.mxu0 0.0
    %1845 = vmatprep.subr.mxu0 0.0
    %1846 = vmatpush1.msra.mxu0 0.0
    %1847 = vmatprep.subr.mxu0 0.0
    %1848 = vmatpush1.msra.mxu0 0.0
    %1849 = vmatprep.subr.mxu0 0.0
    %1850 = vmatpush1.msra.mxu0 0.0
    %1851 = vmatprep.subr.mxu0 0.0
    %1852 = vmatpush1.msra.mxu0 0.0
    %1853 = vmatprep.subr.mxu0 0.0
    %1854 = vmatpush1.msra.mxu0 0.0
    %1855 = vmatprep.subr.mxu0 0.0
    %1856 = vmatpush1.msra.mxu0 0.0
    %1857 = vmatprep.subr.mxu0 0.0
    %1858 = vmatpush1.msra.mxu0 0.0
    %1859 = vmatprep.subr.mxu0 0.0
    %1860 = vmatpush1.msra.mxu0 0.0
    %1861 = vmatprep.subr.mxu0 0.0
    %1862 = vmatpush1.msra.mxu0 0.0
    %1863 = vmatprep.subr.mxu0 0.0
    %1864 = vmatpush1.msra.mxu0 0.0
    %1865 = vmatprep.subr.mxu0 0.0
    %1866 = vmatpush1.msra.mxu0 0.0
    %1867 = vmatprep.mubr.f32.mxu0 0.0
    %1868 = vmatmul.mubr.f32.gmra.mrb[0].mxu0 %v1801
    %v1869 = vpop.f32.mrb[0].mxu0
    %v1870 = vadd.f32 0.0, %v1869
    %v1871 = vpop.f32.mrb[0].mxu0
    %1872 = vdwg.mxu0
    %1873 = vrot.lane.b32.xlu0 %v257, 96
    %v1874 = vpop.permute.xlu0 %1873
    %v1877 = vsel %vm262, %v1796, 0
    %1879 = vmatprep.subr.mxu0 0.0
    %1880 = vmatpush1.msra.mxu0 %v1874
    %1881 = vmatprep.subr.mxu0 0.0
    %1882 = vmatpush1.msra.mxu0 0.0
    %1883 = vmatprep.subr.mxu0 0.0
    %1884 = vmatpush1.msra.mxu0 0.0
    %1885 = vmatprep.subr.mxu0 0.0
    %1886 = vmatpush1.msra.mxu0 0.0
    %1887 = vmatprep.subr.mxu0 0.0
    %1888 = vmatpush1.msra.mxu0 0.0
    %1889 = vmatprep.subr.mxu0 0.0
    %1890 = vmatpush1.msra.mxu0 0.0
    %1891 = vmatprep.subr.mxu0 0.0
    %1892 = vmatpush1.msra.mxu0 0.0
    %1893 = vmatprep.subr.mxu0 0.0
    %1894 = vmatpush1.msra.mxu0 0.0
    %1895 = vmatprep.subr.mxu0 0.0
    %1896 = vmatpush1.msra.mxu0 0.0
    %1897 = vmatprep.subr.mxu0 0.0
    %1898 = vmatpush1.msra.mxu0 0.0
    %1899 = vmatprep.subr.mxu0 0.0
    %1900 = vmatpush1.msra.mxu0 0.0
    %1901 = vmatprep.subr.mxu0 0.0
    %1902 = vmatpush1.msra.mxu0 0.0
    %1903 = vmatprep.subr.mxu0 0.0
    %1904 = vmatpush1.msra.mxu0 0.0
    %1905 = vmatprep.subr.mxu0 0.0
    %1906 = vmatpush1.msra.mxu0 0.0
    %1907 = vmatprep.subr.mxu0 0.0
    %1908 = vmatpush1.msra.mxu0 0.0
    %1909 = vmatprep.subr.mxu0 0.0
    %1910 = vmatpush1.msra.mxu0 0.0
    %1911 = vmatprep.subr.mxu0 0.0
    %1912 = vmatpush1.msra.mxu0 0.0
    %1913 = vmatprep.subr.mxu0 0.0
    %1914 = vmatpush1.msra.mxu0 0.0
    %1915 = vmatprep.subr.mxu0 0.0
    %1916 = vmatpush1.msra.mxu0 0.0
    %1917 = vmatprep.subr.mxu0 0.0
    %1918 = vmatpush1.msra.mxu0 0.0
    %1919 = vmatprep.subr.mxu0 0.0
    %1920 = vmatpush1.msra.mxu0 0.0
    %1921 = vmatprep.subr.mxu0 0.0
    %1922 = vmatpush1.msra.mxu0 0.0
    %1923 = vmatprep.subr.mxu0 0.0
    %1924 = vmatpush1.msra.mxu0 0.0
    %1925 = vmatprep.subr.mxu0 0.0
    %1926 = vmatpush1.msra.mxu0 0.0
    %1927 = vmatprep.subr.mxu0 0.0
    %1928 = vmatpush1.msra.mxu0 0.0
    %1929 = vmatprep.subr.mxu0 0.0
    %1930 = vmatpush1.msra.mxu0 0.0
    %1931 = vmatprep.subr.mxu0 0.0
    %1932 = vmatpush1.msra.mxu0 0.0
    %1933 = vmatprep.subr.mxu0 0.0
    %1934 = vmatpush1.msra.mxu0 0.0
    %1935 = vmatprep.subr.mxu0 0.0
    %1936 = vmatpush1.msra.mxu0 0.0
    %1937 = vmatprep.subr.mxu0 0.0
    %1938 = vmatpush1.msra.mxu0 0.0
    %1939 = vmatprep.subr.mxu0 0.0
    %1940 = vmatpush1.msra.mxu0 0.0
    %1941 = vmatprep.subr.mxu0 0.0
    %1942 = vmatpush1.msra.mxu0 0.0
    %1943 = vmatprep.mubr.f32.mxu0 0.0
    %1944 = vmatmul.mubr.f32.gmra.mrb[0].mxu0 %v1877
    %v1945 = vpop.f32.mrb[0].mxu0
    %v1946 = vadd.f32 0.0, %v1945
    %v1947 = vpop.f32.mrb[0].mxu0
    %1948 = vdwg.mxu0
    %1951 = vrot.lane.b32.xlu0 %v1870, 32
    %v1952 = vpop.permute.xlu0 %1951
    %1953 = vrot.lane.b32.xlu0 %v1946, 32
    %v1954 = vpop.permute.xlu0 %1953
    %vm1957 = vcmask 326912
    %1958 = vst.msk [vmem:[#allocation2] sm:$0xff] %vm1957, %v1952
    %1959 = vst.msk [vmem:[#allocation2 + $0x8] sm:$0xff] %vm1957, %v1954
    %1960 = vrot.lane.b32.xlu0 %v249, 88
    %v1961 = vpop.permute.xlu0 %1960
    %1962 = vrot.lane.b32.xlu0 %v249, 24
    %v1963 = vpop.permute.xlu0 %1962
    %v1964 = vsel %vm262, %v1961, 0
    %v1966 = vsel %vm262, %v1963, 0
    %1968 = vmatprep.subr.mxu0 0.0
    %1969 = vmatpush1.xpose.msra.mxu0 %v1966
    %1970 = vmatprep.subr.mxu0 0.0
    %1971 = vmatpush1.xpose.msra.mxu0 0.0
    %1972 = vmatprep.subr.mxu0 0.0
    %1973 = vmatpush1.xpose.msra.mxu0 0.0
    %1974 = vmatprep.subr.mxu0 0.0
    %1975 = vmatpush1.xpose.msra.mxu0 0.0
    %1976 = vmatprep.subr.mxu0 0.0
    %1977 = vmatpush1.xpose.msra.mxu0 0.0
    %1978 = vmatprep.subr.mxu0 0.0
    %1979 = vmatpush1.xpose.msra.mxu0 0.0
    %1980 = vmatprep.subr.mxu0 0.0
    %1981 = vmatpush1.xpose.msra.mxu0 0.0
    %1982 = vmatprep.subr.mxu0 0.0
    %1983 = vmatpush1.xpose.msra.mxu0 0.0
    %1984 = vmatprep.subr.mxu0 0.0
    %1985 = vmatpush1.xpose.msra.mxu0 0.0
    %1986 = vmatprep.subr.mxu0 0.0
    %1987 = vmatpush1.xpose.msra.mxu0 0.0
    %1988 = vmatprep.subr.mxu0 0.0
    %1989 = vmatpush1.xpose.msra.mxu0 0.0
    %1990 = vmatprep.subr.mxu0 0.0
    %1991 = vmatpush1.xpose.msra.mxu0 0.0
    %1992 = vmatprep.subr.mxu0 0.0
    %1993 = vmatpush1.xpose.msra.mxu0 0.0
    %1994 = vmatprep.subr.mxu0 0.0
    %1995 = vmatpush1.xpose.msra.mxu0 0.0
    %1996 = vmatprep.subr.mxu0 0.0
    %1997 = vmatpush1.xpose.msra.mxu0 0.0
    %1998 = vmatprep.subr.mxu0 0.0
    %1999 = vmatpush1.xpose.msra.mxu0 0.0
    %2000 = vmatprep.subr.mxu0 0.0
    %2001 = vmatpush1.xpose.msra.mxu0 0.0
    %2002 = vmatprep.subr.mxu0 0.0
    %2003 = vmatpush1.xpose.msra.mxu0 0.0
    %2004 = vmatprep.subr.mxu0 0.0
    %2005 = vmatpush1.xpose.msra.mxu0 0.0
    %2006 = vmatprep.subr.mxu0 0.0
    %2007 = vmatpush1.xpose.msra.mxu0 0.0
    %2008 = vmatprep.subr.mxu0 0.0
    %2009 = vmatpush1.xpose.msra.mxu0 0.0
    %2010 = vmatprep.subr.mxu0 0.0
    %2011 = vmatpush1.xpose.msra.mxu0 0.0
    %2012 = vmatprep.subr.mxu0 0.0
    %2013 = vmatpush1.xpose.msra.mxu0 0.0
    %2014 = vmatprep.subr.mxu0 0.0
    %2015 = vmatpush1.xpose.msra.mxu0 0.0
    %2016 = vmatprep.subr.mxu0 0.0
    %2017 = vmatpush1.xpose.msra.mxu0 0.0
    %2018 = vmatprep.subr.mxu0 0.0
    %2019 = vmatpush1.xpose.msra.mxu0 0.0
    %2020 = vmatprep.subr.mxu0 0.0
    %2021 = vmatpush1.xpose.msra.mxu0 0.0
    %2022 = vmatprep.subr.mxu0 0.0
    %2023 = vmatpush1.xpose.msra.mxu0 0.0
    %2024 = vmatprep.subr.mxu0 0.0
    %2025 = vmatpush1.xpose.msra.mxu0 0.0
    %2026 = vmatprep.subr.mxu0 0.0
    %2027 = vmatpush1.xpose.msra.mxu0 0.0
    %2028 = vmatprep.subr.mxu0 0.0
    %2029 = vmatpush1.xpose.msra.mxu0 0.0
    %2030 = vmatprep.subr.mxu0 0.0
    %2031 = vmatpush1.xpose.msra.mxu0 0.0
    %2032 = vmatprep.mubr.f32.mxu0 0.0
    %2033 = vmatmul.mubr.f32.gmra.mrb[0].mxu0 %v1964
    %v2034 = vpop.f32.mrb[0].mxu0
    %v2035 = vadd.f32 0.0, %v2034
    %v2036 = vpop.f32.mrb[0].mxu0
    %2037 = vdwg.mxu0
    %2038 = vrot.lane.b32.xlu0 %v255, 88
    %v2039 = vpop.permute.xlu0 %2038
    %2040 = vrot.lane.b32.xlu0 %v255, 24
    %v2041 = vpop.permute.xlu0 %2040
    %v2042 = vsel %vm262, %v2039, 0
    %v2044 = vsel %vm262, %v2041, 0
    %2046 = vmatprep.subr.mxu0 0.0
    %2047 = vmatpush1.xpose.msra.mxu0 %v2044
    %2048 = vmatprep.subr.mxu0 0.0
    %2049 = vmatpush1.xpose.msra.mxu0 0.0
    %2050 = vmatprep.subr.mxu0 0.0
    %2051 = vmatpush1.xpose.msra.mxu0 0.0
    %2052 = vmatprep.subr.mxu0 0.0
    %2053 = vmatpush1.xpose.msra.mxu0 0.0
    %2054 = vmatprep.subr.mxu0 0.0
    %2055 = vmatpush1.xpose.msra.mxu0 0.0
    %2056 = vmatprep.subr.mxu0 0.0
    %2057 = vmatpush1.xpose.msra.mxu0 0.0
    %2058 = vmatprep.subr.mxu0 0.0
    %2059 = vmatpush1.xpose.msra.mxu0 0.0
    %2060 = vmatprep.subr.mxu0 0.0
    %2061 = vmatpush1.xpose.msra.mxu0 0.0
    %2062 = vmatprep.subr.mxu0 0.0
    %2063 = vmatpush1.xpose.msra.mxu0 0.0
    %2064 = vmatprep.subr.mxu0 0.0
    %2065 = vmatpush1.xpose.msra.mxu0 0.0
    %2066 = vmatprep.subr.mxu0 0.0
    %2067 = vmatpush1.xpose.msra.mxu0 0.0
    %2068 = vmatprep.subr.mxu0 0.0
    %2069 = vmatpush1.xpose.msra.mxu0 0.0
    %2070 = vmatprep.subr.mxu0 0.0
    %2071 = vmatpush1.xpose.msra.mxu0 0.0
    %2072 = vmatprep.subr.mxu0 0.0
    %2073 = vmatpush1.xpose.msra.mxu0 0.0
    %2074 = vmatprep.subr.mxu0 0.0
    %2075 = vmatpush1.xpose.msra.mxu0 0.0
    %2076 = vmatprep.subr.mxu0 0.0
    %2077 = vmatpush1.xpose.msra.mxu0 0.0
    %2078 = vmatprep.subr.mxu0 0.0
    %2079 = vmatpush1.xpose.msra.mxu0 0.0
    %2080 = vmatprep.subr.mxu0 0.0
    %2081 = vmatpush1.xpose.msra.mxu0 0.0
    %2082 = vmatprep.subr.mxu0 0.0
    %2083 = vmatpush1.xpose.msra.mxu0 0.0
    %2084 = vmatprep.subr.mxu0 0.0
    %2085 = vmatpush1.xpose.msra.mxu0 0.0
    %2086 = vmatprep.subr.mxu0 0.0
    %2087 = vmatpush1.xpose.msra.mxu0 0.0
    %2088 = vmatprep.subr.mxu0 0.0
    %2089 = vmatpush1.xpose.msra.mxu0 0.0
    %2090 = vmatprep.subr.mxu0 0.0
    %2091 = vmatpush1.xpose.msra.mxu0 0.0
    %2092 = vmatprep.subr.mxu0 0.0
    %2093 = vmatpush1.xpose.msra.mxu0 0.0
    %2094 = vmatprep.subr.mxu0 0.0
    %2095 = vmatpush1.xpose.msra.mxu0 0.0
    %2096 = vmatprep.subr.mxu0 0.0
    %2097 = vmatpush1.xpose.msra.mxu0 0.0
    %2098 = vmatprep.subr.mxu0 0.0
    %2099 = vmatpush1.xpose.msra.mxu0 0.0
    %2100 = vmatprep.subr.mxu0 0.0
    %2101 = vmatpush1.xpose.msra.mxu0 0.0
    %2102 = vmatprep.subr.mxu0 0.0
    %2103 = vmatpush1.xpose.msra.mxu0 0.0
    %2104 = vmatprep.subr.mxu0 0.0
    %2105 = vmatpush1.xpose.msra.mxu0 0.0
    %2106 = vmatprep.subr.mxu0 0.0
    %2107 = vmatpush1.xpose.msra.mxu0 0.0
    %2108 = vmatprep.subr.mxu0 0.0
    %2109 = vmatpush1.xpose.msra.mxu0 0.0
    %2110 = vmatprep.mubr.f32.mxu0 0.0
    %2111 = vmatmul.mubr.f32.gmra.mrb[0].mxu0 %v2042
    %v2112 = vpop.f32.mrb[0].mxu0
    %v2113 = vadd.f32 0.0, %v2112
    %v2114 = vpop.f32.mrb[0].mxu0
    %2115 = vdwg.mxu0
    %v2116 = vmul.f32 %v2035, 0.35355338
    %v2117 = vmul.f32 %v2113, 0.35355338
    %v2118 = vsel %vm262, %v2116, -inf
    %2119 = vmax.xlane.f32.xlu0 %v2118
    %v2120 = vpop.xlane.xlu0 %2119
    %v2121 = vsel %vm262, %v2117, -inf
    %2122 = vmax.xlane.f32.xlu0 %v2121
    %v2123 = vpop.xlane.xlu0 %2122
    %v2124 = vsub.f32 %v2116, %v2120
    %v2125 = vsub.f32 %v2117, %v2123
    %v2126 = vmul.f32 %v2124, 1.442695
    %v2127 = vpow.pop %v2126
    %v2128 = vmul.f32 %v2125, 1.442695
    %v2129 = vpow.pop %v2128
    %v2130 = vsel %vm262, %v2127, 0.0
    %2131 = vadd.xlane.f32.xlu0 %v2130
    %v2132 = vpop.xlane.xlu0 %2131
    %v2133 = vsel %vm262, %v2129, 0.0
    %2134 = vadd.xlane.f32.xlu0 %v2133
    %v2135 = vpop.xlane.xlu0 %2134
    %v2136 = vrcp.pop %v2132
    %v2137 = vrcp.pop %v2135
    %v2138 = vmul.f32 %v2127, %v2136
    %v2139 = vmul.f32 %v2129, %v2137
    %2140 = vrot.lane.b32.xlu0 %v251, 88
    %v2141 = vpop.permute.xlu0 %2140
    %v2144 = vsel %vm262, %v2138, 0
    %2146 = vmatprep.subr.mxu0 0.0
    %2147 = vmatpush1.msra.mxu0 %v2141
    %2148 = vmatprep.subr.mxu0 0.0
    %2149 = vmatpush1.msra.mxu0 0.0
    %2150 = vmatprep.subr.mxu0 0.0
    %2151 = vmatpush1.msra.mxu0 0.0
    %2152 = vmatprep.subr.mxu0 0.0
    %2153 = vmatpush1.msra.mxu0 0.0
    %2154 = vmatprep.subr.mxu0 0.0
    %2155 = vmatpush1.msra.mxu0 0.0
    %2156 = vmatprep.subr.mxu0 0.0
    %2157 = vmatpush1.msra.mxu0 0.0
    %2158 = vmatprep.subr.mxu0 0.0
    %2159 = vmatpush1.msra.mxu0 0.0
    %2160 = vmatprep.subr.mxu0 0.0
    %2161 = vmatpush1.msra.mxu0 0.0
    %2162 = vmatprep.subr.mxu0 0.0
    %2163 = vmatpush1.msra.mxu0 0.0
    %2164 = vmatprep.subr.mxu0 0.0
    %2165 = vmatpush1.msra.mxu0 0.0
    %2166 = vmatprep.subr.mxu0 0.0
    %2167 = vmatpush1.msra.mxu0 0.0
    %2168 = vmatprep.subr.mxu0 0.0
    %2169 = vmatpush1.msra.mxu0 0.0
    %2170 = vmatprep.subr.mxu0 0.0
    %2171 = vmatpush1.msra.mxu0 0.0
    %2172 = vmatprep.subr.mxu0 0.0
    %2173 = vmatpush1.msra.mxu0 0.0
    %2174 = vmatprep.subr.mxu0 0.0
    %2175 = vmatpush1.msra.mxu0 0.0
    %2176 = vmatprep.subr.mxu0 0.0
    %2177 = vmatpush1.msra.mxu0 0.0
    %2178 = vmatprep.subr.mxu0 0.0
    %2179 = vmatpush1.msra.mxu0 0.0
    %2180 = vmatprep.subr.mxu0 0.0
    %2181 = vmatpush1.msra.mxu0 0.0
    %2182 = vmatprep.subr.mxu0 0.0
    %2183 = vmatpush1.msra.mxu0 0.0
    %2184 = vmatprep.subr.mxu0 0.0
    %2185 = vmatpush1.msra.mxu0 0.0
    %2186 = vmatprep.subr.mxu0 0.0
    %2187 = vmatpush1.msra.mxu0 0.0
    %2188 = vmatprep.subr.mxu0 0.0
    %2189 = vmatpush1.msra.mxu0 0.0
    %2190 = vmatprep.subr.mxu0 0.0
    %2191 = vmatpush1.msra.mxu0 0.0
    %2192 = vmatprep.subr.mxu0 0.0
    %2193 = vmatpush1.msra.mxu0 0.0
    %2194 = vmatprep.subr.mxu0 0.0
    %2195 = vmatpush1.msra.mxu0 0.0
    %2196 = vmatprep.subr.mxu0 0.0
    %2197 = vmatpush1.msra.mxu0 0.0
    %2198 = vmatprep.subr.mxu0 0.0
    %2199 = vmatpush1.msra.mxu0 0.0
    %2200 = vmatprep.subr.mxu0 0.0
    %2201 = vmatpush1.msra.mxu0 0.0
    %2202 = vmatprep.subr.mxu0 0.0
    %2203 = vmatpush1.msra.mxu0 0.0
    %2204 = vmatprep.subr.mxu0 0.0
    %2205 = vmatpush1.msra.mxu0 0.0
    %2206 = vmatprep.subr.mxu0 0.0
    %2207 = vmatpush1.msra.mxu0 0.0
    %2208 = vmatprep.subr.mxu0 0.0
    %2209 = vmatpush1.msra.mxu0 0.0
    %2210 = vmatprep.mubr.f32.mxu0 0.0
    %2211 = vmatmul.mubr.f32.gmra.mrb[0].mxu0 %v2144
    %v2212 = vpop.f32.mrb[0].mxu0
    %v2213 = vadd.f32 0.0, %v2212
    %v2214 = vpop.f32.mrb[0].mxu0
    %2215 = vdwg.mxu0
    %2216 = vrot.lane.b32.xlu0 %v257, 88
    %v2217 = vpop.permute.xlu0 %2216
    %v2220 = vsel %vm262, %v2139, 0
    %2222 = vmatprep.subr.mxu0 0.0
    %2223 = vmatpush1.msra.mxu0 %v2217
    %2224 = vmatprep.subr.mxu0 0.0
    %2225 = vmatpush1.msra.mxu0 0.0
    %2226 = vmatprep.subr.mxu0 0.0
    %2227 = vmatpush1.msra.mxu0 0.0
    %2228 = vmatprep.subr.mxu0 0.0
    %2229 = vmatpush1.msra.mxu0 0.0
    %2230 = vmatprep.subr.mxu0 0.0
    %2231 = vmatpush1.msra.mxu0 0.0
    %2232 = vmatprep.subr.mxu0 0.0
    %2233 = vmatpush1.msra.mxu0 0.0
    %2234 = vmatprep.subr.mxu0 0.0
    %2235 = vmatpush1.msra.mxu0 0.0
    %2236 = vmatprep.subr.mxu0 0.0
    %2237 = vmatpush1.msra.mxu0 0.0
    %2238 = vmatprep.subr.mxu0 0.0
    %2239 = vmatpush1.msra.mxu0 0.0
    %2240 = vmatprep.subr.mxu0 0.0
    %2241 = vmatpush1.msra.mxu0 0.0
    %2242 = vmatprep.subr.mxu0 0.0
    %2243 = vmatpush1.msra.mxu0 0.0
    %2244 = vmatprep.subr.mxu0 0.0
    %2245 = vmatpush1.msra.mxu0 0.0
    %2246 = vmatprep.subr.mxu0 0.0
    %2247 = vmatpush1.msra.mxu0 0.0
    %2248 = vmatprep.subr.mxu0 0.0
    %2249 = vmatpush1.msra.mxu0 0.0
    %2250 = vmatprep.subr.mxu0 0.0
    %2251 = vmatpush1.msra.mxu0 0.0
    %2252 = vmatprep.subr.mxu0 0.0
    %2253 = vmatpush1.msra.mxu0 0.0
    %2254 = vmatprep.subr.mxu0 0.0
    %2255 = vmatpush1.msra.mxu0 0.0
    %2256 = vmatprep.subr.mxu0 0.0
    %2257 = vmatpush1.msra.mxu0 0.0
    %2258 = vmatprep.subr.mxu0 0.0
    %2259 = vmatpush1.msra.mxu0 0.0
    %2260 = vmatprep.subr.mxu0 0.0
    %2261 = vmatpush1.msra.mxu0 0.0
    %2262 = vmatprep.subr.mxu0 0.0
    %2263 = vmatpush1.msra.mxu0 0.0
    %2264 = vmatprep.subr.mxu0 0.0
    %2265 = vmatpush1.msra.mxu0 0.0
    %2266 = vmatprep.subr.mxu0 0.0
    %2267 = vmatpush1.msra.mxu0 0.0
    %2268 = vmatprep.subr.mxu0 0.0
    %2269 = vmatpush1.msra.mxu0 0.0
    %2270 = vmatprep.subr.mxu0 0.0
    %2271 = vmatpush1.msra.mxu0 0.0
    %2272 = vmatprep.subr.mxu0 0.0
    %2273 = vmatpush1.msra.mxu0 0.0
    %2274 = vmatprep.subr.mxu0 0.0
    %2275 = vmatpush1.msra.mxu0 0.0
    %2276 = vmatprep.subr.mxu0 0.0
    %2277 = vmatpush1.msra.mxu0 0.0
    %2278 = vmatprep.subr.mxu0 0.0
    %2279 = vmatpush1.msra.mxu0 0.0
    %2280 = vmatprep.subr.mxu0 0.0
    %2281 = vmatpush1.msra.mxu0 0.0
    %2282 = vmatprep.subr.mxu0 0.0
    %2283 = vmatpush1.msra.mxu0 0.0
    %2284 = vmatprep.subr.mxu0 0.0
    %2285 = vmatpush1.msra.mxu0 0.0
    %2286 = vmatprep.mubr.f32.mxu0 0.0
    %2287 = vmatmul.mubr.f32.gmra.mrb[0].mxu0 %v2220
    %v2288 = vpop.f32.mrb[0].mxu0
    %v2289 = vadd.f32 0.0, %v2288
    %v2290 = vpop.f32.mrb[0].mxu0
    %2291 = vdwg.mxu0
    %2294 = vrot.lane.b32.xlu0 %v2213, 40
    %v2295 = vpop.permute.xlu0 %2294
    %2296 = vrot.lane.b32.xlu0 %v2289, 40
    %v2297 = vpop.permute.xlu0 %2296
    %vm2300 = vcmask 392512
    %2301 = vst.msk [vmem:[#allocation2] sm:$0xff] %vm2300, %v2295
    %2302 = vst.msk [vmem:[#allocation2 + $0x8] sm:$0xff] %vm2300, %v2297
    %2303 = vrot.lane.b32.xlu0 %v249, 80
    %v2304 = vpop.permute.xlu0 %2303
    %2305 = vrot.lane.b32.xlu0 %v249, 16
    %v2306 = vpop.permute.xlu0 %2305
    %v2307 = vsel %vm262, %v2304, 0
    %v2309 = vsel %vm262, %v2306, 0
    %2311 = vmatprep.subr.mxu0 0.0
    %2312 = vmatpush1.xpose.msra.mxu0 %v2309
    %2313 = vmatprep.subr.mxu0 0.0
    %2314 = vmatpush1.xpose.msra.mxu0 0.0
    %2315 = vmatprep.subr.mxu0 0.0
    %2316 = vmatpush1.xpose.msra.mxu0 0.0
    %2317 = vmatprep.subr.mxu0 0.0
    %2318 = vmatpush1.xpose.msra.mxu0 0.0
    %2319 = vmatprep.subr.mxu0 0.0
    %2320 = vmatpush1.xpose.msra.mxu0 0.0
    %2321 = vmatprep.subr.mxu0 0.0
    %2322 = vmatpush1.xpose.msra.mxu0 0.0
    %2323 = vmatprep.subr.mxu0 0.0
    %2324 = vmatpush1.xpose.msra.mxu0 0.0
    %2325 = vmatprep.subr.mxu0 0.0
    %2326 = vmatpush1.xpose.msra.mxu0 0.0
    %2327 = vmatprep.subr.mxu0 0.0
    %2328 = vmatpush1.xpose.msra.mxu0 0.0
    %2329 = vmatprep.subr.mxu0 0.0
    %2330 = vmatpush1.xpose.msra.mxu0 0.0
    %2331 = vmatprep.subr.mxu0 0.0
    %2332 = vmatpush1.xpose.msra.mxu0 0.0
    %2333 = vmatprep.subr.mxu0 0.0
    %2334 = vmatpush1.xpose.msra.mxu0 0.0
    %2335 = vmatprep.subr.mxu0 0.0
    %2336 = vmatpush1.xpose.msra.mxu0 0.0
    %2337 = vmatprep.subr.mxu0 0.0
    %2338 = vmatpush1.xpose.msra.mxu0 0.0
    %2339 = vmatprep.subr.mxu0 0.0
    %2340 = vmatpush1.xpose.msra.mxu0 0.0
    %2341 = vmatprep.subr.mxu0 0.0
    %2342 = vmatpush1.xpose.msra.mxu0 0.0
    %2343 = vmatprep.subr.mxu0 0.0
    %2344 = vmatpush1.xpose.msra.mxu0 0.0
    %2345 = vmatprep.subr.mxu0 0.0
    %2346 = vmatpush1.xpose.msra.mxu0 0.0
    %2347 = vmatprep.subr.mxu0 0.0
    %2348 = vmatpush1.xpose.msra.mxu0 0.0
    %2349 = vmatprep.subr.mxu0 0.0
    %2350 = vmatpush1.xpose.msra.mxu0 0.0
    %2351 = vmatprep.subr.mxu0 0.0
    %2352 = vmatpush1.xpose.msra.mxu0 0.0
    %2353 = vmatprep.subr.mxu0 0.0
    %2354 = vmatpush1.xpose.msra.mxu0 0.0
    %2355 = vmatprep.subr.mxu0 0.0
    %2356 = vmatpush1.xpose.msra.mxu0 0.0
    %2357 = vmatprep.subr.mxu0 0.0
    %2358 = vmatpush1.xpose.msra.mxu0 0.0
    %2359 = vmatprep.subr.mxu0 0.0
    %2360 = vmatpush1.xpose.msra.mxu0 0.0
    %2361 = vmatprep.subr.mxu0 0.0
    %2362 = vmatpush1.xpose.msra.mxu0 0.0
    %2363 = vmatprep.subr.mxu0 0.0
    %2364 = vmatpush1.xpose.msra.mxu0 0.0
    %2365 = vmatprep.subr.mxu0 0.0
    %2366 = vmatpush1.xpose.msra.mxu0 0.0
    %2367 = vmatprep.subr.mxu0 0.0
    %2368 = vmatpush1.xpose.msra.mxu0 0.0
    %2369 = vmatprep.subr.mxu0 0.0
    %2370 = vmatpush1.xpose.msra.mxu0 0.0
    %2371 = vmatprep.subr.mxu0 0.0
    %2372 = vmatpush1.xpose.msra.mxu0 0.0
    %2373 = vmatprep.subr.mxu0 0.0
    %2374 = vmatpush1.xpose.msra.mxu0 0.0
    %2375 = vmatprep.mubr.f32.mxu0 0.0
    %2376 = vmatmul.mubr.f32.gmra.mrb[0].mxu0 %v2307
    %v2377 = vpop.f32.mrb[0].mxu0
    %v2378 = vadd.f32 0.0, %v2377
    %v2379 = vpop.f32.mrb[0].mxu0
    %2380 = vdwg.mxu0
    %2381 = vrot.lane.b32.xlu0 %v255, 80
    %v2382 = vpop.permute.xlu0 %2381
    %2383 = vrot.lane.b32.xlu0 %v255, 16
    %v2384 = vpop.permute.xlu0 %2383
    %v2385 = vsel %vm262, %v2382, 0
    %v2387 = vsel %vm262, %v2384, 0
    %2389 = vmatprep.subr.mxu0 0.0
    %2390 = vmatpush1.xpose.msra.mxu0 %v2387
    %2391 = vmatprep.subr.mxu0 0.0
    %2392 = vmatpush1.xpose.msra.mxu0 0.0
    %2393 = vmatprep.subr.mxu0 0.0
    %2394 = vmatpush1.xpose.msra.mxu0 0.0
    %2395 = vmatprep.subr.mxu0 0.0
    %2396 = vmatpush1.xpose.msra.mxu0 0.0
    %2397 = vmatprep.subr.mxu0 0.0
    %2398 = vmatpush1.xpose.msra.mxu0 0.0
    %2399 = vmatprep.subr.mxu0 0.0
    %2400 = vmatpush1.xpose.msra.mxu0 0.0
    %2401 = vmatprep.subr.mxu0 0.0
    %2402 = vmatpush1.xpose.msra.mxu0 0.0
    %2403 = vmatprep.subr.mxu0 0.0
    %2404 = vmatpush1.xpose.msra.mxu0 0.0
    %2405 = vmatprep.subr.mxu0 0.0
    %2406 = vmatpush1.xpose.msra.mxu0 0.0
    %2407 = vmatprep.subr.mxu0 0.0
    %2408 = vmatpush1.xpose.msra.mxu0 0.0
    %2409 = vmatprep.subr.mxu0 0.0
    %2410 = vmatpush1.xpose.msra.mxu0 0.0
    %2411 = vmatprep.subr.mxu0 0.0
    %2412 = vmatpush1.xpose.msra.mxu0 0.0
    %2413 = vmatprep.subr.mxu0 0.0
    %2414 = vmatpush1.xpose.msra.mxu0 0.0
    %2415 = vmatprep.subr.mxu0 0.0
    %2416 = vmatpush1.xpose.msra.mxu0 0.0
    %2417 = vmatprep.subr.mxu0 0.0
    %2418 = vmatpush1.xpose.msra.mxu0 0.0
    %2419 = vmatprep.subr.mxu0 0.0
    %2420 = vmatpush1.xpose.msra.mxu0 0.0
    %2421 = vmatprep.subr.mxu0 0.0
    %2422 = vmatpush1.xpose.msra.mxu0 0.0
    %2423 = vmatprep.subr.mxu0 0.0
    %2424 = vmatpush1.xpose.msra.mxu0 0.0
    %2425 = vmatprep.subr.mxu0 0.0
    %2426 = vmatpush1.xpose.msra.mxu0 0.0
    %2427 = vmatprep.subr.mxu0 0.0
    %2428 = vmatpush1.xpose.msra.mxu0 0.0
    %2429 = vmatprep.subr.mxu0 0.0
    %2430 = vmatpush1.xpose.msra.mxu0 0.0
    %2431 = vmatprep.subr.mxu0 0.0
    %2432 = vmatpush1.xpose.msra.mxu0 0.0
    %2433 = vmatprep.subr.mxu0 0.0
    %2434 = vmatpush1.xpose.msra.mxu0 0.0
    %2435 = vmatprep.subr.mxu0 0.0
    %2436 = vmatpush1.xpose.msra.mxu0 0.0
    %2437 = vmatprep.subr.mxu0 0.0
    %2438 = vmatpush1.xpose.msra.mxu0 0.0
    %2439 = vmatprep.subr.mxu0 0.0
    %2440 = vmatpush1.xpose.msra.mxu0 0.0
    %2441 = vmatprep.subr.mxu0 0.0
    %2442 = vmatpush1.xpose.msra.mxu0 0.0
    %2443 = vmatprep.subr.mxu0 0.0
    %2444 = vmatpush1.xpose.msra.mxu0 0.0
    %2445 = vmatprep.subr.mxu0 0.0
    %2446 = vmatpush1.xpose.msra.mxu0 0.0
    %2447 = vmatprep.subr.mxu0 0.0
    %2448 = vmatpush1.xpose.msra.mxu0 0.0
    %2449 = vmatprep.subr.mxu0 0.0
    %2450 = vmatpush1.xpose.msra.mxu0 0.0
    %2451 = vmatprep.subr.mxu0 0.0
    %2452 = vmatpush1.xpose.msra.mxu0 0.0
    %2453 = vmatprep.mubr.f32.mxu0 0.0
    %2454 = vmatmul.mubr.f32.gmra.mrb[0].mxu0 %v2385
    %v2455 = vpop.f32.mrb[0].mxu0
    %v2456 = vadd.f32 0.0, %v2455
    %v2457 = vpop.f32.mrb[0].mxu0
    %2458 = vdwg.mxu0
    %v2459 = vmul.f32 %v2378, 0.35355338
    %v2460 = vmul.f32 %v2456, 0.35355338
    %v2461 = vsel %vm262, %v2459, -inf
    %2462 = vmax.xlane.f32.xlu0 %v2461
    %v2463 = vpop.xlane.xlu0 %2462
    %v2464 = vsel %vm262, %v2460, -inf
    %2465 = vmax.xlane.f32.xlu0 %v2464
    %v2466 = vpop.xlane.xlu0 %2465
    %v2467 = vsub.f32 %v2459, %v2463
    %v2468 = vsub.f32 %v2460, %v2466
    %v2469 = vmul.f32 %v2467, 1.442695
    %v2470 = vpow.pop %v2469
    %v2471 = vmul.f32 %v2468, 1.442695
    %v2472 = vpow.pop %v2471
    %v2473 = vsel %vm262, %v2470, 0.0
    %2474 = vadd.xlane.f32.xlu0 %v2473
    %v2475 = vpop.xlane.xlu0 %2474
    %v2476 = vsel %vm262, %v2472, 0.0
    %2477 = vadd.xlane.f32.xlu0 %v2476
    %v2478 = vpop.xlane.xlu0 %2477
    %v2479 = vrcp.pop %v2475
    %v2480 = vrcp.pop %v2478
    %v2481 = vmul.f32 %v2470, %v2479
    %v2482 = vmul.f32 %v2472, %v2480
    %2483 = vrot.lane.b32.xlu0 %v251, 80
    %v2484 = vpop.permute.xlu0 %2483
    %v2487 = vsel %vm262, %v2481, 0
    %2489 = vmatprep.subr.mxu0 0.0
    %2490 = vmatpush1.msra.mxu0 %v2484
    %2491 = vmatprep.subr.mxu0 0.0
    %2492 = vmatpush1.msra.mxu0 0.0
    %2493 = vmatprep.subr.mxu0 0.0
    %2494 = vmatpush1.msra.mxu0 0.0
    %2495 = vmatprep.subr.mxu0 0.0
    %2496 = vmatpush1.msra.mxu0 0.0
    %2497 = vmatprep.subr.mxu0 0.0
    %2498 = vmatpush1.msra.mxu0 0.0
    %2499 = vmatprep.subr.mxu0 0.0
    %2500 = vmatpush1.msra.mxu0 0.0
    %2501 = vmatprep.subr.mxu0 0.0
    %2502 = vmatpush1.msra.mxu0 0.0
    %2503 = vmatprep.subr.mxu0 0.0
    %2504 = vmatpush1.msra.mxu0 0.0
    %2505 = vmatprep.subr.mxu0 0.0
    %2506 = vmatpush1.msra.mxu0 0.0
    %2507 = vmatprep.subr.mxu0 0.0
    %2508 = vmatpush1.msra.mxu0 0.0
    %2509 = vmatprep.subr.mxu0 0.0
    %2510 = vmatpush1.msra.mxu0 0.0
    %2511 = vmatprep.subr.mxu0 0.0
    %2512 = vmatpush1.msra.mxu0 0.0
    %2513 = vmatprep.subr.mxu0 0.0
    %2514 = vmatpush1.msra.mxu0 0.0
    %2515 = vmatprep.subr.mxu0 0.0
    %2516 = vmatpush1.msra.mxu0 0.0
    %2517 = vmatprep.subr.mxu0 0.0
    %2518 = vmatpush1.msra.mxu0 0.0
    %2519 = vmatprep.subr.mxu0 0.0
    %2520 = vmatpush1.msra.mxu0 0.0
    %2521 = vmatprep.subr.mxu0 0.0
    %2522 = vmatpush1.msra.mxu0 0.0
    %2523 = vmatprep.subr.mxu0 0.0
    %2524 = vmatpush1.msra.mxu0 0.0
    %2525 = vmatprep.subr.mxu0 0.0
    %2526 = vmatpush1.msra.mxu0 0.0
    %2527 = vmatprep.subr.mxu0 0.0
    %2528 = vmatpush1.msra.mxu0 0.0
    %2529 = vmatprep.subr.mxu0 0.0
    %2530 = vmatpush1.msra.mxu0 0.0
    %2531 = vmatprep.subr.mxu0 0.0
    %2532 = vmatpush1.msra.mxu0 0.0
    %2533 = vmatprep.subr.mxu0 0.0
    %2534 = vmatpush1.msra.mxu0 0.0
    %2535 = vmatprep.subr.mxu0 0.0
    %2536 = vmatpush1.msra.mxu0 0.0
    %2537 = vmatprep.subr.mxu0 0.0
    %2538 = vmatpush1.msra.mxu0 0.0
    %2539 = vmatprep.subr.mxu0 0.0
    %2540 = vmatpush1.msra.mxu0 0.0
    %2541 = vmatprep.subr.mxu0 0.0
    %2542 = vmatpush1.msra.mxu0 0.0
    %2543 = vmatprep.subr.mxu0 0.0
    %2544 = vmatpush1.msra.mxu0 0.0
    %2545 = vmatprep.subr.mxu0 0.0
    %2546 = vmatpush1.msra.mxu0 0.0
    %2547 = vmatprep.subr.mxu0 0.0
    %2548 = vmatpush1.msra.mxu0 0.0
    %2549 = vmatprep.subr.mxu0 0.0
    %2550 = vmatpush1.msra.mxu0 0.0
    %2551 = vmatprep.subr.mxu0 0.0
    %2552 = vmatpush1.msra.mxu0 0.0
    %2553 = vmatprep.mubr.f32.mxu0 0.0
    %2554 = vmatmul.mubr.f32.gmra.mrb[0].mxu0 %v2487
    %v2555 = vpop.f32.mrb[0].mxu0
    %v2556 = vadd.f32 0.0, %v2555
    %v2557 = vpop.f32.mrb[0].mxu0
    %2558 = vdwg.mxu0
    %2559 = vrot.lane.b32.xlu0 %v257, 80
    %v2560 = vpop.permute.xlu0 %2559
    %v2563 = vsel %vm262, %v2482, 0
    %2565 = vmatprep.subr.mxu0 0.0
    %2566 = vmatpush1.msra.mxu0 %v2560
    %2567 = vmatprep.subr.mxu0 0.0
    %2568 = vmatpush1.msra.mxu0 0.0
    %2569 = vmatprep.subr.mxu0 0.0
    %2570 = vmatpush1.msra.mxu0 0.0
    %2571 = vmatprep.subr.mxu0 0.0
    %2572 = vmatpush1.msra.mxu0 0.0
    %2573 = vmatprep.subr.mxu0 0.0
    %2574 = vmatpush1.msra.mxu0 0.0
    %2575 = vmatprep.subr.mxu0 0.0
    %2576 = vmatpush1.msra.mxu0 0.0
    %2577 = vmatprep.subr.mxu0 0.0
    %2578 = vmatpush1.msra.mxu0 0.0
    %2579 = vmatprep.subr.mxu0 0.0
    %2580 = vmatpush1.msra.mxu0 0.0
    %2581 = vmatprep.subr.mxu0 0.0
    %2582 = vmatpush1.msra.mxu0 0.0
    %2583 = vmatprep.subr.mxu0 0.0
    %2584 = vmatpush1.msra.mxu0 0.0
    %2585 = vmatprep.subr.mxu0 0.0
    %2586 = vmatpush1.msra.mxu0 0.0
    %2587 = vmatprep.subr.mxu0 0.0
    %2588 = vmatpush1.msra.mxu0 0.0
    %2589 = vmatprep.subr.mxu0 0.0
    %2590 = vmatpush1.msra.mxu0 0.0
    %2591 = vmatprep.subr.mxu0 0.0
    %2592 = vmatpush1.msra.mxu0 0.0
    %2593 = vmatprep.subr.mxu0 0.0
    %2594 = vmatpush1.msra.mxu0 0.0
    %2595 = vmatprep.subr.mxu0 0.0
    %2596 = vmatpush1.msra.mxu0 0.0
    %2597 = vmatprep.subr.mxu0 0.0
    %2598 = vmatpush1.msra.mxu0 0.0
    %2599 = vmatprep.subr.mxu0 0.0
    %2600 = vmatpush1.msra.mxu0 0.0
    %2601 = vmatprep.subr.mxu0 0.0
    %2602 = vmatpush1.msra.mxu0 0.0
    %2603 = vmatprep.subr.mxu0 0.0
    %2604 = vmatpush1.msra.mxu0 0.0
    %2605 = vmatprep.subr.mxu0 0.0
    %2606 = vmatpush1.msra.mxu0 0.0
    %2607 = vmatprep.subr.mxu0 0.0
    %2608 = vmatpush1.msra.mxu0 0.0
    %2609 = vmatprep.subr.mxu0 0.0
    %2610 = vmatpush1.msra.mxu0 0.0
    %2611 = vmatprep.subr.mxu0 0.0
    %2612 = vmatpush1.msra.mxu0 0.0
    %2613 = vmatprep.subr.mxu0 0.0
    %2614 = vmatpush1.msra.mxu0 0.0
    %2615 = vmatprep.subr.mxu0 0.0
    %2616 = vmatpush1.msra.mxu0 0.0
    %2617 = vmatprep.subr.mxu0 0.0
    %2618 = vmatpush1.msra.mxu0 0.0
    %2619 = vmatprep.subr.mxu0 0.0
    %2620 = vmatpush1.msra.mxu0 0.0
    %2621 = vmatprep.subr.mxu0 0.0
    %2622 = vmatpush1.msra.mxu0 0.0
    %2623 = vmatprep.subr.mxu0 0.0
    %2624 = vmatpush1.msra.mxu0 0.0
    %2625 = vmatprep.subr.mxu0 0.0
    %2626 = vmatpush1.msra.mxu0 0.0
    %2627 = vmatprep.subr.mxu0 0.0
    %2628 = vmatpush1.msra.mxu0 0.0
    %2629 = vmatprep.mubr.f32.mxu0 0.0
    %2630 = vmatmul.mubr.f32.gmra.mrb[0].mxu0 %v2563
    %v2631 = vpop.f32.mrb[0].mxu0
    %v2632 = vadd.f32 0.0, %v2631
    %v2633 = vpop.f32.mrb[0].mxu0
    %2634 = vdwg.mxu0
    %2637 = vrot.lane.b32.xlu0 %v2556, 48
    %v2638 = vpop.permute.xlu0 %2637
    %2639 = vrot.lane.b32.xlu0 %v2632, 48
    %v2640 = vpop.permute.xlu0 %2639
    %vm2643 = vcmask 458112
    %2644 = vst.msk [vmem:[#allocation2] sm:$0xff] %vm2643, %v2638
    %2645 = vst.msk [vmem:[#allocation2 + $0x8] sm:$0xff] %vm2643, %v2640
    %2646 = vrot.lane.b32.xlu0 %v249, 72
    %v2647 = vpop.permute.xlu0 %2646
    %2648 = vrot.lane.b32.xlu0 %v249, 8
    %v2649 = vpop.permute.xlu0 %2648
    %v2650 = vsel %vm262, %v2647, 0
    %v2652 = vsel %vm262, %v2649, 0
    %2654 = vmatprep.subr.mxu0 0.0
    %2655 = vmatpush1.xpose.msra.mxu0 %v2652
    %2656 = vmatprep.subr.mxu0 0.0
    %2657 = vmatpush1.xpose.msra.mxu0 0.0
    %2658 = vmatprep.subr.mxu0 0.0
    %2659 = vmatpush1.xpose.msra.mxu0 0.0
    %2660 = vmatprep.subr.mxu0 0.0
    %2661 = vmatpush1.xpose.msra.mxu0 0.0
    %2662 = vmatprep.subr.mxu0 0.0
    %2663 = vmatpush1.xpose.msra.mxu0 0.0
    %2664 = vmatprep.subr.mxu0 0.0
    %2665 = vmatpush1.xpose.msra.mxu0 0.0
    %2666 = vmatprep.subr.mxu0 0.0
    %2667 = vmatpush1.xpose.msra.mxu0 0.0
    %2668 = vmatprep.subr.mxu0 0.0
    %2669 = vmatpush1.xpose.msra.mxu0 0.0
    %2670 = vmatprep.subr.mxu0 0.0
    %2671 = vmatpush1.xpose.msra.mxu0 0.0
    %2672 = vmatprep.subr.mxu0 0.0
    %2673 = vmatpush1.xpose.msra.mxu0 0.0
    %2674 = vmatprep.subr.mxu0 0.0
    %2675 = vmatpush1.xpose.msra.mxu0 0.0
    %2676 = vmatprep.subr.mxu0 0.0
    %2677 = vmatpush1.xpose.msra.mxu0 0.0
    %2678 = vmatprep.subr.mxu0 0.0
    %2679 = vmatpush1.xpose.msra.mxu0 0.0
    %2680 = vmatprep.subr.mxu0 0.0
    %2681 = vmatpush1.xpose.msra.mxu0 0.0
    %2682 = vmatprep.subr.mxu0 0.0
    %2683 = vmatpush1.xpose.msra.mxu0 0.0
    %2684 = vmatprep.subr.mxu0 0.0
    %2685 = vmatpush1.xpose.msra.mxu0 0.0
    %2686 = vmatprep.subr.mxu0 0.0
    %2687 = vmatpush1.xpose.msra.mxu0 0.0
    %2688 = vmatprep.subr.mxu0 0.0
    %2689 = vmatpush1.xpose.msra.mxu0 0.0
    %2690 = vmatprep.subr.mxu0 0.0
    %2691 = vmatpush1.xpose.msra.mxu0 0.0
    %2692 = vmatprep.subr.mxu0 0.0
    %2693 = vmatpush1.xpose.msra.mxu0 0.0
    %2694 = vmatprep.subr.mxu0 0.0
    %2695 = vmatpush1.xpose.msra.mxu0 0.0
    %2696 = vmatprep.subr.mxu0 0.0
    %2697 = vmatpush1.xpose.msra.mxu0 0.0
    %2698 = vmatprep.subr.mxu0 0.0
    %2699 = vmatpush1.xpose.msra.mxu0 0.0
    %2700 = vmatprep.subr.mxu0 0.0
    %2701 = vmatpush1.xpose.msra.mxu0 0.0
    %2702 = vmatprep.subr.mxu0 0.0
    %2703 = vmatpush1.xpose.msra.mxu0 0.0
    %2704 = vmatprep.subr.mxu0 0.0
    %2705 = vmatpush1.xpose.msra.mxu0 0.0
    %2706 = vmatprep.subr.mxu0 0.0
    %2707 = vmatpush1.xpose.msra.mxu0 0.0
    %2708 = vmatprep.subr.mxu0 0.0
    %2709 = vmatpush1.xpose.msra.mxu0 0.0
    %2710 = vmatprep.subr.mxu0 0.0
    %2711 = vmatpush1.xpose.msra.mxu0 0.0
    %2712 = vmatprep.subr.mxu0 0.0
    %2713 = vmatpush1.xpose.msra.mxu0 0.0
    %2714 = vmatprep.subr.mxu0 0.0
    %2715 = vmatpush1.xpose.msra.mxu0 0.0
    %2716 = vmatprep.subr.mxu0 0.0
    %2717 = vmatpush1.xpose.msra.mxu0 0.0
    %2718 = vmatprep.mubr.f32.mxu0 0.0
    %2719 = vmatmul.mubr.f32.gmra.mrb[0].mxu0 %v2650
    %v2720 = vpop.f32.mrb[0].mxu0
    %v2721 = vadd.f32 0.0, %v2720
    %v2722 = vpop.f32.mrb[0].mxu0
    %2723 = vdwg.mxu0
    %2724 = vrot.lane.b32.xlu0 %v255, 72
    %v2725 = vpop.permute.xlu0 %2724
    %2726 = vrot.lane.b32.xlu0 %v255, 8
    %v2727 = vpop.permute.xlu0 %2726
    %v2728 = vsel %vm262, %v2725, 0
    %v2730 = vsel %vm262, %v2727, 0
    %2732 = vmatprep.subr.mxu0 0.0
    %2733 = vmatpush1.xpose.msra.mxu0 %v2730
    %2734 = vmatprep.subr.mxu0 0.0
    %2735 = vmatpush1.xpose.msra.mxu0 0.0
    %2736 = vmatprep.subr.mxu0 0.0
    %2737 = vmatpush1.xpose.msra.mxu0 0.0
    %2738 = vmatprep.subr.mxu0 0.0
    %2739 = vmatpush1.xpose.msra.mxu0 0.0
    %2740 = vmatprep.subr.mxu0 0.0
    %2741 = vmatpush1.xpose.msra.mxu0 0.0
    %2742 = vmatprep.subr.mxu0 0.0
    %2743 = vmatpush1.xpose.msra.mxu0 0.0
    %2744 = vmatprep.subr.mxu0 0.0
    %2745 = vmatpush1.xpose.msra.mxu0 0.0
    %2746 = vmatprep.subr.mxu0 0.0
    %2747 = vmatpush1.xpose.msra.mxu0 0.0
    %2748 = vmatprep.subr.mxu0 0.0
    %2749 = vmatpush1.xpose.msra.mxu0 0.0
    %2750 = vmatprep.subr.mxu0 0.0
    %2751 = vmatpush1.xpose.msra.mxu0 0.0
    %2752 = vmatprep.subr.mxu0 0.0
    %2753 = vmatpush1.xpose.msra.mxu0 0.0
    %2754 = vmatprep.subr.mxu0 0.0
    %2755 = vmatpush1.xpose.msra.mxu0 0.0
    %2756 = vmatprep.subr.mxu0 0.0
    %2757 = vmatpush1.xpose.msra.mxu0 0.0
    %2758 = vmatprep.subr.mxu0 0.0
    %2759 = vmatpush1.xpose.msra.mxu0 0.0
    %2760 = vmatprep.subr.mxu0 0.0
    %2761 = vmatpush1.xpose.msra.mxu0 0.0
    %2762 = vmatprep.subr.mxu0 0.0
    %2763 = vmatpush1.xpose.msra.mxu0 0.0
    %2764 = vmatprep.subr.mxu0 0.0
    %2765 = vmatpush1.xpose.msra.mxu0 0.0
    %2766 = vmatprep.subr.mxu0 0.0
    %2767 = vmatpush1.xpose.msra.mxu0 0.0
    %2768 = vmatprep.subr.mxu0 0.0
    %2769 = vmatpush1.xpose.msra.mxu0 0.0
    %2770 = vmatprep.subr.mxu0 0.0
    %2771 = vmatpush1.xpose.msra.mxu0 0.0
    %2772 = vmatprep.subr.mxu0 0.0
    %2773 = vmatpush1.xpose.msra.mxu0 0.0
    %2774 = vmatprep.subr.mxu0 0.0
    %2775 = vmatpush1.xpose.msra.mxu0 0.0
    %2776 = vmatprep.subr.mxu0 0.0
    %2777 = vmatpush1.xpose.msra.mxu0 0.0
    %2778 = vmatprep.subr.mxu0 0.0
    %2779 = vmatpush1.xpose.msra.mxu0 0.0
    %2780 = vmatprep.subr.mxu0 0.0
    %2781 = vmatpush1.xpose.msra.mxu0 0.0
    %2782 = vmatprep.subr.mxu0 0.0
    %2783 = vmatpush1.xpose.msra.mxu0 0.0
    %2784 = vmatprep.subr.mxu0 0.0
    %2785 = vmatpush1.xpose.msra.mxu0 0.0
    %2786 = vmatprep.subr.mxu0 0.0
    %2787 = vmatpush1.xpose.msra.mxu0 0.0
    %2788 = vmatprep.subr.mxu0 0.0
    %2789 = vmatpush1.xpose.msra.mxu0 0.0
    %2790 = vmatprep.subr.mxu0 0.0
    %2791 = vmatpush1.xpose.msra.mxu0 0.0
    %2792 = vmatprep.subr.mxu0 0.0
    %2793 = vmatpush1.xpose.msra.mxu0 0.0
    %2794 = vmatprep.subr.mxu0 0.0
    %2795 = vmatpush1.xpose.msra.mxu0 0.0
    %2796 = vmatprep.mubr.f32.mxu0 0.0
    %2797 = vmatmul.mubr.f32.gmra.mrb[0].mxu0 %v2728
    %v2798 = vpop.f32.mrb[0].mxu0
    %v2799 = vadd.f32 0.0, %v2798
    %v2800 = vpop.f32.mrb[0].mxu0
    %2801 = vdwg.mxu0
    %v2802 = vmul.f32 %v2721, 0.35355338
    %v2803 = vmul.f32 %v2799, 0.35355338
    %v2804 = vsel %vm262, %v2802, -inf
    %2805 = vmax.xlane.f32.xlu0 %v2804
    %v2806 = vpop.xlane.xlu0 %2805
    %v2807 = vsel %vm262, %v2803, -inf
    %2808 = vmax.xlane.f32.xlu0 %v2807
    %v2809 = vpop.xlane.xlu0 %2808
    %v2810 = vsub.f32 %v2802, %v2806
    %v2811 = vsub.f32 %v2803, %v2809
    %v2812 = vmul.f32 %v2810, 1.442695
    %v2813 = vpow.pop %v2812
    %v2814 = vmul.f32 %v2811, 1.442695
    %v2815 = vpow.pop %v2814
    %v2816 = vsel %vm262, %v2813, 0.0
    %2817 = vadd.xlane.f32.xlu0 %v2816
    %v2818 = vpop.xlane.xlu0 %2817
    %v2819 = vsel %vm262, %v2815, 0.0
    %2820 = vadd.xlane.f32.xlu0 %v2819
    %v2821 = vpop.xlane.xlu0 %2820
    %v2822 = vrcp.pop %v2818
    %v2823 = vrcp.pop %v2821
    %v2824 = vmul.f32 %v2813, %v2822
    %v2825 = vmul.f32 %v2815, %v2823
    %2826 = vrot.lane.b32.xlu0 %v251, 72
    %v2827 = vpop.permute.xlu0 %2826
    %v2830 = vsel %vm262, %v2824, 0
    %2832 = vmatprep.subr.mxu0 0.0
    %2833 = vmatpush1.msra.mxu0 %v2827
    %2834 = vmatprep.subr.mxu0 0.0
    %2835 = vmatpush1.msra.mxu0 0.0
    %2836 = vmatprep.subr.mxu0 0.0
    %2837 = vmatpush1.msra.mxu0 0.0
    %2838 = vmatprep.subr.mxu0 0.0
    %2839 = vmatpush1.msra.mxu0 0.0
    %2840 = vmatprep.subr.mxu0 0.0
    %2841 = vmatpush1.msra.mxu0 0.0
    %2842 = vmatprep.subr.mxu0 0.0
    %2843 = vmatpush1.msra.mxu0 0.0
    %2844 = vmatprep.subr.mxu0 0.0
    %2845 = vmatpush1.msra.mxu0 0.0
    %2846 = vmatprep.subr.mxu0 0.0
    %2847 = vmatpush1.msra.mxu0 0.0
    %2848 = vmatprep.subr.mxu0 0.0
    %2849 = vmatpush1.msra.mxu0 0.0
    %2850 = vmatprep.subr.mxu0 0.0
    %2851 = vmatpush1.msra.mxu0 0.0
    %2852 = vmatprep.subr.mxu0 0.0
    %2853 = vmatpush1.msra.mxu0 0.0
    %2854 = vmatprep.subr.mxu0 0.0
    %2855 = vmatpush1.msra.mxu0 0.0
    %2856 = vmatprep.subr.mxu0 0.0
    %2857 = vmatpush1.msra.mxu0 0.0
    %2858 = vmatprep.subr.mxu0 0.0
    %2859 = vmatpush1.msra.mxu0 0.0
    %2860 = vmatprep.subr.mxu0 0.0
    %2861 = vmatpush1.msra.mxu0 0.0
    %2862 = vmatprep.subr.mxu0 0.0
    %2863 = vmatpush1.msra.mxu0 0.0
    %2864 = vmatprep.subr.mxu0 0.0
    %2865 = vmatpush1.msra.mxu0 0.0
    %2866 = vmatprep.subr.mxu0 0.0
    %2867 = vmatpush1.msra.mxu0 0.0
    %2868 = vmatprep.subr.mxu0 0.0
    %2869 = vmatpush1.msra.mxu0 0.0
    %2870 = vmatprep.subr.mxu0 0.0
    %2871 = vmatpush1.msra.mxu0 0.0
    %2872 = vmatprep.subr.mxu0 0.0
    %2873 = vmatpush1.msra.mxu0 0.0
    %2874 = vmatprep.subr.mxu0 0.0
    %2875 = vmatpush1.msra.mxu0 0.0
    %2876 = vmatprep.subr.mxu0 0.0
    %2877 = vmatpush1.msra.mxu0 0.0
    %2878 = vmatprep.subr.mxu0 0.0
    %2879 = vmatpush1.msra.mxu0 0.0
    %2880 = vmatprep.subr.mxu0 0.0
    %2881 = vmatpush1.msra.mxu0 0.0
    %2882 = vmatprep.subr.mxu0 0.0
    %2883 = vmatpush1.msra.mxu0 0.0
    %2884 = vmatprep.subr.mxu0 0.0
    %2885 = vmatpush1.msra.mxu0 0.0
    %2886 = vmatprep.subr.mxu0 0.0
    %2887 = vmatpush1.msra.mxu0 0.0
    %2888 = vmatprep.subr.mxu0 0.0
    %2889 = vmatpush1.msra.mxu0 0.0
    %2890 = vmatprep.subr.mxu0 0.0
    %2891 = vmatpush1.msra.mxu0 0.0
    %2892 = vmatprep.subr.mxu0 0.0
    %2893 = vmatpush1.msra.mxu0 0.0
    %2894 = vmatprep.subr.mxu0 0.0
    %2895 = vmatpush1.msra.mxu0 0.0
    %2896 = vmatprep.mubr.f32.mxu0 0.0
    %2897 = vmatmul.mubr.f32.gmra.mrb[0].mxu0 %v2830
    %v2898 = vpop.f32.mrb[0].mxu0
    %v2899 = vadd.f32 0.0, %v2898
    %v2900 = vpop.f32.mrb[0].mxu0
    %2901 = vdwg.mxu0
    %2902 = vrot.lane.b32.xlu0 %v257, 72
    %v2903 = vpop.permute.xlu0 %2902
    %v2906 = vsel %vm262, %v2825, 0
    %2908 = vmatprep.subr.mxu0 0.0
    %2909 = vmatpush1.msra.mxu0 %v2903
    %2910 = vmatprep.subr.mxu0 0.0
    %2911 = vmatpush1.msra.mxu0 0.0
    %2912 = vmatprep.subr.mxu0 0.0
    %2913 = vmatpush1.msra.mxu0 0.0
    %2914 = vmatprep.subr.mxu0 0.0
    %2915 = vmatpush1.msra.mxu0 0.0
    %2916 = vmatprep.subr.mxu0 0.0
    %2917 = vmatpush1.msra.mxu0 0.0
    %2918 = vmatprep.subr.mxu0 0.0
    %2919 = vmatpush1.msra.mxu0 0.0
    %2920 = vmatprep.subr.mxu0 0.0
    %2921 = vmatpush1.msra.mxu0 0.0
    %2922 = vmatprep.subr.mxu0 0.0
    %2923 = vmatpush1.msra.mxu0 0.0
    %2924 = vmatprep.subr.mxu0 0.0
    %2925 = vmatpush1.msra.mxu0 0.0
    %2926 = vmatprep.subr.mxu0 0.0
    %2927 = vmatpush1.msra.mxu0 0.0
    %2928 = vmatprep.subr.mxu0 0.0
    %2929 = vmatpush1.msra.mxu0 0.0
    %2930 = vmatprep.subr.mxu0 0.0
    %2931 = vmatpush1.msra.mxu0 0.0
    %2932 = vmatprep.subr.mxu0 0.0
    %2933 = vmatpush1.msra.mxu0 0.0
    %2934 = vmatprep.subr.mxu0 0.0
    %2935 = vmatpush1.msra.mxu0 0.0
    %2936 = vmatprep.subr.mxu0 0.0
    %2937 = vmatpush1.msra.mxu0 0.0
    %2938 = vmatprep.subr.mxu0 0.0
    %2939 = vmatpush1.msra.mxu0 0.0
    %2940 = vmatprep.subr.mxu0 0.0
    %2941 = vmatpush1.msra.mxu0 0.0
    %2942 = vmatprep.subr.mxu0 0.0
    %2943 = vmatpush1.msra.mxu0 0.0
    %2944 = vmatprep.subr.mxu0 0.0
    %2945 = vmatpush1.msra.mxu0 0.0
    %2946 = vmatprep.subr.mxu0 0.0
    %2947 = vmatpush1.msra.mxu0 0.0
    %2948 = vmatprep.subr.mxu0 0.0
    %2949 = vmatpush1.msra.mxu0 0.0
    %2950 = vmatprep.subr.mxu0 0.0
    %2951 = vmatpush1.msra.mxu0 0.0
    %2952 = vmatprep.subr.mxu0 0.0
    %2953 = vmatpush1.msra.mxu0 0.0
    %2954 = vmatprep.subr.mxu0 0.0
    %2955 = vmatpush1.msra.mxu0 0.0
    %2956 = vmatprep.subr.mxu0 0.0
    %2957 = vmatpush1.msra.mxu0 0.0
    %2958 = vmatprep.subr.mxu0 0.0
    %2959 = vmatpush1.msra.mxu0 0.0
    %2960 = vmatprep.subr.mxu0 0.0
    %2961 = vmatpush1.msra.mxu0 0.0
    %2962 = vmatprep.subr.mxu0 0.0
    %2963 = vmatpush1.msra.mxu0 0.0
    %2964 = vmatprep.subr.mxu0 0.0
    %2965 = vmatpush1.msra.mxu0 0.0
    %2966 = vmatprep.subr.mxu0 0.0
    %2967 = vmatpush1.msra.mxu0 0.0
    %2968 = vmatprep.subr.mxu0 0.0
    %2969 = vmatpush1.msra.mxu0 0.0
    %2970 = vmatprep.subr.mxu0 0.0
    %2971 = vmatpush1.msra.mxu0 0.0
    %2972 = vmatprep.mubr.f32.mxu0 0.0
    %2973 = vmatmul.mubr.f32.gmra.mrb[0].mxu0 %v2906
    %v2974 = vpop.f32.mrb[0].mxu0
    %v2975 = vadd.f32 0.0, %v2974
    %v2976 = vpop.f32.mrb[0].mxu0
    %2977 = vdwg.mxu0
    %2980 = vrot.lane.b32.xlu0 %v2899, 56
    %v2981 = vpop.permute.xlu0 %2980
    %2982 = vrot.lane.b32.xlu0 %v2975, 56
    %v2983 = vpop.permute.xlu0 %2982
    %vm2986 = vcmask 523712
    %2987 = vst.msk [vmem:[#allocation2] sm:$0xff] %vm2986, %v2981
    %2988 = vst.msk [vmem:[#allocation2 + $0x8] sm:$0xff] %vm2986, %v2983
    %v2989 = vld [vmem:[#allocation2] sm:$0xff]
    %v2990 = vld [vmem:[#allocation2 + $0x8] sm:$0xff]
    %v2991 = vlaneseq
    %v2992 = vshrl.u32 %v2991, 7
    %v2993 = vsub.s32 0, %v2992
    %v2994 = vrot.slane %v138, %v2993
    %v2996 = vsel %vm175, %v2989, 0
    %v2999 = vsel %vm175, %v2990, 0
    %3001 = vmatprep.subr.mxu0 0.0
    %3002 = vmatpush1.msra.mxu0 %v130
    %3003 = vmatprep.subr.mxu0 0.0
    %3004 = vmatpush1.msra.mxu0 %v131
    %3005 = vmatprep.subr.mxu0 0.0
    %3006 = vmatpush1.msra.mxu0 %v132
    %3007 = vmatprep.subr.mxu0 0.0
    %3008 = vmatpush1.msra.mxu0 %v133
    %3009 = vmatprep.subr.mxu0 0.0
    %3010 = vmatpush1.msra.mxu0 %v134
    %3011 = vmatprep.subr.mxu0 0.0
    %3012 = vmatpush1.msra.mxu0 %v135
    %3013 = vmatprep.subr.mxu0 0.0
    %3014 = vmatpush1.msra.mxu0 %v136
    %3015 = vmatprep.subr.mxu0 0.0
    %3016 = vmatpush1.msra.mxu0 %v137
    %3017 = vmatprep.subr.mxu0 0.0
    %3018 = vmatpush1.msra.mxu0 0.0
    %3019 = vmatprep.subr.mxu0 0.0
    %3020 = vmatpush1.msra.mxu0 0.0
    %3021 = vmatprep.subr.mxu0 0.0
    %3022 = vmatpush1.msra.mxu0 0.0
    %3023 = vmatprep.subr.mxu0 0.0
    %3024 = vmatpush1.msra.mxu0 0.0
    %3025 = vmatprep.subr.mxu0 0.0
    %3026 = vmatpush1.msra.mxu0 0.0
    %3027 = vmatprep.subr.mxu0 0.0
    %3028 = vmatpush1.msra.mxu0 0.0
    %3029 = vmatprep.subr.mxu0 0.0
    %3030 = vmatpush1.msra.mxu0 0.0
    %3031 = vmatprep.subr.mxu0 0.0
    %3032 = vmatpush1.msra.mxu0 0.0
    %3033 = vmatprep.subr.mxu0 0.0
    %3034 = vmatpush1.msra.mxu0 0.0
    %3035 = vmatprep.subr.mxu0 0.0
    %3036 = vmatpush1.msra.mxu0 0.0
    %3037 = vmatprep.subr.mxu0 0.0
    %3038 = vmatpush1.msra.mxu0 0.0
    %3039 = vmatprep.subr.mxu0 0.0
    %3040 = vmatpush1.msra.mxu0 0.0
    %3041 = vmatprep.subr.mxu0 0.0
    %3042 = vmatpush1.msra.mxu0 0.0
    %3043 = vmatprep.subr.mxu0 0.0
    %3044 = vmatpush1.msra.mxu0 0.0
    %3045 = vmatprep.subr.mxu0 0.0
    %3046 = vmatpush1.msra.mxu0 0.0
    %3047 = vmatprep.subr.mxu0 0.0
    %3048 = vmatpush1.msra.mxu0 0.0
    %3049 = vmatprep.subr.mxu0 0.0
    %3050 = vmatpush1.msra.mxu0 0.0
    %3051 = vmatprep.subr.mxu0 0.0
    %3052 = vmatpush1.msra.mxu0 0.0
    %3053 = vmatprep.subr.mxu0 0.0
    %3054 = vmatpush1.msra.mxu0 0.0
    %3055 = vmatprep.subr.mxu0 0.0
    %3056 = vmatpush1.msra.mxu0 0.0
    %3057 = vmatprep.subr.mxu0 0.0
    %3058 = vmatpush1.msra.mxu0 0.0
    %3059 = vmatprep.subr.mxu0 0.0
    %3060 = vmatpush1.msra.mxu0 0.0
    %3061 = vmatprep.subr.mxu0 0.0
    %3062 = vmatpush1.msra.mxu0 0.0
    %3063 = vmatprep.subr.mxu0 0.0
    %3064 = vmatpush1.msra.mxu0 0.0
    %3065 = vmatprep.mubr.f32.mxu0 0.0
    %3066 = vmatmul.mubr.f32.gmra.mrb[0].mxu0 %v2996
    %v3067 = vpop.f32.mrb[0].mxu0
    %v3068 = vadd.f32 %v2994, %v3067
    %v3069 = vpop.f32.mrb[0].mxu0
    %3070 = vmatprep.mubr.f32.mxu0 0.0
    %3071 = vmatmul.mubr.f32.gmra.mrb[0].mxu0 %v2999
    %v3072 = vpop.f32.mrb[0].mxu0
    %v3073 = vadd.f32 %v2994, %v3072
    %v3074 = vpop.f32.mrb[0].mxu0
    %3075 = vdwg.mxu0
    %v3076 = vadd.f32 %v104, %v3068
    %v3077 = vadd.f32 %v109, %v3073
    %v3078 = vsel %vm175, %v3076, 0.0
    %3079 = vadd.xlane.f32.xlu0 %v3078
    %v3080 = vpop.xlane.xlu0 %3079
    %v3081 = vsel %vm175, %v3077, 0.0
    %3082 = vadd.xlane.f32.xlu0 %v3081
    %v3083 = vpop.xlane.xlu0 %3082
    %v3084 = vrcp.pop 64.0
    %v3085 = vmul.f32 %v3080, %v3084
    %v3086 = vmul.f32 %v3083, %v3084
    %v3087 = vsub.f32 %v3076, %v3085
    %v3088 = vsub.f32 %v3077, %v3086
    %v3089 = vmul.f32 %v3087, %v3087
    %v3090 = vmul.f32 %v3088, %v3088
    %v3091 = vsel %vm175, %v3089, 0.0
    %3092 = vadd.xlane.f32.xlu0 %v3091
    %v3093 = vpop.xlane.xlu0 %3092
    %v3094 = vsel %vm175, %v3090, 0.0
    %3095 = vadd.xlane.f32.xlu0 %v3094
    %v3096 = vpop.xlane.xlu0 %3095
    %v3097 = vmul.f32 %v3093, %v3084
    %v3098 = vmul.f32 %v3096, %v3084
    %v3099 = vadd.f32 %v3097, 1e-05
    %v3100 = vadd.f32 %v3098, 1e-05
    %v3101 = vrsqrt.pop %v3099
    %v3102 = vrsqrt.pop %v3100
    %v3103 = vmul.f32 %v3087, %v3101
    %v3104 = vmul.f32 %v3088, %v3102
    %v3105 = vlaneseq
    %v3106 = vshrl.u32 %v3105, 7
    %v3107 = vsub.s32 1, %v3106
    %v3108 = vrot.slane %v138, %v3107
    %v3109 = vmul.f32 %v3103, %v3108
    %v3110 = vmul.f32 %v3104, %v3108
    %v3111 = vlaneseq
    %v3112 = vshrl.u32 %v3111, 7
    %v3113 = vsub.s32 2, %v3112
    %v3114 = vrot.slane %v138, %v3113
    %v3115 = vadd.f32 %v3109, %v3114
    %v3116 = vadd.f32 %v3110, %v3114
    %v3117 = vlaneseq
    %v3118 = vshrl.u32 %v3117, 7
    %v3119 = vsub.s32 0, %v3118
    %v3120 = vrot.slane %v147, %v3119
    %v3122 = vsel %vm175, %v3115, 0
    %v3125 = vsel %vm175, %v3116, 0
    %3127 = vmatprep.subr.mxu0 0.0
    %3128 = vmatpush1.msra.mxu0 %v139
    %3129 = vmatprep.subr.mxu0 0.0
    %3130 = vmatpush1.msra.mxu0 %v140
    %3131 = vmatprep.subr.mxu0 0.0
    %3132 = vmatpush1.msra.mxu0 %v141
    %3133 = vmatprep.subr.mxu0 0.0
    %3134 = vmatpush1.msra.mxu0 %v142
    %3135 = vmatprep.subr.mxu0 0.0
    %3136 = vmatpush1.msra.mxu0 %v143
    %3137 = vmatprep.subr.mxu0 0.0
    %3138 = vmatpush1.msra.mxu0 %v144
    %3139 = vmatprep.subr.mxu0 0.0
    %3140 = vmatpush1.msra.mxu0 %v145
    %3141 = vmatprep.subr.mxu0 0.0
    %3142 = vmatpush1.msra.mxu0 %v146
    %3143 = vmatprep.subr.mxu0 0.0
    %3144 = vmatpush1.msra.mxu0 0.0
    %3145 = vmatprep.subr.mxu0 0.0
    %3146 = vmatpush1.msra.mxu0 0.0
    %3147 = vmatprep.subr.mxu0 0.0
    %3148 = vmatpush1.msra.mxu0 0.0
    %3149 = vmatprep.subr.mxu0 0.0
    %3150 = vmatpush1.msra.mxu0 0.0
    %3151 = vmatprep.subr.mxu0 0.0
    %3152 = vmatpush1.msra.mxu0 0.0
    %3153 = vmatprep.subr.mxu0 0.0
    %3154 = vmatpush1.msra.mxu0 0.0
    %3155 = vmatprep.subr.mxu0 0.0
    %3156 = vmatpush1.msra.mxu0 0.0
    %3157 = vmatprep.subr.mxu0 0.0
    %3158 = vmatpush1.msra.mxu0 0.0
    %3159 = vmatprep.subr.mxu0 0.0
    %3160 = vmatpush1.msra.mxu0 0.0
    %3161 = vmatprep.subr.mxu0 0.0
    %3162 = vmatpush1.msra.mxu0 0.0
    %3163 = vmatprep.subr.mxu0 0.0
    %3164 = vmatpush1.msra.mxu0 0.0
    %3165 = vmatprep.subr.mxu0 0.0
    %3166 = vmatpush1.msra.mxu0 0.0
    %3167 = vmatprep.subr.mxu0 0.0
    %3168 = vmatpush1.msra.mxu0 0.0
    %3169 = vmatprep.subr.mxu0 0.0
    %3170 = vmatpush1.msra.mxu0 0.0
    %3171 = vmatprep.subr.mxu0 0.0
    %3172 = vmatpush1.msra.mxu0 0.0
    %3173 = vmatprep.subr.mxu0 0.0
    %3174 = vmatpush1.msra.mxu0 0.0
    %3175 = vmatprep.subr.mxu0 0.0
    %3176 = vmatpush1.msra.mxu0 0.0
    %3177 = vmatprep.subr.mxu0 0.0
    %3178 = vmatpush1.msra.mxu0 0.0
    %3179 = vmatprep.subr.mxu0 0.0
    %3180 = vmatpush1.msra.mxu0 0.0
    %3181 = vmatprep.subr.mxu0 0.0
    %3182 = vmatpush1.msra.mxu0 0.0
    %3183 = vmatprep.subr.mxu0 0.0
    %3184 = vmatpush1.msra.mxu0 0.0
    %3185 = vmatprep.subr.mxu0 0.0
    %3186 = vmatpush1.msra.mxu0 0.0
    %3187 = vmatprep.subr.mxu0 0.0
    %3188 = vmatpush1.msra.mxu0 0.0
    %3189 = vmatprep.subr.mxu0 0.0
    %3190 = vmatpush1.msra.mxu0 0.0
    %3191 = vmatprep.mubr.f32.mxu0 0.0
    %3192 = vmatmul.mubr.f32.gmra.mrb[0].mxu0 %v3122
    %v3193 = vpop.f32.mrb[0].mxu0
    %v3194 = vadd.f32 %v3120, %v3193
    %v3195 = vpop.f32.mrb[0].mxu0
    %3196 = vmatprep.mubr.f32.mxu0 0.0
    %3197 = vmatmul.mubr.f32.gmra.mrb[0].mxu0 %v3125
    %v3198 = vpop.f32.mrb[0].mxu0
    %v3199 = vadd.f32 %v3120, %v3198
    %v3200 = vpop.f32.mrb[0].mxu0
    %3201 = vdwg.mxu0
    %v3202 = vmax.f32 %v3194, 0.0
    %v3203 = vmax.f32 %v3199, 0.0
    %v3204 = vlaneseq
    %v3205 = vshrl.u32 %v3204, 7
    %v3206 = vsub.s32 5, %v3205
    %v3207 = vrot.slane %v138, %v3206
    %3208 = vmatprep.subr.mxu0 0.0
    %3209 = vmatpush1.msra.mxu0 %v148
    %3210 = vmatprep.subr.mxu0 0.0
    %3211 = vmatpush1.msra.mxu0 %v149
    %3212 = vmatprep.subr.mxu0 0.0
    %3213 = vmatpush1.msra.mxu0 %v150
    %3214 = vmatprep.subr.mxu0 0.0
    %3215 = vmatpush1.msra.mxu0 %v151
    %3216 = vmatprep.subr.mxu0 0.0
    %3217 = vmatpush1.msra.mxu0 %v152
    %3218 = vmatprep.subr.mxu0 0.0
    %3219 = vmatpush1.msra.mxu0 %v153
    %3220 = vmatprep.subr.mxu0 0.0
    %3221 = vmatpush1.msra.mxu0 %v154
    %3222 = vmatprep.subr.mxu0 0.0
    %3223 = vmatpush1.msra.mxu0 %v155
    %3224 = vmatprep.subr.mxu0 0.0
    %3225 = vmatpush1.msra.mxu0 %v156
    %3226 = vmatprep.subr.mxu0 0.0
    %3227 = vmatpush1.msra.mxu0 %v157
    %3228 = vmatprep.subr.mxu0 0.0
    %3229 = vmatpush1.msra.mxu0 %v158
    %3230 = vmatprep.subr.mxu0 0.0
    %3231 = vmatpush1.msra.mxu0 %v159
    %3232 = vmatprep.subr.mxu0 0.0
    %3233 = vmatpush1.msra.mxu0 %v160
    %3234 = vmatprep.subr.mxu0 0.0
    %3235 = vmatpush1.msra.mxu0 %v161
    %3236 = vmatprep.subr.mxu0 0.0
    %3237 = vmatpush1.msra.mxu0 %v162
    %3238 = vmatprep.subr.mxu0 0.0
    %3239 = vmatpush1.msra.mxu0 %v163
    %3240 = vmatprep.subr.mxu0 0.0
    %3241 = vmatpush1.msra.mxu0 0.0
    %3242 = vmatprep.subr.mxu0 0.0
    %3243 = vmatpush1.msra.mxu0 0.0
    %3244 = vmatprep.subr.mxu0 0.0
    %3245 = vmatpush1.msra.mxu0 0.0
    %3246 = vmatprep.subr.mxu0 0.0
    %3247 = vmatpush1.msra.mxu0 0.0
    %3248 = vmatprep.subr.mxu0 0.0
    %3249 = vmatpush1.msra.mxu0 0.0
    %3250 = vmatprep.subr.mxu0 0.0
    %3251 = vmatpush1.msra.mxu0 0.0
    %3252 = vmatprep.subr.mxu0 0.0
    %3253 = vmatpush1.msra.mxu0 0.0
    %3254 = vmatprep.subr.mxu0 0.0
    %3255 = vmatpush1.msra.mxu0 0.0
    %3256 = vmatprep.subr.mxu0 0.0
    %3257 = vmatpush1.msra.mxu0 0.0
    %3258 = vmatprep.subr.mxu0 0.0
    %3259 = vmatpush1.msra.mxu0 0.0
    %3260 = vmatprep.subr.mxu0 0.0
    %3261 = vmatpush1.msra.mxu0 0.0
    %3262 = vmatprep.subr.mxu0 0.0
    %3263 = vmatpush1.msra.mxu0 0.0
    %3264 = vmatprep.subr.mxu0 0.0
    %3265 = vmatpush1.msra.mxu0 0.0
    %3266 = vmatprep.subr.mxu0 0.0
    %3267 = vmatpush1.msra.mxu0 0.0
    %3268 = vmatprep.subr.mxu0 0.0
    %3269 = vmatpush1.msra.mxu0 0.0
    %3270 = vmatprep.subr.mxu0 0.0
    %3271 = vmatpush1.msra.mxu0 0.0
    %3272 = vmatprep.mubr.f32.mxu0 0.0
    %3273 = vmatmul.mubr.f32.gmra.mrb[0].mxu0 %v3202
    %v3274 = vpop.f32.mrb[0].mxu0
    %v3275 = vadd.f32 %v3207, %v3274
    %v3276 = vpop.f32.mrb[0].mxu0
    %3277 = vmatprep.mubr.f32.mxu0 0.0
    %3278 = vmatmul.mubr.f32.gmra.mrb[0].mxu0 %v3203
    %v3279 = vpop.f32.mrb[0].mxu0
    %v3280 = vadd.f32 %v3207, %v3279
    %v3281 = vpop.f32.mrb[0].mxu0
    %3282 = vdwg.mxu0
    %v3283 = vadd.f32 %v3115, %v3275
    %v3284 = vadd.f32 %v3116, %v3280
    %v3285 = vsel %vm175, %v3283, 0.0
    %3286 = vadd.xlane.f32.xlu0 %v3285
    %v3287 = vpop.xlane.xlu0 %3286
    %v3288 = vsel %vm175, %v3284, 0.0
    %3289 = vadd.xlane.f32.xlu0 %v3288
    %v3290 = vpop.xlane.xlu0 %3289
    %v3291 = vmul.f32 %v3287, %v3084
    %v3292 = vmul.f32 %v3290, %v3084
    %v3293 = vsub.f32 %v3283, %v3291
    %v3294 = vsub.f32 %v3284, %v3292
    %v3295 = vmul.f32 %v3293, %v3293
    %v3296 = vmul.f32 %v3294, %v3294
    %v3297 = vsel %vm175, %v3295, 0.0
    %3298 = vadd.xlane.f32.xlu0 %v3297
    %v3299 = vpop.xlane.xlu0 %3298
    %v3300 = vsel %vm175, %v3296, 0.0
    %3301 = vadd.xlane.f32.xlu0 %v3300
    %v3302 = vpop.xlane.xlu0 %3301
    %v3303 = vmul.f32 %v3299, %v3084
    %v3304 = vmul.f32 %v3302, %v3084
    %v3305 = vadd.f32 %v3303, 1e-05
    %v3306 = vadd.f32 %v3304, 1e-05
    %v3307 = vrsqrt.pop %v3305
    %v3308 = vrsqrt.pop %v3306
    %v3309 = vmul.f32 %v3293, %v3307
    %v3310 = vmul.f32 %v3294, %v3308
    %v3311 = vlaneseq
    %v3312 = vshrl.u32 %v3311, 7
    %v3313 = vsub.s32 3, %v3312
    %v3314 = vrot.slane %v138, %v3313
    %v3315 = vmul.f32 %v3309, %v3314
    %v3316 = vmul.f32 %v3310, %v3314
    %v3317 = vlaneseq
    %v3318 = vshrl.u32 %v3317, 7
    %v3319 = vsub.s32 4, %v3318
    %v3320 = vrot.slane %v138, %v3319
    %v3321 = vadd.f32 %v3315, %v3320
    %v3322 = vadd.f32 %v3316, %v3320
    %v3323 = vld [vmem:[%s1 + $0x90] sm:$0xff]
    %v3324 = vld [vmem:[%s1 + $0x98] sm:$0xff]
    %v3325 = vld [vmem:[%s1 + $0xa0] sm:$0xff]
    %v3326 = vld [vmem:[%s1 + $0xa8] sm:$0xff]
    %v3327 = vld [vmem:[%s1 + $0xb0] sm:$0xff]
    %v3328 = vld [vmem:[%s1 + $0xb8] sm:$0xff]
    %v3329 = vld [vmem:[%s1 + $0xc0] sm:$0xff]
    %v3330 = vld [vmem:[%s1 + $0xc8] sm:$0xff]
    %v3331 = vld [vmem:[%s1 + $0xd0] sm:$0xff]
    %v3332 = vld [vmem:[%s1 + $0xd8] sm:$0xff]
    %v3333 = vld [vmem:[%s1 + $0xe0] sm:$0xff]
    %v3334 = vld [vmem:[%s1 + $0xe8] sm:$0xff]
    %v3335 = vld [vmem:[%s1 + $0xf0] sm:$0xff]
    %v3336 = vld [vmem:[%s1 + $0xf8] sm:$0xff]
    %v3337 = vld [vmem:[%s1 + $0x100] sm:$0xff]
    %v3338 = vld [vmem:[%s1 + $0x108] sm:$0xff]
    %s3339 = scalar_lea.vmem %s1, 272
    %v3340 = vld [vmem:[%s3339] ss:$8 sm:$0x3]
    %v3341 = vld [vmem:[%s3 + $0xe0] sm:$0xff]
    %v3342 = vld [vmem:[%s3 + $0xe8] sm:$0xff]
    %v3343 = vld [vmem:[%s3 + $0xf0] sm:$0xff]
    %v3344 = vld [vmem:[%s3 + $0xf8] sm:$0xff]
    %v3345 = vld [vmem:[%s3 + $0x100] sm:$0xff]
    %v3346 = vld [vmem:[%s3 + $0x108] sm:$0xff]
    %v3347 = vld [vmem:[%s3 + $0x110] sm:$0xff]
    %v3348 = vld [vmem:[%s3 + $0x118] sm:$0xff]
    %v3349 = vld [vmem:[%s3 + $0x120] sm:$0xff]
    %v3350 = vld [vmem:[%s2 + $0x48] sm:$0xff]
    %v3351 = vld [vmem:[%s2 + $0x50] sm:$0xff]
    %v3352 = vld [vmem:[%s2 + $0x58] sm:$0xff]
    %v3353 = vld [vmem:[%s2 + $0x60] sm:$0xff]
    %v3354 = vld [vmem:[%s2 + $0x68] sm:$0xff]
    %v3355 = vld [vmem:[%s2 + $0x70] sm:$0xff]
    %v3356 = vld [vmem:[%s2 + $0x78] sm:$0xff]
    %v3357 = vld [vmem:[%s2 + $0x80] sm:$0xff]
    %v3358 = vld [vmem:[%s2 + $0x88] sm:$0x1]
    %v3359 = vld [vmem:[%s3 + $0x128] sm:$0xff]
    %v3360 = vld [vmem:[%s3 + $0x130] sm:$0xff]
    %v3361 = vld [vmem:[%s3 + $0x138] sm:$0xff]
    %v3362 = vld [vmem:[%s3 + $0x140] sm:$0xff]
    %v3363 = vld [vmem:[%s3 + $0x148] sm:$0xff]
    %v3364 = vld [vmem:[%s3 + $0x150] sm:$0xff]
    %v3365 = vld [vmem:[%s3 + $0x158] sm:$0xff]
    %v3366 = vld [vmem:[%s3 + $0x160] sm:$0xff]
    %v3367 = vld [vmem:[%s3 + $0x168] sm:$0xff]
    %v3368 = vld [vmem:[%s3 + $0x170] sm:$0xff]
    %v3369 = vld [vmem:[%s3 + $0x178] sm:$0xff]
    %v3370 = vld [vmem:[%s3 + $0x180] sm:$0xff]
    %v3371 = vld [vmem:[%s3 + $0x188] sm:$0xff]
    %v3372 = vld [vmem:[%s3 + $0x190] sm:$0xff]
    %v3373 = vld [vmem:[%s3 + $0x198] sm:$0xff]
    %v3374 = vld [vmem:[%s3 + $0x1a0] sm:$0xff]
    %v3376 = vlaneseq
    %v3377 = vshrl.u32 %v3376, 7
    %v3378 = vsub.s32 0, %v3377
    %v3379 = vrot.slane %v3340, %v3378
    %v3380 = vlaneseq
    %v3381 = vshrl.u32 %v3380, 7
    %v3382 = vsub.s32 1, %v3381
    %v3383 = vrot.slane %v3340, %v3382
    %v3387 = vsel %vm175, %v3321, 0
    %v3390 = vsel %vm175, %v3322, 0
    %3392 = vmatprep.subr.mxu0 %v3324
    %3393 = vmatpush1.msra.mxu0 %v3323
    %3394 = vmatprep.subr.mxu0 %v3326
    %3395 = vmatpush1.msra.mxu0 %v3325
    %3396 = vmatprep.subr.mxu0 %v3328
    %3397 = vmatpush1.msra.mxu0 %v3327
    %3398 = vmatprep.subr.mxu0 %v3330
    %3399 = vmatpush1.msra.mxu0 %v3329
    %3400 = vmatprep.subr.mxu0 %v3332
    %3401 = vmatpush1.msra.mxu0 %v3331
    %3402 = vmatprep.subr.mxu0 %v3334
    %3403 = vmatpush1.msra.mxu0 %v3333
    %3404 = vmatprep.subr.mxu0 %v3336
    %3405 = vmatpush1.msra.mxu0 %v3335
    %3406 = vmatprep.subr.mxu0 %v3338
    %3407 = vmatpush1.msra.mxu0 %v3337
    %3408 = vmatprep.subr.mxu0 0.0
    %3409 = vmatpush1.msra.mxu0 0.0
    %3410 = vmatprep.subr.mxu0 0.0
    %3411 = vmatpush1.msra.mxu0 0.0
    %3412 = vmatprep.subr.mxu0 0.0
    %3413 = vmatpush1.msra.mxu0 0.0
    %3414 = vmatprep.subr.mxu0 0.0
    %3415 = vmatpush1.msra.mxu0 0.0
    %3416 = vmatprep.subr.mxu0 0.0
    %3417 = vmatpush1.msra.mxu0 0.0
    %3418 = vmatprep.subr.mxu0 0.0
    %3419 = vmatpush1.msra.mxu0 0.0
    %3420 = vmatprep.subr.mxu0 0.0
    %3421 = vmatpush1.msra.mxu0 0.0
    %3422 = vmatprep.subr.mxu0 0.0
    %3423 = vmatpush1.msra.mxu0 0.0
    %3424 = vmatprep.subr.mxu0 0.0
    %3425 = vmatpush1.msra.mxu0 0.0
    %3426 = vmatprep.subr.mxu0 0.0
    %3427 = vmatpush1.msra.mxu0 0.0
    %3428 = vmatprep.subr.mxu0 0.0
    %3429 = vmatpush1.msra.mxu0 0.0
    %3430 = vmatprep.subr.mxu0 0.0
    %3431 = vmatpush1.msra.mxu0 0.0
    %3432 = vmatprep.subr.mxu0 0.0
    %3433 = vmatpush1.msra.mxu0 0.0
    %3434 = vmatprep.subr.mxu0 0.0
    %3435 = vmatpush1.msra.mxu0 0.0
    %3436 = vmatprep.subr.mxu0 0.0
    %3437 = vmatpush1.msra.mxu0 0.0
    %3438 = vmatprep.subr.mxu0 0.0
    %3439 = vmatpush1.msra.mxu0 0.0
    %3440 = vmatprep.subr.mxu0 0.0
    %3441 = vmatpush1.msra.mxu0 0.0
    %3442 = vmatprep.subr.mxu0 0.0
    %3443 = vmatpush1.msra.mxu0 0.0
    %3444 = vmatprep.subr.mxu0 0.0
    %3445 = vmatpush1.msra.mxu0 0.0
    %3446 = vmatprep.subr.mxu0 0.0
    %3447 = vmatpush1.msra.mxu0 0.0
    %3448 = vmatprep.subr.mxu0 0.0
    %3449 = vmatpush1.msra.mxu0 0.0
    %3450 = vmatprep.subr.mxu0 0.0
    %3451 = vmatpush1.msra.mxu0 0.0
    %3452 = vmatprep.subr.mxu0 0.0
    %3453 = vmatpush1.msra.mxu0 0.0
    %3454 = vmatprep.subr.mxu0 0.0
    %3455 = vmatpush1.msra.mxu0 0.0
    %3456 = vmatprep.mubr.f32.mxu0 0.0
    %3457 = vmatmul.mubr.f32.gmra.mrb[0].mxu0 %v3387
    %v3458 = vpop.f32.mrb[0].mxu0
    %v3459 = vadd.f32 %v3379, %v3458
    %v3460 = vpop.f32.mrb[0].mxu0
    %v3461 = vadd.f32 %v3383, %v3460
    %3462 = vmatprep.mubr.f32.mxu0 0.0
    %3463 = vmatmul.mubr.f32.gmra.mrb[0].mxu0 %v3390
    %v3464 = vpop.f32.mrb[0].mxu0
    %v3465 = vadd.f32 %v3379, %v3464
    %v3466 = vpop.f32.mrb[0].mxu0
    %v3467 = vadd.f32 %v3383, %v3466
    %3468 = vdwg.mxu0
    %3470 = vrot.lane.b32.xlu0 %v3459, 64
    %v3471 = vpop.permute.xlu0 %3470
    %v3472 = vsel %vm262, %v3459, 0
    %v3474 = vsel %vm262, %v3471, 0
    %3476 = vmatprep.subr.mxu0 0.0
    %3477 = vmatpush1.xpose.msra.mxu0 %v3474
    %3478 = vmatprep.subr.mxu0 0.0
    %3479 = vmatpush1.xpose.msra.mxu0 0.0
    %3480 = vmatprep.subr.mxu0 0.0
    %3481 = vmatpush1.xpose.msra.mxu0 0.0
    %3482 = vmatprep.subr.mxu0 0.0
    %3483 = vmatpush1.xpose.msra.mxu0 0.0
    %3484 = vmatprep.subr.mxu0 0.0
    %3485 = vmatpush1.xpose.msra.mxu0 0.0
    %3486 = vmatprep.subr.mxu0 0.0
    %3487 = vmatpush1.xpose.msra.mxu0 0.0
    %3488 = vmatprep.subr.mxu0 0.0
    %3489 = vmatpush1.xpose.msra.mxu0 0.0
    %3490 = vmatprep.subr.mxu0 0.0
    %3491 = vmatpush1.xpose.msra.mxu0 0.0
    %3492 = vmatprep.subr.mxu0 0.0
    %3493 = vmatpush1.xpose.msra.mxu0 0.0
    %3494 = vmatprep.subr.mxu0 0.0
    %3495 = vmatpush1.xpose.msra.mxu0 0.0
    %3496 = vmatprep.subr.mxu0 0.0
    %3497 = vmatpush1.xpose.msra.mxu0 0.0
    %3498 = vmatprep.subr.mxu0 0.0
    %3499 = vmatpush1.xpose.msra.mxu0 0.0
    %3500 = vmatprep.subr.mxu0 0.0
    %3501 = vmatpush1.xpose.msra.mxu0 0.0
    %3502 = vmatprep.subr.mxu0 0.0
    %3503 = vmatpush1.xpose.msra.mxu0 0.0
    %3504 = vmatprep.subr.mxu0 0.0
    %3505 = vmatpush1.xpose.msra.mxu0 0.0
    %3506 = vmatprep.subr.mxu0 0.0
    %3507 = vmatpush1.xpose.msra.mxu0 0.0
    %3508 = vmatprep.subr.mxu0 0.0
    %3509 = vmatpush1.xpose.msra.mxu0 0.0
    %3510 = vmatprep.subr.mxu0 0.0
    %3511 = vmatpush1.xpose.msra.mxu0 0.0
    %3512 = vmatprep.subr.mxu0 0.0
    %3513 = vmatpush1.xpose.msra.mxu0 0.0
    %3514 = vmatprep.subr.mxu0 0.0
    %3515 = vmatpush1.xpose.msra.mxu0 0.0
    %3516 = vmatprep.subr.mxu0 0.0
    %3517 = vmatpush1.xpose.msra.mxu0 0.0
    %3518 = vmatprep.subr.mxu0 0.0
    %3519 = vmatpush1.xpose.msra.mxu0 0.0
    %3520 = vmatprep.subr.mxu0 0.0
    %3521 = vmatpush1.xpose.msra.mxu0 0.0
    %3522 = vmatprep.subr.mxu0 0.0
    %3523 = vmatpush1.xpose.msra.mxu0 0.0
    %3524 = vmatprep.subr.mxu0 0.0
    %3525 = vmatpush1.xpose.msra.mxu0 0.0
    %3526 = vmatprep.subr.mxu0 0.0
    %3527 = vmatpush1.xpose.msra.mxu0 0.0
    %3528 = vmatprep.subr.mxu0 0.0
    %3529 = vmatpush1.xpose.msra.mxu0 0.0
    %3530 = vmatprep.subr.mxu0 0.0
    %3531 = vmatpush1.xpose.msra.mxu0 0.0
    %3532 = vmatprep.subr.mxu0 0.0
    %3533 = vmatpush1.xpose.msra.mxu0 0.0
    %3534 = vmatprep.subr.mxu0 0.0
    %3535 = vmatpush1.xpose.msra.mxu0 0.0
    %3536 = vmatprep.subr.mxu0 0.0
    %3537 = vmatpush1.xpose.msra.mxu0 0.0
    %3538 = vmatprep.subr.mxu0 0.0
    %3539 = vmatpush1.xpose.msra.mxu0 0.0
    %3540 = vmatprep.mubr.f32.mxu0 0.0
    %3541 = vmatmul.mubr.f32.gmra.mrb[0].mxu0 %v3472
    %v3542 = vpop.f32.mrb[0].mxu0
    %v3543 = vadd.f32 0.0, %v3542
    %v3544 = vpop.f32.mrb[0].mxu0
    %3545 = vdwg.mxu0
    %3547 = vrot.lane.b32.xlu0 %v3465, 64
    %v3548 = vpop.permute.xlu0 %3547
    %v3549 = vsel %vm262, %v3465, 0
    %v3551 = vsel %vm262, %v3548, 0
    %3553 = vmatprep.subr.mxu0 0.0
    %3554 = vmatpush1.xpose.msra.mxu0 %v3551
    %3555 = vmatprep.subr.mxu0 0.0
    %3556 = vmatpush1.xpose.msra.mxu0 0.0
    %3557 = vmatprep.subr.mxu0 0.0
    %3558 = vmatpush1.xpose.msra.mxu0 0.0
    %3559 = vmatprep.subr.mxu0 0.0
    %3560 = vmatpush1.xpose.msra.mxu0 0.0
    %3561 = vmatprep.subr.mxu0 0.0
    %3562 = vmatpush1.xpose.msra.mxu0 0.0
    %3563 = vmatprep.subr.mxu0 0.0
    %3564 = vmatpush1.xpose.msra.mxu0 0.0
    %3565 = vmatprep.subr.mxu0 0.0
    %3566 = vmatpush1.xpose.msra.mxu0 0.0
    %3567 = vmatprep.subr.mxu0 0.0
    %3568 = vmatpush1.xpose.msra.mxu0 0.0
    %3569 = vmatprep.subr.mxu0 0.0
    %3570 = vmatpush1.xpose.msra.mxu0 0.0
    %3571 = vmatprep.subr.mxu0 0.0
    %3572 = vmatpush1.xpose.msra.mxu0 0.0
    %3573 = vmatprep.subr.mxu0 0.0
    %3574 = vmatpush1.xpose.msra.mxu0 0.0
    %3575 = vmatprep.subr.mxu0 0.0
    %3576 = vmatpush1.xpose.msra.mxu0 0.0
    %3577 = vmatprep.subr.mxu0 0.0
    %3578 = vmatpush1.xpose.msra.mxu0 0.0
    %3579 = vmatprep.subr.mxu0 0.0
    %3580 = vmatpush1.xpose.msra.mxu0 0.0
    %3581 = vmatprep.subr.mxu0 0.0
    %3582 = vmatpush1.xpose.msra.mxu0 0.0
    %3583 = vmatprep.subr.mxu0 0.0
    %3584 = vmatpush1.xpose.msra.mxu0 0.0
    %3585 = vmatprep.subr.mxu0 0.0
    %3586 = vmatpush1.xpose.msra.mxu0 0.0
    %3587 = vmatprep.subr.mxu0 0.0
    %3588 = vmatpush1.xpose.msra.mxu0 0.0
    %3589 = vmatprep.subr.mxu0 0.0
    %3590 = vmatpush1.xpose.msra.mxu0 0.0
    %3591 = vmatprep.subr.mxu0 0.0
    %3592 = vmatpush1.xpose.msra.mxu0 0.0
    %3593 = vmatprep.subr.mxu0 0.0
    %3594 = vmatpush1.xpose.msra.mxu0 0.0
    %3595 = vmatprep.subr.mxu0 0.0
    %3596 = vmatpush1.xpose.msra.mxu0 0.0
    %3597 = vmatprep.subr.mxu0 0.0
    %3598 = vmatpush1.xpose.msra.mxu0 0.0
    %3599 = vmatprep.subr.mxu0 0.0
    %3600 = vmatpush1.xpose.msra.mxu0 0.0
    %3601 = vmatprep.subr.mxu0 0.0
    %3602 = vmatpush1.xpose.msra.mxu0 0.0
    %3603 = vmatprep.subr.mxu0 0.0
    %3604 = vmatpush1.xpose.msra.mxu0 0.0
    %3605 = vmatprep.subr.mxu0 0.0
    %3606 = vmatpush1.xpose.msra.mxu0 0.0
    %3607 = vmatprep.subr.mxu0 0.0
    %3608 = vmatpush1.xpose.msra.mxu0 0.0
    %3609 = vmatprep.subr.mxu0 0.0
    %3610 = vmatpush1.xpose.msra.mxu0 0.0
    %3611 = vmatprep.subr.mxu0 0.0
    %3612 = vmatpush1.xpose.msra.mxu0 0.0
    %3613 = vmatprep.subr.mxu0 0.0
    %3614 = vmatpush1.xpose.msra.mxu0 0.0
    %3615 = vmatprep.subr.mxu0 0.0
    %3616 = vmatpush1.xpose.msra.mxu0 0.0
    %3617 = vmatprep.mubr.f32.mxu0 0.0
    %3618 = vmatmul.mubr.f32.gmra.mrb[0].mxu0 %v3549
    %v3619 = vpop.f32.mrb[0].mxu0
    %v3620 = vadd.f32 0.0, %v3619
    %v3621 = vpop.f32.mrb[0].mxu0
    %3622 = vdwg.mxu0
    %v3623 = vmul.f32 %v3543, 0.35355338
    %v3624 = vmul.f32 %v3620, 0.35355338
    %v3625 = vsel %vm262, %v3623, -inf
    %3626 = vmax.xlane.f32.xlu0 %v3625
    %v3627 = vpop.xlane.xlu0 %3626
    %v3628 = vsel %vm262, %v3624, -inf
    %3629 = vmax.xlane.f32.xlu0 %v3628
    %v3630 = vpop.xlane.xlu0 %3629
    %v3631 = vsub.f32 %v3623, %v3627
    %v3632 = vsub.f32 %v3624, %v3630
    %v3633 = vmul.f32 %v3631, 1.442695
    %v3634 = vpow.pop %v3633
    %v3635 = vmul.f32 %v3632, 1.442695
    %v3636 = vpow.pop %v3635
    %v3637 = vsel %vm262, %v3634, 0.0
    %3638 = vadd.xlane.f32.xlu0 %v3637
    %v3639 = vpop.xlane.xlu0 %3638
    %v3640 = vsel %vm262, %v3636, 0.0
    %3641 = vadd.xlane.f32.xlu0 %v3640
    %v3642 = vpop.xlane.xlu0 %3641
    %v3643 = vrcp.pop %v3639
    %v3644 = vrcp.pop %v3642
    %v3645 = vmul.f32 %v3634, %v3643
    %v3646 = vmul.f32 %v3636, %v3644
    %v3648 = vsel %vm262, %v3645, 0
    %3650 = vmatprep.subr.mxu0 0.0
    %3651 = vmatpush1.msra.mxu0 %v3461
    %3652 = vmatprep.subr.mxu0 0.0
    %3653 = vmatpush1.msra.mxu0 0.0
    %3654 = vmatprep.subr.mxu0 0.0
    %3655 = vmatpush1.msra.mxu0 0.0
    %3656 = vmatprep.subr.mxu0 0.0
    %3657 = vmatpush1.msra.mxu0 0.0
    %3658 = vmatprep.subr.mxu0 0.0
    %3659 = vmatpush1.msra.mxu0 0.0
    %3660 = vmatprep.subr.mxu0 0.0
    %3661 = vmatpush1.msra.mxu0 0.0
    %3662 = vmatprep.subr.mxu0 0.0
    %3663 = vmatpush1.msra.mxu0 0.0
    %3664 = vmatprep.subr.mxu0 0.0
    %3665 = vmatpush1.msra.mxu0 0.0
    %3666 = vmatprep.subr.mxu0 0.0
    %3667 = vmatpush1.msra.mxu0 0.0
    %3668 = vmatprep.subr.mxu0 0.0
    %3669 = vmatpush1.msra.mxu0 0.0
    %3670 = vmatprep.subr.mxu0 0.0
    %3671 = vmatpush1.msra.mxu0 0.0
    %3672 = vmatprep.subr.mxu0 0.0
    %3673 = vmatpush1.msra.mxu0 0.0
    %3674 = vmatprep.subr.mxu0 0.0
    %3675 = vmatpush1.msra.mxu0 0.0
    %3676 = vmatprep.subr.mxu0 0.0
    %3677 = vmatpush1.msra.mxu0 0.0
    %3678 = vmatprep.subr.mxu0 0.0
    %3679 = vmatpush1.msra.mxu0 0.0
    %3680 = vmatprep.subr.mxu0 0.0
    %3681 = vmatpush1.msra.mxu0 0.0
    %3682 = vmatprep.subr.mxu0 0.0
    %3683 = vmatpush1.msra.mxu0 0.0
    %3684 = vmatprep.subr.mxu0 0.0
    %3685 = vmatpush1.msra.mxu0 0.0
    %3686 = vmatprep.subr.mxu0 0.0
    %3687 = vmatpush1.msra.mxu0 0.0
    %3688 = vmatprep.subr.mxu0 0.0
    %3689 = vmatpush1.msra.mxu0 0.0
    %3690 = vmatprep.subr.mxu0 0.0
    %3691 = vmatpush1.msra.mxu0 0.0
    %3692 = vmatprep.subr.mxu0 0.0
    %3693 = vmatpush1.msra.mxu0 0.0
    %3694 = vmatprep.subr.mxu0 0.0
    %3695 = vmatpush1.msra.mxu0 0.0
    %3696 = vmatprep.subr.mxu0 0.0
    %3697 = vmatpush1.msra.mxu0 0.0
    %3698 = vmatprep.subr.mxu0 0.0
    %3699 = vmatpush1.msra.mxu0 0.0
    %3700 = vmatprep.subr.mxu0 0.0
    %3701 = vmatpush1.msra.mxu0 0.0
    %3702 = vmatprep.subr.mxu0 0.0
    %3703 = vmatpush1.msra.mxu0 0.0
    %3704 = vmatprep.subr.mxu0 0.0
    %3705 = vmatpush1.msra.mxu0 0.0
    %3706 = vmatprep.subr.mxu0 0.0
    %3707 = vmatpush1.msra.mxu0 0.0
    %3708 = vmatprep.subr.mxu0 0.0
    %3709 = vmatpush1.msra.mxu0 0.0
    %3710 = vmatprep.subr.mxu0 0.0
    %3711 = vmatpush1.msra.mxu0 0.0
    %3712 = vmatprep.subr.mxu0 0.0
    %3713 = vmatpush1.msra.mxu0 0.0
    %3714 = vmatprep.mubr.f32.mxu0 0.0
    %3715 = vmatmul.mubr.f32.gmra.mrb[0].mxu0 %v3648
    %v3716 = vpop.f32.mrb[0].mxu0
    %v3717 = vadd.f32 0.0, %v3716
    %v3718 = vpop.f32.mrb[0].mxu0
    %3719 = vdwg.mxu0
    %v3721 = vsel %vm262, %v3646, 0
    %3723 = vmatprep.subr.mxu0 0.0
    %3724 = vmatpush1.msra.mxu0 %v3467
    %3725 = vmatprep.subr.mxu0 0.0
    %3726 = vmatpush1.msra.mxu0 0.0
    %3727 = vmatprep.subr.mxu0 0.0
    %3728 = vmatpush1.msra.mxu0 0.0
    %3729 = vmatprep.subr.mxu0 0.0
    %3730 = vmatpush1.msra.mxu0 0.0
    %3731 = vmatprep.subr.mxu0 0.0
    %3732 = vmatpush1.msra.mxu0 0.0
    %3733 = vmatprep.subr.mxu0 0.0
    %3734 = vmatpush1.msra.mxu0 0.0
    %3735 = vmatprep.subr.mxu0 0.0
    %3736 = vmatpush1.msra.mxu0 0.0
    %3737 = vmatprep.subr.mxu0 0.0
    %3738 = vmatpush1.msra.mxu0 0.0
    %3739 = vmatprep.subr.mxu0 0.0
    %3740 = vmatpush1.msra.mxu0 0.0
    %3741 = vmatprep.subr.mxu0 0.0
    %3742 = vmatpush1.msra.mxu0 0.0
    %3743 = vmatprep.subr.mxu0 0.0
    %3744 = vmatpush1.msra.mxu0 0.0
    %3745 = vmatprep.subr.mxu0 0.0
    %3746 = vmatpush1.msra.mxu0 0.0
    %3747 = vmatprep.subr.mxu0 0.0
    %3748 = vmatpush1.msra.mxu0 0.0
    %3749 = vmatprep.subr.mxu0 0.0
    %3750 = vmatpush1.msra.mxu0 0.0
    %3751 = vmatprep.subr.mxu0 0.0
    %3752 = vmatpush1.msra.mxu0 0.0
    %3753 = vmatprep.subr.mxu0 0.0
    %3754 = vmatpush1.msra.mxu0 0.0
    %3755 = vmatprep.subr.mxu0 0.0
    %3756 = vmatpush1.msra.mxu0 0.0
    %3757 = vmatprep.subr.mxu0 0.0
    %3758 = vmatpush1.msra.mxu0 0.0
    %3759 = vmatprep.subr.mxu0 0.0
    %3760 = vmatpush1.msra.mxu0 0.0
    %3761 = vmatprep.subr.mxu0 0.0
    %3762 = vmatpush1.msra.mxu0 0.0
    %3763 = vmatprep.subr.mxu0 0.0
    %3764 = vmatpush1.msra.mxu0 0.0
    %3765 = vmatprep.subr.mxu0 0.0
    %3766 = vmatpush1.msra.mxu0 0.0
    %3767 = vmatprep.subr.mxu0 0.0
    %3768 = vmatpush1.msra.mxu0 0.0
    %3769 = vmatprep.subr.mxu0 0.0
    %3770 = vmatpush1.msra.mxu0 0.0
    %3771 = vmatprep.subr.mxu0 0.0
    %3772 = vmatpush1.msra.mxu0 0.0
    %3773 = vmatprep.subr.mxu0 0.0
    %3774 = vmatpush1.msra.mxu0 0.0
    %3775 = vmatprep.subr.mxu0 0.0
    %3776 = vmatpush1.msra.mxu0 0.0
    %3777 = vmatprep.subr.mxu0 0.0
    %3778 = vmatpush1.msra.mxu0 0.0
    %3779 = vmatprep.subr.mxu0 0.0
    %3780 = vmatpush1.msra.mxu0 0.0
    %3781 = vmatprep.subr.mxu0 0.0
    %3782 = vmatpush1.msra.mxu0 0.0
    %3783 = vmatprep.subr.mxu0 0.0
    %3784 = vmatpush1.msra.mxu0 0.0
    %3785 = vmatprep.subr.mxu0 0.0
    %3786 = vmatpush1.msra.mxu0 0.0
    %3787 = vmatprep.mubr.f32.mxu0 0.0
    %3788 = vmatmul.mubr.f32.gmra.mrb[0].mxu0 %v3721
    %v3789 = vpop.f32.mrb[0].mxu0
    %v3790 = vadd.f32 0.0, %v3789
    %v3791 = vpop.f32.mrb[0].mxu0
    %3792 = vdwg.mxu0
    %3793 = vst.msk [vmem:[#allocation2] sm:$0xff] %vm262, %v3717
    %3794 = vst.msk [vmem:[#allocation2 + $0x8] sm:$0xff] %vm262, %v3790
    %3795 = vrot.lane.b32.xlu0 %v3459, 120
    %v3796 = vpop.permute.xlu0 %3795
    %3797 = vrot.lane.b32.xlu0 %v3459, 56
    %v3798 = vpop.permute.xlu0 %3797
    %v3799 = vsel %vm262, %v3796, 0
    %v3801 = vsel %vm262, %v3798, 0
    %3803 = vmatprep.subr.mxu0 0.0
    %3804 = vmatpush1.xpose.msra.mxu0 %v3801
    %3805 = vmatprep.subr.mxu0 0.0
    %3806 = vmatpush1.xpose.msra.mxu0 0.0
    %3807 = vmatprep.subr.mxu0 0.0
    %3808 = vmatpush1.xpose.msra.mxu0 0.0
    %3809 = vmatprep.subr.mxu0 0.0
    %3810 = vmatpush1.xpose.msra.mxu0 0.0
    %3811 = vmatprep.subr.mxu0 0.0
    %3812 = vmatpush1.xpose.msra.mxu0 0.0
    %3813 = vmatprep.subr.mxu0 0.0
    %3814 = vmatpush1.xpose.msra.mxu0 0.0
    %3815 = vmatprep.subr.mxu0 0.0
    %3816 = vmatpush1.xpose.msra.mxu0 0.0
    %3817 = vmatprep.subr.mxu0 0.0
    %3818 = vmatpush1.xpose.msra.mxu0 0.0
    %3819 = vmatprep.subr.mxu0 0.0
    %3820 = vmatpush1.xpose.msra.mxu0 0.0
    %3821 = vmatprep.subr.mxu0 0.0
    %3822 = vmatpush1.xpose.msra.mxu0 0.0
    %3823 = vmatprep.subr.mxu0 0.0
    %3824 = vmatpush1.xpose.msra.mxu0 0.0
    %3825 = vmatprep.subr.mxu0 0.0
    %3826 = vmatpush1.xpose.msra.mxu0 0.0
    %3827 = vmatprep.subr.mxu0 0.0
    %3828 = vmatpush1.xpose.msra.mxu0 0.0
    %3829 = vmatprep.subr.mxu0 0.0
    %3830 = vmatpush1.xpose.msra.mxu0 0.0
    %3831 = vmatprep.subr.mxu0 0.0
    %3832 = vmatpush1.xpose.msra.mxu0 0.0
    %3833 = vmatprep.subr.mxu0 0.0
    %3834 = vmatpush1.xpose.msra.mxu0 0.0
    %3835 = vmatprep.subr.mxu0 0.0
    %3836 = vmatpush1.xpose.msra.mxu0 0.0
    %3837 = vmatprep.subr.mxu0 0.0
    %3838 = vmatpush1.xpose.msra.mxu0 0.0
    %3839 = vmatprep.subr.mxu0 0.0
    %3840 = vmatpush1.xpose.msra.mxu0 0.0
    %3841 = vmatprep.subr.mxu0 0.0
    %3842 = vmatpush1.xpose.msra.mxu0 0.0
    %3843 = vmatprep.subr.mxu0 0.0
    %3844 = vmatpush1.xpose.msra.mxu0 0.0
    %3845 = vmatprep.subr.mxu0 0.0
    %3846 = vmatpush1.xpose.msra.mxu0 0.0
    %3847 = vmatprep.subr.mxu0 0.0
    %3848 = vmatpush1.xpose.msra.mxu0 0.0
    %3849 = vmatprep.subr.mxu0 0.0
    %3850 = vmatpush1.xpose.msra.mxu0 0.0
    %3851 = vmatprep.subr.mxu0 0.0
    %3852 = vmatpush1.xpose.msra.mxu0 0.0
    %3853 = vmatprep.subr.mxu0 0.0
    %3854 = vmatpush1.xpose.msra.mxu0 0.0
    %3855 = vmatprep.subr.mxu0 0.0
    %3856 = vmatpush1.xpose.msra.mxu0 0.0
    %3857 = vmatprep.subr.mxu0 0.0
    %3858 = vmatpush1.xpose.msra.mxu0 0.0
    %3859 = vmatprep.subr.mxu0 0.0
    %3860 = vmatpush1.xpose.msra.mxu0 0.0
    %3861 = vmatprep.subr.mxu0 0.0
    %3862 = vmatpush1.xpose.msra.mxu0 0.0
    %3863 = vmatprep.subr.mxu0 0.0
    %3864 = vmatpush1.xpose.msra.mxu0 0.0
    %3865 = vmatprep.subr.mxu0 0.0
    %3866 = vmatpush1.xpose.msra.mxu0 0.0
    %3867 = vmatprep.mubr.f32.mxu0 0.0
    %3868 = vmatmul.mubr.f32.gmra.mrb[0].mxu0 %v3799
    %v3869 = vpop.f32.mrb[0].mxu0
    %v3870 = vadd.f32 0.0, %v3869
    %v3871 = vpop.f32.mrb[0].mxu0
    %3872 = vdwg.mxu0
    %3873 = vrot.lane.b32.xlu0 %v3465, 120
    %v3874 = vpop.permute.xlu0 %3873
    %3875 = vrot.lane.b32.xlu0 %v3465, 56
    %v3876 = vpop.permute.xlu0 %3875
    %v3877 = vsel %vm262, %v3874, 0
    %v3879 = vsel %vm262, %v3876, 0
    %3881 = vmatprep.subr.mxu0 0.0
    %3882 = vmatpush1.xpose.msra.mxu0 %v3879
    %3883 = vmatprep.subr.mxu0 0.0
    %3884 = vmatpush1.xpose.msra.mxu0 0.0
    %3885 = vmatprep.subr.mxu0 0.0
    %3886 = vmatpush1.xpose.msra.mxu0 0.0
    %3887 = vmatprep.subr.mxu0 0.0
    %3888 = vmatpush1.xpose.msra.mxu0 0.0
    %3889 = vmatprep.subr.mxu0 0.0
    %3890 = vmatpush1.xpose.msra.mxu0 0.0
    %3891 = vmatprep.subr.mxu0 0.0
    %3892 = vmatpush1.xpose.msra.mxu0 0.0
    %3893 = vmatprep.subr.mxu0 0.0
    %3894 = vmatpush1.xpose.msra.mxu0 0.0
    %3895 = vmatprep.subr.mxu0 0.0
    %3896 = vmatpush1.xpose.msra.mxu0 0.0
    %3897 = vmatprep.subr.mxu0 0.0
    %3898 = vmatpush1.xpose.msra.mxu0 0.0
    %3899 = vmatprep.subr.mxu0 0.0
    %3900 = vmatpush1.xpose.msra.mxu0 0.0
    %3901 = vmatprep.subr.mxu0 0.0
    %3902 = vmatpush1.xpose.msra.mxu0 0.0
    %3903 = vmatprep.subr.mxu0 0.0
    %3904 = vmatpush1.xpose.msra.mxu0 0.0
    %3905 = vmatprep.subr.mxu0 0.0
    %3906 = vmatpush1.xpose.msra.mxu0 0.0
    %3907 = vmatprep.subr.mxu0 0.0
    %3908 = vmatpush1.xpose.msra.mxu0 0.0
    %3909 = vmatprep.subr.mxu0 0.0
    %3910 = vmatpush1.xpose.msra.mxu0 0.0
    %3911 = vmatprep.subr.mxu0 0.0
    %3912 = vmatpush1.xpose.msra.mxu0 0.0
    %3913 = vmatprep.subr.mxu0 0.0
    %3914 = vmatpush1.xpose.msra.mxu0 0.0
    %3915 = vmatprep.subr.mxu0 0.0
    %3916 = vmatpush1.xpose.msra.mxu0 0.0
    %3917 = vmatprep.subr.mxu0 0.0
    %3918 = vmatpush1.xpose.msra.mxu0 0.0
    %3919 = vmatprep.subr.mxu0 0.0
    %3920 = vmatpush1.xpose.msra.mxu0 0.0
    %3921 = vmatprep.subr.mxu0 0.0
    %3922 = vmatpush1.xpose.msra.mxu0 0.0
    %3923 = vmatprep.subr.mxu0 0.0
    %3924 = vmatpush1.xpose.msra.mxu0 0.0
    %3925 = vmatprep.subr.mxu0 0.0
    %3926 = vmatpush1.xpose.msra.mxu0 0.0
    %3927 = vmatprep.subr.mxu0 0.0
    %3928 = vmatpush1.xpose.msra.mxu0 0.0
    %3929 = vmatprep.subr.mxu0 0.0
    %3930 = vmatpush1.xpose.msra.mxu0 0.0
    %3931 = vmatprep.subr.mxu0 0.0
    %3932 = vmatpush1.xpose.msra.mxu0 0.0
    %3933 = vmatprep.subr.mxu0 0.0
    %3934 = vmatpush1.xpose.msra.mxu0 0.0
    %3935 = vmatprep.subr.mxu0 0.0
    %3936 = vmatpush1.xpose.msra.mxu0 0.0
    %3937 = vmatprep.subr.mxu0 0.0
    %3938 = vmatpush1.xpose.msra.mxu0 0.0
    %3939 = vmatprep.subr.mxu0 0.0
    %3940 = vmatpush1.xpose.msra.mxu0 0.0
    %3941 = vmatprep.subr.mxu0 0.0
    %3942 = vmatpush1.xpose.msra.mxu0 0.0
    %3943 = vmatprep.subr.mxu0 0.0
    %3944 = vmatpush1.xpose.msra.mxu0 0.0
    %3945 = vmatprep.mubr.f32.mxu0 0.0
    %3946 = vmatmul.mubr.f32.gmra.mrb[0].mxu0 %v3877
    %v3947 = vpop.f32.mrb[0].mxu0
    %v3948 = vadd.f32 0.0, %v3947
    %v3949 = vpop.f32.mrb[0].mxu0
    %3950 = vdwg.mxu0
    %v3951 = vmul.f32 %v3870, 0.35355338
    %v3952 = vmul.f32 %v3948, 0.35355338
    %v3953 = vsel %vm262, %v3951, -inf
    %3954 = vmax.xlane.f32.xlu0 %v3953
    %v3955 = vpop.xlane.xlu0 %3954
    %v3956 = vsel %vm262, %v3952, -inf
    %3957 = vmax.xlane.f32.xlu0 %v3956
    %v3958 = vpop.xlane.xlu0 %3957
    %v3959 = vsub.f32 %v3951, %v3955
    %v3960 = vsub.f32 %v3952, %v3958
    %v3961 = vmul.f32 %v3959, 1.442695
    %v3962 = vpow.pop %v3961
    %v3963 = vmul.f32 %v3960, 1.442695
    %v3964 = vpow.pop %v3963
    %v3965 = vsel %vm262, %v3962, 0.0
    %3966 = vadd.xlane.f32.xlu0 %v3965
    %v3967 = vpop.xlane.xlu0 %3966
    %v3968 = vsel %vm262, %v3964, 0.0
    %3969 = vadd.xlane.f32.xlu0 %v3968
    %v3970 = vpop.xlane.xlu0 %3969
    %v3971 = vrcp.pop %v3967
    %v3972 = vrcp.pop %v3970
    %v3973 = vmul.f32 %v3962, %v3971
    %v3974 = vmul.f32 %v3964, %v3972
    %3976 = vrot.lane.b32.xlu0 %v3461, 120
    %v3977 = vpop.permute.xlu0 %3976
    %v3980 = vsel %vm262, %v3973, 0
    %3982 = vmatprep.subr.mxu0 0.0
    %3983 = vmatpush1.msra.mxu0 %v3977
    %3984 = vmatprep.subr.mxu0 0.0
    %3985 = vmatpush1.msra.mxu0 0.0
    %3986 = vmatprep.subr.mxu0 0.0
    %3987 = vmatpush1.msra.mxu0 0.0
    %3988 = vmatprep.subr.mxu0 0.0
    %3989 = vmatpush1.msra.mxu0 0.0
    %3990 = vmatprep.subr.mxu0 0.0
    %3991 = vmatpush1.msra.mxu0 0.0
    %3992 = vmatprep.subr.mxu0 0.0
    %3993 = vmatpush1.msra.mxu0 0.0
    %3994 = vmatprep.subr.mxu0 0.0
    %3995 = vmatpush1.msra.mxu0 0.0
    %3996 = vmatprep.subr.mxu0 0.0
    %3997 = vmatpush1.msra.mxu0 0.0
    %3998 = vmatprep.subr.mxu0 0.0
    %3999 = vmatpush1.msra.mxu0 0.0
    %4000 = vmatprep.subr.mxu0 0.0
    %4001 = vmatpush1.msra.mxu0 0.0
    %4002 = vmatprep.subr.mxu0 0.0
    %4003 = vmatpush1.msra.mxu0 0.0
    %4004 = vmatprep.subr.mxu0 0.0
    %4005 = vmatpush1.msra.mxu0 0.0
    %4006 = vmatprep.subr.mxu0 0.0
    %4007 = vmatpush1.msra.mxu0 0.0
    %4008 = vmatprep.subr.mxu0 0.0
    %4009 = vmatpush1.msra.mxu0 0.0
    %4010 = vmatprep.subr.mxu0 0.0
    %4011 = vmatpush1.msra.mxu0 0.0
    %4012 = vmatprep.subr.mxu0 0.0
    %4013 = vmatpush1.msra.mxu0 0.0
    %4014 = vmatprep.subr.mxu0 0.0
    %4015 = vmatpush1.msra.mxu0 0.0
    %4016 = vmatprep.subr.mxu0 0.0
    %4017 = vmatpush1.msra.mxu0 0.0
    %4018 = vmatprep.subr.mxu0 0.0
    %4019 = vmatpush1.msra.mxu0 0.0
    %4020 = vmatprep.subr.mxu0 0.0
    %4021 = vmatpush1.msra.mxu0 0.0
    %4022 = vmatprep.subr.mxu0 0.0
    %4023 = vmatpush1.msra.mxu0 0.0
    %4024 = vmatprep.subr.mxu0 0.0
    %4025 = vmatpush1.msra.mxu0 0.0
    %4026 = vmatprep.subr.mxu0 0.0
    %4027 = vmatpush1.msra.mxu0 0.0
    %4028 = vmatprep.subr.mxu0 0.0
    %4029 = vmatpush1.msra.mxu0 0.0
    %4030 = vmatprep.subr.mxu0 0.0
    %4031 = vmatpush1.msra.mxu0 0.0
    %4032 = vmatprep.subr.mxu0 0.0
    %4033 = vmatpush1.msra.mxu0 0.0
    %4034 = vmatprep.subr.mxu0 0.0
    %4035 = vmatpush1.msra.mxu0 0.0
    %4036 = vmatprep.subr.mxu0 0.0
    %4037 = vmatpush1.msra.mxu0 0.0
    %4038 = vmatprep.subr.mxu0 0.0
    %4039 = vmatpush1.msra.mxu0 0.0
    %4040 = vmatprep.subr.mxu0 0.0
    %4041 = vmatpush1.msra.mxu0 0.0
    %4042 = vmatprep.subr.mxu0 0.0
    %4043 = vmatpush1.msra.mxu0 0.0
    %4044 = vmatprep.subr.mxu0 0.0
    %4045 = vmatpush1.msra.mxu0 0.0
    %4046 = vmatprep.mubr.f32.mxu0 0.0
    %4047 = vmatmul.mubr.f32.gmra.mrb[0].mxu0 %v3980
    %v4048 = vpop.f32.mrb[0].mxu0
    %v4049 = vadd.f32 0.0, %v4048
    %v4050 = vpop.f32.mrb[0].mxu0
    %4051 = vdwg.mxu0
    %4053 = vrot.lane.b32.xlu0 %v3467, 120
    %v4054 = vpop.permute.xlu0 %4053
    %v4057 = vsel %vm262, %v3974, 0
    %4059 = vmatprep.subr.mxu0 0.0
    %4060 = vmatpush1.msra.mxu0 %v4054
    %4061 = vmatprep.subr.mxu0 0.0
    %4062 = vmatpush1.msra.mxu0 0.0
    %4063 = vmatprep.subr.mxu0 0.0
    %4064 = vmatpush1.msra.mxu0 0.0
    %4065 = vmatprep.subr.mxu0 0.0
    %4066 = vmatpush1.msra.mxu0 0.0
    %4067 = vmatprep.subr.mxu0 0.0
    %4068 = vmatpush1.msra.mxu0 0.0
    %4069 = vmatprep.subr.mxu0 0.0
    %4070 = vmatpush1.msra.mxu0 0.0
    %4071 = vmatprep.subr.mxu0 0.0
    %4072 = vmatpush1.msra.mxu0 0.0
    %4073 = vmatprep.subr.mxu0 0.0
    %4074 = vmatpush1.msra.mxu0 0.0
    %4075 = vmatprep.subr.mxu0 0.0
    %4076 = vmatpush1.msra.mxu0 0.0
    %4077 = vmatprep.subr.mxu0 0.0
    %4078 = vmatpush1.msra.mxu0 0.0
    %4079 = vmatprep.subr.mxu0 0.0
    %4080 = vmatpush1.msra.mxu0 0.0
    %4081 = vmatprep.subr.mxu0 0.0
    %4082 = vmatpush1.msra.mxu0 0.0
    %4083 = vmatprep.subr.mxu0 0.0
    %4084 = vmatpush1.msra.mxu0 0.0
    %4085 = vmatprep.subr.mxu0 0.0
    %4086 = vmatpush1.msra.mxu0 0.0
    %4087 = vmatprep.subr.mxu0 0.0
    %4088 = vmatpush1.msra.mxu0 0.0
    %4089 = vmatprep.subr.mxu0 0.0
    %4090 = vmatpush1.msra.mxu0 0.0
    %4091 = vmatprep.subr.mxu0 0.0
    %4092 = vmatpush1.msra.mxu0 0.0
    %4093 = vmatprep.subr.mxu0 0.0
    %4094 = vmatpush1.msra.mxu0 0.0
    %4095 = vmatprep.subr.mxu0 0.0
    %4096 = vmatpush1.msra.mxu0 0.0
    %4097 = vmatprep.subr.mxu0 0.0
    %4098 = vmatpush1.msra.mxu0 0.0
    %4099 = vmatprep.subr.mxu0 0.0
    %4100 = vmatpush1.msra.mxu0 0.0
    %4101 = vmatprep.subr.mxu0 0.0
    %4102 = vmatpush1.msra.mxu0 0.0
    %4103 = vmatprep.subr.mxu0 0.0
    %4104 = vmatpush1.msra.mxu0 0.0
    %4105 = vmatprep.subr.mxu0 0.0
    %4106 = vmatpush1.msra.mxu0 0.0
    %4107 = vmatprep.subr.mxu0 0.0
    %4108 = vmatpush1.msra.mxu0 0.0
    %4109 = vmatprep.subr.mxu0 0.0
    %4110 = vmatpush1.msra.mxu0 0.0
    %4111 = vmatprep.subr.mxu0 0.0
    %4112 = vmatpush1.msra.mxu0 0.0
    %4113 = vmatprep.subr.mxu0 0.0
    %4114 = vmatpush1.msra.mxu0 0.0
    %4115 = vmatprep.subr.mxu0 0.0
    %4116 = vmatpush1.msra.mxu0 0.0
    %4117 = vmatprep.subr.mxu0 0.0
    %4118 = vmatpush1.msra.mxu0 0.0
    %4119 = vmatprep.subr.mxu0 0.0
    %4120 = vmatpush1.msra.mxu0 0.0
    %4121 = vmatprep.subr.mxu0 0.0
    %4122 = vmatpush1.msra.mxu0 0.0
    %4123 = vmatprep.mubr.f32.mxu0 0.0
    %4124 = vmatmul.mubr.f32.gmra.mrb[0].mxu0 %v4057
    %v4125 = vpop.f32.mrb[0].mxu0
    %v4126 = vadd.f32 0.0, %v4125
    %v4127 = vpop.f32.mrb[0].mxu0
    %4128 = vdwg.mxu0
    %4131 = vrot.lane.b32.xlu0 %v4049, 8
    %v4132 = vpop.permute.xlu0 %4131
    %4133 = vrot.lane.b32.xlu0 %v4126, 8
    %v4134 = vpop.permute.xlu0 %4133
    %4137 = vst.msk [vmem:[#allocation2] sm:$0xff] %vm928, %v4132
    %4138 = vst.msk [vmem:[#allocation2 + $0x8] sm:$0xff] %vm928, %v4134
    %4139 = vrot.lane.b32.xlu0 %v3459, 112
    %v4140 = vpop.permute.xlu0 %4139
    %4141 = vrot.lane.b32.xlu0 %v3459, 48
    %v4142 = vpop.permute.xlu0 %4141
    %v4143 = vsel %vm262, %v4140, 0
    %v4145 = vsel %vm262, %v4142, 0
    %4147 = vmatprep.subr.mxu0 0.0
    %4148 = vmatpush1.xpose.msra.mxu0 %v4145
    %4149 = vmatprep.subr.mxu0 0.0
    %4150 = vmatpush1.xpose.msra.mxu0 0.0
    %4151 = vmatprep.subr.mxu0 0.0
    %4152 = vmatpush1.xpose.msra.mxu0 0.0
    %4153 = vmatprep.subr.mxu0 0.0
    %4154 = vmatpush1.xpose.msra.mxu0 0.0
    %4155 = vmatprep.subr.mxu0 0.0
    %4156 = vmatpush1.xpose.msra.mxu0 0.0
    %4157 = vmatprep.subr.mxu0 0.0
    %4158 = vmatpush1.xpose.msra.mxu0 0.0
    %4159 = vmatprep.subr.mxu0 0.0
    %4160 = vmatpush1.xpose.msra.mxu0 0.0
    %4161 = vmatprep.subr.mxu0 0.0
    %4162 = vmatpush1.xpose.msra.mxu0 0.0
    %4163 = vmatprep.subr.mxu0 0.0
    %4164 = vmatpush1.xpose.msra.mxu0 0.0
    %4165 = vmatprep.subr.mxu0 0.0
    %4166 = vmatpush1.xpose.msra.mxu0 0.0
    %4167 = vmatprep.subr.mxu0 0.0
    %4168 = vmatpush1.xpose.msra.mxu0 0.0
    %4169 = vmatprep.subr.mxu0 0.0
    %4170 = vmatpush1.xpose.msra.mxu0 0.0
    %4171 = vmatprep.subr.mxu0 0.0
    %4172 = vmatpush1.xpose.msra.mxu0 0.0
    %4173 = vmatprep.subr.mxu0 0.0
    %4174 = vmatpush1.xpose.msra.mxu0 0.0
    %4175 = vmatprep.subr.mxu0 0.0
    %4176 = vmatpush1.xpose.msra.mxu0 0.0
    %4177 = vmatprep.subr.mxu0 0.0
    %4178 = vmatpush1.xpose.msra.mxu0 0.0
    %4179 = vmatprep.subr.mxu0 0.0
    %4180 = vmatpush1.xpose.msra.mxu0 0.0
    %4181 = vmatprep.subr.mxu0 0.0
    %4182 = vmatpush1.xpose.msra.mxu0 0.0
    %4183 = vmatprep.subr.mxu0 0.0
    %4184 = vmatpush1.xpose.msra.mxu0 0.0
    %4185 = vmatprep.subr.mxu0 0.0
    %4186 = vmatpush1.xpose.msra.mxu0 0.0
    %4187 = vmatprep.subr.mxu0 0.0
    %4188 = vmatpush1.xpose.msra.mxu0 0.0
    %4189 = vmatprep.subr.mxu0 0.0
    %4190 = vmatpush1.xpose.msra.mxu0 0.0
    %4191 = vmatprep.subr.mxu0 0.0
    %4192 = vmatpush1.xpose.msra.mxu0 0.0
    %4193 = vmatprep.subr.mxu0 0.0
    %4194 = vmatpush1.xpose.msra.mxu0 0.0
    %4195 = vmatprep.subr.mxu0 0.0
    %4196 = vmatpush1.xpose.msra.mxu0 0.0
    %4197 = vmatprep.subr.mxu0 0.0
    %4198 = vmatpush1.xpose.msra.mxu0 0.0
    %4199 = vmatprep.subr.mxu0 0.0
    %4200 = vmatpush1.xpose.msra.mxu0 0.0
    %4201 = vmatprep.subr.mxu0 0.0
    %4202 = vmatpush1.xpose.msra.mxu0 0.0
    %4203 = vmatprep.subr.mxu0 0.0
    %4204 = vmatpush1.xpose.msra.mxu0 0.0
    %4205 = vmatprep.subr.mxu0 0.0
    %4206 = vmatpush1.xpose.msra.mxu0 0.0
    %4207 = vmatprep.subr.mxu0 0.0
    %4208 = vmatpush1.xpose.msra.mxu0 0.0
    %4209 = vmatprep.subr.mxu0 0.0
    %4210 = vmatpush1.xpose.msra.mxu0 0.0
    %4211 = vmatprep.mubr.f32.mxu0 0.0
    %4212 = vmatmul.mubr.f32.gmra.mrb[0].mxu0 %v4143
    %v4213 = vpop.f32.mrb[0].mxu0
    %v4214 = vadd.f32 0.0, %v4213
    %v4215 = vpop.f32.mrb[0].mxu0
    %4216 = vdwg.mxu0
    %4217 = vrot.lane.b32.xlu0 %v3465, 112
    %v4218 = vpop.permute.xlu0 %4217
    %4219 = vrot.lane.b32.xlu0 %v3465, 48
    %v4220 = vpop.permute.xlu0 %4219
    %v4221 = vsel %vm262, %v4218, 0
    %v4223 = vsel %vm262, %v4220, 0
    %4225 = vmatprep.subr.mxu0 0.0
    %4226 = vmatpush1.xpose.msra.mxu0 %v4223
    %4227 = vmatprep.subr.mxu0 0.0
    %4228 = vmatpush1.xpose.msra.mxu0 0.0
    %4229 = vmatprep.subr.mxu0 0.0
    %4230 = vmatpush1.xpose.msra.mxu0 0.0
    %4231 = vmatprep.subr.mxu0 0.0
    %4232 = vmatpush1.xpose.msra.mxu0 0.0
    %4233 = vmatprep.subr.mxu0 0.0
    %4234 = vmatpush1.xpose.msra.mxu0 0.0
    %4235 = vmatprep.subr.mxu0 0.0
    %4236 = vmatpush1.xpose.msra.mxu0 0.0
    %4237 = vmatprep.subr.mxu0 0.0
    %4238 = vmatpush1.xpose.msra.mxu0 0.0
    %4239 = vmatprep.subr.mxu0 0.0
    %4240 = vmatpush1.xpose.msra.mxu0 0.0
    %4241 = vmatprep.subr.mxu0 0.0
    %4242 = vmatpush1.xpose.msra.mxu0 0.0
    %4243 = vmatprep.subr.mxu0 0.0
    %4244 = vmatpush1.xpose.msra.mxu0 0.0
    %4245 = vmatprep.subr.mxu0 0.0
    %4246 = vmatpush1.xpose.msra.mxu0 0.0
    %4247 = vmatprep.subr.mxu0 0.0
    %4248 = vmatpush1.xpose.msra.mxu0 0.0
    %4249 = vmatprep.subr.mxu0 0.0
    %4250 = vmatpush1.xpose.msra.mxu0 0.0
    %4251 = vmatprep.subr.mxu0 0.0
    %4252 = vmatpush1.xpose.msra.mxu0 0.0
    %4253 = vmatprep.subr.mxu0 0.0
    %4254 = vmatpush1.xpose.msra.mxu0 0.0
    %4255 = vmatprep.subr.mxu0 0.0
    %4256 = vmatpush1.xpose.msra.mxu0 0.0
    %4257 = vmatprep.subr.mxu0 0.0
    %4258 = vmatpush1.xpose.msra.mxu0 0.0
    %4259 = vmatprep.subr.mxu0 0.0
    %4260 = vmatpush1.xpose.msra.mxu0 0.0
    %4261 = vmatprep.subr.mxu0 0.0
    %4262 = vmatpush1.xpose.msra.mxu0 0.0
    %4263 = vmatprep.subr.mxu0 0.0
    %4264 = vmatpush1.xpose.msra.mxu0 0.0
    %4265 = vmatprep.subr.mxu0 0.0
    %4266 = vmatpush1.xpose.msra.mxu0 0.0
    %4267 = vmatprep.subr.mxu0 0.0
    %4268 = vmatpush1.xpose.msra.mxu0 0.0
    %4269 = vmatprep.subr.mxu0 0.0
    %4270 = vmatpush1.xpose.msra.mxu0 0.0
    %4271 = vmatprep.subr.mxu0 0.0
    %4272 = vmatpush1.xpose.msra.mxu0 0.0
    %4273 = vmatprep.subr.mxu0 0.0
    %4274 = vmatpush1.xpose.msra.mxu0 0.0
    %4275 = vmatprep.subr.mxu0 0.0
    %4276 = vmatpush1.xpose.msra.mxu0 0.0
    %4277 = vmatprep.subr.mxu0 0.0
    %4278 = vmatpush1.xpose.msra.mxu0 0.0
    %4279 = vmatprep.subr.mxu0 0.0
    %4280 = vmatpush1.xpose.msra.mxu0 0.0
    %4281 = vmatprep.subr.mxu0 0.0
    %4282 = vmatpush1.xpose.msra.mxu0 0.0
    %4283 = vmatprep.subr.mxu0 0.0
    %4284 = vmatpush1.xpose.msra.mxu0 0.0
    %4285 = vmatprep.subr.mxu0 0.0
    %4286 = vmatpush1.xpose.msra.mxu0 0.0
    %4287 = vmatprep.subr.mxu0 0.0
    %4288 = vmatpush1.xpose.msra.mxu0 0.0
    %4289 = vmatprep.mubr.f32.mxu0 0.0
    %4290 = vmatmul.mubr.f32.gmra.mrb[0].mxu0 %v4221
    %v4291 = vpop.f32.mrb[0].mxu0
    %v4292 = vadd.f32 0.0, %v4291
    %v4293 = vpop.f32.mrb[0].mxu0
    %4294 = vdwg.mxu0
    %v4295 = vmul.f32 %v4214, 0.35355338
    %v4296 = vmul.f32 %v4292, 0.35355338
    %v4297 = vsel %vm262, %v4295, -inf
    %4298 = vmax.xlane.f32.xlu0 %v4297
    %v4299 = vpop.xlane.xlu0 %4298
    %v4300 = vsel %vm262, %v4296, -inf
    %4301 = vmax.xlane.f32.xlu0 %v4300
    %v4302 = vpop.xlane.xlu0 %4301
    %v4303 = vsub.f32 %v4295, %v4299
    %v4304 = vsub.f32 %v4296, %v4302
    %v4305 = vmul.f32 %v4303, 1.442695
    %v4306 = vpow.pop %v4305
    %v4307 = vmul.f32 %v4304, 1.442695
    %v4308 = vpow.pop %v4307
    %v4309 = vsel %vm262, %v4306, 0.0
    %4310 = vadd.xlane.f32.xlu0 %v4309
    %v4311 = vpop.xlane.xlu0 %4310
    %v4312 = vsel %vm262, %v4308, 0.0
    %4313 = vadd.xlane.f32.xlu0 %v4312
    %v4314 = vpop.xlane.xlu0 %4313
    %v4315 = vrcp.pop %v4311
    %v4316 = vrcp.pop %v4314
    %v4317 = vmul.f32 %v4306, %v4315
    %v4318 = vmul.f32 %v4308, %v4316
    %4319 = vrot.lane.b32.xlu0 %v3461, 112
    %v4320 = vpop.permute.xlu0 %4319
    %v4323 = vsel %vm262, %v4317, 0
    %4325 = vmatprep.subr.mxu0 0.0
    %4326 = vmatpush1.msra.mxu0 %v4320
    %4327 = vmatprep.subr.mxu0 0.0
    %4328 = vmatpush1.msra.mxu0 0.0
    %4329 = vmatprep.subr.mxu0 0.0
    %4330 = vmatpush1.msra.mxu0 0.0
    %4331 = vmatprep.subr.mxu0 0.0
    %4332 = vmatpush1.msra.mxu0 0.0
    %4333 = vmatprep.subr.mxu0 0.0
    %4334 = vmatpush1.msra.mxu0 0.0
    %4335 = vmatprep.subr.mxu0 0.0
    %4336 = vmatpush1.msra.mxu0 0.0
    %4337 = vmatprep.subr.mxu0 0.0
    %4338 = vmatpush1.msra.mxu0 0.0
    %4339 = vmatprep.subr.mxu0 0.0
    %4340 = vmatpush1.msra.mxu0 0.0
    %4341 = vmatprep.subr.mxu0 0.0
    %4342 = vmatpush1.msra.mxu0 0.0
    %4343 = vmatprep.subr.mxu0 0.0
    %4344 = vmatpush1.msra.mxu0 0.0
    %4345 = vmatprep.subr.mxu0 0.0
    %4346 = vmatpush1.msra.mxu0 0.0
    %4347 = vmatprep.subr.mxu0 0.0
    %4348 = vmatpush1.msra.mxu0 0.0
    %4349 = vmatprep.subr.mxu0 0.0
    %4350 = vmatpush1.msra.mxu0 0.0
    %4351 = vmatprep.subr.mxu0 0.0
    %4352 = vmatpush1.msra.mxu0 0.0
    %4353 = vmatprep.subr.mxu0 0.0
    %4354 = vmatpush1.msra.mxu0 0.0
    %4355 = vmatprep.subr.mxu0 0.0
    %4356 = vmatpush1.msra.mxu0 0.0
    %4357 = vmatprep.subr.mxu0 0.0
    %4358 = vmatpush1.msra.mxu0 0.0
    %4359 = vmatprep.subr.mxu0 0.0
    %4360 = vmatpush1.msra.mxu0 0.0
    %4361 = vmatprep.subr.mxu0 0.0
    %4362 = vmatpush1.msra.mxu0 0.0
    %4363 = vmatprep.subr.mxu0 0.0
    %4364 = vmatpush1.msra.mxu0 0.0
    %4365 = vmatprep.subr.mxu0 0.0
    %4366 = vmatpush1.msra.mxu0 0.0
    %4367 = vmatprep.subr.mxu0 0.0
    %4368 = vmatpush1.msra.mxu0 0.0
    %4369 = vmatprep.subr.mxu0 0.0
    %4370 = vmatpush1.msra.mxu0 0.0
    %4371 = vmatprep.subr.mxu0 0.0
    %4372 = vmatpush1.msra.mxu0 0.0
    %4373 = vmatprep.subr.mxu0 0.0
    %4374 = vmatpush1.msra.mxu0 0.0
    %4375 = vmatprep.subr.mxu0 0.0
    %4376 = vmatpush1.msra.mxu0 0.0
    %4377 = vmatprep.subr.mxu0 0.0
    %4378 = vmatpush1.msra.mxu0 0.0
    %4379 = vmatprep.subr.mxu0 0.0
    %4380 = vmatpush1.msra.mxu0 0.0
    %4381 = vmatprep.subr.mxu0 0.0
    %4382 = vmatpush1.msra.mxu0 0.0
    %4383 = vmatprep.subr.mxu0 0.0
    %4384 = vmatpush1.msra.mxu0 0.0
    %4385 = vmatprep.subr.mxu0 0.0
    %4386 = vmatpush1.msra.mxu0 0.0
    %4387 = vmatprep.subr.mxu0 0.0
    %4388 = vmatpush1.msra.mxu0 0.0
    %4389 = vmatprep.mubr.f32.mxu0 0.0
    %4390 = vmatmul.mubr.f32.gmra.mrb[0].mxu0 %v4323
    %v4391 = vpop.f32.mrb[0].mxu0
    %v4392 = vadd.f32 0.0, %v4391
    %v4393 = vpop.f32.mrb[0].mxu0
    %4394 = vdwg.mxu0
    %4395 = vrot.lane.b32.xlu0 %v3467, 112
    %v4396 = vpop.permute.xlu0 %4395
    %v4399 = vsel %vm262, %v4318, 0
    %4401 = vmatprep.subr.mxu0 0.0
    %4402 = vmatpush1.msra.mxu0 %v4396
    %4403 = vmatprep.subr.mxu0 0.0
    %4404 = vmatpush1.msra.mxu0 0.0
    %4405 = vmatprep.subr.mxu0 0.0
    %4406 = vmatpush1.msra.mxu0 0.0
    %4407 = vmatprep.subr.mxu0 0.0
    %4408 = vmatpush1.msra.mxu0 0.0
    %4409 = vmatprep.subr.mxu0 0.0
    %4410 = vmatpush1.msra.mxu0 0.0
    %4411 = vmatprep.subr.mxu0 0.0
    %4412 = vmatpush1.msra.mxu0 0.0
    %4413 = vmatprep.subr.mxu0 0.0
    %4414 = vmatpush1.msra.mxu0 0.0
    %4415 = vmatprep.subr.mxu0 0.0
    %4416 = vmatpush1.msra.mxu0 0.0
    %4417 = vmatprep.subr.mxu0 0.0
    %4418 = vmatpush1.msra.mxu0 0.0
    %4419 = vmatprep.subr.mxu0 0.0
    %4420 = vmatpush1.msra.mxu0 0.0
    %4421 = vmatprep.subr.mxu0 0.0
    %4422 = vmatpush1.msra.mxu0 0.0
    %4423 = vmatprep.subr.mxu0 0.0
    %4424 = vmatpush1.msra.mxu0 0.0
    %4425 = vmatprep.subr.mxu0 0.0
    %4426 = vmatpush1.msra.mxu0 0.0
    %4427 = vmatprep.subr.mxu0 0.0
    %4428 = vmatpush1.msra.mxu0 0.0
    %4429 = vmatprep.subr.mxu0 0.0
    %4430 = vmatpush1.msra.mxu0 0.0
    %4431 = vmatprep.subr.mxu0 0.0
    %4432 = vmatpush1.msra.mxu0 0.0
    %4433 = vmatprep.subr.mxu0 0.0
    %4434 = vmatpush1.msra.mxu0 0.0
    %4435 = vmatprep.subr.mxu0 0.0
    %4436 = vmatpush1.msra.mxu0 0.0
    %4437 = vmatprep.subr.mxu0 0.0
    %4438 = vmatpush1.msra.mxu0 0.0
    %4439 = vmatprep.subr.mxu0 0.0
    %4440 = vmatpush1.msra.mxu0 0.0
    %4441 = vmatprep.subr.mxu0 0.0
    %4442 = vmatpush1.msra.mxu0 0.0
    %4443 = vmatprep.subr.mxu0 0.0
    %4444 = vmatpush1.msra.mxu0 0.0
    %4445 = vmatprep.subr.mxu0 0.0
    %4446 = vmatpush1.msra.mxu0 0.0
    %4447 = vmatprep.subr.mxu0 0.0
    %4448 = vmatpush1.msra.mxu0 0.0
    %4449 = vmatprep.subr.mxu0 0.0
    %4450 = vmatpush1.msra.mxu0 0.0
    %4451 = vmatprep.subr.mxu0 0.0
    %4452 = vmatpush1.msra.mxu0 0.0
    %4453 = vmatprep.subr.mxu0 0.0
    %4454 = vmatpush1.msra.mxu0 0.0
    %4455 = vmatprep.subr.mxu0 0.0
    %4456 = vmatpush1.msra.mxu0 0.0
    %4457 = vmatprep.subr.mxu0 0.0
    %4458 = vmatpush1.msra.mxu0 0.0
    %4459 = vmatprep.subr.mxu0 0.0
    %4460 = vmatpush1.msra.mxu0 0.0
    %4461 = vmatprep.subr.mxu0 0.0
    %4462 = vmatpush1.msra.mxu0 0.0
    %4463 = vmatprep.subr.mxu0 0.0
    %4464 = vmatpush1.msra.mxu0 0.0
    %4465 = vmatprep.mubr.f32.mxu0 0.0
    %4466 = vmatmul.mubr.f32.gmra.mrb[0].mxu0 %v4399
    %v4467 = vpop.f32.mrb[0].mxu0
    %v4468 = vadd.f32 0.0, %v4467
    %v4469 = vpop.f32.mrb[0].mxu0
    %4470 = vdwg.mxu0
    %4473 = vrot.lane.b32.xlu0 %v4392, 16
    %v4474 = vpop.permute.xlu0 %4473
    %4475 = vrot.lane.b32.xlu0 %v4468, 16
    %v4476 = vpop.permute.xlu0 %4475
    %4479 = vst.msk [vmem:[#allocation2] sm:$0xff] %vm1271, %v4474
    %4480 = vst.msk [vmem:[#allocation2 + $0x8] sm:$0xff] %vm1271, %v4476
    %4481 = vrot.lane.b32.xlu0 %v3459, 104
    %v4482 = vpop.permute.xlu0 %4481
    %4483 = vrot.lane.b32.xlu0 %v3459, 40
    %v4484 = vpop.permute.xlu0 %4483
    %v4485 = vsel %vm262, %v4482, 0
    %v4487 = vsel %vm262, %v4484, 0
    %4489 = vmatprep.subr.mxu0 0.0
    %4490 = vmatpush1.xpose.msra.mxu0 %v4487
    %4491 = vmatprep.subr.mxu0 0.0
    %4492 = vmatpush1.xpose.msra.mxu0 0.0
    %4493 = vmatprep.subr.mxu0 0.0
    %4494 = vmatpush1.xpose.msra.mxu0 0.0
    %4495 = vmatprep.subr.mxu0 0.0
    %4496 = vmatpush1.xpose.msra.mxu0 0.0
    %4497 = vmatprep.subr.mxu0 0.0
    %4498 = vmatpush1.xpose.msra.mxu0 0.0
    %4499 = vmatprep.subr.mxu0 0.0
    %4500 = vmatpush1.xpose.msra.mxu0 0.0
    %4501 = vmatprep.subr.mxu0 0.0
    %4502 = vmatpush1.xpose.msra.mxu0 0.0
    %4503 = vmatprep.subr.mxu0 0.0
    %4504 = vmatpush1.xpose.msra.mxu0 0.0
    %4505 = vmatprep.subr.mxu0 0.0
    %4506 = vmatpush1.xpose.msra.mxu0 0.0
    %4507 = vmatprep.subr.mxu0 0.0
    %4508 = vmatpush1.xpose.msra.mxu0 0.0
    %4509 = vmatprep.subr.mxu0 0.0
    %4510 = vmatpush1.xpose.msra.mxu0 0.0
    %4511 = vmatprep.subr.mxu0 0.0
    %4512 = vmatpush1.xpose.msra.mxu0 0.0
    %4513 = vmatprep.subr.mxu0 0.0
    %4514 = vmatpush1.xpose.msra.mxu0 0.0
    %4515 = vmatprep.subr.mxu0 0.0
    %4516 = vmatpush1.xpose.msra.mxu0 0.0
    %4517 = vmatprep.subr.mxu0 0.0
    %4518 = vmatpush1.xpose.msra.mxu0 0.0
    %4519 = vmatprep.subr.mxu0 0.0
    %4520 = vmatpush1.xpose.msra.mxu0 0.0
    %4521 = vmatprep.subr.mxu0 0.0
    %4522 = vmatpush1.xpose.msra.mxu0 0.0
    %4523 = vmatprep.subr.mxu0 0.0
    %4524 = vmatpush1.xpose.msra.mxu0 0.0
    %4525 = vmatprep.subr.mxu0 0.0
    %4526 = vmatpush1.xpose.msra.mxu0 0.0
    %4527 = vmatprep.subr.mxu0 0.0
    %4528 = vmatpush1.xpose.msra.mxu0 0.0
    %4529 = vmatprep.subr.mxu0 0.0
    %4530 = vmatpush1.xpose.msra.mxu0 0.0
    %4531 = vmatprep.subr.mxu0 0.0
    %4532 = vmatpush1.xpose.msra.mxu0 0.0
    %4533 = vmatprep.subr.mxu0 0.0
    %4534 = vmatpush1.xpose.msra.mxu0 0.0
    %4535 = vmatprep.subr.mxu0 0.0
    %4536 = vmatpush1.xpose.msra.mxu0 0.0
    %4537 = vmatprep.subr.mxu0 0.0
    %4538 = vmatpush1.xpose.msra.mxu0 0.0
    %4539 = vmatprep.subr.mxu0 0.0
    %4540 = vmatpush1.xpose.msra.mxu0 0.0
    %4541 = vmatprep.subr.mxu0 0.0
    %4542 = vmatpush1.xpose.msra.mxu0 0.0
    %4543 = vmatprep.subr.mxu0 0.0
    %4544 = vmatpush1.xpose.msra.mxu0 0.0
    %4545 = vmatprep.subr.mxu0 0.0
    %4546 = vmatpush1.xpose.msra.mxu0 0.0
    %4547 = vmatprep.subr.mxu0 0.0
    %4548 = vmatpush1.xpose.msra.mxu0 0.0
    %4549 = vmatprep.subr.mxu0 0.0
    %4550 = vmatpush1.xpose.msra.mxu0 0.0
    %4551 = vmatprep.subr.mxu0 0.0
    %4552 = vmatpush1.xpose.msra.mxu0 0.0
    %4553 = vmatprep.mubr.f32.mxu0 0.0
    %4554 = vmatmul.mubr.f32.gmra.mrb[0].mxu0 %v4485
    %v4555 = vpop.f32.mrb[0].mxu0
    %v4556 = vadd.f32 0.0, %v4555
    %v4557 = vpop.f32.mrb[0].mxu0
    %4558 = vdwg.mxu0
    %4559 = vrot.lane.b32.xlu0 %v3465, 104
    %v4560 = vpop.permute.xlu0 %4559
    %4561 = vrot.lane.b32.xlu0 %v3465, 40
    %v4562 = vpop.permute.xlu0 %4561
    %v4563 = vsel %vm262, %v4560, 0
    %v4565 = vsel %vm262, %v4562, 0
    %4567 = vmatprep.subr.mxu0 0.0
    %4568 = vmatpush1.xpose.msra.mxu0 %v4565
    %4569 = vmatprep.subr.mxu0 0.0
    %4570 = vmatpush1.xpose.msra.mxu0 0.0
    %4571 = vmatprep.subr.mxu0 0.0
    %4572 = vmatpush1.xpose.msra.mxu0 0.0
    %4573 = vmatprep.subr.mxu0 0.0
    %4574 = vmatpush1.xpose.msra.mxu0 0.0
    %4575 = vmatprep.subr.mxu0 0.0
    %4576 = vmatpush1.xpose.msra.mxu0 0.0
    %4577 = vmatprep.subr.mxu0 0.0
    %4578 = vmatpush1.xpose.msra.mxu0 0.0
    %4579 = vmatprep.subr.mxu0 0.0
    %4580 = vmatpush1.xpose.msra.mxu0 0.0
    %4581 = vmatprep.subr.mxu0 0.0
    %4582 = vmatpush1.xpose.msra.mxu0 0.0
    %4583 = vmatprep.subr.mxu0 0.0
    %4584 = vmatpush1.xpose.msra.mxu0 0.0
    %4585 = vmatprep.subr.mxu0 0.0
    %4586 = vmatpush1.xpose.msra.mxu0 0.0
    %4587 = vmatprep.subr.mxu0 0.0
    %4588 = vmatpush1.xpose.msra.mxu0 0.0
    %4589 = vmatprep.subr.mxu0 0.0
    %4590 = vmatpush1.xpose.msra.mxu0 0.0
    %4591 = vmatprep.subr.mxu0 0.0
    %4592 = vmatpush1.xpose.msra.mxu0 0.0
    %4593 = vmatprep.subr.mxu0 0.0
    %4594 = vmatpush1.xpose.msra.mxu0 0.0
    %4595 = vmatprep.subr.mxu0 0.0
    %4596 = vmatpush1.xpose.msra.mxu0 0.0
    %4597 = vmatprep.subr.mxu0 0.0
    %4598 = vmatpush1.xpose.msra.mxu0 0.0
    %4599 = vmatprep.subr.mxu0 0.0
    %4600 = vmatpush1.xpose.msra.mxu0 0.0
    %4601 = vmatprep.subr.mxu0 0.0
    %4602 = vmatpush1.xpose.msra.mxu0 0.0
    %4603 = vmatprep.subr.mxu0 0.0
    %4604 = vmatpush1.xpose.msra.mxu0 0.0
    %4605 = vmatprep.subr.mxu0 0.0
    %4606 = vmatpush1.xpose.msra.mxu0 0.0
    %4607 = vmatprep.subr.mxu0 0.0
    %4608 = vmatpush1.xpose.msra.mxu0 0.0
    %4609 = vmatprep.subr.mxu0 0.0
    %4610 = vmatpush1.xpose.msra.mxu0 0.0
    %4611 = vmatprep.subr.mxu0 0.0
    %4612 = vmatpush1.xpose.msra.mxu0 0.0
    %4613 = vmatprep.subr.mxu0 0.0
    %4614 = vmatpush1.xpose.msra.mxu0 0.0
    %4615 = vmatprep.subr.mxu0 0.0
    %4616 = vmatpush1.xpose.msra.mxu0 0.0
    %4617 = vmatprep.subr.mxu0 0.0
    %4618 = vmatpush1.xpose.msra.mxu0 0.0
    %4619 = vmatprep.subr.mxu0 0.0
    %4620 = vmatpush1.xpose.msra.mxu0 0.0
    %4621 = vmatprep.subr.mxu0 0.0
    %4622 = vmatpush1.xpose.msra.mxu0 0.0
    %4623 = vmatprep.subr.mxu0 0.0
    %4624 = vmatpush1.xpose.msra.mxu0 0.0
    %4625 = vmatprep.subr.mxu0 0.0
    %4626 = vmatpush1.xpose.msra.mxu0 0.0
    %4627 = vmatprep.subr.mxu0 0.0
    %4628 = vmatpush1.xpose.msra.mxu0 0.0
    %4629 = vmatprep.subr.mxu0 0.0
    %4630 = vmatpush1.xpose.msra.mxu0 0.0
    %4631 = vmatprep.mubr.f32.mxu0 0.0
    %4632 = vmatmul.mubr.f32.gmra.mrb[0].mxu0 %v4563
    %v4633 = vpop.f32.mrb[0].mxu0
    %v4634 = vadd.f32 0.0, %v4633
    %v4635 = vpop.f32.mrb[0].mxu0
    %4636 = vdwg.mxu0
    %v4637 = vmul.f32 %v4556, 0.35355338
    %v4638 = vmul.f32 %v4634, 0.35355338
    %v4639 = vsel %vm262, %v4637, -inf
    %4640 = vmax.xlane.f32.xlu0 %v4639
    %v4641 = vpop.xlane.xlu0 %4640
    %v4642 = vsel %vm262, %v4638, -inf
    %4643 = vmax.xlane.f32.xlu0 %v4642
    %v4644 = vpop.xlane.xlu0 %4643
    %v4645 = vsub.f32 %v4637, %v4641
    %v4646 = vsub.f32 %v4638, %v4644
    %v4647 = vmul.f32 %v4645, 1.442695
    %v4648 = vpow.pop %v4647
    %v4649 = vmul.f32 %v4646, 1.442695
    %v4650 = vpow.pop %v4649
    %v4651 = vsel %vm262, %v4648, 0.0
    %4652 = vadd.xlane.f32.xlu0 %v4651
    %v4653 = vpop.xlane.xlu0 %4652
    %v4654 = vsel %vm262, %v4650, 0.0
    %4655 = vadd.xlane.f32.xlu0 %v4654
    %v4656 = vpop.xlane.xlu0 %4655
    %v4657 = vrcp.pop %v4653
    %v4658 = vrcp.pop %v4656
    %v4659 = vmul.f32 %v4648, %v4657
    %v4660 = vmul.f32 %v4650, %v4658
    %4661 = vrot.lane.b32.xlu0 %v3461, 104
    %v4662 = vpop.permute.xlu0 %4661
    %v4665 = vsel %vm262, %v4659, 0
    %4667 = vmatprep.subr.mxu0 0.0
    %4668 = vmatpush1.msra.mxu0 %v4662
    %4669 = vmatprep.subr.mxu0 0.0
    %4670 = vmatpush1.msra.mxu0 0.0
    %4671 = vmatprep.subr.mxu0 0.0
    %4672 = vmatpush1.msra.mxu0 0.0
    %4673 = vmatprep.subr.mxu0 0.0
    %4674 = vmatpush1.msra.mxu0 0.0
    %4675 = vmatprep.subr.mxu0 0.0
    %4676 = vmatpush1.msra.mxu0 0.0
    %4677 = vmatprep.subr.mxu0 0.0
    %4678 = vmatpush1.msra.mxu0 0.0
    %4679 = vmatprep.subr.mxu0 0.0
    %4680 = vmatpush1.msra.mxu0 0.0
    %4681 = vmatprep.subr.mxu0 0.0
    %4682 = vmatpush1.msra.mxu0 0.0
    %4683 = vmatprep.subr.mxu0 0.0
    %4684 = vmatpush1.msra.mxu0 0.0
    %4685 = vmatprep.subr.mxu0 0.0
    %4686 = vmatpush1.msra.mxu0 0.0
    %4687 = vmatprep.subr.mxu0 0.0
    %4688 = vmatpush1.msra.mxu0 0.0
    %4689 = vmatprep.subr.mxu0 0.0
    %4690 = vmatpush1.msra.mxu0 0.0
    %4691 = vmatprep.subr.mxu0 0.0
    %4692 = vmatpush1.msra.mxu0 0.0
    %4693 = vmatprep.subr.mxu0 0.0
    %4694 = vmatpush1.msra.mxu0 0.0
    %4695 = vmatprep.subr.mxu0 0.0
    %4696 = vmatpush1.msra.mxu0 0.0
    %4697 = vmatprep.subr.mxu0 0.0
    %4698 = vmatpush1.msra.mxu0 0.0
    %4699 = vmatprep.subr.mxu0 0.0
    %4700 = vmatpush1.msra.mxu0 0.0
    %4701 = vmatprep.subr.mxu0 0.0
    %4702 = vmatpush1.msra.mxu0 0.0
    %4703 = vmatprep.subr.mxu0 0.0
    %4704 = vmatpush1.msra.mxu0 0.0
    %4705 = vmatprep.subr.mxu0 0.0
    %4706 = vmatpush1.msra.mxu0 0.0
    %4707 = vmatprep.subr.mxu0 0.0
    %4708 = vmatpush1.msra.mxu0 0.0
    %4709 = vmatprep.subr.mxu0 0.0
    %4710 = vmatpush1.msra.mxu0 0.0
    %4711 = vmatprep.subr.mxu0 0.0
    %4712 = vmatpush1.msra.mxu0 0.0
    %4713 = vmatprep.subr.mxu0 0.0
    %4714 = vmatpush1.msra.mxu0 0.0
    %4715 = vmatprep.subr.mxu0 0.0
    %4716 = vmatpush1.msra.mxu0 0.0
    %4717 = vmatprep.subr.mxu0 0.0
    %4718 = vmatpush1.msra.mxu0 0.0
    %4719 = vmatprep.subr.mxu0 0.0
    %4720 = vmatpush1.msra.mxu0 0.0
    %4721 = vmatprep.subr.mxu0 0.0
    %4722 = vmatpush1.msra.mxu0 0.0
    %4723 = vmatprep.subr.mxu0 0.0
    %4724 = vmatpush1.msra.mxu0 0.0
    %4725 = vmatprep.subr.mxu0 0.0
    %4726 = vmatpush1.msra.mxu0 0.0
    %4727 = vmatprep.subr.mxu0 0.0
    %4728 = vmatpush1.msra.mxu0 0.0
    %4729 = vmatprep.subr.mxu0 0.0
    %4730 = vmatpush1.msra.mxu0 0.0
    %4731 = vmatprep.mubr.f32.mxu0 0.0
    %4732 = vmatmul.mubr.f32.gmra.mrb[0].mxu0 %v4665
    %v4733 = vpop.f32.mrb[0].mxu0
    %v4734 = vadd.f32 0.0, %v4733
    %v4735 = vpop.f32.mrb[0].mxu0
    %4736 = vdwg.mxu0
    %4737 = vrot.lane.b32.xlu0 %v3467, 104
    %v4738 = vpop.permute.xlu0 %4737
    %v4741 = vsel %vm262, %v4660, 0
    %4743 = vmatprep.subr.mxu0 0.0
    %4744 = vmatpush1.msra.mxu0 %v4738
    %4745 = vmatprep.subr.mxu0 0.0
    %4746 = vmatpush1.msra.mxu0 0.0
    %4747 = vmatprep.subr.mxu0 0.0
    %4748 = vmatpush1.msra.mxu0 0.0
    %4749 = vmatprep.subr.mxu0 0.0
    %4750 = vmatpush1.msra.mxu0 0.0
    %4751 = vmatprep.subr.mxu0 0.0
    %4752 = vmatpush1.msra.mxu0 0.0
    %4753 = vmatprep.subr.mxu0 0.0
    %4754 = vmatpush1.msra.mxu0 0.0
    %4755 = vmatprep.subr.mxu0 0.0
    %4756 = vmatpush1.msra.mxu0 0.0
    %4757 = vmatprep.subr.mxu0 0.0
    %4758 = vmatpush1.msra.mxu0 0.0
    %4759 = vmatprep.subr.mxu0 0.0
    %4760 = vmatpush1.msra.mxu0 0.0
    %4761 = vmatprep.subr.mxu0 0.0
    %4762 = vmatpush1.msra.mxu0 0.0
    %4763 = vmatprep.subr.mxu0 0.0
    %4764 = vmatpush1.msra.mxu0 0.0
    %4765 = vmatprep.subr.mxu0 0.0
    %4766 = vmatpush1.msra.mxu0 0.0
    %4767 = vmatprep.subr.mxu0 0.0
    %4768 = vmatpush1.msra.mxu0 0.0
    %4769 = vmatprep.subr.mxu0 0.0
    %4770 = vmatpush1.msra.mxu0 0.0
    %4771 = vmatprep.subr.mxu0 0.0
    %4772 = vmatpush1.msra.mxu0 0.0
    %4773 = vmatprep.subr.mxu0 0.0
    %4774 = vmatpush1.msra.mxu0 0.0
    %4775 = vmatprep.subr.mxu0 0.0
    %4776 = vmatpush1.msra.mxu0 0.0
    %4777 = vmatprep.subr.mxu0 0.0
    %4778 = vmatpush1.msra.mxu0 0.0
    %4779 = vmatprep.subr.mxu0 0.0
    %4780 = vmatpush1.msra.mxu0 0.0
    %4781 = vmatprep.subr.mxu0 0.0
    %4782 = vmatpush1.msra.mxu0 0.0
    %4783 = vmatprep.subr.mxu0 0.0
    %4784 = vmatpush1.msra.mxu0 0.0
    %4785 = vmatprep.subr.mxu0 0.0
    %4786 = vmatpush1.msra.mxu0 0.0
    %4787 = vmatprep.subr.mxu0 0.0
    %4788 = vmatpush1.msra.mxu0 0.0
    %4789 = vmatprep.subr.mxu0 0.0
    %4790 = vmatpush1.msra.mxu0 0.0
    %4791 = vmatprep.subr.mxu0 0.0
    %4792 = vmatpush1.msra.mxu0 0.0
    %4793 = vmatprep.subr.mxu0 0.0
    %4794 = vmatpush1.msra.mxu0 0.0
    %4795 = vmatprep.subr.mxu0 0.0
    %4796 = vmatpush1.msra.mxu0 0.0
    %4797 = vmatprep.subr.mxu0 0.0
    %4798 = vmatpush1.msra.mxu0 0.0
    %4799 = vmatprep.subr.mxu0 0.0
    %4800 = vmatpush1.msra.mxu0 0.0
    %4801 = vmatprep.subr.mxu0 0.0
    %4802 = vmatpush1.msra.mxu0 0.0
    %4803 = vmatprep.subr.mxu0 0.0
    %4804 = vmatpush1.msra.mxu0 0.0
    %4805 = vmatprep.subr.mxu0 0.0
    %4806 = vmatpush1.msra.mxu0 0.0
    %4807 = vmatprep.mubr.f32.mxu0 0.0
    %4808 = vmatmul.mubr.f32.gmra.mrb[0].mxu0 %v4741
    %v4809 = vpop.f32.mrb[0].mxu0
    %v4810 = vadd.f32 0.0, %v4809
    %v4811 = vpop.f32.mrb[0].mxu0
    %4812 = vdwg.mxu0
    %4815 = vrot.lane.b32.xlu0 %v4734, 24
    %v4816 = vpop.permute.xlu0 %4815
    %4817 = vrot.lane.b32.xlu0 %v4810, 24
    %v4818 = vpop.permute.xlu0 %4817
    %4821 = vst.msk [vmem:[#allocation2] sm:$0xff] %vm1614, %v4816
    %4822 = vst.msk [vmem:[#allocation2 + $0x8] sm:$0xff] %vm1614, %v4818
    %4823 = vrot.lane.b32.xlu0 %v3459, 96
    %v4824 = vpop.permute.xlu0 %4823
    %4825 = vrot.lane.b32.xlu0 %v3459, 32
    %v4826 = vpop.permute.xlu0 %4825
    %v4827 = vsel %vm262, %v4824, 0
    %v4829 = vsel %vm262, %v4826, 0
    %4831 = vmatprep.subr.mxu0 0.0
    %4832 = vmatpush1.xpose.msra.mxu0 %v4829
    %4833 = vmatprep.subr.mxu0 0.0
    %4834 = vmatpush1.xpose.msra.mxu0 0.0
    %4835 = vmatprep.subr.mxu0 0.0
    %4836 = vmatpush1.xpose.msra.mxu0 0.0
    %4837 = vmatprep.subr.mxu0 0.0
    %4838 = vmatpush1.xpose.msra.mxu0 0.0
    %4839 = vmatprep.subr.mxu0 0.0
    %4840 = vmatpush1.xpose.msra.mxu0 0.0
    %4841 = vmatprep.subr.mxu0 0.0
    %4842 = vmatpush1.xpose.msra.mxu0 0.0
    %4843 = vmatprep.subr.mxu0 0.0
    %4844 = vmatpush1.xpose.msra.mxu0 0.0
    %4845 = vmatprep.subr.mxu0 0.0
    %4846 = vmatpush1.xpose.msra.mxu0 0.0
    %4847 = vmatprep.subr.mxu0 0.0
    %4848 = vmatpush1.xpose.msra.mxu0 0.0
    %4849 = vmatprep.subr.mxu0 0.0
    %4850 = vmatpush1.xpose.msra.mxu0 0.0
    %4851 = vmatprep.subr.mxu0 0.0
    %4852 = vmatpush1.xpose.msra.mxu0 0.0
    %4853 = vmatprep.subr.mxu0 0.0
    %4854 = vmatpush1.xpose.msra.mxu0 0.0
    %4855 = vmatprep.subr.mxu0 0.0
    %4856 = vmatpush1.xpose.msra.mxu0 0.0
    %4857 = vmatprep.subr.mxu0 0.0
    %4858 = vmatpush1.xpose.msra.mxu0 0.0
    %4859 = vmatprep.subr.mxu0 0.0
    %4860 = vmatpush1.xpose.msra.mxu0 0.0
    %4861 = vmatprep.subr.mxu0 0.0
    %4862 = vmatpush1.xpose.msra.mxu0 0.0
    %4863 = vmatprep.subr.mxu0 0.0
    %4864 = vmatpush1.xpose.msra.mxu0 0.0
    %4865 = vmatprep.subr.mxu0 0.0
    %4866 = vmatpush1.xpose.msra.mxu0 0.0
    %4867 = vmatprep.subr.mxu0 0.0
    %4868 = vmatpush1.xpose.msra.mxu0 0.0
    %4869 = vmatprep.subr.mxu0 0.0
    %4870 = vmatpush1.xpose.msra.mxu0 0.0
    %4871 = vmatprep.subr.mxu0 0.0
    %4872 = vmatpush1.xpose.msra.mxu0 0.0
    %4873 = vmatprep.subr.mxu0 0.0
    %4874 = vmatpush1.xpose.msra.mxu0 0.0
    %4875 = vmatprep.subr.mxu0 0.0
    %4876 = vmatpush1.xpose.msra.mxu0 0.0
    %4877 = vmatprep.subr.mxu0 0.0
    %4878 = vmatpush1.xpose.msra.mxu0 0.0
    %4879 = vmatprep.subr.mxu0 0.0
    %4880 = vmatpush1.xpose.msra.mxu0 0.0
    %4881 = vmatprep.subr.mxu0 0.0
    %4882 = vmatpush1.xpose.msra.mxu0 0.0
    %4883 = vmatprep.subr.mxu0 0.0
    %4884 = vmatpush1.xpose.msra.mxu0 0.0
    %4885 = vmatprep.subr.mxu0 0.0
    %4886 = vmatpush1.xpose.msra.mxu0 0.0
    %4887 = vmatprep.subr.mxu0 0.0
    %4888 = vmatpush1.xpose.msra.mxu0 0.0
    %4889 = vmatprep.subr.mxu0 0.0
    %4890 = vmatpush1.xpose.msra.mxu0 0.0
    %4891 = vmatprep.subr.mxu0 0.0
    %4892 = vmatpush1.xpose.msra.mxu0 0.0
    %4893 = vmatprep.subr.mxu0 0.0
    %4894 = vmatpush1.xpose.msra.mxu0 0.0
    %4895 = vmatprep.mubr.f32.mxu0 0.0
    %4896 = vmatmul.mubr.f32.gmra.mrb[0].mxu0 %v4827
    %v4897 = vpop.f32.mrb[0].mxu0
    %v4898 = vadd.f32 0.0, %v4897
    %v4899 = vpop.f32.mrb[0].mxu0
    %4900 = vdwg.mxu0
    %4901 = vrot.lane.b32.xlu0 %v3465, 96
    %v4902 = vpop.permute.xlu0 %4901
    %4903 = vrot.lane.b32.xlu0 %v3465, 32
    %v4904 = vpop.permute.xlu0 %4903
    %v4905 = vsel %vm262, %v4902, 0
    %v4907 = vsel %vm262, %v4904, 0
    %4909 = vmatprep.subr.mxu0 0.0
    %4910 = vmatpush1.xpose.msra.mxu0 %v4907
    %4911 = vmatprep.subr.mxu0 0.0
    %4912 = vmatpush1.xpose.msra.mxu0 0.0
    %4913 = vmatprep.subr.mxu0 0.0
    %4914 = vmatpush1.xpose.msra.mxu0 0.0
    %4915 = vmatprep.subr.mxu0 0.0
    %4916 = vmatpush1.xpose.msra.mxu0 0.0
    %4917 = vmatprep.subr.mxu0 0.0
    %4918 = vmatpush1.xpose.msra.mxu0 0.0
    %4919 = vmatprep.subr.mxu0 0.0
    %4920 = vmatpush1.xpose.msra.mxu0 0.0
    %4921 = vmatprep.subr.mxu0 0.0
    %4922 = vmatpush1.xpose.msra.mxu0 0.0
    %4923 = vmatprep.subr.mxu0 0.0
    %4924 = vmatpush1.xpose.msra.mxu0 0.0
    %4925 = vmatprep.subr.mxu0 0.0
    %4926 = vmatpush1.xpose.msra.mxu0 0.0
    %4927 = vmatprep.subr.mxu0 0.0
    %4928 = vmatpush1.xpose.msra.mxu0 0.0
    %4929 = vmatprep.subr.mxu0 0.0
    %4930 = vmatpush1.xpose.msra.mxu0 0.0
    %4931 = vmatprep.subr.mxu0 0.0
    %4932 = vmatpush1.xpose.msra.mxu0 0.0
    %4933 = vmatprep.subr.mxu0 0.0
    %4934 = vmatpush1.xpose.msra.mxu0 0.0
    %4935 = vmatprep.subr.mxu0 0.0
    %4936 = vmatpush1.xpose.msra.mxu0 0.0
    %4937 = vmatprep.subr.mxu0 0.0
    %4938 = vmatpush1.xpose.msra.mxu0 0.0
    %4939 = vmatprep.subr.mxu0 0.0
    %4940 = vmatpush1.xpose.msra.mxu0 0.0
    %4941 = vmatprep.subr.mxu0 0.0
    %4942 = vmatpush1.xpose.msra.mxu0 0.0
    %4943 = vmatprep.subr.mxu0 0.0
    %4944 = vmatpush1.xpose.msra.mxu0 0.0
    %4945 = vmatprep.subr.mxu0 0.0
    %4946 = vmatpush1.xpose.msra.mxu0 0.0
    %4947 = vmatprep.subr.mxu0 0.0
    %4948 = vmatpush1.xpose.msra.mxu0 0.0
    %4949 = vmatprep.subr.mxu0 0.0
    %4950 = vmatpush1.xpose.msra.mxu0 0.0
    %4951 = vmatprep.subr.mxu0 0.0
    %4952 = vmatpush1.xpose.msra.mxu0 0.0
    %4953 = vmatprep.subr.mxu0 0.0
    %4954 = vmatpush1.xpose.msra.mxu0 0.0
    %4955 = vmatprep.subr.mxu0 0.0
    %4956 = vmatpush1.xpose.msra.mxu0 0.0
    %4957 = vmatprep.subr.mxu0 0.0
    %4958 = vmatpush1.xpose.msra.mxu0 0.0
    %4959 = vmatprep.subr.mxu0 0.0
    %4960 = vmatpush1.xpose.msra.mxu0 0.0
    %4961 = vmatprep.subr.mxu0 0.0
    %4962 = vmatpush1.xpose.msra.mxu0 0.0
    %4963 = vmatprep.subr.mxu0 0.0
    %4964 = vmatpush1.xpose.msra.mxu0 0.0
    %4965 = vmatprep.subr.mxu0 0.0
    %4966 = vmatpush1.xpose.msra.mxu0 0.0
    %4967 = vmatprep.subr.mxu0 0.0
    %4968 = vmatpush1.xpose.msra.mxu0 0.0
    %4969 = vmatprep.subr.mxu0 0.0
    %4970 = vmatpush1.xpose.msra.mxu0 0.0
    %4971 = vmatprep.subr.mxu0 0.0
    %4972 = vmatpush1.xpose.msra.mxu0 0.0
    %4973 = vmatprep.mubr.f32.mxu0 0.0
    %4974 = vmatmul.mubr.f32.gmra.mrb[0].mxu0 %v4905
    %v4975 = vpop.f32.mrb[0].mxu0
    %v4976 = vadd.f32 0.0, %v4975
    %v4977 = vpop.f32.mrb[0].mxu0
    %4978 = vdwg.mxu0
    %v4979 = vmul.f32 %v4898, 0.35355338
    %v4980 = vmul.f32 %v4976, 0.35355338
    %v4981 = vsel %vm262, %v4979, -inf
    %4982 = vmax.xlane.f32.xlu0 %v4981
    %v4983 = vpop.xlane.xlu0 %4982
    %v4984 = vsel %vm262, %v4980, -inf
    %4985 = vmax.xlane.f32.xlu0 %v4984
    %v4986 = vpop.xlane.xlu0 %4985
    %v4987 = vsub.f32 %v4979, %v4983
    %v4988 = vsub.f32 %v4980, %v4986
    %v4989 = vmul.f32 %v4987, 1.442695
    %v4990 = vpow.pop %v4989
    %v4991 = vmul.f32 %v4988, 1.442695
    %v4992 = vpow.pop %v4991
    %v4993 = vsel %vm262, %v4990, 0.0
    %4994 = vadd.xlane.f32.xlu0 %v4993
    %v4995 = vpop.xlane.xlu0 %4994
    %v4996 = vsel %vm262, %v4992, 0.0
    %4997 = vadd.xlane.f32.xlu0 %v4996
    %v4998 = vpop.xlane.xlu0 %4997
    %v4999 = vrcp.pop %v4995
    %v5000 = vrcp.pop %v4998
    %v5001 = vmul.f32 %v4990, %v4999
    %v5002 = vmul.f32 %v4992, %v5000
    %5003 = vrot.lane.b32.xlu0 %v3461, 96
    %v5004 = vpop.permute.xlu0 %5003
    %v5007 = vsel %vm262, %v5001, 0
    %5009 = vmatprep.subr.mxu0 0.0
    %5010 = vmatpush1.msra.mxu0 %v5004
    %5011 = vmatprep.subr.mxu0 0.0
    %5012 = vmatpush1.msra.mxu0 0.0
    %5013 = vmatprep.subr.mxu0 0.0
    %5014 = vmatpush1.msra.mxu0 0.0
    %5015 = vmatprep.subr.mxu0 0.0
    %5016 = vmatpush1.msra.mxu0 0.0
    %5017 = vmatprep.subr.mxu0 0.0
    %5018 = vmatpush1.msra.mxu0 0.0
    %5019 = vmatprep.subr.mxu0 0.0
    %5020 = vmatpush1.msra.mxu0 0.0
    %5021 = vmatprep.subr.mxu0 0.0
    %5022 = vmatpush1.msra.mxu0 0.0
    %5023 = vmatprep.subr.mxu0 0.0
    %5024 = vmatpush1.msra.mxu0 0.0
    %5025 = vmatprep.subr.mxu0 0.0
    %5026 = vmatpush1.msra.mxu0 0.0
    %5027 = vmatprep.subr.mxu0 0.0
    %5028 = vmatpush1.msra.mxu0 0.0
    %5029 = vmatprep.subr.mxu0 0.0
    %5030 = vmatpush1.msra.mxu0 0.0
    %5031 = vmatprep.subr.mxu0 0.0
    %5032 = vmatpush1.msra.mxu0 0.0
    %5033 = vmatprep.subr.mxu0 0.0
    %5034 = vmatpush1.msra.mxu0 0.0
    %5035 = vmatprep.subr.mxu0 0.0
    %5036 = vmatpush1.msra.mxu0 0.0
    %5037 = vmatprep.subr.mxu0 0.0
    %5038 = vmatpush1.msra.mxu0 0.0
    %5039 = vmatprep.subr.mxu0 0.0
    %5040 = vmatpush1.msra.mxu0 0.0
    %5041 = vmatprep.subr.mxu0 0.0
    %5042 = vmatpush1.msra.mxu0 0.0
    %5043 = vmatprep.subr.mxu0 0.0
    %5044 = vmatpush1.msra.mxu0 0.0
    %5045 = vmatprep.subr.mxu0 0.0
    %5046 = vmatpush1.msra.mxu0 0.0
    %5047 = vmatprep.subr.mxu0 0.0
    %5048 = vmatpush1.msra.mxu0 0.0
    %5049 = vmatprep.subr.mxu0 0.0
    %5050 = vmatpush1.msra.mxu0 0.0
    %5051 = vmatprep.subr.mxu0 0.0
    %5052 = vmatpush1.msra.mxu0 0.0
    %5053 = vmatprep.subr.mxu0 0.0
    %5054 = vmatpush1.msra.mxu0 0.0
    %5055 = vmatprep.subr.mxu0 0.0
    %5056 = vmatpush1.msra.mxu0 0.0
    %5057 = vmatprep.subr.mxu0 0.0
    %5058 = vmatpush1.msra.mxu0 0.0
    %5059 = vmatprep.subr.mxu0 0.0
    %5060 = vmatpush1.msra.mxu0 0.0
    %5061 = vmatprep.subr.mxu0 0.0
    %5062 = vmatpush1.msra.mxu0 0.0
    %5063 = vmatprep.subr.mxu0 0.0
    %5064 = vmatpush1.msra.mxu0 0.0
    %5065 = vmatprep.subr.mxu0 0.0
    %5066 = vmatpush1.msra.mxu0 0.0
    %5067 = vmatprep.subr.mxu0 0.0
    %5068 = vmatpush1.msra.mxu0 0.0
    %5069 = vmatprep.subr.mxu0 0.0
    %5070 = vmatpush1.msra.mxu0 0.0
    %5071 = vmatprep.subr.mxu0 0.0
    %5072 = vmatpush1.msra.mxu0 0.0
    %5073 = vmatprep.mubr.f32.mxu0 0.0
    %5074 = vmatmul.mubr.f32.gmra.mrb[0].mxu0 %v5007
    %v5075 = vpop.f32.mrb[0].mxu0
    %v5076 = vadd.f32 0.0, %v5075
    %v5077 = vpop.f32.mrb[0].mxu0
    %5078 = vdwg.mxu0
    %5079 = vrot.lane.b32.xlu0 %v3467, 96
    %v5080 = vpop.permute.xlu0 %5079
    %v5083 = vsel %vm262, %v5002, 0
    %5085 = vmatprep.subr.mxu0 0.0
    %5086 = vmatpush1.msra.mxu0 %v5080
    %5087 = vmatprep.subr.mxu0 0.0
    %5088 = vmatpush1.msra.mxu0 0.0
    %5089 = vmatprep.subr.mxu0 0.0
    %5090 = vmatpush1.msra.mxu0 0.0
    %5091 = vmatprep.subr.mxu0 0.0
    %5092 = vmatpush1.msra.mxu0 0.0
    %5093 = vmatprep.subr.mxu0 0.0
    %5094 = vmatpush1.msra.mxu0 0.0
    %5095 = vmatprep.subr.mxu0 0.0
    %5096 = vmatpush1.msra.mxu0 0.0
    %5097 = vmatprep.subr.mxu0 0.0
    %5098 = vmatpush1.msra.mxu0 0.0
    %5099 = vmatprep.subr.mxu0 0.0
    %5100 = vmatpush1.msra.mxu0 0.0
    %5101 = vmatprep.subr.mxu0 0.0
    %5102 = vmatpush1.msra.mxu0 0.0
    %5103 = vmatprep.subr.mxu0 0.0
    %5104 = vmatpush1.msra.mxu0 0.0
    %5105 = vmatprep.subr.mxu0 0.0
    %5106 = vmatpush1.msra.mxu0 0.0
    %5107 = vmatprep.subr.mxu0 0.0
    %5108 = vmatpush1.msra.mxu0 0.0
    %5109 = vmatprep.subr.mxu0 0.0
    %5110 = vmatpush1.msra.mxu0 0.0
    %5111 = vmatprep.subr.mxu0 0.0
    %5112 = vmatpush1.msra.mxu0 0.0
    %5113 = vmatprep.subr.mxu0 0.0
    %5114 = vmatpush1.msra.mxu0 0.0
    %5115 = vmatprep.subr.mxu0 0.0
    %5116 = vmatpush1.msra.mxu0 0.0
    %5117 = vmatprep.subr.mxu0 0.0
    %5118 = vmatpush1.msra.mxu0 0.0
    %5119 = vmatprep.subr.mxu0 0.0
    %5120 = vmatpush1.msra.mxu0 0.0
    %5121 = vmatprep.subr.mxu0 0.0
    %5122 = vmatpush1.msra.mxu0 0.0
    %5123 = vmatprep.subr.mxu0 0.0
    %5124 = vmatpush1.msra.mxu0 0.0
    %5125 = vmatprep.subr.mxu0 0.0
    %5126 = vmatpush1.msra.mxu0 0.0
    %5127 = vmatprep.subr.mxu0 0.0
    %5128 = vmatpush1.msra.mxu0 0.0
    %5129 = vmatprep.subr.mxu0 0.0
    %5130 = vmatpush1.msra.mxu0 0.0
    %5131 = vmatprep.subr.mxu0 0.0
    %5132 = vmatpush1.msra.mxu0 0.0
    %5133 = vmatprep.subr.mxu0 0.0
    %5134 = vmatpush1.msra.mxu0 0.0
    %5135 = vmatprep.subr.mxu0 0.0
    %5136 = vmatpush1.msra.mxu0 0.0
    %5137 = vmatprep.subr.mxu0 0.0
    %5138 = vmatpush1.msra.mxu0 0.0
    %5139 = vmatprep.subr.mxu0 0.0
    %5140 = vmatpush1.msra.mxu0 0.0
    %5141 = vmatprep.subr.mxu0 0.0
    %5142 = vmatpush1.msra.mxu0 0.0
    %5143 = vmatprep.subr.mxu0 0.0
    %5144 = vmatpush1.msra.mxu0 0.0
    %5145 = vmatprep.subr.mxu0 0.0
    %5146 = vmatpush1.msra.mxu0 0.0
    %5147 = vmatprep.subr.mxu0 0.0
    %5148 = vmatpush1.msra.mxu0 0.0
    %5149 = vmatprep.mubr.f32.mxu0 0.0
    %5150 = vmatmul.mubr.f32.gmra.mrb[0].mxu0 %v5083
    %v5151 = vpop.f32.mrb[0].mxu0
    %v5152 = vadd.f32 0.0, %v5151
    %v5153 = vpop.f32.mrb[0].mxu0
    %5154 = vdwg.mxu0
    %5157 = vrot.lane.b32.xlu0 %v5076, 32
    %v5158 = vpop.permute.xlu0 %5157
    %5159 = vrot.lane.b32.xlu0 %v5152, 32
    %v5160 = vpop.permute.xlu0 %5159
    %5163 = vst.msk [vmem:[#allocation2] sm:$0xff] %vm1957, %v5158
    %5164 = vst.msk [vmem:[#allocation2 + $0x8] sm:$0xff] %vm1957, %v5160
    %5165 = vrot.lane.b32.xlu0 %v3459, 88
    %v5166 = vpop.permute.xlu0 %5165
    %5167 = vrot.lane.b32.xlu0 %v3459, 24
    %v5168 = vpop.permute.xlu0 %5167
    %v5169 = vsel %vm262, %v5166, 0
    %v5171 = vsel %vm262, %v5168, 0
    %5173 = vmatprep.subr.mxu0 0.0
    %5174 = vmatpush1.xpose.msra.mxu0 %v5171
    %5175 = vmatprep.subr.mxu0 0.0
    %5176 = vmatpush1.xpose.msra.mxu0 0.0
    %5177 = vmatprep.subr.mxu0 0.0
    %5178 = vmatpush1.xpose.msra.mxu0 0.0
    %5179 = vmatprep.subr.mxu0 0.0
    %5180 = vmatpush1.xpose.msra.mxu0 0.0
    %5181 = vmatprep.subr.mxu0 0.0
    %5182 = vmatpush1.xpose.msra.mxu0 0.0
    %5183 = vmatprep.subr.mxu0 0.0
    %5184 = vmatpush1.xpose.msra.mxu0 0.0
    %5185 = vmatprep.subr.mxu0 0.0
    %5186 = vmatpush1.xpose.msra.mxu0 0.0
    %5187 = vmatprep.subr.mxu0 0.0
    %5188 = vmatpush1.xpose.msra.mxu0 0.0
    %5189 = vmatprep.subr.mxu0 0.0
    %5190 = vmatpush1.xpose.msra.mxu0 0.0
    %5191 = vmatprep.subr.mxu0 0.0
    %5192 = vmatpush1.xpose.msra.mxu0 0.0
    %5193 = vmatprep.subr.mxu0 0.0
    %5194 = vmatpush1.xpose.msra.mxu0 0.0
    %5195 = vmatprep.subr.mxu0 0.0
    %5196 = vmatpush1.xpose.msra.mxu0 0.0
    %5197 = vmatprep.subr.mxu0 0.0
    %5198 = vmatpush1.xpose.msra.mxu0 0.0
    %5199 = vmatprep.subr.mxu0 0.0
    %5200 = vmatpush1.xpose.msra.mxu0 0.0
    %5201 = vmatprep.subr.mxu0 0.0
    %5202 = vmatpush1.xpose.msra.mxu0 0.0
    %5203 = vmatprep.subr.mxu0 0.0
    %5204 = vmatpush1.xpose.msra.mxu0 0.0
    %5205 = vmatprep.subr.mxu0 0.0
    %5206 = vmatpush1.xpose.msra.mxu0 0.0
    %5207 = vmatprep.subr.mxu0 0.0
    %5208 = vmatpush1.xpose.msra.mxu0 0.0
    %5209 = vmatprep.subr.mxu0 0.0
    %5210 = vmatpush1.xpose.msra.mxu0 0.0
    %5211 = vmatprep.subr.mxu0 0.0
    %5212 = vmatpush1.xpose.msra.mxu0 0.0
    %5213 = vmatprep.subr.mxu0 0.0
    %5214 = vmatpush1.xpose.msra.mxu0 0.0
    %5215 = vmatprep.subr.mxu0 0.0
    %5216 = vmatpush1.xpose.msra.mxu0 0.0
    %5217 = vmatprep.subr.mxu0 0.0
    %5218 = vmatpush1.xpose.msra.mxu0 0.0
    %5219 = vmatprep.subr.mxu0 0.0
    %5220 = vmatpush1.xpose.msra.mxu0 0.0
    %5221 = vmatprep.subr.mxu0 0.0
    %5222 = vmatpush1.xpose.msra.mxu0 0.0
    %5223 = vmatprep.subr.mxu0 0.0
    %5224 = vmatpush1.xpose.msra.mxu0 0.0
    %5225 = vmatprep.subr.mxu0 0.0
    %5226 = vmatpush1.xpose.msra.mxu0 0.0
    %5227 = vmatprep.subr.mxu0 0.0
    %5228 = vmatpush1.xpose.msra.mxu0 0.0
    %5229 = vmatprep.subr.mxu0 0.0
    %5230 = vmatpush1.xpose.msra.mxu0 0.0
    %5231 = vmatprep.subr.mxu0 0.0
    %5232 = vmatpush1.xpose.msra.mxu0 0.0
    %5233 = vmatprep.subr.mxu0 0.0
    %5234 = vmatpush1.xpose.msra.mxu0 0.0
    %5235 = vmatprep.subr.mxu0 0.0
    %5236 = vmatpush1.xpose.msra.mxu0 0.0
    %5237 = vmatprep.mubr.f32.mxu0 0.0
    %5238 = vmatmul.mubr.f32.gmra.mrb[0].mxu0 %v5169
    %v5239 = vpop.f32.mrb[0].mxu0
    %v5240 = vadd.f32 0.0, %v5239
    %v5241 = vpop.f32.mrb[0].mxu0
    %5242 = vdwg.mxu0
    %5243 = vrot.lane.b32.xlu0 %v3465, 88
    %v5244 = vpop.permute.xlu0 %5243
    %5245 = vrot.lane.b32.xlu0 %v3465, 24
    %v5246 = vpop.permute.xlu0 %5245
    %v5247 = vsel %vm262, %v5244, 0
    %v5249 = vsel %vm262, %v5246, 0
    %5251 = vmatprep.subr.mxu0 0.0
    %5252 = vmatpush1.xpose.msra.mxu0 %v5249
    %5253 = vmatprep.subr.mxu0 0.0
    %5254 = vmatpush1.xpose.msra.mxu0 0.0
    %5255 = vmatprep.subr.mxu0 0.0
    %5256 = vmatpush1.xpose.msra.mxu0 0.0
    %5257 = vmatprep.subr.mxu0 0.0
    %5258 = vmatpush1.xpose.msra.mxu0 0.0
    %5259 = vmatprep.subr.mxu0 0.0
    %5260 = vmatpush1.xpose.msra.mxu0 0.0
    %5261 = vmatprep.subr.mxu0 0.0
    %5262 = vmatpush1.xpose.msra.mxu0 0.0
    %5263 = vmatprep.subr.mxu0 0.0
    %5264 = vmatpush1.xpose.msra.mxu0 0.0
    %5265 = vmatprep.subr.mxu0 0.0
    %5266 = vmatpush1.xpose.msra.mxu0 0.0
    %5267 = vmatprep.subr.mxu0 0.0
    %5268 = vmatpush1.xpose.msra.mxu0 0.0
    %5269 = vmatprep.subr.mxu0 0.0
    %5270 = vmatpush1.xpose.msra.mxu0 0.0
    %5271 = vmatprep.subr.mxu0 0.0
    %5272 = vmatpush1.xpose.msra.mxu0 0.0
    %5273 = vmatprep.subr.mxu0 0.0
    %5274 = vmatpush1.xpose.msra.mxu0 0.0
    %5275 = vmatprep.subr.mxu0 0.0
    %5276 = vmatpush1.xpose.msra.mxu0 0.0
    %5277 = vmatprep.subr.mxu0 0.0
    %5278 = vmatpush1.xpose.msra.mxu0 0.0
    %5279 = vmatprep.subr.mxu0 0.0
    %5280 = vmatpush1.xpose.msra.mxu0 0.0
    %5281 = vmatprep.subr.mxu0 0.0
    %5282 = vmatpush1.xpose.msra.mxu0 0.0
    %5283 = vmatprep.subr.mxu0 0.0
    %5284 = vmatpush1.xpose.msra.mxu0 0.0
    %5285 = vmatprep.subr.mxu0 0.0
    %5286 = vmatpush1.xpose.msra.mxu0 0.0
    %5287 = vmatprep.subr.mxu0 0.0
    %5288 = vmatpush1.xpose.msra.mxu0 0.0
    %5289 = vmatprep.subr.mxu0 0.0
    %5290 = vmatpush1.xpose.msra.mxu0 0.0
    %5291 = vmatprep.subr.mxu0 0.0
    %5292 = vmatpush1.xpose.msra.mxu0 0.0
    %5293 = vmatprep.subr.mxu0 0.0
    %5294 = vmatpush1.xpose.msra.mxu0 0.0
    %5295 = vmatprep.subr.mxu0 0.0
    %5296 = vmatpush1.xpose.msra.mxu0 0.0
    %5297 = vmatprep.subr.mxu0 0.0
    %5298 = vmatpush1.xpose.msra.mxu0 0.0
    %5299 = vmatprep.subr.mxu0 0.0
    %5300 = vmatpush1.xpose.msra.mxu0 0.0
    %5301 = vmatprep.subr.mxu0 0.0
    %5302 = vmatpush1.xpose.msra.mxu0 0.0
    %5303 = vmatprep.subr.mxu0 0.0
    %5304 = vmatpush1.xpose.msra.mxu0 0.0
    %5305 = vmatprep.subr.mxu0 0.0
    %5306 = vmatpush1.xpose.msra.mxu0 0.0
    %5307 = vmatprep.subr.mxu0 0.0
    %5308 = vmatpush1.xpose.msra.mxu0 0.0
    %5309 = vmatprep.subr.mxu0 0.0
    %5310 = vmatpush1.xpose.msra.mxu0 0.0
    %5311 = vmatprep.subr.mxu0 0.0
    %5312 = vmatpush1.xpose.msra.mxu0 0.0
    %5313 = vmatprep.subr.mxu0 0.0
    %5314 = vmatpush1.xpose.msra.mxu0 0.0
    %5315 = vmatprep.mubr.f32.mxu0 0.0
    %5316 = vmatmul.mubr.f32.gmra.mrb[0].mxu0 %v5247
    %v5317 = vpop.f32.mrb[0].mxu0
    %v5318 = vadd.f32 0.0, %v5317
    %v5319 = vpop.f32.mrb[0].mxu0
    %5320 = vdwg.mxu0
    %v5321 = vmul.f32 %v5240, 0.35355338
    %v5322 = vmul.f32 %v5318, 0.35355338
    %v5323 = vsel %vm262, %v5321, -inf
    %5324 = vmax.xlane.f32.xlu0 %v5323
    %v5325 = vpop.xlane.xlu0 %5324
    %v5326 = vsel %vm262, %v5322, -inf
    %5327 = vmax.xlane.f32.xlu0 %v5326
    %v5328 = vpop.xlane.xlu0 %5327
    %v5329 = vsub.f32 %v5321, %v5325
    %v5330 = vsub.f32 %v5322, %v5328
    %v5331 = vmul.f32 %v5329, 1.442695
    %v5332 = vpow.pop %v5331
    %v5333 = vmul.f32 %v5330, 1.442695
    %v5334 = vpow.pop %v5333
    %v5335 = vsel %vm262, %v5332, 0.0
    %5336 = vadd.xlane.f32.xlu0 %v5335
    %v5337 = vpop.xlane.xlu0 %5336
    %v5338 = vsel %vm262, %v5334, 0.0
    %5339 = vadd.xlane.f32.xlu0 %v5338
    %v5340 = vpop.xlane.xlu0 %5339
    %v5341 = vrcp.pop %v5337
    %v5342 = vrcp.pop %v5340
    %v5343 = vmul.f32 %v5332, %v5341
    %v5344 = vmul.f32 %v5334, %v5342
    %5345 = vrot.lane.b32.xlu0 %v3461, 88
    %v5346 = vpop.permute.xlu0 %5345
    %v5349 = vsel %vm262, %v5343, 0
    %5351 = vmatprep.subr.mxu0 0.0
    %5352 = vmatpush1.msra.mxu0 %v5346
    %5353 = vmatprep.subr.mxu0 0.0
    %5354 = vmatpush1.msra.mxu0 0.0
    %5355 = vmatprep.subr.mxu0 0.0
    %5356 = vmatpush1.msra.mxu0 0.0
    %5357 = vmatprep.subr.mxu0 0.0
    %5358 = vmatpush1.msra.mxu0 0.0
    %5359 = vmatprep.subr.mxu0 0.0
    %5360 = vmatpush1.msra.mxu0 0.0
    %5361 = vmatprep.subr.mxu0 0.0
    %5362 = vmatpush1.msra.mxu0 0.0
    %5363 = vmatprep.subr.mxu0 0.0
    %5364 = vmatpush1.msra.mxu0 0.0
    %5365 = vmatprep.subr.mxu0 0.0
    %5366 = vmatpush1.msra.mxu0 0.0
    %5367 = vmatprep.subr.mxu0 0.0
    %5368 = vmatpush1.msra.mxu0 0.0
    %5369 = vmatprep.subr.mxu0 0.0
    %5370 = vmatpush1.msra.mxu0 0.0
    %5371 = vmatprep.subr.mxu0 0.0
    %5372 = vmatpush1.msra.mxu0 0.0
    %5373 = vmatprep.subr.mxu0 0.0
    %5374 = vmatpush1.msra.mxu0 0.0
    %5375 = vmatprep.subr.mxu0 0.0
    %5376 = vmatpush1.msra.mxu0 0.0
    %5377 = vmatprep.subr.mxu0 0.0
    %5378 = vmatpush1.msra.mxu0 0.0
    %5379 = vmatprep.subr.mxu0 0.0
    %5380 = vmatpush1.msra.mxu0 0.0
    %5381 = vmatprep.subr.mxu0 0.0
    %5382 = vmatpush1.msra.mxu0 0.0
    %5383 = vmatprep.subr.mxu0 0.0
    %5384 = vmatpush1.msra.mxu0 0.0
    %5385 = vmatprep.subr.mxu0 0.0
    %5386 = vmatpush1.msra.mxu0 0.0
    %5387 = vmatprep.subr.mxu0 0.0
    %5388 = vmatpush1.msra.mxu0 0.0
    %5389 = vmatprep.subr.mxu0 0.0
    %5390 = vmatpush1.msra.mxu0 0.0
    %5391 = vmatprep.subr.mxu0 0.0
    %5392 = vmatpush1.msra.mxu0 0.0
    %5393 = vmatprep.subr.mxu0 0.0
    %5394 = vmatpush1.msra.mxu0 0.0
    %5395 = vmatprep.subr.mxu0 0.0
    %5396 = vmatpush1.msra.mxu0 0.0
    %5397 = vmatprep.subr.mxu0 0.0
    %5398 = vmatpush1.msra.mxu0 0.0
    %5399 = vmatprep.subr.mxu0 0.0
    %5400 = vmatpush1.msra.mxu0 0.0
    %5401 = vmatprep.subr.mxu0 0.0
    %5402 = vmatpush1.msra.mxu0 0.0
    %5403 = vmatprep.subr.mxu0 0.0
    %5404 = vmatpush1.msra.mxu0 0.0
    %5405 = vmatprep.subr.mxu0 0.0
    %5406 = vmatpush1.msra.mxu0 0.0
    %5407 = vmatprep.subr.mxu0 0.0
    %5408 = vmatpush1.msra.mxu0 0.0
    %5409 = vmatprep.subr.mxu0 0.0
    %5410 = vmatpush1.msra.mxu0 0.0
    %5411 = vmatprep.subr.mxu0 0.0
    %5412 = vmatpush1.msra.mxu0 0.0
    %5413 = vmatprep.subr.mxu0 0.0
    %5414 = vmatpush1.msra.mxu0 0.0
    %5415 = vmatprep.mubr.f32.mxu0 0.0
    %5416 = vmatmul.mubr.f32.gmra.mrb[0].mxu0 %v5349
    %v5417 = vpop.f32.mrb[0].mxu0
    %v5418 = vadd.f32 0.0, %v5417
    %v5419 = vpop.f32.mrb[0].mxu0
    %5420 = vdwg.mxu0
    %5421 = vrot.lane.b32.xlu0 %v3467, 88
    %v5422 = vpop.permute.xlu0 %5421
    %v5425 = vsel %vm262, %v5344, 0
    %5427 = vmatprep.subr.mxu0 0.0
    %5428 = vmatpush1.msra.mxu0 %v5422
    %5429 = vmatprep.subr.mxu0 0.0
    %5430 = vmatpush1.msra.mxu0 0.0
    %5431 = vmatprep.subr.mxu0 0.0
    %5432 = vmatpush1.msra.mxu0 0.0
    %5433 = vmatprep.subr.mxu0 0.0
    %5434 = vmatpush1.msra.mxu0 0.0
    %5435 = vmatprep.subr.mxu0 0.0
    %5436 = vmatpush1.msra.mxu0 0.0
    %5437 = vmatprep.subr.mxu0 0.0
    %5438 = vmatpush1.msra.mxu0 0.0
    %5439 = vmatprep.subr.mxu0 0.0
    %5440 = vmatpush1.msra.mxu0 0.0
    %5441 = vmatprep.subr.mxu0 0.0
    %5442 = vmatpush1.msra.mxu0 0.0
    %5443 = vmatprep.subr.mxu0 0.0
    %5444 = vmatpush1.msra.mxu0 0.0
    %5445 = vmatprep.subr.mxu0 0.0
    %5446 = vmatpush1.msra.mxu0 0.0
    %5447 = vmatprep.subr.mxu0 0.0
    %5448 = vmatpush1.msra.mxu0 0.0
    %5449 = vmatprep.subr.mxu0 0.0
    %5450 = vmatpush1.msra.mxu0 0.0
    %5451 = vmatprep.subr.mxu0 0.0
    %5452 = vmatpush1.msra.mxu0 0.0
    %5453 = vmatprep.subr.mxu0 0.0
    %5454 = vmatpush1.msra.mxu0 0.0
    %5455 = vmatprep.subr.mxu0 0.0
    %5456 = vmatpush1.msra.mxu0 0.0
    %5457 = vmatprep.subr.mxu0 0.0
    %5458 = vmatpush1.msra.mxu0 0.0
    %5459 = vmatprep.subr.mxu0 0.0
    %5460 = vmatpush1.msra.mxu0 0.0
    %5461 = vmatprep.subr.mxu0 0.0
    %5462 = vmatpush1.msra.mxu0 0.0
    %5463 = vmatprep.subr.mxu0 0.0
    %5464 = vmatpush1.msra.mxu0 0.0
    %5465 = vmatprep.subr.mxu0 0.0
    %5466 = vmatpush1.msra.mxu0 0.0
    %5467 = vmatprep.subr.mxu0 0.0
    %5468 = vmatpush1.msra.mxu0 0.0
    %5469 = vmatprep.subr.mxu0 0.0
    %5470 = vmatpush1.msra.mxu0 0.0
    %5471 = vmatprep.subr.mxu0 0.0
    %5472 = vmatpush1.msra.mxu0 0.0
    %5473 = vmatprep.subr.mxu0 0.0
    %5474 = vmatpush1.msra.mxu0 0.0
    %5475 = vmatprep.subr.mxu0 0.0
    %5476 = vmatpush1.msra.mxu0 0.0
    %5477 = vmatprep.subr.mxu0 0.0
    %5478 = vmatpush1.msra.mxu0 0.0
    %5479 = vmatprep.subr.mxu0 0.0
    %5480 = vmatpush1.msra.mxu0 0.0
    %5481 = vmatprep.subr.mxu0 0.0
    %5482 = vmatpush1.msra.mxu0 0.0
    %5483 = vmatprep.subr.mxu0 0.0
    %5484 = vmatpush1.msra.mxu0 0.0
    %5485 = vmatprep.subr.mxu0 0.0
    %5486 = vmatpush1.msra.mxu0 0.0
    %5487 = vmatprep.subr.mxu0 0.0
    %5488 = vmatpush1.msra.mxu0 0.0
    %5489 = vmatprep.subr.mxu0 0.0
    %5490 = vmatpush1.msra.mxu0 0.0
    %5491 = vmatprep.mubr.f32.mxu0 0.0
    %5492 = vmatmul.mubr.f32.gmra.mrb[0].mxu0 %v5425
    %v5493 = vpop.f32.mrb[0].mxu0
    %v5494 = vadd.f32 0.0, %v5493
    %v5495 = vpop.f32.mrb[0].mxu0
    %5496 = vdwg.mxu0
    %5499 = vrot.lane.b32.xlu0 %v5418, 40
    %v5500 = vpop.permute.xlu0 %5499
    %5501 = vrot.lane.b32.xlu0 %v5494, 40
    %v5502 = vpop.permute.xlu0 %5501
    %5505 = vst.msk [vmem:[#allocation2] sm:$0xff] %vm2300, %v5500
    %5506 = vst.msk [vmem:[#allocation2 + $0x8] sm:$0xff] %vm2300, %v5502
    %5507 = vrot.lane.b32.xlu0 %v3459, 80
    %v5508 = vpop.permute.xlu0 %5507
    %5509 = vrot.lane.b32.xlu0 %v3459, 16
    %v5510 = vpop.permute.xlu0 %5509
    %v5511 = vsel %vm262, %v5508, 0
    %v5513 = vsel %vm262, %v5510, 0
    %5515 = vmatprep.subr.mxu0 0.0
    %5516 = vmatpush1.xpose.msra.mxu0 %v5513
    %5517 = vmatprep.subr.mxu0 0.0
    %5518 = vmatpush1.xpose.msra.mxu0 0.0
    %5519 = vmatprep.subr.mxu0 0.0
    %5520 = vmatpush1.xpose.msra.mxu0 0.0
    %5521 = vmatprep.subr.mxu0 0.0
    %5522 = vmatpush1.xpose.msra.mxu0 0.0
    %5523 = vmatprep.subr.mxu0 0.0
    %5524 = vmatpush1.xpose.msra.mxu0 0.0
    %5525 = vmatprep.subr.mxu0 0.0
    %5526 = vmatpush1.xpose.msra.mxu0 0.0
    %5527 = vmatprep.subr.mxu0 0.0
    %5528 = vmatpush1.xpose.msra.mxu0 0.0
    %5529 = vmatprep.subr.mxu0 0.0
    %5530 = vmatpush1.xpose.msra.mxu0 0.0
    %5531 = vmatprep.subr.mxu0 0.0
    %5532 = vmatpush1.xpose.msra.mxu0 0.0
    %5533 = vmatprep.subr.mxu0 0.0
    %5534 = vmatpush1.xpose.msra.mxu0 0.0
    %5535 = vmatprep.subr.mxu0 0.0
    %5536 = vmatpush1.xpose.msra.mxu0 0.0
    %5537 = vmatprep.subr.mxu0 0.0
    %5538 = vmatpush1.xpose.msra.mxu0 0.0
    %5539 = vmatprep.subr.mxu0 0.0
    %5540 = vmatpush1.xpose.msra.mxu0 0.0
    %5541 = vmatprep.subr.mxu0 0.0
    %5542 = vmatpush1.xpose.msra.mxu0 0.0
    %5543 = vmatprep.subr.mxu0 0.0
    %5544 = vmatpush1.xpose.msra.mxu0 0.0
    %5545 = vmatprep.subr.mxu0 0.0
    %5546 = vmatpush1.xpose.msra.mxu0 0.0
    %5547 = vmatprep.subr.mxu0 0.0
    %5548 = vmatpush1.xpose.msra.mxu0 0.0
    %5549 = vmatprep.subr.mxu0 0.0
    %5550 = vmatpush1.xpose.msra.mxu0 0.0
    %5551 = vmatprep.subr.mxu0 0.0
    %5552 = vmatpush1.xpose.msra.mxu0 0.0
    %5553 = vmatprep.subr.mxu0 0.0
    %5554 = vmatpush1.xpose.msra.mxu0 0.0
    %5555 = vmatprep.subr.mxu0 0.0
    %5556 = vmatpush1.xpose.msra.mxu0 0.0
    %5557 = vmatprep.subr.mxu0 0.0
    %5558 = vmatpush1.xpose.msra.mxu0 0.0
    %5559 = vmatprep.subr.mxu0 0.0
    %5560 = vmatpush1.xpose.msra.mxu0 0.0
    %5561 = vmatprep.subr.mxu0 0.0
    %5562 = vmatpush1.xpose.msra.mxu0 0.0
    %5563 = vmatprep.subr.mxu0 0.0
    %5564 = vmatpush1.xpose.msra.mxu0 0.0
    %5565 = vmatprep.subr.mxu0 0.0
    %5566 = vmatpush1.xpose.msra.mxu0 0.0
    %5567 = vmatprep.subr.mxu0 0.0
    %5568 = vmatpush1.xpose.msra.mxu0 0.0
    %5569 = vmatprep.subr.mxu0 0.0
    %5570 = vmatpush1.xpose.msra.mxu0 0.0
    %5571 = vmatprep.subr.mxu0 0.0
    %5572 = vmatpush1.xpose.msra.mxu0 0.0
    %5573 = vmatprep.subr.mxu0 0.0
    %5574 = vmatpush1.xpose.msra.mxu0 0.0
    %5575 = vmatprep.subr.mxu0 0.0
    %5576 = vmatpush1.xpose.msra.mxu0 0.0
    %5577 = vmatprep.subr.mxu0 0.0
    %5578 = vmatpush1.xpose.msra.mxu0 0.0
    %5579 = vmatprep.mubr.f32.mxu0 0.0
    %5580 = vmatmul.mubr.f32.gmra.mrb[0].mxu0 %v5511
    %v5581 = vpop.f32.mrb[0].mxu0
    %v5582 = vadd.f32 0.0, %v5581
    %v5583 = vpop.f32.mrb[0].mxu0
    %5584 = vdwg.mxu0
    %5585 = vrot.lane.b32.xlu0 %v3465, 80
    %v5586 = vpop.permute.xlu0 %5585
    %5587 = vrot.lane.b32.xlu0 %v3465, 16
    %v5588 = vpop.permute.xlu0 %5587
    %v5589 = vsel %vm262, %v5586, 0
    %v5591 = vsel %vm262, %v5588, 0
    %5593 = vmatprep.subr.mxu0 0.0
    %5594 = vmatpush1.xpose.msra.mxu0 %v5591
    %5595 = vmatprep.subr.mxu0 0.0
    %5596 = vmatpush1.xpose.msra.mxu0 0.0
    %5597 = vmatprep.subr.mxu0 0.0
    %5598 = vmatpush1.xpose.msra.mxu0 0.0
    %5599 = vmatprep.subr.mxu0 0.0
    %5600 = vmatpush1.xpose.msra.mxu0 0.0
    %5601 = vmatprep.subr.mxu0 0.0
    %5602 = vmatpush1.xpose.msra.mxu0 0.0
    %5603 = vmatprep.subr.mxu0 0.0
    %5604 = vmatpush1.xpose.msra.mxu0 0.0
    %5605 = vmatprep.subr.mxu0 0.0
    %5606 = vmatpush1.xpose.msra.mxu0 0.0
    %5607 = vmatprep.subr.mxu0 0.0
    %5608 = vmatpush1.xpose.msra.mxu0 0.0
    %5609 = vmatprep.subr.mxu0 0.0
    %5610 = vmatpush1.xpose.msra.mxu0 0.0
    %5611 = vmatprep.subr.mxu0 0.0
    %5612 = vmatpush1.xpose.msra.mxu0 0.0
    %5613 = vmatprep.subr.mxu0 0.0
    %5614 = vmatpush1.xpose.msra.mxu0 0.0
    %5615 = vmatprep.subr.mxu0 0.0
    %5616 = vmatpush1.xpose.msra.mxu0 0.0
    %5617 = vmatprep.subr.mxu0 0.0
    %5618 = vmatpush1.xpose.msra.mxu0 0.0
    %5619 = vmatprep.subr.mxu0 0.0
    %5620 = vmatpush1.xpose.msra.mxu0 0.0
    %5621 = vmatprep.subr.mxu0 0.0
    %5622 = vmatpush1.xpose.msra.mxu0 0.0
    %5623 = vmatprep.subr.mxu0 0.0
    %5624 = vmatpush1.xpose.msra.mxu0 0.0
    %5625 = vmatprep.subr.mxu0 0.0
    %5626 = vmatpush1.xpose.msra.mxu0 0.0
    %5627 = vmatprep.subr.mxu0 0.0
    %5628 = vmatpush1.xpose.msra.mxu0 0.0
    %5629 = vmatprep.subr.mxu0 0.0
    %5630 = vmatpush1.xpose.msra.mxu0 0.0
    %5631 = vmatprep.subr.mxu0 0.0
    %5632 = vmatpush1.xpose.msra.mxu0 0.0
    %5633 = vmatprep.subr.mxu0 0.0
    %5634 = vmatpush1.xpose.msra.mxu0 0.0
    %5635 = vmatprep.subr.mxu0 0.0
    %5636 = vmatpush1.xpose.msra.mxu0 0.0
    %5637 = vmatprep.subr.mxu0 0.0
    %5638 = vmatpush1.xpose.msra.mxu0 0.0
    %5639 = vmatprep.subr.mxu0 0.0
    %5640 = vmatpush1.xpose.msra.mxu0 0.0
    %5641 = vmatprep.subr.mxu0 0.0
    %5642 = vmatpush1.xpose.msra.mxu0 0.0
    %5643 = vmatprep.subr.mxu0 0.0
    %5644 = vmatpush1.xpose.msra.mxu0 0.0
    %5645 = vmatprep.subr.mxu0 0.0
    %5646 = vmatpush1.xpose.msra.mxu0 0.0
    %5647 = vmatprep.subr.mxu0 0.0
    %5648 = vmatpush1.xpose.msra.mxu0 0.0
    %5649 = vmatprep.subr.mxu0 0.0
    %5650 = vmatpush1.xpose.msra.mxu0 0.0
    %5651 = vmatprep.subr.mxu0 0.0
    %5652 = vmatpush1.xpose.msra.mxu0 0.0
    %5653 = vmatprep.subr.mxu0 0.0
    %5654 = vmatpush1.xpose.msra.mxu0 0.0
    %5655 = vmatprep.subr.mxu0 0.0
    %5656 = vmatpush1.xpose.msra.mxu0 0.0
    %5657 = vmatprep.mubr.f32.mxu0 0.0
    %5658 = vmatmul.mubr.f32.gmra.mrb[0].mxu0 %v5589
    %v5659 = vpop.f32.mrb[0].mxu0
    %v5660 = vadd.f32 0.0, %v5659
    %v5661 = vpop.f32.mrb[0].mxu0
    %5662 = vdwg.mxu0
    %v5663 = vmul.f32 %v5582, 0.35355338
    %v5664 = vmul.f32 %v5660, 0.35355338
    %v5665 = vsel %vm262, %v5663, -inf
    %5666 = vmax.xlane.f32.xlu0 %v5665
    %v5667 = vpop.xlane.xlu0 %5666
    %v5668 = vsel %vm262, %v5664, -inf
    %5669 = vmax.xlane.f32.xlu0 %v5668
    %v5670 = vpop.xlane.xlu0 %5669
    %v5671 = vsub.f32 %v5663, %v5667
    %v5672 = vsub.f32 %v5664, %v5670
    %v5673 = vmul.f32 %v5671, 1.442695
    %v5674 = vpow.pop %v5673
    %v5675 = vmul.f32 %v5672, 1.442695
    %v5676 = vpow.pop %v5675
    %v5677 = vsel %vm262, %v5674, 0.0
    %5678 = vadd.xlane.f32.xlu0 %v5677
    %v5679 = vpop.xlane.xlu0 %5678
    %v5680 = vsel %vm262, %v5676, 0.0
    %5681 = vadd.xlane.f32.xlu0 %v5680
    %v5682 = vpop.xlane.xlu0 %5681
    %v5683 = vrcp.pop %v5679
    %v5684 = vrcp.pop %v5682
    %v5685 = vmul.f32 %v5674, %v5683
    %v5686 = vmul.f32 %v5676, %v5684
    %5687 = vrot.lane.b32.xlu0 %v3461, 80
    %v5688 = vpop.permute.xlu0 %5687
    %v5691 = vsel %vm262, %v5685, 0
    %5693 = vmatprep.subr.mxu0 0.0
    %5694 = vmatpush1.msra.mxu0 %v5688
    %5695 = vmatprep.subr.mxu0 0.0
    %5696 = vmatpush1.msra.mxu0 0.0
    %5697 = vmatprep.subr.mxu0 0.0
    %5698 = vmatpush1.msra.mxu0 0.0
    %5699 = vmatprep.subr.mxu0 0.0
    %5700 = vmatpush1.msra.mxu0 0.0
    %5701 = vmatprep.subr.mxu0 0.0
    %5702 = vmatpush1.msra.mxu0 0.0
    %5703 = vmatprep.subr.mxu0 0.0
    %5704 = vmatpush1.msra.mxu0 0.0
    %5705 = vmatprep.subr.mxu0 0.0
    %5706 = vmatpush1.msra.mxu0 0.0
    %5707 = vmatprep.subr.mxu0 0.0
    %5708 = vmatpush1.msra.mxu0 0.0
    %5709 = vmatprep.subr.mxu0 0.0
    %5710 = vmatpush1.msra.mxu0 0.0
    %5711 = vmatprep.subr.mxu0 0.0
    %5712 = vmatpush1.msra.mxu0 0.0
    %5713 = vmatprep.subr.mxu0 0.0
    %5714 = vmatpush1.msra.mxu0 0.0
    %5715 = vmatprep.subr.mxu0 0.0
    %5716 = vmatpush1.msra.mxu0 0.0
    %5717 = vmatprep.subr.mxu0 0.0
    %5718 = vmatpush1.msra.mxu0 0.0
    %5719 = vmatprep.subr.mxu0 0.0
    %5720 = vmatpush1.msra.mxu0 0.0
    %5721 = vmatprep.subr.mxu0 0.0
    %5722 = vmatpush1.msra.mxu0 0.0
    %5723 = vmatprep.subr.mxu0 0.0
    %5724 = vmatpush1.msra.mxu0 0.0
    %5725 = vmatprep.subr.mxu0 0.0
    %5726 = vmatpush1.msra.mxu0 0.0
    %5727 = vmatprep.subr.mxu0 0.0
    %5728 = vmatpush1.msra.mxu0 0.0
    %5729 = vmatprep.subr.mxu0 0.0
    %5730 = vmatpush1.msra.mxu0 0.0
    %5731 = vmatprep.subr.mxu0 0.0
    %5732 = vmatpush1.msra.mxu0 0.0
    %5733 = vmatprep.subr.mxu0 0.0
    %5734 = vmatpush1.msra.mxu0 0.0
    %5735 = vmatprep.subr.mxu0 0.0
    %5736 = vmatpush1.msra.mxu0 0.0
    %5737 = vmatprep.subr.mxu0 0.0
    %5738 = vmatpush1.msra.mxu0 0.0
    %5739 = vmatprep.subr.mxu0 0.0
    %5740 = vmatpush1.msra.mxu0 0.0
    %5741 = vmatprep.subr.mxu0 0.0
    %5742 = vmatpush1.msra.mxu0 0.0
    %5743 = vmatprep.subr.mxu0 0.0
    %5744 = vmatpush1.msra.mxu0 0.0
    %5745 = vmatprep.subr.mxu0 0.0
    %5746 = vmatpush1.msra.mxu0 0.0
    %5747 = vmatprep.subr.mxu0 0.0
    %5748 = vmatpush1.msra.mxu0 0.0
    %5749 = vmatprep.subr.mxu0 0.0
    %5750 = vmatpush1.msra.mxu0 0.0
    %5751 = vmatprep.subr.mxu0 0.0
    %5752 = vmatpush1.msra.mxu0 0.0
    %5753 = vmatprep.subr.mxu0 0.0
    %5754 = vmatpush1.msra.mxu0 0.0
    %5755 = vmatprep.subr.mxu0 0.0
    %5756 = vmatpush1.msra.mxu0 0.0
    %5757 = vmatprep.mubr.f32.mxu0 0.0
    %5758 = vmatmul.mubr.f32.gmra.mrb[0].mxu0 %v5691
    %v5759 = vpop.f32.mrb[0].mxu0
    %v5760 = vadd.f32 0.0, %v5759
    %v5761 = vpop.f32.mrb[0].mxu0
    %5762 = vdwg.mxu0
    %5763 = vrot.lane.b32.xlu0 %v3467, 80
    %v5764 = vpop.permute.xlu0 %5763
    %v5767 = vsel %vm262, %v5686, 0
    %5769 = vmatprep.subr.mxu0 0.0
    %5770 = vmatpush1.msra.mxu0 %v5764
    %5771 = vmatprep.subr.mxu0 0.0
    %5772 = vmatpush1.msra.mxu0 0.0
    %5773 = vmatprep.subr.mxu0 0.0
    %5774 = vmatpush1.msra.mxu0 0.0
    %5775 = vmatprep.subr.mxu0 0.0
    %5776 = vmatpush1.msra.mxu0 0.0
    %5777 = vmatprep.subr.mxu0 0.0
    %5778 = vmatpush1.msra.mxu0 0.0
    %5779 = vmatprep.subr.mxu0 0.0
    %5780 = vmatpush1.msra.mxu0 0.0
    %5781 = vmatprep.subr.mxu0 0.0
    %5782 = vmatpush1.msra.mxu0 0.0
    %5783 = vmatprep.subr.mxu0 0.0
    %5784 = vmatpush1.msra.mxu0 0.0
    %5785 = vmatprep.subr.mxu0 0.0
    %5786 = vmatpush1.msra.mxu0 0.0
    %5787 = vmatprep.subr.mxu0 0.0
    %5788 = vmatpush1.msra.mxu0 0.0
    %5789 = vmatprep.subr.mxu0 0.0
    %5790 = vmatpush1.msra.mxu0 0.0
    %5791 = vmatprep.subr.mxu0 0.0
    %5792 = vmatpush1.msra.mxu0 0.0
    %5793 = vmatprep.subr.mxu0 0.0
    %5794 = vmatpush1.msra.mxu0 0.0
    %5795 = vmatprep.subr.mxu0 0.0
    %5796 = vmatpush1.msra.mxu0 0.0
    %5797 = vmatprep.subr.mxu0 0.0
    %5798 = vmatpush1.msra.mxu0 0.0
    %5799 = vmatprep.subr.mxu0 0.0
    %5800 = vmatpush1.msra.mxu0 0.0
    %5801 = vmatprep.subr.mxu0 0.0
    %5802 = vmatpush1.msra.mxu0 0.0
    %5803 = vmatprep.subr.mxu0 0.0
    %5804 = vmatpush1.msra.mxu0 0.0
    %5805 = vmatprep.subr.mxu0 0.0
    %5806 = vmatpush1.msra.mxu0 0.0
    %5807 = vmatprep.subr.mxu0 0.0
    %5808 = vmatpush1.msra.mxu0 0.0
    %5809 = vmatprep.subr.mxu0 0.0
    %5810 = vmatpush1.msra.mxu0 0.0
    %5811 = vmatprep.subr.mxu0 0.0
    %5812 = vmatpush1.msra.mxu0 0.0
    %5813 = vmatprep.subr.mxu0 0.0
    %5814 = vmatpush1.msra.mxu0 0.0
    %5815 = vmatprep.subr.mxu0 0.0
    %5816 = vmatpush1.msra.mxu0 0.0
    %5817 = vmatprep.subr.mxu0 0.0
    %5818 = vmatpush1.msra.mxu0 0.0
    %5819 = vmatprep.subr.mxu0 0.0
    %5820 = vmatpush1.msra.mxu0 0.0
    %5821 = vmatprep.subr.mxu0 0.0
    %5822 = vmatpush1.msra.mxu0 0.0
    %5823 = vmatprep.subr.mxu0 0.0
    %5824 = vmatpush1.msra.mxu0 0.0
    %5825 = vmatprep.subr.mxu0 0.0
    %5826 = vmatpush1.msra.mxu0 0.0
    %5827 = vmatprep.subr.mxu0 0.0
    %5828 = vmatpush1.msra.mxu0 0.0
    %5829 = vmatprep.subr.mxu0 0.0
    %5830 = vmatpush1.msra.mxu0 0.0
    %5831 = vmatprep.subr.mxu0 0.0
    %5832 = vmatpush1.msra.mxu0 0.0
    %5833 = vmatprep.mubr.f32.mxu0 0.0
    %5834 = vmatmul.mubr.f32.gmra.mrb[0].mxu0 %v5767
    %v5835 = vpop.f32.mrb[0].mxu0
    %v5836 = vadd.f32 0.0, %v5835
    %v5837 = vpop.f32.mrb[0].mxu0
    %5838 = vdwg.mxu0
    %5841 = vrot.lane.b32.xlu0 %v5760, 48
    %v5842 = vpop.permute.xlu0 %5841
    %5843 = vrot.lane.b32.xlu0 %v5836, 48
    %v5844 = vpop.permute.xlu0 %5843
    %5847 = vst.msk [vmem:[#allocation2] sm:$0xff] %vm2643, %v5842
    %5848 = vst.msk [vmem:[#allocation2 + $0x8] sm:$0xff] %vm2643, %v5844
    %5849 = vrot.lane.b32.xlu0 %v3459, 72
    %v5850 = vpop.permute.xlu0 %5849
    %5851 = vrot.lane.b32.xlu0 %v3459, 8
    %v5852 = vpop.permute.xlu0 %5851
    %v5853 = vsel %vm262, %v5850, 0
    %v5855 = vsel %vm262, %v5852, 0
    %5857 = vmatprep.subr.mxu0 0.0
    %5858 = vmatpush1.xpose.msra.mxu0 %v5855
    %5859 = vmatprep.subr.mxu0 0.0
    %5860 = vmatpush1.xpose.msra.mxu0 0.0
    %5861 = vmatprep.subr.mxu0 0.0
    %5862 = vmatpush1.xpose.msra.mxu0 0.0
    %5863 = vmatprep.subr.mxu0 0.0
    %5864 = vmatpush1.xpose.msra.mxu0 0.0
    %5865 = vmatprep.subr.mxu0 0.0
    %5866 = vmatpush1.xpose.msra.mxu0 0.0
    %5867 = vmatprep.subr.mxu0 0.0
    %5868 = vmatpush1.xpose.msra.mxu0 0.0
    %5869 = vmatprep.subr.mxu0 0.0
    %5870 = vmatpush1.xpose.msra.mxu0 0.0
    %5871 = vmatprep.subr.mxu0 0.0
    %5872 = vmatpush1.xpose.msra.mxu0 0.0
    %5873 = vmatprep.subr.mxu0 0.0
    %5874 = vmatpush1.xpose.msra.mxu0 0.0
    %5875 = vmatprep.subr.mxu0 0.0
    %5876 = vmatpush1.xpose.msra.mxu0 0.0
    %5877 = vmatprep.subr.mxu0 0.0
    %5878 = vmatpush1.xpose.msra.mxu0 0.0
    %5879 = vmatprep.subr.mxu0 0.0
    %5880 = vmatpush1.xpose.msra.mxu0 0.0
    %5881 = vmatprep.subr.mxu0 0.0
    %5882 = vmatpush1.xpose.msra.mxu0 0.0
    %5883 = vmatprep.subr.mxu0 0.0
    %5884 = vmatpush1.xpose.msra.mxu0 0.0
    %5885 = vmatprep.subr.mxu0 0.0
    %5886 = vmatpush1.xpose.msra.mxu0 0.0
    %5887 = vmatprep.subr.mxu0 0.0
    %5888 = vmatpush1.xpose.msra.mxu0 0.0
    %5889 = vmatprep.subr.mxu0 0.0
    %5890 = vmatpush1.xpose.msra.mxu0 0.0
    %5891 = vmatprep.subr.mxu0 0.0
    %5892 = vmatpush1.xpose.msra.mxu0 0.0
    %5893 = vmatprep.subr.mxu0 0.0
    %5894 = vmatpush1.xpose.msra.mxu0 0.0
    %5895 = vmatprep.subr.mxu0 0.0
    %5896 = vmatpush1.xpose.msra.mxu0 0.0
    %5897 = vmatprep.subr.mxu0 0.0
    %5898 = vmatpush1.xpose.msra.mxu0 0.0
    %5899 = vmatprep.subr.mxu0 0.0
    %5900 = vmatpush1.xpose.msra.mxu0 0.0
    %5901 = vmatprep.subr.mxu0 0.0
    %5902 = vmatpush1.xpose.msra.mxu0 0.0
    %5903 = vmatprep.subr.mxu0 0.0
    %5904 = vmatpush1.xpose.msra.mxu0 0.0
    %5905 = vmatprep.subr.mxu0 0.0
    %5906 = vmatpush1.xpose.msra.mxu0 0.0
    %5907 = vmatprep.subr.mxu0 0.0
    %5908 = vmatpush1.xpose.msra.mxu0 0.0
    %5909 = vmatprep.subr.mxu0 0.0
    %5910 = vmatpush1.xpose.msra.mxu0 0.0
    %5911 = vmatprep.subr.mxu0 0.0
    %5912 = vmatpush1.xpose.msra.mxu0 0.0
    %5913 = vmatprep.subr.mxu0 0.0
    %5914 = vmatpush1.xpose.msra.mxu0 0.0
    %5915 = vmatprep.subr.mxu0 0.0
    %5916 = vmatpush1.xpose.msra.mxu0 0.0
    %5917 = vmatprep.subr.mxu0 0.0
    %5918 = vmatpush1.xpose.msra.mxu0 0.0
    %5919 = vmatprep.subr.mxu0 0.0
    %5920 = vmatpush1.xpose.msra.mxu0 0.0
    %5921 = vmatprep.mubr.f32.mxu0 0.0
    %5922 = vmatmul.mubr.f32.gmra.mrb[0].mxu0 %v5853
    %v5923 = vpop.f32.mrb[0].mxu0
    %v5924 = vadd.f32 0.0, %v5923
    %v5925 = vpop.f32.mrb[0].mxu0
    %5926 = vdwg.mxu0
    %5927 = vrot.lane.b32.xlu0 %v3465, 72
    %v5928 = vpop.permute.xlu0 %5927
    %5929 = vrot.lane.b32.xlu0 %v3465, 8
    %v5930 = vpop.permute.xlu0 %5929
    %v5931 = vsel %vm262, %v5928, 0
    %v5933 = vsel %vm262, %v5930, 0
    %5935 = vmatprep.subr.mxu0 0.0
    %5936 = vmatpush1.xpose.msra.mxu0 %v5933
    %5937 = vmatprep.subr.mxu0 0.0
    %5938 = vmatpush1.xpose.msra.mxu0 0.0
    %5939 = vmatprep.subr.mxu0 0.0
    %5940 = vmatpush1.xpose.msra.mxu0 0.0
    %5941 = vmatprep.subr.mxu0 0.0
    %5942 = vmatpush1.xpose.msra.mxu0 0.0
    %5943 = vmatprep.subr.mxu0 0.0
    %5944 = vmatpush1.xpose.msra.mxu0 0.0
    %5945 = vmatprep.subr.mxu0 0.0
    %5946 = vmatpush1.xpose.msra.mxu0 0.0
    %5947 = vmatprep.subr.mxu0 0.0
    %5948 = vmatpush1.xpose.msra.mxu0 0.0
    %5949 = vmatprep.subr.mxu0 0.0
    %5950 = vmatpush1.xpose.msra.mxu0 0.0
    %5951 = vmatprep.subr.mxu0 0.0
    %5952 = vmatpush1.xpose.msra.mxu0 0.0
    %5953 = vmatprep.subr.mxu0 0.0
    %5954 = vmatpush1.xpose.msra.mxu0 0.0
    %5955 = vmatprep.subr.mxu0 0.0
    %5956 = vmatpush1.xpose.msra.mxu0 0.0
    %5957 = vmatprep.subr.mxu0 0.0
    %5958 = vmatpush1.xpose.msra.mxu0 0.0
    %5959 = vmatprep.subr.mxu0 0.0
    %5960 = vmatpush1.xpose.msra.mxu0 0.0
    %5961 = vmatprep.subr.mxu0 0.0
    %5962 = vmatpush1.xpose.msra.mxu0 0.0
    %5963 = vmatprep.subr.mxu0 0.0
    %5964 = vmatpush1.xpose.msra.mxu0 0.0
    %5965 = vmatprep.subr.mxu0 0.0
    %5966 = vmatpush1.xpose.msra.mxu0 0.0
    %5967 = vmatprep.subr.mxu0 0.0
    %5968 = vmatpush1.xpose.msra.mxu0 0.0
    %5969 = vmatprep.subr.mxu0 0.0
    %5970 = vmatpush1.xpose.msra.mxu0 0.0
    %5971 = vmatprep.subr.mxu0 0.0
    %5972 = vmatpush1.xpose.msra.mxu0 0.0
    %5973 = vmatprep.subr.mxu0 0.0
    %5974 = vmatpush1.xpose.msra.mxu0 0.0
    %5975 = vmatprep.subr.mxu0 0.0
    %5976 = vmatpush1.xpose.msra.mxu0 0.0
    %5977 = vmatprep.subr.mxu0 0.0
    %5978 = vmatpush1.xpose.msra.mxu0 0.0
    %5979 = vmatprep.subr.mxu0 0.0
    %5980 = vmatpush1.xpose.msra.mxu0 0.0
    %5981 = vmatprep.subr.mxu0 0.0
    %5982 = vmatpush1.xpose.msra.mxu0 0.0
    %5983 = vmatprep.subr.mxu0 0.0
    %5984 = vmatpush1.xpose.msra.mxu0 0.0
    %5985 = vmatprep.subr.mxu0 0.0
    %5986 = vmatpush1.xpose.msra.mxu0 0.0
    %5987 = vmatprep.subr.mxu0 0.0
    %5988 = vmatpush1.xpose.msra.mxu0 0.0
    %5989 = vmatprep.subr.mxu0 0.0
    %5990 = vmatpush1.xpose.msra.mxu0 0.0
    %5991 = vmatprep.subr.mxu0 0.0
    %5992 = vmatpush1.xpose.msra.mxu0 0.0
    %5993 = vmatprep.subr.mxu0 0.0
    %5994 = vmatpush1.xpose.msra.mxu0 0.0
    %5995 = vmatprep.subr.mxu0 0.0
    %5996 = vmatpush1.xpose.msra.mxu0 0.0
    %5997 = vmatprep.subr.mxu0 0.0
    %5998 = vmatpush1.xpose.msra.mxu0 0.0
    %5999 = vmatprep.mubr.f32.mxu0 0.0
    %6000 = vmatmul.mubr.f32.gmra.mrb[0].mxu0 %v5931
    %v6001 = vpop.f32.mrb[0].mxu0
    %v6002 = vadd.f32 0.0, %v6001
    %v6003 = vpop.f32.mrb[0].mxu0
    %6004 = vdwg.mxu0
    %v6005 = vmul.f32 %v5924, 0.35355338
    %v6006 = vmul.f32 %v6002, 0.35355338
    %v6007 = vsel %vm262, %v6005, -inf
    %6008 = vmax.xlane.f32.xlu0 %v6007
    %v6009 = vpop.xlane.xlu0 %6008
    %v6010 = vsel %vm262, %v6006, -inf
    %6011 = vmax.xlane.f32.xlu0 %v6010
    %v6012 = vpop.xlane.xlu0 %6011
    %v6013 = vsub.f32 %v6005, %v6009
    %v6014 = vsub.f32 %v6006, %v6012
    %v6015 = vmul.f32 %v6013, 1.442695
    %v6016 = vpow.pop %v6015
    %v6017 = vmul.f32 %v6014, 1.442695
    %v6018 = vpow.pop %v6017
    %v6019 = vsel %vm262, %v6016, 0.0
    %6020 = vadd.xlane.f32.xlu0 %v6019
    %v6021 = vpop.xlane.xlu0 %6020
    %v6022 = vsel %vm262, %v6018, 0.0
    %6023 = vadd.xlane.f32.xlu0 %v6022
    %v6024 = vpop.xlane.xlu0 %6023
    %v6025 = vrcp.pop %v6021
    %v6026 = vrcp.pop %v6024
    %v6027 = vmul.f32 %v6016, %v6025
    %v6028 = vmul.f32 %v6018, %v6026
    %6029 = vrot.lane.b32.xlu0 %v3461, 72
    %v6030 = vpop.permute.xlu0 %6029
    %v6033 = vsel %vm262, %v6027, 0
    %6035 = vmatprep.subr.mxu0 0.0
    %6036 = vmatpush1.msra.mxu0 %v6030
    %6037 = vmatprep.subr.mxu0 0.0
    %6038 = vmatpush1.msra.mxu0 0.0
    %6039 = vmatprep.subr.mxu0 0.0
    %6040 = vmatpush1.msra.mxu0 0.0
    %6041 = vmatprep.subr.mxu0 0.0
    %6042 = vmatpush1.msra.mxu0 0.0
    %6043 = vmatprep.subr.mxu0 0.0
    %6044 = vmatpush1.msra.mxu0 0.0
    %6045 = vmatprep.subr.mxu0 0.0
    %6046 = vmatpush1.msra.mxu0 0.0
    %6047 = vmatprep.subr.mxu0 0.0
    %6048 = vmatpush1.msra.mxu0 0.0
    %6049 = vmatprep.subr.mxu0 0.0
    %6050 = vmatpush1.msra.mxu0 0.0
    %6051 = vmatprep.subr.mxu0 0.0
    %6052 = vmatpush1.msra.mxu0 0.0
    %6053 = vmatprep.subr.mxu0 0.0
    %6054 = vmatpush1.msra.mxu0 0.0
    %6055 = vmatprep.subr.mxu0 0.0
    %6056 = vmatpush1.msra.mxu0 0.0
    %6057 = vmatprep.subr.mxu0 0.0
    %6058 = vmatpush1.msra.mxu0 0.0
    %6059 = vmatprep.subr.mxu0 0.0
    %6060 = vmatpush1.msra.mxu0 0.0
    %6061 = vmatprep.subr.mxu0 0.0
    %6062 = vmatpush1.msra.mxu0 0.0
    %6063 = vmatprep.subr.mxu0 0.0
    %6064 = vmatpush1.msra.mxu0 0.0
    %6065 = vmatprep.subr.mxu0 0.0
    %6066 = vmatpush1.msra.mxu0 0.0
    %6067 = vmatprep.subr.mxu0 0.0
    %6068 = vmatpush1.msra.mxu0 0.0
    %6069 = vmatprep.subr.mxu0 0.0
    %6070 = vmatpush1.msra.mxu0 0.0
    %6071 = vmatprep.subr.mxu0 0.0
    %6072 = vmatpush1.msra.mxu0 0.0
    %6073 = vmatprep.subr.mxu0 0.0
    %6074 = vmatpush1.msra.mxu0 0.0
    %6075 = vmatprep.subr.mxu0 0.0
    %6076 = vmatpush1.msra.mxu0 0.0
    %6077 = vmatprep.subr.mxu0 0.0
    %6078 = vmatpush1.msra.mxu0 0.0
    %6079 = vmatprep.subr.mxu0 0.0
    %6080 = vmatpush1.msra.mxu0 0.0
    %6081 = vmatprep.subr.mxu0 0.0
    %6082 = vmatpush1.msra.mxu0 0.0
    %6083 = vmatprep.subr.mxu0 0.0
    %6084 = vmatpush1.msra.mxu0 0.0
    %6085 = vmatprep.subr.mxu0 0.0
    %6086 = vmatpush1.msra.mxu0 0.0
    %6087 = vmatprep.subr.mxu0 0.0
    %6088 = vmatpush1.msra.mxu0 0.0
    %6089 = vmatprep.subr.mxu0 0.0
    %6090 = vmatpush1.msra.mxu0 0.0
    %6091 = vmatprep.subr.mxu0 0.0
    %6092 = vmatpush1.msra.mxu0 0.0
    %6093 = vmatprep.subr.mxu0 0.0
    %6094 = vmatpush1.msra.mxu0 0.0
    %6095 = vmatprep.subr.mxu0 0.0
    %6096 = vmatpush1.msra.mxu0 0.0
    %6097 = vmatprep.subr.mxu0 0.0
    %6098 = vmatpush1.msra.mxu0 0.0
    %6099 = vmatprep.mubr.f32.mxu0 0.0
    %6100 = vmatmul.mubr.f32.gmra.mrb[0].mxu0 %v6033
    %v6101 = vpop.f32.mrb[0].mxu0
    %v6102 = vadd.f32 0.0, %v6101
    %v6103 = vpop.f32.mrb[0].mxu0
    %6104 = vdwg.mxu0
    %6105 = vrot.lane.b32.xlu0 %v3467, 72
    %v6106 = vpop.permute.xlu0 %6105
    %v6109 = vsel %vm262, %v6028, 0
    %6111 = vmatprep.subr.mxu0 0.0
    %6112 = vmatpush1.msra.mxu0 %v6106
    %6113 = vmatprep.subr.mxu0 0.0
    %6114 = vmatpush1.msra.mxu0 0.0
    %6115 = vmatprep.subr.mxu0 0.0
    %6116 = vmatpush1.msra.mxu0 0.0
    %6117 = vmatprep.subr.mxu0 0.0
    %6118 = vmatpush1.msra.mxu0 0.0
    %6119 = vmatprep.subr.mxu0 0.0
    %6120 = vmatpush1.msra.mxu0 0.0
    %6121 = vmatprep.subr.mxu0 0.0
    %6122 = vmatpush1.msra.mxu0 0.0
    %6123 = vmatprep.subr.mxu0 0.0
    %6124 = vmatpush1.msra.mxu0 0.0
    %6125 = vmatprep.subr.mxu0 0.0
    %6126 = vmatpush1.msra.mxu0 0.0
    %6127 = vmatprep.subr.mxu0 0.0
    %6128 = vmatpush1.msra.mxu0 0.0
    %6129 = vmatprep.subr.mxu0 0.0
    %6130 = vmatpush1.msra.mxu0 0.0
    %6131 = vmatprep.subr.mxu0 0.0
    %6132 = vmatpush1.msra.mxu0 0.0
    %6133 = vmatprep.subr.mxu0 0.0
    %6134 = vmatpush1.msra.mxu0 0.0
    %6135 = vmatprep.subr.mxu0 0.0
    %6136 = vmatpush1.msra.mxu0 0.0
    %6137 = vmatprep.subr.mxu0 0.0
    %6138 = vmatpush1.msra.mxu0 0.0
    %6139 = vmatprep.subr.mxu0 0.0
    %6140 = vmatpush1.msra.mxu0 0.0
    %6141 = vmatprep.subr.mxu0 0.0
    %6142 = vmatpush1.msra.mxu0 0.0
    %6143 = vmatprep.subr.mxu0 0.0
    %6144 = vmatpush1.msra.mxu0 0.0
    %6145 = vmatprep.subr.mxu0 0.0
    %6146 = vmatpush1.msra.mxu0 0.0
    %6147 = vmatprep.subr.mxu0 0.0
    %6148 = vmatpush1.msra.mxu0 0.0
    %6149 = vmatprep.subr.mxu0 0.0
    %6150 = vmatpush1.msra.mxu0 0.0
    %6151 = vmatprep.subr.mxu0 0.0
    %6152 = vmatpush1.msra.mxu0 0.0
    %6153 = vmatprep.subr.mxu0 0.0
    %6154 = vmatpush1.msra.mxu0 0.0
    %6155 = vmatprep.subr.mxu0 0.0
    %6156 = vmatpush1.msra.mxu0 0.0
    %6157 = vmatprep.subr.mxu0 0.0
    %6158 = vmatpush1.msra.mxu0 0.0
    %6159 = vmatprep.subr.mxu0 0.0
    %6160 = vmatpush1.msra.mxu0 0.0
    %6161 = vmatprep.subr.mxu0 0.0
    %6162 = vmatpush1.msra.mxu0 0.0
    %6163 = vmatprep.subr.mxu0 0.0
    %6164 = vmatpush1.msra.mxu0 0.0
    %6165 = vmatprep.subr.mxu0 0.0
    %6166 = vmatpush1.msra.mxu0 0.0
    %6167 = vmatprep.subr.mxu0 0.0
    %6168 = vmatpush1.msra.mxu0 0.0
    %6169 = vmatprep.subr.mxu0 0.0
    %6170 = vmatpush1.msra.mxu0 0.0
    %6171 = vmatprep.subr.mxu0 0.0
    %6172 = vmatpush1.msra.mxu0 0.0
    %6173 = vmatprep.subr.mxu0 0.0
    %6174 = vmatpush1.msra.mxu0 0.0
    %6175 = vmatprep.mubr.f32.mxu0 0.0
    %6176 = vmatmul.mubr.f32.gmra.mrb[0].mxu0 %v6109
    %v6177 = vpop.f32.mrb[0].mxu0
    %v6178 = vadd.f32 0.0, %v6177
    %v6179 = vpop.f32.mrb[0].mxu0
    %6180 = vdwg.mxu0
    %6183 = vrot.lane.b32.xlu0 %v6102, 56
    %v6184 = vpop.permute.xlu0 %6183
    %6185 = vrot.lane.b32.xlu0 %v6178, 56
    %v6186 = vpop.permute.xlu0 %6185
    %6189 = vst.msk [vmem:[#allocation2] sm:$0xff] %vm2986, %v6184
    %6190 = vst.msk [vmem:[#allocation2 + $0x8] sm:$0xff] %vm2986, %v6186
    %v6191 = vld [vmem:[#allocation2] sm:$0xff]
    %v6192 = vld [vmem:[#allocation2 + $0x8] sm:$0xff]
    %v6193 = vlaneseq
    %v6194 = vshrl.u32 %v6193, 7
    %v6195 = vsub.s32 0, %v6194
    %v6196 = vrot.slane %v3349, %v6195
    %v6198 = vsel %vm175, %v6191, 0
    %v6201 = vsel %vm175, %v6192, 0
    %6203 = vmatprep.subr.mxu0 0.0
    %6204 = vmatpush1.msra.mxu0 %v3341
    %6205 = vmatprep.subr.mxu0 0.0
    %6206 = vmatpush1.msra.mxu0 %v3342
    %6207 = vmatprep.subr.mxu0 0.0
    %6208 = vmatpush1.msra.mxu0 %v3343
    %6209 = vmatprep.subr.mxu0 0.0
    %6210 = vmatpush1.msra.mxu0 %v3344
    %6211 = vmatprep.subr.mxu0 0.0
    %6212 = vmatpush1.msra.mxu0 %v3345
    %6213 = vmatprep.subr.mxu0 0.0
    %6214 = vmatpush1.msra.mxu0 %v3346
    %6215 = vmatprep.subr.mxu0 0.0
    %6216 = vmatpush1.msra.mxu0 %v3347
    %6217 = vmatprep.subr.mxu0 0.0
    %6218 = vmatpush1.msra.mxu0 %v3348
    %6219 = vmatprep.subr.mxu0 0.0
    %6220 = vmatpush1.msra.mxu0 0.0
    %6221 = vmatprep.subr.mxu0 0.0
    %6222 = vmatpush1.msra.mxu0 0.0
    %6223 = vmatprep.subr.mxu0 0.0
    %6224 = vmatpush1.msra.mxu0 0.0
    %6225 = vmatprep.subr.mxu0 0.0
    %6226 = vmatpush1.msra.mxu0 0.0
    %6227 = vmatprep.subr.mxu0 0.0
    %6228 = vmatpush1.msra.mxu0 0.0
    %6229 = vmatprep.subr.mxu0 0.0
    %6230 = vmatpush1.msra.mxu0 0.0
    %6231 = vmatprep.subr.mxu0 0.0
    %6232 = vmatpush1.msra.mxu0 0.0
    %6233 = vmatprep.subr.mxu0 0.0
    %6234 = vmatpush1.msra.mxu0 0.0
    %6235 = vmatprep.subr.mxu0 0.0
    %6236 = vmatpush1.msra.mxu0 0.0
    %6237 = vmatprep.subr.mxu0 0.0
    %6238 = vmatpush1.msra.mxu0 0.0
    %6239 = vmatprep.subr.mxu0 0.0
    %6240 = vmatpush1.msra.mxu0 0.0
    %6241 = vmatprep.subr.mxu0 0.0
    %6242 = vmatpush1.msra.mxu0 0.0
    %6243 = vmatprep.subr.mxu0 0.0
    %6244 = vmatpush1.msra.mxu0 0.0
    %6245 = vmatprep.subr.mxu0 0.0
    %6246 = vmatpush1.msra.mxu0 0.0
    %6247 = vmatprep.subr.mxu0 0.0
    %6248 = vmatpush1.msra.mxu0 0.0
    %6249 = vmatprep.subr.mxu0 0.0
    %6250 = vmatpush1.msra.mxu0 0.0
    %6251 = vmatprep.subr.mxu0 0.0
    %6252 = vmatpush1.msra.mxu0 0.0
    %6253 = vmatprep.subr.mxu0 0.0
    %6254 = vmatpush1.msra.mxu0 0.0
    %6255 = vmatprep.subr.mxu0 0.0
    %6256 = vmatpush1.msra.mxu0 0.0
    %6257 = vmatprep.subr.mxu0 0.0
    %6258 = vmatpush1.msra.mxu0 0.0
    %6259 = vmatprep.subr.mxu0 0.0
    %6260 = vmatpush1.msra.mxu0 0.0
    %6261 = vmatprep.subr.mxu0 0.0
    %6262 = vmatpush1.msra.mxu0 0.0
    %6263 = vmatprep.subr.mxu0 0.0
    %6264 = vmatpush1.msra.mxu0 0.0
    %6265 = vmatprep.subr.mxu0 0.0
    %6266 = vmatpush1.msra.mxu0 0.0
    %6267 = vmatprep.mubr.f32.mxu0 0.0
    %6268 = vmatmul.mubr.f32.gmra.mrb[0].mxu0 %v6198
    %v6269 = vpop.f32.mrb[0].mxu0
    %v6270 = vadd.f32 %v6196, %v6269
    %v6271 = vpop.f32.mrb[0].mxu0
    %6272 = vmatprep.mubr.f32.mxu0 0.0
    %6273 = vmatmul.mubr.f32.gmra.mrb[0].mxu0 %v6201
    %v6274 = vpop.f32.mrb[0].mxu0
    %v6275 = vadd.f32 %v6196, %v6274
    %v6276 = vpop.f32.mrb[0].mxu0
    %6277 = vdwg.mxu0
    %v6278 = vadd.f32 %v3321, %v6270
    %v6279 = vadd.f32 %v3322, %v6275
    %v6280 = vsel %vm175, %v6278, 0.0
    %6281 = vadd.xlane.f32.xlu0 %v6280
    %v6282 = vpop.xlane.xlu0 %6281
    %v6283 = vsel %vm175, %v6279, 0.0
    %6284 = vadd.xlane.f32.xlu0 %v6283
    %v6285 = vpop.xlane.xlu0 %6284
    %v6286 = vmul.f32 %v6282, %v3084
    %v6287 = vmul.f32 %v6285, %v3084
    %v6288 = vsub.f32 %v6278, %v6286
    %v6289 = vsub.f32 %v6279, %v6287
    %v6290 = vmul.f32 %v6288, %v6288
    %v6291 = vmul.f32 %v6289, %v6289
    %v6292 = vsel %vm175, %v6290, 0.0
    %6293 = vadd.xlane.f32.xlu0 %v6292
    %v6294 = vpop.xlane.xlu0 %6293
    %v6295 = vsel %vm175, %v6291, 0.0
    %6296 = vadd.xlane.f32.xlu0 %v6295
    %v6297 = vpop.xlane.xlu0 %6296
    %v6298 = vmul.f32 %v6294, %v3084
    %v6299 = vmul.f32 %v6297, %v3084
    %v6300 = vadd.f32 %v6298, 1e-05
    %v6301 = vadd.f32 %v6299, 1e-05
    %v6302 = vrsqrt.pop %v6300
    %v6303 = vrsqrt.pop %v6301
    %v6304 = vmul.f32 %v6288, %v6302
    %v6305 = vmul.f32 %v6289, %v6303
    %v6306 = vlaneseq
    %v6307 = vshrl.u32 %v6306, 7
    %v6308 = vsub.s32 1, %v6307
    %v6309 = vrot.slane %v3349, %v6308
    %v6310 = vmul.f32 %v6304, %v6309
    %v6311 = vmul.f32 %v6305, %v6309
    %v6312 = vlaneseq
    %v6313 = vshrl.u32 %v6312, 7
    %v6314 = vsub.s32 2, %v6313
    %v6315 = vrot.slane %v3349, %v6314
    %v6316 = vadd.f32 %v6310, %v6315
    %v6317 = vadd.f32 %v6311, %v6315
    %v6318 = vlaneseq
    %v6319 = vshrl.u32 %v6318, 7
    %v6320 = vsub.s32 0, %v6319
    %v6321 = vrot.slane %v3358, %v6320
    %v6323 = vsel %vm175, %v6316, 0
    %v6326 = vsel %vm175, %v6317, 0
    %6328 = vmatprep.subr.mxu0 0.0
    %6329 = vmatpush1.msra.mxu0 %v3350
    %6330 = vmatprep.subr.mxu0 0.0
    %6331 = vmatpush1.msra.mxu0 %v3351
    %6332 = vmatprep.subr.mxu0 0.0
    %6333 = vmatpush1.msra.mxu0 %v3352
    %6334 = vmatprep.subr.mxu0 0.0
    %6335 = vmatpush1.msra.mxu0 %v3353
    %6336 = vmatprep.subr.mxu0 0.0
    %6337 = vmatpush1.msra.mxu0 %v3354
    %6338 = vmatprep.subr.mxu0 0.0
    %6339 = vmatpush1.msra.mxu0 %v3355
    %6340 = vmatprep.subr.mxu0 0.0
    %6341 = vmatpush1.msra.mxu0 %v3356
    %6342 = vmatprep.subr.mxu0 0.0
    %6343 = vmatpush1.msra.mxu0 %v3357
    %6344 = vmatprep.subr.mxu0 0.0
    %6345 = vmatpush1.msra.mxu0 0.0
    %6346 = vmatprep.subr.mxu0 0.0
    %6347 = vmatpush1.msra.mxu0 0.0
    %6348 = vmatprep.subr.mxu0 0.0
    %6349 = vmatpush1.msra.mxu0 0.0
    %6350 = vmatprep.subr.mxu0 0.0
    %6351 = vmatpush1.msra.mxu0 0.0
    %6352 = vmatprep.subr.mxu0 0.0
    %6353 = vmatpush1.msra.mxu0 0.0
    %6354 = vmatprep.subr.mxu0 0.0
    %6355 = vmatpush1.msra.mxu0 0.0
    %6356 = vmatprep.subr.mxu0 0.0
    %6357 = vmatpush1.msra.mxu0 0.0
    %6358 = vmatprep.subr.mxu0 0.0
    %6359 = vmatpush1.msra.mxu0 0.0
    %6360 = vmatprep.subr.mxu0 0.0
    %6361 = vmatpush1.msra.mxu0 0.0
    %6362 = vmatprep.subr.mxu0 0.0
    %6363 = vmatpush1.msra.mxu0 0.0
    %6364 = vmatprep.subr.mxu0 0.0
    %6365 = vmatpush1.msra.mxu0 0.0
    %6366 = vmatprep.subr.mxu0 0.0
    %6367 = vmatpush1.msra.mxu0 0.0
    %6368 = vmatprep.subr.mxu0 0.0
    %6369 = vmatpush1.msra.mxu0 0.0
    %6370 = vmatprep.subr.mxu0 0.0
    %6371 = vmatpush1.msra.mxu0 0.0
    %6372 = vmatprep.subr.mxu0 0.0
    %6373 = vmatpush1.msra.mxu0 0.0
    %6374 = vmatprep.subr.mxu0 0.0
    %6375 = vmatpush1.msra.mxu0 0.0
    %6376 = vmatprep.subr.mxu0 0.0
    %6377 = vmatpush1.msra.mxu0 0.0
    %6378 = vmatprep.subr.mxu0 0.0
    %6379 = vmatpush1.msra.mxu0 0.0
    %6380 = vmatprep.subr.mxu0 0.0
    %6381 = vmatpush1.msra.mxu0 0.0
    %6382 = vmatprep.subr.mxu0 0.0
    %6383 = vmatpush1.msra.mxu0 0.0
    %6384 = vmatprep.subr.mxu0 0.0
    %6385 = vmatpush1.msra.mxu0 0.0
    %6386 = vmatprep.subr.mxu0 0.0
    %6387 = vmatpush1.msra.mxu0 0.0
    %6388 = vmatprep.subr.mxu0 0.0
    %6389 = vmatpush1.msra.mxu0 0.0
    %6390 = vmatprep.subr.mxu0 0.0
    %6391 = vmatpush1.msra.mxu0 0.0
    %6392 = vmatprep.mubr.f32.mxu0 0.0
    %6393 = vmatmul.mubr.f32.gmra.mrb[0].mxu0 %v6323
    %v6394 = vpop.f32.mrb[0].mxu0
    %v6395 = vadd.f32 %v6321, %v6394
    %v6396 = vpop.f32.mrb[0].mxu0
    %6397 = vmatprep.mubr.f32.mxu0 0.0
    %6398 = vmatmul.mubr.f32.gmra.mrb[0].mxu0 %v6326
    %v6399 = vpop.f32.mrb[0].mxu0
    %v6400 = vadd.f32 %v6321, %v6399
    %v6401 = vpop.f32.mrb[0].mxu0
    %6402 = vdwg.mxu0
    %v6403 = vmax.f32 %v6395, 0.0
    %v6404 = vmax.f32 %v6400, 0.0
    %v6405 = vlaneseq
    %v6406 = vshrl.u32 %v6405, 7
    %v6407 = vsub.s32 5, %v6406
    %v6408 = vrot.slane %v3349, %v6407
    %6409 = vmatprep.subr.mxu0 0.0
    %6410 = vmatpush1.msra.mxu0 %v3359
    %6411 = vmatprep.subr.mxu0 0.0
    %6412 = vmatpush1.msra.mxu0 %v3360
    %6413 = vmatprep.subr.mxu0 0.0
    %6414 = vmatpush1.msra.mxu0 %v3361
    %6415 = vmatprep.subr.mxu0 0.0
    %6416 = vmatpush1.msra.mxu0 %v3362
    %6417 = vmatprep.subr.mxu0 0.0
    %6418 = vmatpush1.msra.mxu0 %v3363
    %6419 = vmatprep.subr.mxu0 0.0
    %6420 = vmatpush1.msra.mxu0 %v3364
    %6421 = vmatprep.subr.mxu0 0.0
    %6422 = vmatpush1.msra.mxu0 %v3365
    %6423 = vmatprep.subr.mxu0 0.0
    %6424 = vmatpush1.msra.mxu0 %v3366
    %6425 = vmatprep.subr.mxu0 0.0
    %6426 = vmatpush1.msra.mxu0 %v3367
    %6427 = vmatprep.subr.mxu0 0.0
    %6428 = vmatpush1.msra.mxu0 %v3368
    %6429 = vmatprep.subr.mxu0 0.0
    %6430 = vmatpush1.msra.mxu0 %v3369
    %6431 = vmatprep.subr.mxu0 0.0
    %6432 = vmatpush1.msra.mxu0 %v3370
    %6433 = vmatprep.subr.mxu0 0.0
    %6434 = vmatpush1.msra.mxu0 %v3371
    %6435 = vmatprep.subr.mxu0 0.0
    %6436 = vmatpush1.msra.mxu0 %v3372
    %6437 = vmatprep.subr.mxu0 0.0
    %6438 = vmatpush1.msra.mxu0 %v3373
    %6439 = vmatprep.subr.mxu0 0.0
    %6440 = vmatpush1.msra.mxu0 %v3374
    %6441 = vmatprep.subr.mxu0 0.0
    %6442 = vmatpush1.msra.mxu0 0.0
    %6443 = vmatprep.subr.mxu0 0.0
    %6444 = vmatpush1.msra.mxu0 0.0
    %6445 = vmatprep.subr.mxu0 0.0
    %6446 = vmatpush1.msra.mxu0 0.0
    %6447 = vmatprep.subr.mxu0 0.0
    %6448 = vmatpush1.msra.mxu0 0.0
    %6449 = vmatprep.subr.mxu0 0.0
    %6450 = vmatpush1.msra.mxu0 0.0
    %6451 = vmatprep.subr.mxu0 0.0
    %6452 = vmatpush1.msra.mxu0 0.0
    %6453 = vmatprep.subr.mxu0 0.0
    %6454 = vmatpush1.msra.mxu0 0.0
    %6455 = vmatprep.subr.mxu0 0.0
    %6456 = vmatpush1.msra.mxu0 0.0
    %6457 = vmatprep.subr.mxu0 0.0
    %6458 = vmatpush1.msra.mxu0 0.0
    %6459 = vmatprep.subr.mxu0 0.0
    %6460 = vmatpush1.msra.mxu0 0.0
    %6461 = vmatprep.subr.mxu0 0.0
    %6462 = vmatpush1.msra.mxu0 0.0
    %6463 = vmatprep.subr.mxu0 0.0
    %6464 = vmatpush1.msra.mxu0 0.0
    %6465 = vmatprep.subr.mxu0 0.0
    %6466 = vmatpush1.msra.mxu0 0.0
    %6467 = vmatprep.subr.mxu0 0.0
    %6468 = vmatpush1.msra.mxu0 0.0
    %6469 = vmatprep.subr.mxu0 0.0
    %6470 = vmatpush1.msra.mxu0 0.0
    %6471 = vmatprep.subr.mxu0 0.0
    %6472 = vmatpush1.msra.mxu0 0.0
    %6473 = vmatprep.mubr.f32.mxu0 0.0
    %6474 = vmatmul.mubr.f32.gmra.mrb[0].mxu0 %v6403
    %v6475 = vpop.f32.mrb[0].mxu0
    %v6476 = vadd.f32 %v6408, %v6475
    %v6477 = vpop.f32.mrb[0].mxu0
    %6478 = vmatprep.mubr.f32.mxu0 0.0
    %6479 = vmatmul.mubr.f32.gmra.mrb[0].mxu0 %v6404
    %v6480 = vpop.f32.mrb[0].mxu0
    %v6481 = vadd.f32 %v6408, %v6480
    %v6482 = vpop.f32.mrb[0].mxu0
    %6483 = vdwg.mxu0
    %v6484 = vadd.f32 %v6316, %v6476
    %v6485 = vadd.f32 %v6317, %v6481
    %v6486 = vsel %vm175, %v6484, 0.0
    %6487 = vadd.xlane.f32.xlu0 %v6486
    %v6488 = vpop.xlane.xlu0 %6487
    %v6489 = vsel %vm175, %v6485, 0.0
    %6490 = vadd.xlane.f32.xlu0 %v6489
    %v6491 = vpop.xlane.xlu0 %6490
    %v6492 = vmul.f32 %v6488, %v3084
    %v6493 = vmul.f32 %v6491, %v3084
    %v6494 = vsub.f32 %v6484, %v6492
    %v6495 = vsub.f32 %v6485, %v6493
    %v6496 = vmul.f32 %v6494, %v6494
    %v6497 = vmul.f32 %v6495, %v6495
    %v6498 = vsel %vm175, %v6496, 0.0
    %6499 = vadd.xlane.f32.xlu0 %v6498
    %v6500 = vpop.xlane.xlu0 %6499
    %v6501 = vsel %vm175, %v6497, 0.0
    %6502 = vadd.xlane.f32.xlu0 %v6501
    %v6503 = vpop.xlane.xlu0 %6502
    %v6504 = vmul.f32 %v6500, %v3084
    %v6505 = vmul.f32 %v6503, %v3084
    %v6506 = vadd.f32 %v6504, 1e-05
    %v6507 = vadd.f32 %v6505, 1e-05
    %v6508 = vrsqrt.pop %v6506
    %v6509 = vrsqrt.pop %v6507
    %v6510 = vmul.f32 %v6494, %v6508
    %v6511 = vmul.f32 %v6495, %v6509
    %v6512 = vlaneseq
    %v6513 = vshrl.u32 %v6512, 7
    %v6514 = vsub.s32 3, %v6513
    %v6515 = vrot.slane %v3349, %v6514
    %v6516 = vmul.f32 %v6510, %v6515
    %v6517 = vmul.f32 %v6511, %v6515
    %v6518 = vlaneseq
    %v6519 = vshrl.u32 %v6518, 7
    %v6520 = vsub.s32 4, %v6519
    %v6521 = vrot.slane %v3349, %v6520
    %v6522 = vadd.f32 %v6516, %v6521
    %v6523 = vadd.f32 %v6517, %v6521
    %v6524 = vsel %vm175, %v6522, 0.0
    %v6525 = vrot.slane %v6524, 4
    %v6526 = vadd.f32 %v6524, %v6525
    %v6527 = vrot.slane %v6526, 2
    %v6528 = vadd.f32 %v6526, %v6527
    %v6529 = vrot.slane %v6528, 1
    %v6530 = vadd.f32 %v6528, %v6529
    %v6531 = vsel %vm175, %v6523, 0.0
    %v6532 = vrot.slane %v6531, 4
    %v6533 = vadd.f32 %v6531, %v6532
    %v6534 = vrot.slane %v6533, 2
    %v6535 = vadd.f32 %v6533, %v6534
    %v6536 = vrot.slane %v6535, 1
    %v6537 = vadd.f32 %v6535, %v6536
    %v6538 = vrcp.pop 8.0
    %v6539 = vmul.f32 %v6530, %v6538
    %v6540 = vmul.f32 %v6537, %v6538
    %v6541 = vld [vmem:[%s3 + $0x1a8] sm:$0xff]
    %v6542 = vld [vmem:[%s3 + $0x1b0] sm:$0xff]
    %v6543 = vld [vmem:[%s3 + $0x1b8] sm:$0xff]
    %v6544 = vld [vmem:[%s3 + $0x1c0] sm:$0xff]
    %v6545 = vld [vmem:[%s3 + $0x1c8] sm:$0xff]
    %v6546 = vld [vmem:[%s3 + $0x1d0] sm:$0xff]
    %v6547 = vld [vmem:[%s3 + $0x1d8] sm:$0xff]
    %v6548 = vld [vmem:[%s3 + $0x1e0] sm:$0xff]
    %v6549 = vld [vmem:[%s3 + $0x1e8] sm:$0x1]
    %v6550 = vlaneseq
    %v6551 = vshrl.u32 %v6550, 7
    %v6552 = vsub.s32 0, %v6551
    %v6553 = vrot.slane %v6549, %v6552
    %vm6556 = vcmask 1041409
    %v6557 = vsel %vm6556, %v6540, %v6539
    %v6558 = vsel %vm175, %v6557, 0
    %6560 = vmatprep.subr.mxu0 0.0
    %6561 = vmatpush1.msra.mxu0 %v6541
    %6562 = vmatprep.subr.mxu0 0.0
    %6563 = vmatpush1.msra.mxu0 %v6542
    %6564 = vmatprep.subr.mxu0 0.0
    %6565 = vmatpush1.msra.mxu0 %v6543
    %6566 = vmatprep.subr.mxu0 0.0
    %6567 = vmatpush1.msra.mxu0 %v6544
    %6568 = vmatprep.subr.mxu0 0.0
    %6569 = vmatpush1.msra.mxu0 %v6545
    %6570 = vmatprep.subr.mxu0 0.0
    %6571 = vmatpush1.msra.mxu0 %v6546
    %6572 = vmatprep.subr.mxu0 0.0
    %6573 = vmatpush1.msra.mxu0 %v6547
    %6574 = vmatprep.subr.mxu0 0.0
    %6575 = vmatpush1.msra.mxu0 %v6548
    %6576 = vmatprep.subr.mxu0 0.0
    %6577 = vmatpush1.msra.mxu0 0.0
    %6578 = vmatprep.subr.mxu0 0.0
    %6579 = vmatpush1.msra.mxu0 0.0
    %6580 = vmatprep.subr.mxu0 0.0
    %6581 = vmatpush1.msra.mxu0 0.0
    %6582 = vmatprep.subr.mxu0 0.0
    %6583 = vmatpush1.msra.mxu0 0.0
    %6584 = vmatprep.subr.mxu0 0.0
    %6585 = vmatpush1.msra.mxu0 0.0
    %6586 = vmatprep.subr.mxu0 0.0
    %6587 = vmatpush1.msra.mxu0 0.0
    %6588 = vmatprep.subr.mxu0 0.0
    %6589 = vmatpush1.msra.mxu0 0.0
    %6590 = vmatprep.subr.mxu0 0.0
    %6591 = vmatpush1.msra.mxu0 0.0
    %6592 = vmatprep.subr.mxu0 0.0
    %6593 = vmatpush1.msra.mxu0 0.0
    %6594 = vmatprep.subr.mxu0 0.0
    %6595 = vmatpush1.msra.mxu0 0.0
    %6596 = vmatprep.subr.mxu0 0.0
    %6597 = vmatpush1.msra.mxu0 0.0
    %6598 = vmatprep.subr.mxu0 0.0
    %6599 = vmatpush1.msra.mxu0 0.0
    %6600 = vmatprep.subr.mxu0 0.0
    %6601 = vmatpush1.msra.mxu0 0.0
    %6602 = vmatprep.subr.mxu0 0.0
    %6603 = vmatpush1.msra.mxu0 0.0
    %6604 = vmatprep.subr.mxu0 0.0
    %6605 = vmatpush1.msra.mxu0 0.0
    %6606 = vmatprep.subr.mxu0 0.0
    %6607 = vmatpush1.msra.mxu0 0.0
    %6608 = vmatprep.subr.mxu0 0.0
    %6609 = vmatpush1.msra.mxu0 0.0
    %6610 = vmatprep.subr.mxu0 0.0
    %6611 = vmatpush1.msra.mxu0 0.0
    %6612 = vmatprep.subr.mxu0 0.0
    %6613 = vmatpush1.msra.mxu0 0.0
    %6614 = vmatprep.subr.mxu0 0.0
    %6615 = vmatpush1.msra.mxu0 0.0
    %6616 = vmatprep.subr.mxu0 0.0
    %6617 = vmatpush1.msra.mxu0 0.0
    %6618 = vmatprep.subr.mxu0 0.0
    %6619 = vmatpush1.msra.mxu0 0.0
    %6620 = vmatprep.subr.mxu0 0.0
    %6621 = vmatpush1.msra.mxu0 0.0
    %6622 = vmatprep.subr.mxu0 0.0
    %6623 = vmatpush1.msra.mxu0 0.0
    %6624 = vmatprep.mubr.f32.mxu0 0.0
    %6625 = vmatmul.mubr.f32.gmra.mrb[0].mxu0 %v6558
    %v6626 = vpop.f32.mrb[0].mxu0
    %v6627 = vadd.f32 %v6553, %v6626
    %v6628 = vpop.f32.mrb[0].mxu0
    %6629 = vdwg.mxu0
    %v6630 = vmax.f32 %v6627, 0.0
    %v6631 = vld [vmem:[%s4] sm:$0xff]
    %v6632 = vld [vmem:[%s4 + $0x8] sm:$0xff]
    %v6633 = vld [vmem:[%s4 + $0x10] sm:$0xff]
    %v6634 = vld [vmem:[%s4 + $0x18] sm:$0xff]
    %v6635 = vld [vmem:[%s4 + $0x20] sm:$0xff]
    %v6636 = vld [vmem:[%s4 + $0x28] sm:$0xff]
    %v6637 = vld [vmem:[%s4 + $0x30] sm:$0xff]
    %v6638 = vld [vmem:[%s4 + $0x38] sm:$0xff]
    %v6639 = vld [vmem:[%s4 + $0x40] sm:$0xff]
    %v6640 = vlaneseq
    %v6641 = vshrl.u32 %v6640, 7
    %v6642 = vsub.s32 0, %v6641
    %v6643 = vrot.slane %v6639, %v6642
    %v6645 = vsel %vm175, %v6630, 0
    %6647 = vmatprep.subr.mxu0 0.0
    %6648 = vmatpush1.msra.mxu0 %v6631
    %6649 = vmatprep.subr.mxu0 0.0
    %6650 = vmatpush1.msra.mxu0 %v6632
    %6651 = vmatprep.subr.mxu0 0.0
    %6652 = vmatpush1.msra.mxu0 %v6633
    %6653 = vmatprep.subr.mxu0 0.0
    %6654 = vmatpush1.msra.mxu0 %v6634
    %6655 = vmatprep.subr.mxu0 0.0
    %6656 = vmatpush1.msra.mxu0 %v6635
    %6657 = vmatprep.subr.mxu0 0.0
    %6658 = vmatpush1.msra.mxu0 %v6636
    %6659 = vmatprep.subr.mxu0 0.0
    %6660 = vmatpush1.msra.mxu0 %v6637
    %6661 = vmatprep.subr.mxu0 0.0
    %6662 = vmatpush1.msra.mxu0 %v6638
    %6663 = vmatprep.subr.mxu0 0.0
    %6664 = vmatpush1.msra.mxu0 0.0
    %6665 = vmatprep.subr.mxu0 0.0
    %6666 = vmatpush1.msra.mxu0 0.0
    %6667 = vmatprep.subr.mxu0 0.0
    %6668 = vmatpush1.msra.mxu0 0.0
    %6669 = vmatprep.subr.mxu0 0.0
    %6670 = vmatpush1.msra.mxu0 0.0
    %6671 = vmatprep.subr.mxu0 0.0
    %6672 = vmatpush1.msra.mxu0 0.0
    %6673 = vmatprep.subr.mxu0 0.0
    %6674 = vmatpush1.msra.mxu0 0.0
    %6675 = vmatprep.subr.mxu0 0.0
    %6676 = vmatpush1.msra.mxu0 0.0
    %6677 = vmatprep.subr.mxu0 0.0
    %6678 = vmatpush1.msra.mxu0 0.0
    %6679 = vmatprep.subr.mxu0 0.0
    %6680 = vmatpush1.msra.mxu0 0.0
    %6681 = vmatprep.subr.mxu0 0.0
    %6682 = vmatpush1.msra.mxu0 0.0
    %6683 = vmatprep.subr.mxu0 0.0
    %6684 = vmatpush1.msra.mxu0 0.0
    %6685 = vmatprep.subr.mxu0 0.0
    %6686 = vmatpush1.msra.mxu0 0.0
    %6687 = vmatprep.subr.mxu0 0.0
    %6688 = vmatpush1.msra.mxu0 0.0
    %6689 = vmatprep.subr.mxu0 0.0
    %6690 = vmatpush1.msra.mxu0 0.0
    %6691 = vmatprep.subr.mxu0 0.0
    %6692 = vmatpush1.msra.mxu0 0.0
    %6693 = vmatprep.subr.mxu0 0.0
    %6694 = vmatpush1.msra.mxu0 0.0
    %6695 = vmatprep.subr.mxu0 0.0
    %6696 = vmatpush1.msra.mxu0 0.0
    %6697 = vmatprep.subr.mxu0 0.0
    %6698 = vmatpush1.msra.mxu0 0.0
    %6699 = vmatprep.subr.mxu0 0.0
    %6700 = vmatpush1.msra.mxu0 0.0
    %6701 = vmatprep.subr.mxu0 0.0
    %6702 = vmatpush1.msra.mxu0 0.0
    %6703 = vmatprep.subr.mxu0 0.0
    %6704 = vmatpush1.msra.mxu0 0.0
    %6705 = vmatprep.subr.mxu0 0.0
    %6706 = vmatpush1.msra.mxu0 0.0
    %6707 = vmatprep.subr.mxu0 0.0
    %6708 = vmatpush1.msra.mxu0 0.0
    %6709 = vmatprep.subr.mxu0 0.0
    %6710 = vmatpush1.msra.mxu0 0.0
    %6711 = vmatprep.mubr.f32.mxu0 0.0
    %6712 = vmatmul.mubr.f32.gmra.mrb[0].mxu0 %v6645
    %v6713 = vpop.f32.mrb[0].mxu0
    %v6714 = vadd.f32 %v6643, %v6713
    %v6715 = vpop.f32.mrb[0].mxu0
    %6716 = vdwg.mxu0
    %vm6717 = vcmask 254976
    %v6718 = vsel %vm6717, %v6714, 0.0
    %6719 = vadd.xlane.f32.xlu0 %v6718
    %v6720 = vpop.xlane.xlu0 %6719
    %v6721 = vrcp.pop 32.0
    %v6722 = vmul.f32 %v6720, %v6721
    %v6723 = vsub.f32 %v6714, %v6722
    %v6724 = vmul.f32 %v6723, %v6723
    %v6725 = vsel %vm6717, %v6724, 0.0
    %6726 = vadd.xlane.f32.xlu0 %v6725
    %v6727 = vpop.xlane.xlu0 %6726
    %v6728 = vmul.f32 %v6727, %v6721
    %v6729 = vadd.f32 %v6728, 1e-05
    %v6730 = vrsqrt.pop %v6729
    %v6731 = vmul.f32 %v6723, %v6730
    %v6732 = vlaneseq
    %v6733 = vshrl.u32 %v6732, 7
    %v6734 = vsub.s32 1, %v6733
    %v6735 = vrot.slane %v6639, %v6734
    %v6736 = vmul.f32 %v6731, %v6735
    %v6737 = vlaneseq
    %v6738 = vshrl.u32 %v6737, 7
    %v6739 = vsub.s32 2, %v6738
    %v6740 = vrot.slane %v6639, %v6739
    %v6741 = vadd.f32 %v6736, %v6740
    %v6742 = vmul.f32 %v6741, %v6741
    %v6743 = vsel %vm6717, %v6742, 0.0
    %6744 = vadd.xlane.f32.xlu0 %v6743
    %v6745 = vpop.xlane.xlu0 %6744
    %v6746 = vmax.f32 %v6745, 1e-24
    %v6747 = vrsqrt.pop %v6746
    %v6748 = vmul.f32 %v6741, %v6747
    %6749 = vst.msk [vmem:[#allocation3] sm:$0x3] %vm6717, %v6748
    // Predicated region
    $region22: #{tpu_custom_call.1} parent=1 // pred_check
      _
    $region23: #{tpu_custom_call.1} parent=1 // pred_check_branch
      %6751 = sbr.rel (0) target = $region25
    $region24: #{tpu_custom_call.1} parent=1 // pred_region
      %s6753 = ssub.s32 32, 32
      %6754 = vsyncadd [#allocation4], %s6753
      %s6756 = sshll.u32 [#allocation3], 4
      %s6757 = int_to_ptr.vmem [resolvable:$true] %s6756
      %6759 = dma.vmem_to_hbm [thread:$0]  %s6757, 32, %s5, [#allocation4]
    $region25: #{tpu_custom_call.1} parent=1 // pred_fallthru
      _
    // Predicated region
    $region26: #{tpu_custom_call.1} parent=1 // pred_check
      _
    $region27: #{tpu_custom_call.1} parent=1 // pred_check_branch
      %6761 = sbr.rel (0) target = $region29
    $region28: #{tpu_custom_call.1} parent=1 // pred_region
      %6762 = dma.done [#allocation4], 32
    $region29: #{tpu_custom_call.1} parent=1 // pred_fallthru
      _
    %6763 = vsyncpa [#allocation4], 1

</llo_original>
